<compile_context>
chip_gen: v7x
topology: tpu7x:2x2x1
jax: 0.10.0
libtpu: 0.0.40
codegen_flags: <defaults>
</compile_context>

<pallas_src>
import functools

import jax
import jax.numpy as jnp
from jax.experimental import pallas as pl
from jax.experimental.pallas import tpu as pltpu


# ------------------------------- fused kernel ------------------------------- #

def _ssb_kernel(x_ref, mask_ref, w1_ref, b1_ref, w2_ref, b2_ref,
                w3_ref, b3_ref, w4_ref, b4_ref,
                wd1_ref, bd1_ref, wd2_ref, bd2_ref, o_ref,
                *, width, hw_img, nb, res_scale, packed):
    L = x_ref.shape[2]                       # lanes per grid step = nb * hw_img
    cdt = w1_ref.dtype                       # MXU operand dtype (bf16 or f32)
    x = x_ref[0]                             # (C, L) f32

    taps = [(t // 3 - 1, t % 3 - 1) for t in range(9)]

    def tap_piece(v, t, dy, dx):
        # Lane-rotate the flattened image by the tap offset (XLU), zero wrapped /
        # out-of-image pixels with the compact (1, L) per-tap mask, cast for MXU.
        # Center tap needs neither the roll nor the mask.
        if dy == 0 and dx == 0:
            return v.astype(cdt)
        s = dy * width + dx
        return (pltpu.roll(v, shift=(-s) % L, axis=1) * mask_ref[t]).astype(cdt)

    def conv3x3(v, w_ref):
        if packed:
            # Small C: stack the 9 taps along sublanes, one K=9C MXU contraction.
            patches = jnp.concatenate(
                [tap_piece(v, t, dy, dx) for t, (dy, dx) in enumerate(taps)], axis=0)
            return jax.lax.dot_general(w_ref[...], patches, (((1,), (0,)), ((), ())),
                                       preferred_element_type=jnp.float32)
        # Large C: 9 accumulating K=C matmuls; no (9C, L) patches buffer is ever
        # materialized (on v7x the MRB accumulates the partials in place).
        acc = None
        for t, (dy, dx) in enumerate(taps):
            part = jax.lax.dot_general(w_ref[t], tap_piece(v, t, dy, dx),
                                       (((1,), (0,)), ((), ())),
                                       preferred_element_type=jnp.float32)
            acc = part if acc is None else acc + part
        return acc

    # ----- spa: ResBlock (3x3 convs); bias/relu/residual in f32 -----
    mid = jnp.maximum(conv3x3(x, w1_ref) + b1_ref[...], 0.0)
    y1 = (conv3x3(mid, w2_ref) + b2_ref[...]) * res_scale + x

    # ----- spc: ResAttentionBlock (1x1 convs) + CALayer, fully in VMEM -----
    def mm(w_ref, v):                        # (C_out, C_in) @ (C_in, L)
        return jax.lax.dot_general(w_ref[...], v.astype(cdt), (((1,), (0,)), ((), ())),
                                   preferred_element_type=jnp.float32)

    t1 = jnp.maximum(mm(w3_ref, y1) + b3_ref[...], 0.0)
    u = mm(w4_ref, t1) + b4_ref[...]

    # CALayer PER IMAGE (nb images folded side by side along the lane axis).
    # hw_img is a multiple of 128 so every slice / store below is lane-aligned.
    for b in range(nb):
        lo, hi = b * hw_img, (b + 1) * hw_img
        u_b, y1_b = u[:, lo:hi], y1[:, lo:hi]
        pooled = jnp.mean(u_b, axis=1, keepdims=True)                        # (C,1)
        d = jnp.maximum(jnp.sum(wd1_ref[...] * pooled, axis=0, keepdims=True)
                        + bd1_ref[...], 0.0)                                 # (1,Cr)
        gate = jax.nn.sigmoid(jnp.sum(wd2_ref[...] * d, axis=1, keepdims=True)
                              + bd2_ref[...])                                # (C,1)
        o_ref[0, :, lo:hi] = ((u_b * gate) * res_scale + y1_b).astype(o_ref.dtype)


# ------------------------------ wrapper (glue) ------------------------------ #

def ssb_forward(x_nchw, params, res_scale=0.1, *,
                compute_dtype=jnp.bfloat16, im2col_packed=None, fold_batch=None):
    """x_nchw: (B, C, H, W) float32 (PyTorch layout). Returns NCHW float32."""
    x = x_nchw.astype(jnp.float32)
    B, C, H, W = x.shape
    HW = H * W
    f32 = jnp.float32
    cdt = jnp.dtype(compute_dtype)

    # Layout contract: ragged widths would force masked partial stores.
    assert HW % 128 == 0, "H*W must be a multiple of 128"
    assert C % 16 == 0, "n_feats must be a multiple of 16 (CALayer reduction / sublanes)"

    if im2col_packed is None:
        # Packed K=9C im2col only when a per-tap K=C would underfill the MXU.
        im2col_packed = C < 128
    if fold_batch is None:
        # Small problems: fold the batch into the lane axis (one wide grid step).
        fold_batch = B > 1 and (B * C * HW * 4) <= (8 << 20)

    nb = B if fold_batch else 1            # images per grid step
    G = B // nb                            # grid steps
    L = nb * HW                            # lanes per step

    if fold_batch:
        xf = jnp.transpose(x.reshape(B, C, HW), (1, 0, 2)).reshape(1, C, L)
    else:
        xf = x.reshape(B, C, HW)           # contiguous reshape, no copy

    # Compact (9, 1, L) per-tap zero-padding mask (~9*L*4 bytes, single-buffered).
    # Zeroes both image-boundary taps and the cross-image wrap of the lane rolls.
    p = jnp.arange(L)
    pi, pj = (p % HW) // W, p % W
    rows = []
    for ky in range(3):
        for kx in range(3):
            dy, dx = ky - 1, kx - 1
            rows.append((pi + dy >= 0) & (pi + dy < H) & (pj + dx >= 0) & (pj + dx < W))
    mask = jnp.stack(rows, 0).astype(f32).reshape(9, 1, L)

    # Weight packing (MXU operand dtype); biases stay f32 (added post-matmul).
    if im2col_packed:   # (C_out, C_in, 3, 3) -> (C_out, 9*C_in), tap-major then C_in
        pack3 = lambda w: jnp.transpose(w.astype(f32), (0, 2, 3, 1)).reshape(C, 9 * C).astype(cdt)
    else:               # -> (9, C_out, C_in), one (C, C) slab per tap
        pack3 = lambda w: jnp.transpose(w.astype(f32), (2, 3, 0, 1)).reshape(9, C, C).astype(cdt)
    col = lambda b: jnp.asarray(b, f32).reshape(-1, 1)

    const_args = (
        mask,
        pack3(params["w1"]), col(params["b1"]),
        pack3(params["w2"]), col(params["b2"]),
        params["w3"].astype(cdt), col(params["b3"]),
        params["w4"].astype(cdt), col(params["b4"]),
        params["wd1"].T.astype(f32),                      # (C, Cr)
        jnp.asarray(params["bd1"], f32).reshape(1, -1),   # (1, Cr)
        params["wd2"].astype(f32),                        # (C, Cr)
        col(params["bd2"]),                               # (C, 1)
    )

    cost = pl.CostEstimate(
        flops=int(2 * B * HW * C * C * (2 * 9 + 2)),      # two 3x3 + two 1x1 convs
        transcendentals=int(B * C),                        # sigmoid gate
        bytes_accessed=int(2 * B * C * HW * 4
                           + sum(a.size * a.dtype.itemsize for a in const_args)))

    kernel = functools.partial(_ssb_kernel, width=W, hw_img=HW, nb=nb,
                               res_scale=float(res_scale), packed=im2col_packed)

    # TODO(synk): for very large H*W (beyond ~C=256, 64x64 on v7x's 64 MiB VMEM),
    # add a row-tiled grid axis with a 2-row halo and a two-phase CALayer
    # (accumulate the global pool across tiles, apply the gate in a second pass).
    def call(single_buffer_invariants):
        img = pl.BlockSpec((1, C, L), lambda g: (g, 0, 0))

        def inv_spec(a):
            kw = ({"pipeline_mode": pl.Buffered(buffer_count=1)}
                  if single_buffer_invariants else {})
            return pl.BlockSpec(a.shape, lambda g, _nd=a.ndim: (0,) * _nd, **kw)

        return pl.pallas_call(
            kernel,
            out_shape=jax.ShapeDtypeStruct((G, C, L), f32),
            grid=(G,),
            in_specs=[img] + [inv_spec(a) for a in const_args],
            out_specs=img,
            compiler_params=pltpu.CompilerParams(
                dimension_semantics=("parallel",),
                vmem_limit_bytes=64 * 1024 * 1024),
            cost_estimate=cost,
        )(xf, *const_args)

    try:
        out = call(True)       # grid-invariant weights/mask single-buffered
    except Exception:          # pl.Buffered(1) unsupported -> default double buffering
        out = call(False)

    if fold_batch:
        return jnp.transpose(out.reshape(C, B, HW), (1, 0, 2)).reshape(B, C, H, W)
    return out.reshape(B, C, H, W)


# ----------------------------- pure-JAX reference --------------------------- #

def ssb_reference(x_nchw, params, res_scale=0.1):
    x = x_nchw.astype(jnp.float32)

    def conv3(v, w, b):
        return jax.lax.conv_general_dilated(
            v, w.astype(jnp.float32), (1, 1), ((1, 1), (1, 1)),
            dimension_numbers=("NCHW", "OIHW", "NCHW")) + b.reshape(1, -1, 1, 1)

    def conv1(v, w, b):
        return jnp.einsum("oc,bchw->bohw", w, v) + b.reshape(1, -1, 1, 1)

    m = jax.nn.relu(conv3(x, params["w1"], params["b1"]))
    y1 = conv3(m, params["w2"], params["b2"]) * res_scale + x
    t = jax.nn.relu(conv1(y1, params["w3"], params["b3"]))
    u = conv1(t, params["w4"], params["b4"])
    pooled = jnp.mean(u, axis=(2, 3), keepdims=True)
    d = jax.nn.relu(conv1(pooled, params["wd1"], params["bd1"]))
    s = jax.nn.sigmoid(conv1(d, params["wd2"], params["bd2"]))
    return (u * s) * res_scale + y1


# ----------------------------------- main ----------------------------------- #

if __name__ == "__main__":
    # n_feats must be divisible by 16 (CALayer reduction); H*W multiple of 128.
    B, C, H, W = 2, 32, 16, 16
    res_scale = 0.1
    Cr = C // 16

    key = jax.random.PRNGKey(0)
    ks = jax.random.split(key, 11)
    init = lambda k, shape: 0.05 * jax.random.normal(k, shape, jnp.float32)

    params = {
        "w1": init(ks[0], (C, C, 3, 3)),  "b1": init(ks[1], (C,)),
        "w2": init(ks[2], (C, C, 3, 3)),  "b2": init(ks[3], (C,)),
        "w3": init(ks[4], (C, C)),        "b3": init(ks[5], (C,)),
        "w4": init(ks[6], (C, C)),        "b4": init(ks[7], (C,)),
        "wd1": init(ks[8], (Cr, C)),      "bd1": jnp.zeros((Cr,), jnp.float32),
        "wd2": init(ks[9], (C, Cr)),      "bd2": jnp.zeros((C,), jnp.float32),
    }

    x = jax.random.normal(ks[10], (B, C, H, W), jnp.float32)
    ref = jax.block_until_ready(ssb_reference(x, params, res_scale))

    # 1) f32 MXU operands, batch folded into lanes, packed K=9C im2col (small-C path).
    out = jax.block_until_ready(
        ssb_forward(x, params, res_scale, compute_dtype=jnp.float32))
    assert out.shape == (B, C, H, W)
    err = float(jnp.max(jnp.abs(out - ref)))
    assert jnp.allclose(out, ref, atol=1e-4, rtol=1e-4), err

    # 2) f32, per-tap accumulating matmuls + per-image grid (large-C / production structure).
    out2 = jax.block_until_ready(
        ssb_forward(x, params, res_scale, compute_dtype=jnp.float32,
                    im2col_packed=False, fold_batch=False))
    err2 = float(jnp.max(jnp.abs(out2 - ref)))
    assert jnp.allclose(out2, ref, atol=1e-4, rtol=1e-4), err2

    # 3) default config: bf16 MXU operands with f32 accumulation (looser tolerance).
    out3 = jax.block_until_ready(ssb_forward(x, params, res_scale))
    err3 = float(jnp.max(jnp.abs(out3 - ref)))
    assert jnp.allclose(out3, ref, atol=5e-2, rtol=5e-2), err3

    print("KERNEL_OK")
</pallas_src>

<mosaic_0001>
module attributes {stable_mosaic.version = 11 : i64} {
  func.func @_ssb_kernel(%arg0: i32, %arg1: memref<1x32x512xf32, #tpu.memory_space<vmem>>, %arg2: memref<9x1x512xf32, #tpu.memory_space<vmem>>, %arg3: memref<32x288xf32, #tpu.memory_space<vmem>>, %arg4: memref<32x1xf32, #tpu.memory_space<vmem>>, %arg5: memref<32x288xf32, #tpu.memory_space<vmem>>, %arg6: memref<32x1xf32, #tpu.memory_space<vmem>>, %arg7: memref<32x32xf32, #tpu.memory_space<vmem>>, %arg8: memref<32x1xf32, #tpu.memory_space<vmem>>, %arg9: memref<32x32xf32, #tpu.memory_space<vmem>>, %arg10: memref<32x1xf32, #tpu.memory_space<vmem>>, %arg11: memref<32x2xf32, #tpu.memory_space<vmem>>, %arg12: memref<1x2xf32, #tpu.memory_space<vmem>>, %arg13: memref<32x2xf32, #tpu.memory_space<vmem>>, %arg14: memref<32x1xf32, #tpu.memory_space<vmem>>, %arg15: memref<1x32x512xf32, #tpu.memory_space<vmem>>) attributes {dimension_semantics = [#tpu.dimension_semantics<parallel>], iteration_bounds = array<i64: 1>, scalar_prefetch = 0 : i64, scratch_operands = 0 : i64, tpu.core_type = #tpu.core_type<tc>, window_params = [{transform_indices = @transform_0, window_bounds = array<i64: 1, 32, 512>}, {pipeline_mode = #tpu.pipeline_mode<synchronous>, transform_indices = @transform_1, window_bounds = array<i64: 9, 1, 512>}, {pipeline_mode = #tpu.pipeline_mode<synchronous>, transform_indices = @transform_2, window_bounds = array<i64: 32, 288>}, {pipeline_mode = #tpu.pipeline_mode<synchronous>, transform_indices = @transform_3, window_bounds = array<i64: 32, 1>}, {pipeline_mode = #tpu.pipeline_mode<synchronous>, transform_indices = @transform_4, window_bounds = array<i64: 32, 288>}, {pipeline_mode = #tpu.pipeline_mode<synchronous>, transform_indices = @transform_5, window_bounds = array<i64: 32, 1>}, {pipeline_mode = #tpu.pipeline_mode<synchronous>, transform_indices = @transform_6, window_bounds = array<i64: 32, 32>}, {pipeline_mode = #tpu.pipeline_mode<synchronous>, transform_indices = @transform_7, window_bounds = array<i64: 32, 1>}, {pipeline_mode = #tpu.pipeline_mode<synchronous>, transform_indices = @transform_8, window_bounds = array<i64: 32, 32>}, {pipeline_mode = #tpu.pipeline_mode<synchronous>, transform_indices = @transform_9, window_bounds = array<i64: 32, 1>}, {pipeline_mode = #tpu.pipeline_mode<synchronous>, transform_indices = @transform_10, window_bounds = array<i64: 32, 2>}, {pipeline_mode = #tpu.pipeline_mode<synchronous>, transform_indices = @transform_11, window_bounds = array<i64: 1, 2>}, {pipeline_mode = #tpu.pipeline_mode<synchronous>, transform_indices = @transform_12, window_bounds = array<i64: 32, 2>}, {pipeline_mode = #tpu.pipeline_mode<synchronous>, transform_indices = @transform_13, window_bounds = array<i64: 32, 1>}, {transform_indices = @transform_14, window_bounds = array<i64: 1, 32, 512>}]} {
    %c0 = arith.constant 0 : index
    %c0_0 = arith.constant 0 : index
    %c0_1 = arith.constant 0 : index
    %0 = vector.load %arg1[%c0, %c0_0, %c0_1] : memref<1x32x512xf32, #tpu.memory_space<vmem>>, vector<1x32x512xf32>
    %1 = vector.shape_cast %0 : vector<1x32x512xf32> to vector<32x512xf32>
    %c17_i32 = arith.constant 17 : i32
    %2 = tpu.dynamic_rotate %1 by %c17_i32 dim 1 : vector<32x512xf32>, i32 -> vector<32x512xf32>
    %c0_2 = arith.constant 0 : index
    %c0_3 = arith.constant 0 : index
    %c0_4 = arith.constant 0 : index
    %3 = vector.load %arg2[%c0_2, %c0_3, %c0_4] : memref<9x1x512xf32, #tpu.memory_space<vmem>>, vector<1x1x512xf32>
    %4 = vector.shape_cast %3 : vector<1x1x512xf32> to vector<1x512xf32>
    %5 = vector.broadcast %4 : vector<1x512xf32> to vector<32x512xf32>
    %6 = arith.mulf %2, %5 : vector<32x512xf32>
    %c16_i32 = arith.constant 16 : i32
    %7 = tpu.dynamic_rotate %1 by %c16_i32 dim 1 : vector<32x512xf32>, i32 -> vector<32x512xf32>
    %c1 = arith.constant 1 : index
    %c0_5 = arith.constant 0 : index
    %c0_6 = arith.constant 0 : index
    %8 = vector.load %arg2[%c1, %c0_5, %c0_6] : memref<9x1x512xf32, #tpu.memory_space<vmem>>, vector<1x1x512xf32>
    %9 = vector.shape_cast %8 : vector<1x1x512xf32> to vector<1x512xf32>
    %10 = vector.broadcast %9 : vector<1x512xf32> to vector<32x512xf32>
    %11 = arith.mulf %7, %10 : vector<32x512xf32>
    %c15_i32 = arith.constant 15 : i32
    %12 = tpu.dynamic_rotate %1 by %c15_i32 dim 1 : vector<32x512xf32>, i32 -> vector<32x512xf32>
    %c2 = arith.constant 2 : index
    %c0_7 = arith.constant 0 : index
    %c0_8 = arith.constant 0 : index
    %13 = vector.load %arg2[%c2, %c0_7, %c0_8] : memref<9x1x512xf32, #tpu.memory_space<vmem>>, vector<1x1x512xf32>
    %14 = vector.shape_cast %13 : vector<1x1x512xf32> to vector<1x512xf32>
    %15 = vector.broadcast %14 : vector<1x512xf32> to vector<32x512xf32>
    %16 = arith.mulf %12, %15 : vector<32x512xf32>
    %c1_i32 = arith.constant 1 : i32
    %17 = tpu.dynamic_rotate %1 by %c1_i32 dim 1 : vector<32x512xf32>, i32 -> vector<32x512xf32>
    %c3 = arith.constant 3 : index
    %c0_9 = arith.constant 0 : index
    %c0_10 = arith.constant 0 : index
    %18 = vector.load %arg2[%c3, %c0_9, %c0_10] : memref<9x1x512xf32, #tpu.memory_space<vmem>>, vector<1x1x512xf32>
    %19 = vector.shape_cast %18 : vector<1x1x512xf32> to vector<1x512xf32>
    %20 = vector.broadcast %19 : vector<1x512xf32> to vector<32x512xf32>
    %21 = arith.mulf %17, %20 : vector<32x512xf32>
    %c511_i32 = arith.constant 511 : i32
    %22 = tpu.dynamic_rotate %1 by %c511_i32 dim 1 : vector<32x512xf32>, i32 -> vector<32x512xf32>
    %c5 = arith.constant 5 : index
    %c0_11 = arith.constant 0 : index
    %c0_12 = arith.constant 0 : index
    %23 = vector.load %arg2[%c5, %c0_11, %c0_12] : memref<9x1x512xf32, #tpu.memory_space<vmem>>, vector<1x1x512xf32>
    %24 = vector.shape_cast %23 : vector<1x1x512xf32> to vector<1x512xf32>
    %25 = vector.broadcast %24 : vector<1x512xf32> to vector<32x512xf32>
    %26 = arith.mulf %22, %25 : vector<32x512xf32>
    %c497_i32 = arith.constant 497 : i32
    %27 = tpu.dynamic_rotate %1 by %c497_i32 dim 1 : vector<32x512xf32>, i32 -> vector<32x512xf32>
    %c6 = arith.constant 6 : index
    %c0_13 = arith.constant 0 : index
    %c0_14 = arith.constant 0 : index
    %28 = vector.load %arg2[%c6, %c0_13, %c0_14] : memref<9x1x512xf32, #tpu.memory_space<vmem>>, vector<1x1x512xf32>
    %29 = vector.shape_cast %28 : vector<1x1x512xf32> to vector<1x512xf32>
    %30 = vector.broadcast %29 : vector<1x512xf32> to vector<32x512xf32>
    %31 = arith.mulf %27, %30 : vector<32x512xf32>
    %c496_i32 = arith.constant 496 : i32
    %32 = tpu.dynamic_rotate %1 by %c496_i32 dim 1 : vector<32x512xf32>, i32 -> vector<32x512xf32>
    %c7 = arith.constant 7 : index
    %c0_15 = arith.constant 0 : index
    %c0_16 = arith.constant 0 : index
    %33 = vector.load %arg2[%c7, %c0_15, %c0_16] : memref<9x1x512xf32, #tpu.memory_space<vmem>>, vector<1x1x512xf32>
    %34 = vector.shape_cast %33 : vector<1x1x512xf32> to vector<1x512xf32>
    %35 = vector.broadcast %34 : vector<1x512xf32> to vector<32x512xf32>
    %36 = arith.mulf %32, %35 : vector<32x512xf32>
    %c495_i32 = arith.constant 495 : i32
    %37 = tpu.dynamic_rotate %1 by %c495_i32 dim 1 : vector<32x512xf32>, i32 -> vector<32x512xf32>
    %c8 = arith.constant 8 : index
    %c0_17 = arith.constant 0 : index
    %c0_18 = arith.constant 0 : index
    %38 = vector.load %arg2[%c8, %c0_17, %c0_18] : memref<9x1x512xf32, #tpu.memory_space<vmem>>, vector<1x1x512xf32>
    %39 = vector.shape_cast %38 : vector<1x1x512xf32> to vector<1x512xf32>
    %40 = vector.broadcast %39 : vector<1x512xf32> to vector<32x512xf32>
    %41 = arith.mulf %37, %40 : vector<32x512xf32>
    %42 = tpu.concatenate %6, %11, %16, %21, %1, %26, %31, %36, %41 in 0 : vector<32x512xf32>, vector<32x512xf32>, vector<32x512xf32>, vector<32x512xf32>, vector<32x512xf32>, vector<32x512xf32>, vector<32x512xf32>, vector<32x512xf32>, vector<32x512xf32> -> vector<288x512xf32>
    %c0_19 = arith.constant 0 : index
    %c0_20 = arith.constant 0 : index
    %43 = vector.load %arg3[%c0_19, %c0_20] : memref<32x288xf32, #tpu.memory_space<vmem>>, vector<32x288xf32>
    %cst = arith.constant dense<0.000000e+00> : vector<32x512xf32>
    %44 = tpu.matmul %43, %42, %cst {dimension_numbers = #tpu.dot_dimension_numbers<[1], [0], [0], [1], [0, 0, 1, 1], [], []>} : vector<32x288xf32>, vector<288x512xf32>, vector<32x512xf32> -> vector<32x512xf32>
    %c0_21 = arith.constant 0 : index
    %c0_22 = arith.constant 0 : index
    %45 = vector.load %arg4[%c0_21, %c0_22] : memref<32x1xf32, #tpu.memory_space<vmem>>, vector<32x1xf32>
    %46 = vector.broadcast %45 : vector<32x1xf32> to vector<32x512xf32>
    %47 = arith.addf %44, %46 : vector<32x512xf32>
    %cst_23 = arith.constant 0.000000e+00 : f32
    %48 = vector.broadcast %cst_23 : f32 to vector<32x512xf32>
    %49 = arith.maximumf %47, %48 : vector<32x512xf32>
    %c17_i32_24 = arith.constant 17 : i32
    %50 = tpu.dynamic_rotate %49 by %c17_i32_24 dim 1 : vector<32x512xf32>, i32 -> vector<32x512xf32>
    %c0_25 = arith.constant 0 : index
    %c0_26 = arith.constant 0 : index
    %c0_27 = arith.constant 0 : index
    %51 = vector.load %arg2[%c0_25, %c0_26, %c0_27] : memref<9x1x512xf32, #tpu.memory_space<vmem>>, vector<1x1x512xf32>
    %52 = vector.shape_cast %51 : vector<1x1x512xf32> to vector<1x512xf32>
    %53 = vector.broadcast %52 : vector<1x512xf32> to vector<32x512xf32>
    %54 = arith.mulf %50, %53 : vector<32x512xf32>
    %c16_i32_28 = arith.constant 16 : i32
    %55 = tpu.dynamic_rotate %49 by %c16_i32_28 dim 1 : vector<32x512xf32>, i32 -> vector<32x512xf32>
    %c1_29 = arith.constant 1 : index
    %c0_30 = arith.constant 0 : index
    %c0_31 = arith.constant 0 : index
    %56 = vector.load %arg2[%c1_29, %c0_30, %c0_31] : memref<9x1x512xf32, #tpu.memory_space<vmem>>, vector<1x1x512xf32>
    %57 = vector.shape_cast %56 : vector<1x1x512xf32> to vector<1x512xf32>
    %58 = vector.broadcast %57 : vector<1x512xf32> to vector<32x512xf32>
    %59 = arith.mulf %55, %58 : vector<32x512xf32>
    %c15_i32_32 = arith.constant 15 : i32
    %60 = tpu.dynamic_rotate %49 by %c15_i32_32 dim 1 : vector<32x512xf32>, i32 -> vector<32x512xf32>
    %c2_33 = arith.constant 2 : index
    %c0_34 = arith.constant 0 : index
    %c0_35 = arith.constant 0 : index
    %61 = vector.load %arg2[%c2_33, %c0_34, %c0_35] : memref<9x1x512xf32, #tpu.memory_space<vmem>>, vector<1x1x512xf32>
    %62 = vector.shape_cast %61 : vector<1x1x512xf32> to vector<1x512xf32>
    %63 = vector.broadcast %62 : vector<1x512xf32> to vector<32x512xf32>
    %64 = arith.mulf %60, %63 : vector<32x512xf32>
    %c1_i32_36 = arith.constant 1 : i32
    %65 = tpu.dynamic_rotate %49 by %c1_i32_36 dim 1 : vector<32x512xf32>, i32 -> vector<32x512xf32>
    %c3_37 = arith.constant 3 : index
    %c0_38 = arith.constant 0 : index
    %c0_39 = arith.constant 0 : index
    %66 = vector.load %arg2[%c3_37, %c0_38, %c0_39] : memref<9x1x512xf32, #tpu.memory_space<vmem>>, vector<1x1x512xf32>
    %67 = vector.shape_cast %66 : vector<1x1x512xf32> to vector<1x512xf32>
    %68 = vector.broadcast %67 : vector<1x512xf32> to vector<32x512xf32>
    %69 = arith.mulf %65, %68 : vector<32x512xf32>
    %c511_i32_40 = arith.constant 511 : i32
    %70 = tpu.dynamic_rotate %49 by %c511_i32_40 dim 1 : vector<32x512xf32>, i32 -> vector<32x512xf32>
    %c5_41 = arith.constant 5 : index
    %c0_42 = arith.constant 0 : index
    %c0_43 = arith.constant 0 : index
    %71 = vector.load %arg2[%c5_41, %c0_42, %c0_43] : memref<9x1x512xf32, #tpu.memory_space<vmem>>, vector<1x1x512xf32>
    %72 = vector.shape_cast %71 : vector<1x1x512xf32> to vector<1x512xf32>
    %73 = vector.broadcast %72 : vector<1x512xf32> to vector<32x512xf32>
    %74 = arith.mulf %70, %73 : vector<32x512xf32>
    %c497_i32_44 = arith.constant 497 : i32
    %75 = tpu.dynamic_rotate %49 by %c497_i32_44 dim 1 : vector<32x512xf32>, i32 -> vector<32x512xf32>
    %c6_45 = arith.constant 6 : index
    %c0_46 = arith.constant 0 : index
    %c0_47 = arith.constant 0 : index
    %76 = vector.load %arg2[%c6_45, %c0_46, %c0_47] : memref<9x1x512xf32, #tpu.memory_space<vmem>>, vector<1x1x512xf32>
    %77 = vector.shape_cast %76 : vector<1x1x512xf32> to vector<1x512xf32>
    %78 = vector.broadcast %77 : vector<1x512xf32> to vector<32x512xf32>
    %79 = arith.mulf %75, %78 : vector<32x512xf32>
    %c496_i32_48 = arith.constant 496 : i32
    %80 = tpu.dynamic_rotate %49 by %c496_i32_48 dim 1 : vector<32x512xf32>, i32 -> vector<32x512xf32>
    %c7_49 = arith.constant 7 : index
    %c0_50 = arith.constant 0 : index
    %c0_51 = arith.constant 0 : index
    %81 = vector.load %arg2[%c7_49, %c0_50, %c0_51] : memref<9x1x512xf32, #tpu.memory_space<vmem>>, vector<1x1x512xf32>
    %82 = vector.shape_cast %81 : vector<1x1x512xf32> to vector<1x512xf32>
    %83 = vector.broadcast %82 : vector<1x512xf32> to vector<32x512xf32>
    %84 = arith.mulf %80, %83 : vector<32x512xf32>
    %c495_i32_52 = arith.constant 495 : i32
    %85 = tpu.dynamic_rotate %49 by %c495_i32_52 dim 1 : vector<32x512xf32>, i32 -> vector<32x512xf32>
    %c8_53 = arith.constant 8 : index
    %c0_54 = arith.constant 0 : index
    %c0_55 = arith.constant 0 : index
    %86 = vector.load %arg2[%c8_53, %c0_54, %c0_55] : memref<9x1x512xf32, #tpu.memory_space<vmem>>, vector<1x1x512xf32>
    %87 = vector.shape_cast %86 : vector<1x1x512xf32> to vector<1x512xf32>
    %88 = vector.broadcast %87 : vector<1x512xf32> to vector<32x512xf32>
    %89 = arith.mulf %85, %88 : vector<32x512xf32>
    %90 = tpu.concatenate %54, %59, %64, %69, %49, %74, %79, %84, %89 in 0 : vector<32x512xf32>, vector<32x512xf32>, vector<32x512xf32>, vector<32x512xf32>, vector<32x512xf32>, vector<32x512xf32>, vector<32x512xf32>, vector<32x512xf32>, vector<32x512xf32> -> vector<288x512xf32>
    %c0_56 = arith.constant 0 : index
    %c0_57 = arith.constant 0 : index
    %91 = vector.load %arg5[%c0_56, %c0_57] : memref<32x288xf32, #tpu.memory_space<vmem>>, vector<32x288xf32>
    %cst_58 = arith.constant dense<0.000000e+00> : vector<32x512xf32>
    %92 = tpu.matmul %91, %90, %cst_58 {dimension_numbers = #tpu.dot_dimension_numbers<[1], [0], [0], [1], [0, 0, 1, 1], [], []>} : vector<32x288xf32>, vector<288x512xf32>, vector<32x512xf32> -> vector<32x512xf32>
    %c0_59 = arith.constant 0 : index
    %c0_60 = arith.constant 0 : index
    %93 = vector.load %arg6[%c0_59, %c0_60] : memref<32x1xf32, #tpu.memory_space<vmem>>, vector<32x1xf32>
    %94 = vector.broadcast %93 : vector<32x1xf32> to vector<32x512xf32>
    %95 = arith.addf %92, %94 : vector<32x512xf32>
    %cst_61 = arith.constant 1.000000e-01 : f32
    %96 = vector.broadcast %cst_61 : f32 to vector<32x512xf32>
    %97 = arith.mulf %95, %96 : vector<32x512xf32>
    %98 = arith.addf %97, %1 : vector<32x512xf32>
    %c0_62 = arith.constant 0 : index
    %c0_63 = arith.constant 0 : index
    %99 = vector.load %arg7[%c0_62, %c0_63] : memref<32x32xf32, #tpu.memory_space<vmem>>, vector<32x32xf32>
    %cst_64 = arith.constant dense<0.000000e+00> : vector<32x512xf32>
    %100 = tpu.matmul %99, %98, %cst_64 {dimension_numbers = #tpu.dot_dimension_numbers<[1], [0], [0], [1], [0, 0, 1, 1], [], []>} : vector<32x32xf32>, vector<32x512xf32>, vector<32x512xf32> -> vector<32x512xf32>
    %c0_65 = arith.constant 0 : index
    %c0_66 = arith.constant 0 : index
    %101 = vector.load %arg8[%c0_65, %c0_66] : memref<32x1xf32, #tpu.memory_space<vmem>>, vector<32x1xf32>
    %102 = vector.broadcast %101 : vector<32x1xf32> to vector<32x512xf32>
    %103 = arith.addf %100, %102 : vector<32x512xf32>
    %cst_67 = arith.constant 0.000000e+00 : f32
    %104 = vector.broadcast %cst_67 : f32 to vector<32x512xf32>
    %105 = arith.maximumf %103, %104 : vector<32x512xf32>
    %c0_68 = arith.constant 0 : index
    %c0_69 = arith.constant 0 : index
    %106 = vector.load %arg9[%c0_68, %c0_69] : memref<32x32xf32, #tpu.memory_space<vmem>>, vector<32x32xf32>
    %cst_70 = arith.constant dense<0.000000e+00> : vector<32x512xf32>
    %107 = tpu.matmul %106, %105, %cst_70 {dimension_numbers = #tpu.dot_dimension_numbers<[1], [0], [0], [1], [0, 0, 1, 1], [], []>} : vector<32x32xf32>, vector<32x512xf32>, vector<32x512xf32> -> vector<32x512xf32>
    %c0_71 = arith.constant 0 : index
    %c0_72 = arith.constant 0 : index
    %108 = vector.load %arg10[%c0_71, %c0_72] : memref<32x1xf32, #tpu.memory_space<vmem>>, vector<32x1xf32>
    %109 = vector.broadcast %108 : vector<32x1xf32> to vector<32x512xf32>
    %110 = arith.addf %107, %109 : vector<32x512xf32>
    %111 = vector.extract_strided_slice %110 {offsets = [0, 0], sizes = [32, 256], strides = [1, 1]} : vector<32x512xf32> to vector<32x256xf32>
    %112 = vector.extract_strided_slice %98 {offsets = [0, 0], sizes = [32, 256], strides = [1, 1]} : vector<32x512xf32> to vector<32x256xf32>
    %cst_73 = arith.constant dense<0.000000e+00> : vector<32xf32>
    %113 = vector.multi_reduction <add>, %111, %cst_73 [1] : vector<32x256xf32> to vector<32xf32>
    %114 = vector.shape_cast %113 : vector<32xf32> to vector<32x1xf32>
    %cst_74 = arith.constant 2.560000e+02 : f32
    %115 = vector.broadcast %cst_74 : f32 to vector<32x1xf32>
    %116 = arith.divf %114, %115 : vector<32x1xf32>
    %c0_75 = arith.constant 0 : index
    %c0_76 = arith.constant 0 : index
    %117 = vector.load %arg11[%c0_75, %c0_76] : memref<32x2xf32, #tpu.memory_space<vmem>>, vector<32x2xf32>
    %118 = vector.broadcast %116 : vector<32x1xf32> to vector<32x2xf32>
    %119 = arith.mulf %117, %118 : vector<32x2xf32>
    %cst_77 = arith.constant dense<0.000000e+00> : vector<2xf32>
    %120 = vector.multi_reduction <add>, %119, %cst_77 [0] : vector<32x2xf32> to vector<2xf32>
    %121 = vector.shape_cast %120 : vector<2xf32> to vector<1x2xf32>
    %c0_78 = arith.constant 0 : index
    %c0_79 = arith.constant 0 : index
    %122 = vector.load %arg12[%c0_78, %c0_79] : memref<1x2xf32, #tpu.memory_space<vmem>>, vector<1x2xf32>
    %123 = arith.addf %121, %122 : vector<1x2xf32>
    %cst_80 = arith.constant 0.000000e+00 : f32
    %124 = vector.broadcast %cst_80 : f32 to vector<1x2xf32>
    %125 = arith.maximumf %123, %124 : vector<1x2xf32>
    %c0_81 = arith.constant 0 : index
    %c0_82 = arith.constant 0 : index
    %126 = vector.load %arg13[%c0_81, %c0_82] : memref<32x2xf32, #tpu.memory_space<vmem>>, vector<32x2xf32>
    %127 = vector.broadcast %125 : vector<1x2xf32> to vector<32x2xf32>
    %128 = arith.mulf %126, %127 : vector<32x2xf32>
    %cst_83 = arith.constant dense<0.000000e+00> : vector<32xf32>
    %129 = vector.multi_reduction <add>, %128, %cst_83 [1] : vector<32x2xf32> to vector<32xf32>
    %130 = vector.shape_cast %129 : vector<32xf32> to vector<32x1xf32>
    %c0_84 = arith.constant 0 : index
    %c0_85 = arith.constant 0 : index
    %131 = vector.load %arg14[%c0_84, %c0_85] : memref<32x1xf32, #tpu.memory_space<vmem>>, vector<32x1xf32>
    %132 = arith.addf %130, %131 : vector<32x1xf32>
    %133 = arith.negf %132 : vector<32x1xf32>
    %134 = math.exp %133 : vector<32x1xf32>
    %cst_86 = arith.constant 1.000000e+00 : f32
    %135 = vector.broadcast %cst_86 : f32 to vector<32x1xf32>
    %136 = arith.addf %135, %134 : vector<32x1xf32>
    %137 = arith.divf %135, %136 : vector<32x1xf32>
    %138 = vector.broadcast %137 : vector<32x1xf32> to vector<32x256xf32>
    %139 = arith.mulf %111, %138 : vector<32x256xf32>
    %cst_87 = arith.constant 1.000000e-01 : f32
    %140 = vector.broadcast %cst_87 : f32 to vector<32x256xf32>
    %141 = arith.mulf %139, %140 : vector<32x256xf32>
    %142 = arith.addf %141, %112 : vector<32x256xf32>
    %c0_88 = arith.constant 0 : index
    %c0_89 = arith.constant 0 : index
    %c0_90 = arith.constant 0 : index
    %143 = vector.load %arg15[%c0_88, %c0_89, %c0_90] : memref<1x32x512xf32, #tpu.memory_space<vmem>>, vector<1x32x256xf32>
    %144 = vector.shape_cast %143 : vector<1x32x256xf32> to vector<32x256xf32>
    %145 = vector.shape_cast %142 : vector<32x256xf32> to vector<1x32x256xf32>
    tpu.vector_store %arg15[%c0_88, %c0_89, %c0_90], %145 {strides = array<i32>} : memref<1x32x512xf32, #tpu.memory_space<vmem>>, vector<1x32x256xf32>,
    %146 = vector.extract_strided_slice %110 {offsets = [0, 256], sizes = [32, 256], strides = [1, 1]} : vector<32x512xf32> to vector<32x256xf32>
    %147 = vector.extract_strided_slice %98 {offsets = [0, 256], sizes = [32, 256], strides = [1, 1]} : vector<32x512xf32> to vector<32x256xf32>
    %cst_91 = arith.constant dense<0.000000e+00> : vector<32xf32>
    %148 = vector.multi_reduction <add>, %146, %cst_91 [1] : vector<32x256xf32> to vector<32xf32>
    %149 = vector.shape_cast %148 : vector<32xf32> to vector<32x1xf32>
    %cst_92 = arith.constant 2.560000e+02 : f32
    %150 = vector.broadcast %cst_92 : f32 to vector<32x1xf32>
    %151 = arith.divf %149, %150 : vector<32x1xf32>
    %c0_93 = arith.constant 0 : index
    %c0_94 = arith.constant 0 : index
    %152 = vector.load %arg11[%c0_93, %c0_94] : memref<32x2xf32, #tpu.memory_space<vmem>>, vector<32x2xf32>
    %153 = vector.broadcast %151 : vector<32x1xf32> to vector<32x2xf32>
    %154 = arith.mulf %152, %153 : vector<32x2xf32>
    %cst_95 = arith.constant dense<0.000000e+00> : vector<2xf32>
    %155 = vector.multi_reduction <add>, %154, %cst_95 [0] : vector<32x2xf32> to vector<2xf32>
    %156 = vector.shape_cast %155 : vector<2xf32> to vector<1x2xf32>
    %c0_96 = arith.constant 0 : index
    %c0_97 = arith.constant 0 : index
    %157 = vector.load %arg12[%c0_96, %c0_97] : memref<1x2xf32, #tpu.memory_space<vmem>>, vector<1x2xf32>
    %158 = arith.addf %156, %157 : vector<1x2xf32>
    %cst_98 = arith.constant 0.000000e+00 : f32
    %159 = vector.broadcast %cst_98 : f32 to vector<1x2xf32>
    %160 = arith.maximumf %158, %159 : vector<1x2xf32>
    %c0_99 = arith.constant 0 : index
    %c0_100 = arith.constant 0 : index
    %161 = vector.load %arg13[%c0_99, %c0_100] : memref<32x2xf32, #tpu.memory_space<vmem>>, vector<32x2xf32>
    %162 = vector.broadcast %160 : vector<1x2xf32> to vector<32x2xf32>
    %163 = arith.mulf %161, %162 : vector<32x2xf32>
    %cst_101 = arith.constant dense<0.000000e+00> : vector<32xf32>
    %164 = vector.multi_reduction <add>, %163, %cst_101 [1] : vector<32x2xf32> to vector<32xf32>
    %165 = vector.shape_cast %164 : vector<32xf32> to vector<32x1xf32>
    %c0_102 = arith.constant 0 : index
    %c0_103 = arith.constant 0 : index
    %166 = vector.load %arg14[%c0_102, %c0_103] : memref<32x1xf32, #tpu.memory_space<vmem>>, vector<32x1xf32>
    %167 = arith.addf %165, %166 : vector<32x1xf32>
    %168 = arith.negf %167 : vector<32x1xf32>
    %169 = math.exp %168 : vector<32x1xf32>
    %cst_104 = arith.constant 1.000000e+00 : f32
    %170 = vector.broadcast %cst_104 : f32 to vector<32x1xf32>
    %171 = arith.addf %170, %169 : vector<32x1xf32>
    %172 = arith.divf %170, %171 : vector<32x1xf32>
    %173 = vector.broadcast %172 : vector<32x1xf32> to vector<32x256xf32>
    %174 = arith.mulf %146, %173 : vector<32x256xf32>
    %cst_105 = arith.constant 1.000000e-01 : f32
    %175 = vector.broadcast %cst_105 : f32 to vector<32x256xf32>
    %176 = arith.mulf %174, %175 : vector<32x256xf32>
    %177 = arith.addf %176, %147 : vector<32x256xf32>
    %c0_106 = arith.constant 0 : index
    %c0_107 = arith.constant 0 : index
    %c256 = arith.constant 256 : index
    %178 = vector.load %arg15[%c0_106, %c0_107, %c256] : memref<1x32x512xf32, #tpu.memory_space<vmem>>, vector<1x32x256xf32>
    %179 = vector.shape_cast %178 : vector<1x32x256xf32> to vector<32x256xf32>
    %180 = vector.shape_cast %177 : vector<32x256xf32> to vector<1x32x256xf32>
    tpu.vector_store %arg15[%c0_106, %c0_107, %c256], %180 {strides = array<i32>} : memref<1x32x512xf32, #tpu.memory_space<vmem>>, vector<1x32x256xf32>,
    return
  }
  func.func @transform_0(%arg0: i32) -> (i32, i32, i32) {
    %c0_i32 = arith.constant 0 : i32
    %c0_i32_0 = arith.constant 0 : i32
    %c0_i32_1 = arith.constant 0 : i32
    return %arg0, %c0_i32, %c0_i32_0 : i32, i32, i32
  }
  func.func @transform_1(%arg0: i32) -> (i32, i32, i32) {
    %c0_i32 = arith.constant 0 : i32
    %c0_i32_0 = arith.constant 0 : i32
    %c0_i32_1 = arith.constant 0 : i32
    %c0_i32_2 = arith.constant 0 : i32
    return %c0_i32, %c0_i32_0, %c0_i32_1 : i32, i32, i32
  }
  func.func @transform_2(%arg0: i32) -> (i32, i32) {
    %c0_i32 = arith.constant 0 : i32
    %c0_i32_0 = arith.constant 0 : i32
    %c0_i32_1 = arith.constant 0 : i32
    return %c0_i32, %c0_i32_0 : i32, i32
  }
  func.func @transform_3(%arg0: i32) -> (i32, i32) {
    %c0_i32 = arith.constant 0 : i32
    %c0_i32_0 = arith.constant 0 : i32
    %c0_i32_1 = arith.constant 0 : i32
    return %c0_i32, %c0_i32_0 : i32, i32
  }
  func.func @transform_4(%arg0: i32) -> (i32, i32) {
    %c0_i32 = arith.constant 0 : i32
    %c0_i32_0 = arith.constant 0 : i32
    %c0_i32_1 = arith.constant 0 : i32
    return %c0_i32, %c0_i32_0 : i32, i32
  }
  func.func @transform_5(%arg0: i32) -> (i32, i32) {
    %c0_i32 = arith.constant 0 : i32
    %c0_i32_0 = arith.constant 0 : i32
    %c0_i32_1 = arith.constant 0 : i32
    return %c0_i32, %c0_i32_0 : i32, i32
  }
  func.func @transform_6(%arg0: i32) -> (i32, i32) {
    %c0_i32 = arith.constant 0 : i32
    %c0_i32_0 = arith.constant 0 : i32
    %c0_i32_1 = arith.constant 0 : i32
    return %c0_i32, %c0_i32_0 : i32, i32
  }
  func.func @transform_7(%arg0: i32) -> (i32, i32) {
    %c0_i32 = arith.constant 0 : i32
    %c0_i32_0 = arith.constant 0 : i32
    %c0_i32_1 = arith.constant 0 : i32
    return %c0_i32, %c0_i32_0 : i32, i32
  }
  func.func @transform_8(%arg0: i32) -> (i32, i32) {
    %c0_i32 = arith.constant 0 : i32
    %c0_i32_0 = arith.constant 0 : i32
    %c0_i32_1 = arith.constant 0 : i32
    return %c0_i32, %c0_i32_0 : i32, i32
  }
  func.func @transform_9(%arg0: i32) -> (i32, i32) {
    %c0_i32 = arith.constant 0 : i32
    %c0_i32_0 = arith.constant 0 : i32
    %c0_i32_1 = arith.constant 0 : i32
    return %c0_i32, %c0_i32_0 : i32, i32
  }
  func.func @transform_10(%arg0: i32) -> (i32, i32) {
    %c0_i32 = arith.constant 0 : i32
    %c0_i32_0 = arith.constant 0 : i32
    %c0_i32_1 = arith.constant 0 : i32
    return %c0_i32, %c0_i32_0 : i32, i32
  }
  func.func @transform_11(%arg0: i32) -> (i32, i32) {
    %c0_i32 = arith.constant 0 : i32
    %c0_i32_0 = arith.constant 0 : i32
    %c0_i32_1 = arith.constant 0 : i32
    return %c0_i32, %c0_i32_0 : i32, i32
  }
  func.func @transform_12(%arg0: i32) -> (i32, i32) {
    %c0_i32 = arith.constant 0 : i32
    %c0_i32_0 = arith.constant 0 : i32
    %c0_i32_1 = arith.constant 0 : i32
    return %c0_i32, %c0_i32_0 : i32, i32
  }
  func.func @transform_13(%arg0: i32) -> (i32, i32) {
    %c0_i32 = arith.constant 0 : i32
    %c0_i32_0 = arith.constant 0 : i32
    %c0_i32_1 = arith.constant 0 : i32
    return %c0_i32, %c0_i32_0 : i32, i32
  }
  func.func @transform_14(%arg0: i32) -> (i32, i32, i32) {
    %c0_i32 = arith.constant 0 : i32
    %c0_i32_0 = arith.constant 0 : i32
    %c0_i32_1 = arith.constant 0 : i32
    return %arg0, %c0_i32, %c0_i32_0 : i32, i32, i32
  }
}

module attributes {stable_mosaic.version = 11 : i64} {
  func.func @_ssb_kernel(%arg0: i32, %arg1: memref<1x32x512xf32, #tpu.memory_space<vmem>>, %arg2: memref<9x1x512xf32, #tpu.memory_space<vmem>>, %arg3: memref<32x288xf32, #tpu.memory_space<vmem>>, %arg4: memref<32x1xf32, #tpu.memory_space<vmem>>, %arg5: memref<32x288xf32, #tpu.memory_space<vmem>>, %arg6: memref<32x1xf32, #tpu.memory_space<vmem>>, %arg7: memref<32x32xf32, #tpu.memory_space<vmem>>, %arg8: memref<32x1xf32, #tpu.memory_space<vmem>>, %arg9: memref<32x32xf32, #tpu.memory_space<vmem>>, %arg10: memref<32x1xf32, #tpu.memory_space<vmem>>, %arg11: memref<32x2xf32, #tpu.memory_space<vmem>>, %arg12: memref<1x2xf32, #tpu.memory_space<vmem>>, %arg13: memref<32x2xf32, #tpu.memory_space<vmem>>, %arg14: memref<32x1xf32, #tpu.memory_space<vmem>>, %arg15: memref<1x32x512xf32, #tpu.memory_space<vmem>>) attributes {dimension_semantics = [#tpu.dimension_semantics<parallel>], iteration_bounds = array<i64: 1>, scalar_prefetch = 0 : i64, scratch_operands = 0 : i64, tpu.core_type = #tpu.core_type<tc>, window_params = [{transform_indices = @transform_0, window_bounds = array<i64: 1, 32, 512>}, {pipeline_mode = #tpu.pipeline_mode<synchronous>, transform_indices = @transform_1, window_bounds = array<i64: 9, 1, 512>}, {pipeline_mode = #tpu.pipeline_mode<synchronous>, transform_indices = @transform_2, window_bounds = array<i64: 32, 288>}, {pipeline_mode = #tpu.pipeline_mode<synchronous>, transform_indices = @transform_3, window_bounds = array<i64: 32, 1>}, {pipeline_mode = #tpu.pipeline_mode<synchronous>, transform_indices = @transform_4, window_bounds = array<i64: 32, 288>}, {pipeline_mode = #tpu.pipeline_mode<synchronous>, transform_indices = @transform_5, window_bounds = array<i64: 32, 1>}, {pipeline_mode = #tpu.pipeline_mode<synchronous>, transform_indices = @transform_6, window_bounds = array<i64: 32, 32>}, {pipeline_mode = #tpu.pipeline_mode<synchronous>, transform_indices = @transform_7, window_bounds = array<i64: 32, 1>}, {pipeline_mode = #tpu.pipeline_mode<synchronous>, transform_indices = @transform_8, window_bounds = array<i64: 32, 32>}, {pipeline_mode = #tpu.pipeline_mode<synchronous>, transform_indices = @transform_9, window_bounds = array<i64: 32, 1>}, {pipeline_mode = #tpu.pipeline_mode<synchronous>, transform_indices = @transform_10, window_bounds = array<i64: 32, 2>}, {pipeline_mode = #tpu.pipeline_mode<synchronous>, transform_indices = @transform_11, window_bounds = array<i64: 1, 2>}, {pipeline_mode = #tpu.pipeline_mode<synchronous>, transform_indices = @transform_12, window_bounds = array<i64: 32, 2>}, {pipeline_mode = #tpu.pipeline_mode<synchronous>, transform_indices = @transform_13, window_bounds = array<i64: 32, 1>}, {transform_indices = @transform_14, window_bounds = array<i64: 1, 32, 512>}]} {
    %c0 = arith.constant 0 : index
    %c0_0 = arith.constant 0 : index
    %c0_1 = arith.constant 0 : index
    %0 = vector.load %arg1[%c0, %c0_0, %c0_1] : memref<1x32x512xf32, #tpu.memory_space<vmem>>, vector<1x32x512xf32>
    %1 = vector.shape_cast %0 : vector<1x32x512xf32> to vector<32x512xf32>
    %c17_i32 = arith.constant 17 : i32
    %2 = tpu.dynamic_rotate %1 by %c17_i32 dim 1 : vector<32x512xf32>, i32 -> vector<32x512xf32>
    %c0_2 = arith.constant 0 : index
    %c0_3 = arith.constant 0 : index
    %c0_4 = arith.constant 0 : index
    %3 = vector.load %arg2[%c0_2, %c0_3, %c0_4] : memref<9x1x512xf32, #tpu.memory_space<vmem>>, vector<1x1x512xf32>
    %4 = vector.shape_cast %3 : vector<1x1x512xf32> to vector<1x512xf32>
    %5 = vector.broadcast %4 : vector<1x512xf32> to vector<32x512xf32>
    %6 = arith.mulf %2, %5 : vector<32x512xf32>
    %c16_i32 = arith.constant 16 : i32
    %7 = tpu.dynamic_rotate %1 by %c16_i32 dim 1 : vector<32x512xf32>, i32 -> vector<32x512xf32>
    %c1 = arith.constant 1 : index
    %c0_5 = arith.constant 0 : index
    %c0_6 = arith.constant 0 : index
    %8 = vector.load %arg2[%c1, %c0_5, %c0_6] : memref<9x1x512xf32, #tpu.memory_space<vmem>>, vector<1x1x512xf32>
    %9 = vector.shape_cast %8 : vector<1x1x512xf32> to vector<1x512xf32>
    %10 = vector.broadcast %9 : vector<1x512xf32> to vector<32x512xf32>
    %11 = arith.mulf %7, %10 : vector<32x512xf32>
    %c15_i32 = arith.constant 15 : i32
    %12 = tpu.dynamic_rotate %1 by %c15_i32 dim 1 : vector<32x512xf32>, i32 -> vector<32x512xf32>
    %c2 = arith.constant 2 : index
    %c0_7 = arith.constant 0 : index
    %c0_8 = arith.constant 0 : index
    %13 = vector.load %arg2[%c2, %c0_7, %c0_8] : memref<9x1x512xf32, #tpu.memory_space<vmem>>, vector<1x1x512xf32>
    %14 = vector.shape_cast %13 : vector<1x1x512xf32> to vector<1x512xf32>
    %15 = vector.broadcast %14 : vector<1x512xf32> to vector<32x512xf32>
    %16 = arith.mulf %12, %15 : vector<32x512xf32>
    %c1_i32 = arith.constant 1 : i32
    %17 = tpu.dynamic_rotate %1 by %c1_i32 dim 1 : vector<32x512xf32>, i32 -> vector<32x512xf32>
    %c3 = arith.constant 3 : index
    %c0_9 = arith.constant 0 : index
    %c0_10 = arith.constant 0 : index
    %18 = vector.load %arg2[%c3, %c0_9, %c0_10] : memref<9x1x512xf32, #tpu.memory_space<vmem>>, vector<1x1x512xf32>
    %19 = vector.shape_cast %18 : vector<1x1x512xf32> to vector<1x512xf32>
    %20 = vector.broadcast %19 : vector<1x512xf32> to vector<32x512xf32>
    %21 = arith.mulf %17, %20 : vector<32x512xf32>
    %c511_i32 = arith.constant 511 : i32
    %22 = tpu.dynamic_rotate %1 by %c511_i32 dim 1 : vector<32x512xf32>, i32 -> vector<32x512xf32>
    %c5 = arith.constant 5 : index
    %c0_11 = arith.constant 0 : index
    %c0_12 = arith.constant 0 : index
    %23 = vector.load %arg2[%c5, %c0_11, %c0_12] : memref<9x1x512xf32, #tpu.memory_space<vmem>>, vector<1x1x512xf32>
    %24 = vector.shape_cast %23 : vector<1x1x512xf32> to vector<1x512xf32>
    %25 = vector.broadcast %24 : vector<1x512xf32> to vector<32x512xf32>
    %26 = arith.mulf %22, %25 : vector<32x512xf32>
    %c497_i32 = arith.constant 497 : i32
    %27 = tpu.dynamic_rotate %1 by %c497_i32 dim 1 : vector<32x512xf32>, i32 -> vector<32x512xf32>
    %c6 = arith.constant 6 : index
    %c0_13 = arith.constant 0 : index
    %c0_14 = arith.constant 0 : index
    %28 = vector.load %arg2[%c6, %c0_13, %c0_14] : memref<9x1x512xf32, #tpu.memory_space<vmem>>, vector<1x1x512xf32>
    %29 = vector.shape_cast %28 : vector<1x1x512xf32> to vector<1x512xf32>
    %30 = vector.broadcast %29 : vector<1x512xf32> to vector<32x512xf32>
    %31 = arith.mulf %27, %30 : vector<32x512xf32>
    %c496_i32 = arith.constant 496 : i32
    %32 = tpu.dynamic_rotate %1 by %c496_i32 dim 1 : vector<32x512xf32>, i32 -> vector<32x512xf32>
    %c7 = arith.constant 7 : index
    %c0_15 = arith.constant 0 : index
    %c0_16 = arith.constant 0 : index
    %33 = vector.load %arg2[%c7, %c0_15, %c0_16] : memref<9x1x512xf32, #tpu.memory_space<vmem>>, vector<1x1x512xf32>
    %34 = vector.shape_cast %33 : vector<1x1x512xf32> to vector<1x512xf32>
    %35 = vector.broadcast %34 : vector<1x512xf32> to vector<32x512xf32>
    %36 = arith.mulf %32, %35 : vector<32x512xf32>
    %c495_i32 = arith.constant 495 : i32
    %37 = tpu.dynamic_rotate %1 by %c495_i32 dim 1 : vector<32x512xf32>, i32 -> vector<32x512xf32>
    %c8 = arith.constant 8 : index
    %c0_17 = arith.constant 0 : index
    %c0_18 = arith.constant 0 : index
    %38 = vector.load %arg2[%c8, %c0_17, %c0_18] : memref<9x1x512xf32, #tpu.memory_space<vmem>>, vector<1x1x512xf32>
    %39 = vector.shape_cast %38 : vector<1x1x512xf32> to vector<1x512xf32>
    %40 = vector.broadcast %39 : vector<1x512xf32> to vector<32x512xf32>
    %41 = arith.mulf %37, %40 : vector<32x512xf32>
    %42 = tpu.concatenate %6, %11, %16, %21, %1, %26, %31, %36, %41 in 0 : vector<32x512xf32>, vector<32x512xf32>, vector<32x512xf32>, vector<32x512xf32>, vector<32x512xf32>, vector<32x512xf32>, vector<32x512xf32>, vector<32x512xf32>, vector<32x512xf32> -> vector<288x512xf32>
    %c0_19 = arith.constant 0 : index
    %c0_20 = arith.constant 0 : index
    %43 = vector.load %arg3[%c0_19, %c0_20] : memref<32x288xf32, #tpu.memory_space<vmem>>, vector<32x288xf32>
    %cst = arith.constant dense<0.000000e+00> : vector<32x512xf32>
    %44 = tpu.matmul %43, %42, %cst {dimension_numbers = #tpu.dot_dimension_numbers<[1], [0], [0], [1], [0, 0, 1, 1], [], []>} : vector<32x288xf32>, vector<288x512xf32>, vector<32x512xf32> -> vector<32x512xf32>
    %c0_21 = arith.constant 0 : index
    %c0_22 = arith.constant 0 : index
    %45 = vector.load %arg4[%c0_21, %c0_22] : memref<32x1xf32, #tpu.memory_space<vmem>>, vector<32x1xf32>
    %46 = vector.broadcast %45 : vector<32x1xf32> to vector<32x512xf32>
    %47 = arith.addf %44, %46 : vector<32x512xf32>
    %cst_23 = arith.constant 0.000000e+00 : f32
    %48 = vector.broadcast %cst_23 : f32 to vector<32x512xf32>
    %49 = arith.maximumf %47, %48 : vector<32x512xf32>
    %c17_i32_24 = arith.constant 17 : i32
    %50 = tpu.dynamic_rotate %49 by %c17_i32_24 dim 1 : vector<32x512xf32>, i32 -> vector<32x512xf32>
    %c0_25 = arith.constant 0 : index
    %c0_26 = arith.constant 0 : index
    %c0_27 = arith.constant 0 : index
    %51 = vector.load %arg2[%c0_25, %c0_26, %c0_27] : memref<9x1x512xf32, #tpu.memory_space<vmem>>, vector<1x1x512xf32>
    %52 = vector.shape_cast %51 : vector<1x1x512xf32> to vector<1x512xf32>
    %53 = vector.broadcast %52 : vector<1x512xf32> to vector<32x512xf32>
    %54 = arith.mulf %50, %53 : vector<32x512xf32>
    %c16_i32_28 = arith.constant 16 : i32
    %55 = tpu.dynamic_rotate %49 by %c16_i32_28 dim 1 : vector<32x512xf32>, i32 -> vector<32x512xf32>
    %c1_29 = arith.constant 1 : index
    %c0_30 = arith.constant 0 : index
    %c0_31 = arith.constant 0 : index
    %56 = vector.load %arg2[%c1_29, %c0_30, %c0_31] : memref<9x1x512xf32, #tpu.memory_space<vmem>>, vector<1x1x512xf32>
    %57 = vector.shape_cast %56 : vector<1x1x512xf32> to vector<1x512xf32>
    %58 = vector.broadcast %57 : vector<1x512xf32> to vector<32x512xf32>
    %59 = arith.mulf %55, %58 : vector<32x512xf32>
    %c15_i32_32 = arith.constant 15 : i32
    %60 = tpu.dynamic_rotate %49 by %c15_i32_32 dim 1 : vector<32x512xf32>, i32 -> vector<32x512xf32>
    %c2_33 = arith.constant 2 : index
    %c0_34 = arith.constant 0 : index
    %c0_35 = arith.constant 0 : index
    %61 = vector.load %arg2[%c2_33, %c0_34, %c0_35] : memref<9x1x512xf32, #tpu.memory_space<vmem>>, vector<1x1x512xf32>
    %62 = vector.shape_cast %61 : vector<1x1x512xf32> to vector<1x512xf32>
    %63 = vector.broadcast %62 : vector<1x512xf32> to vector<32x512xf32>
    %64 = arith.mulf %60, %63 : vector<32x512xf32>
    %c1_i32_36 = arith.constant 1 : i32
    %65 = tpu.dynamic_rotate %49 by %c1_i32_36 dim 1 : vector<32x512xf32>, i32 -> vector<32x512xf32>
    %c3_37 = arith.constant 3 : index
    %c0_38 = arith.constant 0 : index
    %c0_39 = arith.constant 0 : index
    %66 = vector.load %arg2[%c3_37, %c0_38, %c0_39] : memref<9x1x512xf32, #tpu.memory_space<vmem>>, vector<1x1x512xf32>
    %67 = vector.shape_cast %66 : vector<1x1x512xf32> to vector<1x512xf32>
    %68 = vector.broadcast %67 : vector<1x512xf32> to vector<32x512xf32>
    %69 = arith.mulf %65, %68 : vector<32x512xf32>
    %c511_i32_40 = arith.constant 511 : i32
    %70 = tpu.dynamic_rotate %49 by %c511_i32_40 dim 1 : vector<32x512xf32>, i32 -> vector<32x512xf32>
    %c5_41 = arith.constant 5 : index
    %c0_42 = arith.constant 0 : index
    %c0_43 = arith.constant 0 : index
    %71 = vector.load %arg2[%c5_41, %c0_42, %c0_43] : memref<9x1x512xf32, #tpu.memory_space<vmem>>, vector<1x1x512xf32>
    %72 = vector.shape_cast %71 : vector<1x1x512xf32> to vector<1x512xf32>
    %73 = vector.broadcast %72 : vector<1x512xf32> to vector<32x512xf32>
    %74 = arith.mulf %70, %73 : vector<32x512xf32>
    %c497_i32_44 = arith.constant 497 : i32
    %75 = tpu.dynamic_rotate %49 by %c497_i32_44 dim 1 : vector<32x512xf32>, i32 -> vector<32x512xf32>
    %c6_45 = arith.constant 6 : index
    %c0_46 = arith.constant 0 : index
    %c0_47 = arith.constant 0 : index
    %76 = vector.load %arg2[%c6_45, %c0_46, %c0_47] : memref<9x1x512xf32, #tpu.memory_space<vmem>>, vector<1x1x512xf32>
    %77 = vector.shape_cast %76 : vector<1x1x512xf32> to vector<1x512xf32>
    %78 = vector.broadcast %77 : vector<1x512xf32> to vector<32x512xf32>
    %79 = arith.mulf %75, %78 : vector<32x512xf32>
    %c496_i32_48 = arith.constant 496 : i32
    %80 = tpu.dynamic_rotate %49 by %c496_i32_48 dim 1 : vector<32x512xf32>, i32 -> vector<32x512xf32>
    %c7_49 = arith.constant 7 : index
    %c0_50 = arith.constant 0 : index
    %c0_51 = arith.constant 0 : index
    %81 = vector.load %arg2[%c7_49, %c0_50, %c0_51] : memref<9x1x512xf32, #tpu.memory_space<vmem>>, vector<1x1x512xf32>
    %82 = vector.shape_cast %81 : vector<1x1x512xf32> to vector<1x512xf32>
    %83 = vector.broadcast %82 : vector<1x512xf32> to vector<32x512xf32>
    %84 = arith.mulf %80, %83 : vector<32x512xf32>
    %c495_i32_52 = arith.constant 495 : i32
    %85 = tpu.dynamic_rotate %49 by %c495_i32_52 dim 1 : vector<32x512xf32>, i32 -> vector<32x512xf32>
    %c8_53 = arith.constant 8 : index
    %c0_54 = arith.constant 0 : index
    %c0_55 = arith.constant 0 : index
    %86 = vector.load %arg2[%c8_53, %c0_54, %c0_55] : memref<9x1x512xf32, #tpu.memory_space<vmem>>, vector<1x1x512xf32>
    %87 = vector.shape_cast %86 : vector<1x1x512xf32> to vector<1x512xf32>
    %88 = vector.broadcast %87 : vector<1x512xf32> to vector<32x512xf32>
    %89 = arith.mulf %85, %88 : vector<32x512xf32>
    %90 = tpu.concatenate %54, %59, %64, %69, %49, %74, %79, %84, %89 in 0 : vector<32x512xf32>, vector<32x512xf32>, vector<32x512xf32>, vector<32x512xf32>, vector<32x512xf32>, vector<32x512xf32>, vector<32x512xf32>, vector<32x512xf32>, vector<32x512xf32> -> vector<288x512xf32>
    %c0_56 = arith.constant 0 : index
    %c0_57 = arith.constant 0 : index
    %91 = vector.load %arg5[%c0_56, %c0_57] : memref<32x288xf32, #tpu.memory_space<vmem>>, vector<32x288xf32>
    %cst_58 = arith.constant dense<0.000000e+00> : vector<32x512xf32>
    %92 = tpu.matmul %91, %90, %cst_58 {dimension_numbers = #tpu.dot_dimension_numbers<[1], [0], [0], [1], [0, 0, 1, 1], [], []>} : vector<32x288xf32>, vector<288x512xf32>, vector<32x512xf32> -> vector<32x512xf32>
    %c0_59 = arith.constant 0 : index
    %c0_60 = arith.constant 0 : index
    %93 = vector.load %arg6[%c0_59, %c0_60] : memref<32x1xf32, #tpu.memory_space<vmem>>, vector<32x1xf32>
    %94 = vector.broadcast %93 : vector<32x1xf32> to vector<32x512xf32>
    %95 = arith.addf %92, %94 : vector<32x512xf32>
    %cst_61 = arith.constant 1.000000e-01 : f32
    %96 = vector.broadcast %cst_61 : f32 to vector<32x512xf32>
    %97 = arith.mulf %95, %96 : vector<32x512xf32>
    %98 = arith.addf %97, %1 : vector<32x512xf32>
    %c0_62 = arith.constant 0 : index
    %c0_63 = arith.constant 0 : index
    %99 = vector.load %arg7[%c0_62, %c0_63] : memref<32x32xf32, #tpu.memory_space<vmem>>, vector<32x32xf32>
    %cst_64 = arith.constant dense<0.000000e+00> : vector<32x512xf32>
    %100 = tpu.matmul %99, %98, %cst_64 {dimension_numbers = #tpu.dot_dimension_numbers<[1], [0], [0], [1], [0, 0, 1, 1], [], []>} : vector<32x32xf32>, vector<32x512xf32>, vector<32x512xf32> -> vector<32x512xf32>
    %c0_65 = arith.constant 0 : index
    %c0_66 = arith.constant 0 : index
    %101 = vector.load %arg8[%c0_65, %c0_66] : memref<32x1xf32, #tpu.memory_space<vmem>>, vector<32x1xf32>
    %102 = vector.broadcast %101 : vector<32x1xf32> to vector<32x512xf32>
    %103 = arith.addf %100, %102 : vector<32x512xf32>
    %cst_67 = arith.constant 0.000000e+00 : f32
    %104 = vector.broadcast %cst_67 : f32 to vector<32x512xf32>
    %105 = arith.maximumf %103, %104 : vector<32x512xf32>
    %c0_68 = arith.constant 0 : index
    %c0_69 = arith.constant 0 : index
    %106 = vector.load %arg9[%c0_68, %c0_69] : memref<32x32xf32, #tpu.memory_space<vmem>>, vector<32x32xf32>
    %cst_70 = arith.constant dense<0.000000e+00> : vector<32x512xf32>
    %107 = tpu.matmul %106, %105, %cst_70 {dimension_numbers = #tpu.dot_dimension_numbers<[1], [0], [0], [1], [0, 0, 1, 1], [], []>} : vector<32x32xf32>, vector<32x512xf32>, vector<32x512xf32> -> vector<32x512xf32>
    %c0_71 = arith.constant 0 : index
    %c0_72 = arith.constant 0 : index
    %108 = vector.load %arg10[%c0_71, %c0_72] : memref<32x1xf32, #tpu.memory_space<vmem>>, vector<32x1xf32>
    %109 = vector.broadcast %108 : vector<32x1xf32> to vector<32x512xf32>
    %110 = arith.addf %107, %109 : vector<32x512xf32>
    %111 = vector.extract_strided_slice %110 {offsets = [0, 0], sizes = [32, 256], strides = [1, 1]} : vector<32x512xf32> to vector<32x256xf32>
    %112 = vector.extract_strided_slice %98 {offsets = [0, 0], sizes = [32, 256], strides = [1, 1]} : vector<32x512xf32> to vector<32x256xf32>
    %cst_73 = arith.constant dense<0.000000e+00> : vector<32xf32>
    %113 = vector.multi_reduction <add>, %111, %cst_73 [1] : vector<32x256xf32> to vector<32xf32>
    %114 = vector.shape_cast %113 : vector<32xf32> to vector<32x1xf32>
    %cst_74 = arith.constant 2.560000e+02 : f32
    %115 = vector.broadcast %cst_74 : f32 to vector<32x1xf32>
    %116 = arith.divf %114, %115 : vector<32x1xf32>
    %c0_75 = arith.constant 0 : index
    %c0_76 = arith.constant 0 : index
    %117 = vector.load %arg11[%c0_75, %c0_76] : memref<32x2xf32, #tpu.memory_space<vmem>>, vector<32x2xf32>
    %118 = vector.broadcast %116 : vector<32x1xf32> to vector<32x2xf32>
    %119 = arith.mulf %117, %118 : vector<32x2xf32>
    %cst_77 = arith.constant dense<0.000000e+00> : vector<2xf32>
    %120 = vector.multi_reduction <add>, %119, %cst_77 [0] : vector<32x2xf32> to vector<2xf32>
    %121 = vector.shape_cast %120 : vector<2xf32> to vector<1x2xf32>
    %c0_78 = arith.constant 0 : index
    %c0_79 = arith.constant 0 : index
    %122 = vector.load %arg12[%c0_78, %c0_79] : memref<1x2xf32, #tpu.memory_space<vmem>>, vector<1x2xf32>
    %123 = arith.addf %121, %122 : vector<1x2xf32>
    %cst_80 = arith.constant 0.000000e+00 : f32
    %124 = vector.broadcast %cst_80 : f32 to vector<1x2xf32>
    %125 = arith.maximumf %123, %124 : vector<1x2xf32>
    %c0_81 = arith.constant 0 : index
    %c0_82 = arith.constant 0 : index
    %126 = vector.load %arg13[%c0_81, %c0_82] : memref<32x2xf32, #tpu.memory_space<vmem>>, vector<32x2xf32>
    %127 = vector.broadcast %125 : vector<1x2xf32> to vector<32x2xf32>
    %128 = arith.mulf %126, %127 : vector<32x2xf32>
    %cst_83 = arith.constant dense<0.000000e+00> : vector<32xf32>
    %129 = vector.multi_reduction <add>, %128, %cst_83 [1] : vector<32x2xf32> to vector<32xf32>
    %130 = vector.shape_cast %129 : vector<32xf32> to vector<32x1xf32>
    %c0_84 = arith.constant 0 : index
    %c0_85 = arith.constant 0 : index
    %131 = vector.load %arg14[%c0_84, %c0_85] : memref<32x1xf32, #tpu.memory_space<vmem>>, vector<32x1xf32>
    %132 = arith.addf %130, %131 : vector<32x1xf32>
    %133 = arith.negf %132 : vector<32x1xf32>
    %134 = math.exp %133 : vector<32x1xf32>
    %cst_86 = arith.constant 1.000000e+00 : f32
    %135 = vector.broadcast %cst_86 : f32 to vector<32x1xf32>
    %136 = arith.addf %135, %134 : vector<32x1xf32>
    %137 = arith.divf %135, %136 : vector<32x1xf32>
    %138 = vector.broadcast %137 : vector<32x1xf32> to vector<32x256xf32>
    %139 = arith.mulf %111, %138 : vector<32x256xf32>
    %cst_87 = arith.constant 1.000000e-01 : f32
    %140 = vector.broadcast %cst_87 : f32 to vector<32x256xf32>
    %141 = arith.mulf %139, %140 : vector<32x256xf32>
    %142 = arith.addf %141, %112 : vector<32x256xf32>
    %c0_88 = arith.constant 0 : index
    %c0_89 = arith.constant 0 : index
    %c0_90 = arith.constant 0 : index
    %143 = vector.load %arg15[%c0_88, %c0_89, %c0_90] : memref<1x32x512xf32, #tpu.memory_space<vmem>>, vector<1x32x256xf32>
    %144 = vector.shape_cast %143 : vector<1x32x256xf32> to vector<32x256xf32>
    %145 = vector.shape_cast %142 : vector<32x256xf32> to vector<1x32x256xf32>
    tpu.vector_store %arg15[%c0_88, %c0_89, %c0_90], %145 {strides = array<i32>} : memref<1x32x512xf32, #tpu.memory_space<vmem>>, vector<1x32x256xf32>,
    %146 = vector.extract_strided_slice %110 {offsets = [0, 256], sizes = [32, 256], strides = [1, 1]} : vector<32x512xf32> to vector<32x256xf32>
    %147 = vector.extract_strided_slice %98 {offsets = [0, 256], sizes = [32, 256], strides = [1, 1]} : vector<32x512xf32> to vector<32x256xf32>
    %cst_91 = arith.constant dense<0.000000e+00> : vector<32xf32>
    %148 = vector.multi_reduction <add>, %146, %cst_91 [1] : vector<32x256xf32> to vector<32xf32>
    %149 = vector.shape_cast %148 : vector<32xf32> to vector<32x1xf32>
    %cst_92 = arith.constant 2.560000e+02 : f32
    %150 = vector.broadcast %cst_92 : f32 to vector<32x1xf32>
    %151 = arith.divf %149, %150 : vector<32x1xf32>
    %c0_93 = arith.constant 0 : index
    %c0_94 = arith.constant 0 : index
    %152 = vector.load %arg11[%c0_93, %c0_94] : memref<32x2xf32, #tpu.memory_space<vmem>>, vector<32x2xf32>
    %153 = vector.broadcast %151 : vector<32x1xf32> to vector<32x2xf32>
    %154 = arith.mulf %152, %153 : vector<32x2xf32>
    %cst_95 = arith.constant dense<0.000000e+00> : vector<2xf32>
    %155 = vector.multi_reduction <add>, %154, %cst_95 [0] : vector<32x2xf32> to vector<2xf32>
    %156 = vector.shape_cast %155 : vector<2xf32> to vector<1x2xf32>
    %c0_96 = arith.constant 0 : index
    %c0_97 = arith.constant 0 : index
    %157 = vector.load %arg12[%c0_96, %c0_97] : memref<1x2xf32, #tpu.memory_space<vmem>>, vector<1x2xf32>
    %158 = arith.addf %156, %157 : vector<1x2xf32>
    %cst_98 = arith.constant 0.000000e+00 : f32
    %159 = vector.broadcast %cst_98 : f32 to vector<1x2xf32>
    %160 = arith.maximumf %158, %159 : vector<1x2xf32>
    %c0_99 = arith.constant 0 : index
    %c0_100 = arith.constant 0 : index
    %161 = vector.load %arg13[%c0_99, %c0_100] : memref<32x2xf32, #tpu.memory_space<vmem>>, vector<32x2xf32>
    %162 = vector.broadcast %160 : vector<1x2xf32> to vector<32x2xf32>
    %163 = arith.mulf %161, %162 : vector<32x2xf32>
    %cst_101 = arith.constant dense<0.000000e+00> : vector<32xf32>
    %164 = vector.multi_reduction <add>, %163, %cst_101 [1] : vector<32x2xf32> to vector<32xf32>
    %165 = vector.shape_cast %164 : vector<32xf32> to vector<32x1xf32>
    %c0_102 = arith.constant 0 : index
    %c0_103 = arith.constant 0 : index
    %166 = vector.load %arg14[%c0_102, %c0_103] : memref<32x1xf32, #tpu.memory_space<vmem>>, vector<32x1xf32>
    %167 = arith.addf %165, %166 : vector<32x1xf32>
    %168 = arith.negf %167 : vector<32x1xf32>
    %169 = math.exp %168 : vector<32x1xf32>
    %cst_104 = arith.constant 1.000000e+00 : f32
    %170 = vector.broadcast %cst_104 : f32 to vector<32x1xf32>
    %171 = arith.addf %170, %169 : vector<32x1xf32>
    %172 = arith.divf %170, %171 : vector<32x1xf32>
    %173 = vector.broadcast %172 : vector<32x1xf32> to vector<32x256xf32>
    %174 = arith.mulf %146, %173 : vector<32x256xf32>
    %cst_105 = arith.constant 1.000000e-01 : f32
    %175 = vector.broadcast %cst_105 : f32 to vector<32x256xf32>
    %176 = arith.mulf %174, %175 : vector<32x256xf32>
    %177 = arith.addf %176, %147 : vector<32x256xf32>
    %c0_106 = arith.constant 0 : index
    %c0_107 = arith.constant 0 : index
    %c256 = arith.constant 256 : index
    %178 = vector.load %arg15[%c0_106, %c0_107, %c256] : memref<1x32x512xf32, #tpu.memory_space<vmem>>, vector<1x32x256xf32>
    %179 = vector.shape_cast %178 : vector<1x32x256xf32> to vector<32x256xf32>
    %180 = vector.shape_cast %177 : vector<32x256xf32> to vector<1x32x256xf32>
    tpu.vector_store %arg15[%c0_106, %c0_107, %c256], %180 {strides = array<i32>} : memref<1x32x512xf32, #tpu.memory_space<vmem>>, vector<1x32x256xf32>,
    return
  }
  func.func @transform_0(%arg0: i32) -> (i32, i32, i32) {
    %c0_i32 = arith.constant 0 : i32
    %c0_i32_0 = arith.constant 0 : i32
    %c0_i32_1 = arith.constant 0 : i32
    return %arg0, %c0_i32, %c0_i32_0 : i32, i32, i32
  }
  func.func @transform_1(%arg0: i32) -> (i32, i32, i32) {
    %c0_i32 = arith.constant 0 : i32
    %c0_i32_0 = arith.constant 0 : i32
    %c0_i32_1 = arith.constant 0 : i32
    %c0_i32_2 = arith.constant 0 : i32
    return %c0_i32, %c0_i32_0, %c0_i32_1 : i32, i32, i32
  }
  func.func @transform_2(%arg0: i32) -> (i32, i32) {
    %c0_i32 = arith.constant 0 : i32
    %c0_i32_0 = arith.constant 0 : i32
    %c0_i32_1 = arith.constant 0 : i32
    return %c0_i32, %c0_i32_0 : i32, i32
  }
  func.func @transform_3(%arg0: i32) -> (i32, i32) {
    %c0_i32 = arith.constant 0 : i32
    %c0_i32_0 = arith.constant 0 : i32
    %c0_i32_1 = arith.constant 0 : i32
    return %c0_i32, %c0_i32_0 : i32, i32
  }
  func.func @transform_4(%arg0: i32) -> (i32, i32) {
    %c0_i32 = arith.constant 0 : i32
    %c0_i32_0 = arith.constant 0 : i32
    %c0_i32_1 = arith.constant 0 : i32
    return %c0_i32, %c0_i32_0 : i32, i32
  }
  func.func @transform_5(%arg0: i32) -> (i32, i32) {
    %c0_i32 = arith.constant 0 : i32
    %c0_i32_0 = arith.constant 0 : i32
    %c0_i32_1 = arith.constant 0 : i32
    return %c0_i32, %c0_i32_0 : i32, i32
  }
  func.func @transform_6(%arg0: i32) -> (i32, i32) {
    %c0_i32 = arith.constant 0 : i32
    %c0_i32_0 = arith.constant 0 : i32
    %c0_i32_1 = arith.constant 0 : i32
    return %c0_i32, %c0_i32_0 : i32, i32
  }
  func.func @transform_7(%arg0: i32) -> (i32, i32) {
    %c0_i32 = arith.constant 0 : i32
    %c0_i32_0 = arith.constant 0 : i32
    %c0_i32_1 = arith.constant 0 : i32
    return %c0_i32, %c0_i32_0 : i32, i32
  }
  func.func @transform_8(%arg0: i32) -> (i32, i32) {
    %c0_i32 = arith.constant 0 : i32
    %c0_i32_0 = arith.constant 0 : i32
    %c0_i32_1 = arith.constant 0 : i32
    return %c0_i32, %c0_i32_0 : i32, i32
  }
  func.func @transform_9(%arg0: i32) -> (i32, i32) {
    %c0_i32 = arith.constant 0 : i32
    %c0_i32_0 = arith.constant 0 : i32
    %c0_i32_1 = arith.constant 0 : i32
    return %c0_i32, %c0_i32_0 : i32, i32
  }
  func.func @transform_10(%arg0: i32) -> (i32, i32) {
    %c0_i32 = arith.constant 0 : i32
    %c0_i32_0 = arith.constant 0 : i32
    %c0_i32_1 = arith.constant 0 : i32
    return %c0_i32, %c0_i32_0 : i32, i32
  }
  func.func @transform_11(%arg0: i32) -> (i32, i32) {
    %c0_i32 = arith.constant 0 : i32
    %c0_i32_0 = arith.constant 0 : i32
    %c0_i32_1 = arith.constant 0 : i32
    return %c0_i32, %c0_i32_0 : i32, i32
  }
  func.func @transform_12(%arg0: i32) -> (i32, i32) {
    %c0_i32 = arith.constant 0 : i32
    %c0_i32_0 = arith.constant 0 : i32
    %c0_i32_1 = arith.constant 0 : i32
    return %c0_i32, %c0_i32_0 : i32, i32
  }
  func.func @transform_13(%arg0: i32) -> (i32, i32) {
    %c0_i32 = arith.constant 0 : i32
    %c0_i32_0 = arith.constant 0 : i32
    %c0_i32_1 = arith.constant 0 : i32
    return %c0_i32, %c0_i32_0 : i32, i32
  }
  func.func @transform_14(%arg0: i32) -> (i32, i32, i32) {
    %c0_i32 = arith.constant 0 : i32
    %c0_i32_0 = arith.constant 0 : i32
    %c0_i32_1 = arith.constant 0 : i32
    return %arg0, %c0_i32, %c0_i32_0 : i32, i32, i32
  }
}

</mosaic_0001>

<llo_original>
// kernel: tpu_custom_call.1
$region0: #{tpu_custom_call.1}
  #allocation0 [shape = 'u32[]', space=smem, size = 0x4, offset = 0x4, fixed_abs, tag = 'smem constant byte address 0x4 - core index']
  #allocation1 [shape = 'u32[144,128]{1,0:T(1,128)}', space=vmem, size = 0x12000, scoped, tag = 'internal scratch']
  %s0 = inlined_call_operand.hbm [shape: f32[1,32,512], index: 0, kind: input, shape index: {}]
  %s1 = inlined_call_operand.hbm [shape: f32[9,1,512], index: 1, kind: input, shape index: {}]
  %s2 = inlined_call_operand.hbm [shape: f32[32,288], index: 2, kind: input, shape index: {}]
  %s3 = inlined_call_operand.hbm [shape: f32[32,1], index: 3, kind: input, shape index: {}]
  %s4 = inlined_call_operand.hbm [shape: f32[32,288], index: 4, kind: input, shape index: {}]
  %s5 = inlined_call_operand.hbm [shape: f32[32,1], index: 5, kind: input, shape index: {}]
  %s6 = inlined_call_operand.hbm [shape: f32[32,32], index: 6, kind: input, shape index: {}]
  %s7 = inlined_call_operand.hbm [shape: f32[32,1], index: 7, kind: input, shape index: {}]
  %s8 = inlined_call_operand.hbm [shape: f32[32,32], index: 8, kind: input, shape index: {}]
  %s9 = inlined_call_operand.hbm [shape: f32[32,1], index: 9, kind: input, shape index: {}]
  %s10 = inlined_call_operand.hbm [shape: f32[32,2], index: 10, kind: input, shape index: {}]
  %s11 = inlined_call_operand.hbm [shape: f32[1,2], index: 11, kind: input, shape index: {}]
  %s12 = inlined_call_operand.hbm [shape: f32[32,2], index: 12, kind: input, shape index: {}]
  %s13 = inlined_call_operand.hbm [shape: f32[32,1], index: 13, kind: input, shape index: {}]
  %s14 = inlined_call_operand.hbm [shape: f32[1,32,512], index: 14, kind: output, shape index: {}]
  %s15 = sld [smem:[#allocation0]]
  $region122: #{tpu_custom_call.1} parent=0
    _
  %s17 = ssub.s32 1, %s15
  %s18 = scalar_select 0, %s17, %s15
  $region1: #{tpu_custom_call.1} parent=0
    #allocation2 [shape = 'u8[65536]{0}', space=vmem, size = 0x10000, scoped, tag = 'input window, operand 0, single buffered']
    #allocation3 [shape = 's32[1]{0}', space=sflag, size = 0x4, scoped, tag = 'scoped memory for tpu_custom_call.1']
    #allocation4 [shape = 's32[1]{0}', space=sflag, size = 0x4, scoped, tag = 'scoped memory for tpu_custom_call.1']
    #allocation5 [shape = 'u8[18432]{0}', space=vmem, size = 0x4800, scoped, tag = 'input window, operand 1, single buffered']
    #allocation6 [shape = 's32[1]{0}', space=sflag, size = 0x4, scoped, tag = 'scoped memory for tpu_custom_call.1']
    #allocation7 [shape = 'u8[49152]{0}', space=vmem, size = 0xc000, scoped, tag = 'input window, operand 2, single buffered']
    #allocation8 [shape = 'u8[16384]{0}', space=vmem, size = 0x4000, scoped, tag = 'input window, operand 3, single buffered']
    #allocation9 [shape = 's32[1]{0}', space=sflag, size = 0x4, scoped, tag = 'scoped memory for tpu_custom_call.1']
    #allocation10 [shape = 'u8[49152]{0}', space=vmem, size = 0xc000, scoped, tag = 'input window, operand 4, single buffered']
    #allocation11 [shape = 'u8[16384]{0}', space=vmem, size = 0x4000, scoped, tag = 'input window, operand 5, single buffered']
    #allocation12 [shape = 's32[1]{0}', space=sflag, size = 0x4, scoped, tag = 'scoped memory for tpu_custom_call.1']
    #allocation13 [shape = 'u8[16384]{0}', space=vmem, size = 0x4000, scoped, tag = 'input window, operand 6, single buffered']
    #allocation14 [shape = 'u8[16384]{0}', space=vmem, size = 0x4000, scoped, tag = 'input window, operand 7, single buffered']
    #allocation15 [shape = 's32[1]{0}', space=sflag, size = 0x4, scoped, tag = 'scoped memory for tpu_custom_call.1']
    #allocation16 [shape = 'u8[16384]{0}', space=vmem, size = 0x4000, scoped, tag = 'input window, operand 8, single buffered']
    #allocation17 [shape = 'u8[16384]{0}', space=vmem, size = 0x4000, scoped, tag = 'input window, operand 9, single buffered']
    #allocation18 [shape = 's32[1]{0}', space=sflag, size = 0x4, scoped, tag = 'scoped memory for tpu_custom_call.1']
    #allocation19 [shape = 'u8[16384]{0}', space=vmem, size = 0x4000, scoped, tag = 'input window, operand 10, single buffered']
    #allocation20 [shape = 'u8[512]{0}', space=vmem, size = 0x400, scoped, tag = 'input window, operand 11, single buffered']
    #allocation21 [shape = 's32[1]{0}', space=sflag, size = 0x4, scoped, tag = 'scoped memory for tpu_custom_call.1']
    #allocation22 [shape = 'u8[16384]{0}', space=vmem, size = 0x4000, scoped, tag = 'input window, operand 12, single buffered']
    #allocation23 [shape = 'u8[16384]{0}', space=vmem, size = 0x4000, scoped, tag = 'input window, operand 13, single buffered']
    #allocation24 [shape = 's32[1]{0}', space=sflag, size = 0x4, scoped, tag = 'scoped memory for tpu_custom_call.1']
    #allocation25 [shape = 'u8[65536]{0}', space=vmem, size = 0x10000, scoped, tag = 'output window, operand 0, single buffered']
    %19 = vsyncpa [#allocation3], 0
    %20 = vsyncpa [#allocation6], 0
    %21 = vsyncpa [#allocation9], 0
    %22 = vsyncpa [#allocation12], 0
    %23 = vsyncpa [#allocation15], 0
    %24 = vsyncpa [#allocation18], 0
    %25 = vsyncpa [#allocation21], 0
    %26 = vsyncpa [#allocation24], 0
    %27 = vsyncpa [#allocation4], 0
    // Predicated region
    $region2: #{tpu_custom_call.1} parent=1 // pred_check
      _
    $region3: #{tpu_custom_call.1} parent=1 // pred_check_branch
      %29 = sbr.rel (0) target = $region5
    $region4: #{tpu_custom_call.1} parent=1 // pred_region
      %s31 = ssub.s32 2048, 2048
      %32 = vsyncadd [#allocation3], %s31
      %s33 = sshll.u32 [#allocation2], 4
      %s34 = int_to_ptr.vmem [resolvable:$true] %s33
      %39 = dma.hbm_to_vmem [thread:$0]  %s0, 2048, %s34, [#allocation3], 512, 512, 32
    $region5: #{tpu_custom_call.1} parent=1 // pred_fallthru
      _
    // Predicated region
    $region6: #{tpu_custom_call.1} parent=1 // pred_check
      _
    $region7: #{tpu_custom_call.1} parent=1 // pred_check_branch
      %41 = sbr.rel (0) target = $region9
    $region8: #{tpu_custom_call.1} parent=1 // pred_region
      %s43 = ssub.s32 576, 576
      %44 = vsyncadd [#allocation6], %s43
      %s45 = sshll.u32 [#allocation5], 4
      %s46 = int_to_ptr.vmem [resolvable:$true] %s45
      %51 = dma.hbm_to_vmem [thread:$0]  %s1, 576, %s46, [#allocation6], 64, 64, 4
    $region9: #{tpu_custom_call.1} parent=1 // pred_fallthru
      _
    // Predicated region
    $region10: #{tpu_custom_call.1} parent=1 // pred_check
      _
    $region11: #{tpu_custom_call.1} parent=1 // pred_check_branch
      %53 = sbr.rel (0) target = $region13
    $region12: #{tpu_custom_call.1} parent=1 // pred_region
      %s55 = ssub.s32 1536, 1536
      %56 = vsyncadd [#allocation6], %s55
      %s57 = sshll.u32 [#allocation7], 4
      %s58 = int_to_ptr.vmem [resolvable:$true] %s57
      %63 = dma.hbm_to_vmem [thread:$0]  %s2, 1536, %s58, [#allocation6], 384, 384, 24
    $region13: #{tpu_custom_call.1} parent=1 // pred_fallthru
      _
    // Predicated region
    $region14: #{tpu_custom_call.1} parent=1 // pred_check
      _
    $region15: #{tpu_custom_call.1} parent=1 // pred_check_branch
      %65 = sbr.rel (0) target = $region17
    $region16: #{tpu_custom_call.1} parent=1 // pred_region
      %s67 = ssub.s32 512, 512
      %68 = vsyncadd [#allocation9], %s67
      %s69 = sshll.u32 [#allocation8], 4
      %s70 = int_to_ptr.vmem [resolvable:$true] %s69
      %75 = dma.hbm_to_vmem [thread:$0]  %s3, 512, %s70, [#allocation9], 128, 128, 8
    $region17: #{tpu_custom_call.1} parent=1 // pred_fallthru
      _
    // Predicated region
    $region18: #{tpu_custom_call.1} parent=1 // pred_check
      _
    $region19: #{tpu_custom_call.1} parent=1 // pred_check_branch
      %77 = sbr.rel (0) target = $region21
    $region20: #{tpu_custom_call.1} parent=1 // pred_region
      %s79 = ssub.s32 1536, 1536
      %80 = vsyncadd [#allocation9], %s79
      %s81 = sshll.u32 [#allocation10], 4
      %s82 = int_to_ptr.vmem [resolvable:$true] %s81
      %87 = dma.hbm_to_vmem [thread:$0]  %s4, 1536, %s82, [#allocation9], 384, 384, 24
    $region21: #{tpu_custom_call.1} parent=1 // pred_fallthru
      _
    // Predicated region
    $region22: #{tpu_custom_call.1} parent=1 // pred_check
      _
    $region23: #{tpu_custom_call.1} parent=1 // pred_check_branch
      %89 = sbr.rel (0) target = $region25
    $region24: #{tpu_custom_call.1} parent=1 // pred_region
      %s91 = ssub.s32 512, 512
      %92 = vsyncadd [#allocation12], %s91
      %s93 = sshll.u32 [#allocation11], 4
      %s94 = int_to_ptr.vmem [resolvable:$true] %s93
      %99 = dma.hbm_to_vmem [thread:$0]  %s5, 512, %s94, [#allocation12], 128, 128, 8
    $region25: #{tpu_custom_call.1} parent=1 // pred_fallthru
      _
    // Predicated region
    $region26: #{tpu_custom_call.1} parent=1 // pred_check
      _
    $region27: #{tpu_custom_call.1} parent=1 // pred_check_branch
      %101 = sbr.rel (0) target = $region29
    $region28: #{tpu_custom_call.1} parent=1 // pred_region
      %s103 = ssub.s32 512, 512
      %104 = vsyncadd [#allocation12], %s103
      %s105 = sshll.u32 [#allocation13], 4
      %s106 = int_to_ptr.vmem [resolvable:$true] %s105
      %111 = dma.hbm_to_vmem [thread:$0]  %s6, 512, %s106, [#allocation12], 128, 128, 8
    $region29: #{tpu_custom_call.1} parent=1 // pred_fallthru
      _
    // Predicated region
    $region30: #{tpu_custom_call.1} parent=1 // pred_check
      _
    $region31: #{tpu_custom_call.1} parent=1 // pred_check_branch
      %113 = sbr.rel (0) target = $region33
    $region32: #{tpu_custom_call.1} parent=1 // pred_region
      %s115 = ssub.s32 512, 512
      %116 = vsyncadd [#allocation15], %s115
      %s117 = sshll.u32 [#allocation14], 4
      %s118 = int_to_ptr.vmem [resolvable:$true] %s117
      %123 = dma.hbm_to_vmem [thread:$0]  %s7, 512, %s118, [#allocation15], 128, 128, 8
    $region33: #{tpu_custom_call.1} parent=1 // pred_fallthru
      _
    // Predicated region
    $region34: #{tpu_custom_call.1} parent=1 // pred_check
      _
    $region35: #{tpu_custom_call.1} parent=1 // pred_check_branch
      %125 = sbr.rel (0) target = $region37
    $region36: #{tpu_custom_call.1} parent=1 // pred_region
      %s127 = ssub.s32 512, 512
      %128 = vsyncadd [#allocation15], %s127
      %s129 = sshll.u32 [#allocation16], 4
      %s130 = int_to_ptr.vmem [resolvable:$true] %s129
      %135 = dma.hbm_to_vmem [thread:$0]  %s8, 512, %s130, [#allocation15], 128, 128, 8
    $region37: #{tpu_custom_call.1} parent=1 // pred_fallthru
      _
    // Predicated region
    $region38: #{tpu_custom_call.1} parent=1 // pred_check
      _
    $region39: #{tpu_custom_call.1} parent=1 // pred_check_branch
      %137 = sbr.rel (0) target = $region41
    $region40: #{tpu_custom_call.1} parent=1 // pred_region
      %s139 = ssub.s32 512, 512
      %140 = vsyncadd [#allocation18], %s139
      %s141 = sshll.u32 [#allocation17], 4
      %s142 = int_to_ptr.vmem [resolvable:$true] %s141
      %147 = dma.hbm_to_vmem [thread:$0]  %s9, 512, %s142, [#allocation18], 128, 128, 8
    $region41: #{tpu_custom_call.1} parent=1 // pred_fallthru
      _
    // Predicated region
    $region42: #{tpu_custom_call.1} parent=1 // pred_check
      _
    $region43: #{tpu_custom_call.1} parent=1 // pred_check_branch
      %149 = sbr.rel (0) target = $region45
    $region44: #{tpu_custom_call.1} parent=1 // pred_region
      %s151 = ssub.s32 512, 512
      %152 = vsyncadd [#allocation18], %s151
      %s153 = sshll.u32 [#allocation19], 4
      %s154 = int_to_ptr.vmem [resolvable:$true] %s153
      %159 = dma.hbm_to_vmem [thread:$0]  %s10, 512, %s154, [#allocation18], 128, 128, 8
    $region45: #{tpu_custom_call.1} parent=1 // pred_fallthru
      _
    // Predicated region
    $region46: #{tpu_custom_call.1} parent=1 // pred_check
      _
    $region47: #{tpu_custom_call.1} parent=1 // pred_check_branch
      %161 = sbr.rel (0) target = $region49
    $region48: #{tpu_custom_call.1} parent=1 // pred_region
      %s163 = ssub.s32 16, 16
      %164 = vsyncadd [#allocation21], %s163
      %s166 = sshll.u32 [#allocation20], 4
      %s167 = int_to_ptr.vmem [resolvable:$true] %s166
      %169 = dma.hbm_to_vmem [thread:$0]  %s11, 16, %s167, [#allocation21]
    $region49: #{tpu_custom_call.1} parent=1 // pred_fallthru
      _
    // Predicated region
    $region50: #{tpu_custom_call.1} parent=1 // pred_check
      _
    $region51: #{tpu_custom_call.1} parent=1 // pred_check_branch
      %171 = sbr.rel (0) target = $region53
    $region52: #{tpu_custom_call.1} parent=1 // pred_region
      %s173 = ssub.s32 512, 512
      %174 = vsyncadd [#allocation21], %s173
      %s175 = sshll.u32 [#allocation22], 4
      %s176 = int_to_ptr.vmem [resolvable:$true] %s175
      %181 = dma.hbm_to_vmem [thread:$0]  %s12, 512, %s176, [#allocation21], 128, 128, 8
    $region53: #{tpu_custom_call.1} parent=1 // pred_fallthru
      _
    // Predicated region
    $region54: #{tpu_custom_call.1} parent=1 // pred_check
      _
    $region55: #{tpu_custom_call.1} parent=1 // pred_check_branch
      %183 = sbr.rel (0) target = $region57
    $region56: #{tpu_custom_call.1} parent=1 // pred_region
      %s185 = ssub.s32 512, 512
      %186 = vsyncadd [#allocation24], %s185
      %s187 = sshll.u32 [#allocation23], 4
      %s188 = int_to_ptr.vmem [resolvable:$true] %s187
      %193 = dma.hbm_to_vmem [thread:$0]  %s13, 512, %s188, [#allocation24], 128, 128, 8
    $region57: #{tpu_custom_call.1} parent=1 // pred_fallthru
      _
    // Predicated region
    $region58: #{tpu_custom_call.1} parent=1 // pred_check
      _
    $region59: #{tpu_custom_call.1} parent=1 // pred_check_branch
      %195 = sbr.rel (0) target = $region61
    $region60: #{tpu_custom_call.1} parent=1 // pred_region
      %196 = dma.done [#allocation3], 2048
    $region61: #{tpu_custom_call.1} parent=1 // pred_fallthru
      _
    // Predicated region
    $region62: #{tpu_custom_call.1} parent=1 // pred_check
      _
    $region63: #{tpu_custom_call.1} parent=1 // pred_check_branch
      %198 = sbr.rel (0) target = $region65
    $region64: #{tpu_custom_call.1} parent=1 // pred_region
      %199 = dma.done [#allocation6], 576
    $region65: #{tpu_custom_call.1} parent=1 // pred_fallthru
      _
    // Predicated region
    $region66: #{tpu_custom_call.1} parent=1 // pred_check
      _
    $region67: #{tpu_custom_call.1} parent=1 // pred_check_branch
      %201 = sbr.rel (0) target = $region69
    $region68: #{tpu_custom_call.1} parent=1 // pred_region
      %202 = dma.done [#allocation6], 1536
    $region69: #{tpu_custom_call.1} parent=1 // pred_fallthru
      _
    // Predicated region
    $region70: #{tpu_custom_call.1} parent=1 // pred_check
      _
    $region71: #{tpu_custom_call.1} parent=1 // pred_check_branch
      %204 = sbr.rel (0) target = $region73
    $region72: #{tpu_custom_call.1} parent=1 // pred_region
      %205 = dma.done [#allocation9], 512
    $region73: #{tpu_custom_call.1} parent=1 // pred_fallthru
      _
    // Predicated region
    $region74: #{tpu_custom_call.1} parent=1 // pred_check
      _
    $region75: #{tpu_custom_call.1} parent=1 // pred_check_branch
      %207 = sbr.rel (0) target = $region77
    $region76: #{tpu_custom_call.1} parent=1 // pred_region
      %208 = dma.done [#allocation9], 1536
    $region77: #{tpu_custom_call.1} parent=1 // pred_fallthru
      _
    // Predicated region
    $region78: #{tpu_custom_call.1} parent=1 // pred_check
      _
    $region79: #{tpu_custom_call.1} parent=1 // pred_check_branch
      %210 = sbr.rel (0) target = $region81
    $region80: #{tpu_custom_call.1} parent=1 // pred_region
      %211 = dma.done [#allocation12], 512
    $region81: #{tpu_custom_call.1} parent=1 // pred_fallthru
      _
    // Predicated region
    $region82: #{tpu_custom_call.1} parent=1 // pred_check
      _
    $region83: #{tpu_custom_call.1} parent=1 // pred_check_branch
      %213 = sbr.rel (0) target = $region85
    $region84: #{tpu_custom_call.1} parent=1 // pred_region
      %214 = dma.done [#allocation12], 512
    $region85: #{tpu_custom_call.1} parent=1 // pred_fallthru
      _
    // Predicated region
    $region86: #{tpu_custom_call.1} parent=1 // pred_check
      _
    $region87: #{tpu_custom_call.1} parent=1 // pred_check_branch
      %216 = sbr.rel (0) target = $region89
    $region88: #{tpu_custom_call.1} parent=1 // pred_region
      %217 = dma.done [#allocation15], 512
    $region89: #{tpu_custom_call.1} parent=1 // pred_fallthru
      _
    // Predicated region
    $region90: #{tpu_custom_call.1} parent=1 // pred_check
      _
    $region91: #{tpu_custom_call.1} parent=1 // pred_check_branch
      %219 = sbr.rel (0) target = $region93
    $region92: #{tpu_custom_call.1} parent=1 // pred_region
      %220 = dma.done [#allocation15], 512
    $region93: #{tpu_custom_call.1} parent=1 // pred_fallthru
      _
    // Predicated region
    $region94: #{tpu_custom_call.1} parent=1 // pred_check
      _
    $region95: #{tpu_custom_call.1} parent=1 // pred_check_branch
      %222 = sbr.rel (0) target = $region97
    $region96: #{tpu_custom_call.1} parent=1 // pred_region
      %223 = dma.done [#allocation18], 512
    $region97: #{tpu_custom_call.1} parent=1 // pred_fallthru
      _
    // Predicated region
    $region98: #{tpu_custom_call.1} parent=1 // pred_check
      _
    $region99: #{tpu_custom_call.1} parent=1 // pred_check_branch
      %225 = sbr.rel (0) target = $region101
    $region100: #{tpu_custom_call.1} parent=1 // pred_region
      %226 = dma.done [#allocation18], 512
    $region101: #{tpu_custom_call.1} parent=1 // pred_fallthru
      _
    // Predicated region
    $region102: #{tpu_custom_call.1} parent=1 // pred_check
      _
    $region103: #{tpu_custom_call.1} parent=1 // pred_check_branch
      %228 = sbr.rel (0) target = $region105
    $region104: #{tpu_custom_call.1} parent=1 // pred_region
      %229 = dma.done [#allocation21], 16
    $region105: #{tpu_custom_call.1} parent=1 // pred_fallthru
      _
    // Predicated region
    $region106: #{tpu_custom_call.1} parent=1 // pred_check
      _
    $region107: #{tpu_custom_call.1} parent=1 // pred_check_branch
      %231 = sbr.rel (0) target = $region109
    $region108: #{tpu_custom_call.1} parent=1 // pred_region
      %232 = dma.done [#allocation21], 512
    $region109: #{tpu_custom_call.1} parent=1 // pred_fallthru
      _
    // Predicated region
    $region110: #{tpu_custom_call.1} parent=1 // pred_check
      _
    $region111: #{tpu_custom_call.1} parent=1 // pred_check_branch
      %234 = sbr.rel (0) target = $region113
    $region112: #{tpu_custom_call.1} parent=1 // pred_region
      %235 = dma.done [#allocation24], 512
    $region113: #{tpu_custom_call.1} parent=1 // pred_fallthru
      _
    %v236 = vld [vmem:[#allocation2] sm:$0xff]
    %v237 = vld [vmem:[#allocation2 + $0x8] sm:$0xff]
    %v238 = vld [vmem:[#allocation2 + $0x10] sm:$0xff]
    %v239 = vld [vmem:[#allocation2 + $0x18] sm:$0xff]
    %v240 = vld [vmem:[#allocation2 + $0x20] sm:$0xff]
    %v241 = vld [vmem:[#allocation2 + $0x28] sm:$0xff]
    %v242 = vld [vmem:[#allocation2 + $0x30] sm:$0xff]
    %v243 = vld [vmem:[#allocation2 + $0x38] sm:$0xff]
    %v244 = vld [vmem:[#allocation2 + $0x40] sm:$0xff]
    %v245 = vld [vmem:[#allocation2 + $0x48] sm:$0xff]
    %v246 = vld [vmem:[#allocation2 + $0x50] sm:$0xff]
    %v247 = vld [vmem:[#allocation2 + $0x58] sm:$0xff]
    %v248 = vld [vmem:[#allocation2 + $0x60] sm:$0xff]
    %v249 = vld [vmem:[#allocation2 + $0x68] sm:$0xff]
    %v250 = vld [vmem:[#allocation2 + $0x70] sm:$0xff]
    %v251 = vld [vmem:[#allocation2 + $0x78] sm:$0xff]
    %252 = vrot.lane.b32.xlu0 %v236, 17
    %v253 = vpop.permute.xlu0 %252
    %254 = vrot.lane.b32.xlu0 %v240, 17
    %v255 = vpop.permute.xlu0 %254
    %256 = vrot.lane.b32.xlu0 %v244, 17
    %v257 = vpop.permute.xlu0 %256
    %258 = vrot.lane.b32.xlu0 %v248, 17
    %v259 = vpop.permute.xlu0 %258
    %260 = vrot.lane.b32.xlu0 %v237, 17
    %v261 = vpop.permute.xlu0 %260
    %262 = vrot.lane.b32.xlu0 %v241, 17
    %v263 = vpop.permute.xlu0 %262
    %264 = vrot.lane.b32.xlu0 %v245, 17
    %v265 = vpop.permute.xlu0 %264
    %266 = vrot.lane.b32.xlu0 %v249, 17
    %v267 = vpop.permute.xlu0 %266
    %268 = vrot.lane.b32.xlu0 %v238, 17
    %v269 = vpop.permute.xlu0 %268
    %270 = vrot.lane.b32.xlu0 %v242, 17
    %v271 = vpop.permute.xlu0 %270
    %272 = vrot.lane.b32.xlu0 %v246, 17
    %v273 = vpop.permute.xlu0 %272
    %274 = vrot.lane.b32.xlu0 %v250, 17
    %v275 = vpop.permute.xlu0 %274
    %276 = vrot.lane.b32.xlu0 %v239, 17
    %v277 = vpop.permute.xlu0 %276
    %278 = vrot.lane.b32.xlu0 %v243, 17
    %v279 = vpop.permute.xlu0 %278
    %280 = vrot.lane.b32.xlu0 %v247, 17
    %v281 = vpop.permute.xlu0 %280
    %282 = vrot.lane.b32.xlu0 %v251, 17
    %v283 = vpop.permute.xlu0 %282
    %v284 = vlaneseq
    %v285 = vand.u32 %v284, 127
    %vm286 = vcmp.lt.s32.totalorder %v285, 17
    %v287 = vsel %vm286, %v269, %v277
    %v288 = vsel %vm286, %v271, %v279
    %v289 = vsel %vm286, %v273, %v281
    %v290 = vsel %vm286, %v275, %v283
    %v291 = vsel %vm286, %v261, %v269
    %v292 = vsel %vm286, %v263, %v271
    %v293 = vsel %vm286, %v265, %v273
    %v294 = vsel %vm286, %v267, %v275
    %v295 = vsel %vm286, %v253, %v261
    %v296 = vsel %vm286, %v255, %v263
    %v297 = vsel %vm286, %v257, %v265
    %v298 = vsel %vm286, %v259, %v267
    %v299 = vsel %vm286, %v277, %v253
    %v300 = vsel %vm286, %v279, %v255
    %v301 = vsel %vm286, %v281, %v257
    %v302 = vsel %vm286, %v283, %v259
    %v303 = vld [vmem:[#allocation5] sm:$0xf]
    %v305 = vlaneseq
    %v306 = vshrl.u32 %v305, 7
    %v307 = vsub.s32 0, %v306
    %v308 = vrot.slane %v303, %v307
    %v309 = vlaneseq
    %v310 = vshrl.u32 %v309, 7
    %v311 = vsub.s32 1, %v310
    %v312 = vrot.slane %v303, %v311
    %v313 = vlaneseq
    %v314 = vshrl.u32 %v313, 7
    %v315 = vsub.s32 2, %v314
    %v316 = vrot.slane %v303, %v315
    %v317 = vlaneseq
    %v318 = vshrl.u32 %v317, 7
    %v319 = vsub.s32 3, %v318
    %v320 = vrot.slane %v303, %v319
    %v325 = vmul.f32 %v299, %v308
    %v326 = vmul.f32 %v295, %v312
    %v327 = vmul.f32 %v291, %v316
    %v328 = vmul.f32 %v287, %v320
    %v329 = vmul.f32 %v300, %v308
    %v330 = vmul.f32 %v296, %v312
    %v331 = vmul.f32 %v292, %v316
    %v332 = vmul.f32 %v288, %v320
    %v333 = vmul.f32 %v301, %v308
    %v334 = vmul.f32 %v297, %v312
    %v335 = vmul.f32 %v293, %v316
    %v336 = vmul.f32 %v289, %v320
    %v337 = vmul.f32 %v302, %v308
    %v338 = vmul.f32 %v298, %v312
    %v339 = vmul.f32 %v294, %v316
    %v340 = vmul.f32 %v290, %v320
    %341 = vrot.lane.b32.xlu0 %v236, 16
    %v342 = vpop.permute.xlu0 %341
    %343 = vrot.lane.b32.xlu0 %v240, 16
    %v344 = vpop.permute.xlu0 %343
    %345 = vrot.lane.b32.xlu0 %v244, 16
    %v346 = vpop.permute.xlu0 %345
    %347 = vrot.lane.b32.xlu0 %v248, 16
    %v348 = vpop.permute.xlu0 %347
    %349 = vrot.lane.b32.xlu0 %v237, 16
    %v350 = vpop.permute.xlu0 %349
    %351 = vrot.lane.b32.xlu0 %v241, 16
    %v352 = vpop.permute.xlu0 %351
    %353 = vrot.lane.b32.xlu0 %v245, 16
    %v354 = vpop.permute.xlu0 %353
    %355 = vrot.lane.b32.xlu0 %v249, 16
    %v356 = vpop.permute.xlu0 %355
    %357 = vrot.lane.b32.xlu0 %v238, 16
    %v358 = vpop.permute.xlu0 %357
    %359 = vrot.lane.b32.xlu0 %v242, 16
    %v360 = vpop.permute.xlu0 %359
    %361 = vrot.lane.b32.xlu0 %v246, 16
    %v362 = vpop.permute.xlu0 %361
    %363 = vrot.lane.b32.xlu0 %v250, 16
    %v364 = vpop.permute.xlu0 %363
    %365 = vrot.lane.b32.xlu0 %v239, 16
    %v366 = vpop.permute.xlu0 %365
    %367 = vrot.lane.b32.xlu0 %v243, 16
    %v368 = vpop.permute.xlu0 %367
    %369 = vrot.lane.b32.xlu0 %v247, 16
    %v370 = vpop.permute.xlu0 %369
    %371 = vrot.lane.b32.xlu0 %v251, 16
    %v372 = vpop.permute.xlu0 %371
    %vm373 = vcmp.lt.s32.totalorder %v285, 16
    %v374 = vsel %vm373, %v358, %v366
    %v375 = vsel %vm373, %v360, %v368
    %v376 = vsel %vm373, %v362, %v370
    %v377 = vsel %vm373, %v364, %v372
    %v378 = vsel %vm373, %v350, %v358
    %v379 = vsel %vm373, %v352, %v360
    %v380 = vsel %vm373, %v354, %v362
    %v381 = vsel %vm373, %v356, %v364
    %v382 = vsel %vm373, %v342, %v350
    %v383 = vsel %vm373, %v344, %v352
    %v384 = vsel %vm373, %v346, %v354
    %v385 = vsel %vm373, %v348, %v356
    %v386 = vsel %vm373, %v366, %v342
    %v387 = vsel %vm373, %v368, %v344
    %v388 = vsel %vm373, %v370, %v346
    %v389 = vsel %vm373, %v372, %v348
    %s390 = scalar_lea.vmem [#allocation5], 4
    %v391 = vld [vmem:[%s390] sm:$0xf]
    %v393 = vlaneseq
    %v394 = vshrl.u32 %v393, 7
    %v395 = vsub.s32 0, %v394
    %v396 = vrot.slane %v391, %v395
    %v397 = vlaneseq
    %v398 = vshrl.u32 %v397, 7
    %v399 = vsub.s32 1, %v398
    %v400 = vrot.slane %v391, %v399
    %v401 = vlaneseq
    %v402 = vshrl.u32 %v401, 7
    %v403 = vsub.s32 2, %v402
    %v404 = vrot.slane %v391, %v403
    %v405 = vlaneseq
    %v406 = vshrl.u32 %v405, 7
    %v407 = vsub.s32 3, %v406
    %v408 = vrot.slane %v391, %v407
    %v413 = vmul.f32 %v386, %v396
    %v414 = vmul.f32 %v382, %v400
    %v415 = vmul.f32 %v378, %v404
    %v416 = vmul.f32 %v374, %v408
    %v417 = vmul.f32 %v387, %v396
    %v418 = vmul.f32 %v383, %v400
    %v419 = vmul.f32 %v379, %v404
    %v420 = vmul.f32 %v375, %v408
    %v421 = vmul.f32 %v388, %v396
    %v422 = vmul.f32 %v384, %v400
    %v423 = vmul.f32 %v380, %v404
    %v424 = vmul.f32 %v376, %v408
    %v425 = vmul.f32 %v389, %v396
    %v426 = vmul.f32 %v385, %v400
    %v427 = vmul.f32 %v381, %v404
    %v428 = vmul.f32 %v377, %v408
    %429 = vrot.lane.b32.xlu0 %v236, 15
    %v430 = vpop.permute.xlu0 %429
    %431 = vrot.lane.b32.xlu0 %v240, 15
    %v432 = vpop.permute.xlu0 %431
    %433 = vrot.lane.b32.xlu0 %v244, 15
    %v434 = vpop.permute.xlu0 %433
    %435 = vrot.lane.b32.xlu0 %v248, 15
    %v436 = vpop.permute.xlu0 %435
    %437 = vrot.lane.b32.xlu0 %v237, 15
    %v438 = vpop.permute.xlu0 %437
    %439 = vrot.lane.b32.xlu0 %v241, 15
    %v440 = vpop.permute.xlu0 %439
    %441 = vrot.lane.b32.xlu0 %v245, 15
    %v442 = vpop.permute.xlu0 %441
    %443 = vrot.lane.b32.xlu0 %v249, 15
    %v444 = vpop.permute.xlu0 %443
    %445 = vrot.lane.b32.xlu0 %v238, 15
    %v446 = vpop.permute.xlu0 %445
    %447 = vrot.lane.b32.xlu0 %v242, 15
    %v448 = vpop.permute.xlu0 %447
    %449 = vrot.lane.b32.xlu0 %v246, 15
    %v450 = vpop.permute.xlu0 %449
    %451 = vrot.lane.b32.xlu0 %v250, 15
    %v452 = vpop.permute.xlu0 %451
    %453 = vrot.lane.b32.xlu0 %v239, 15
    %v454 = vpop.permute.xlu0 %453
    %455 = vrot.lane.b32.xlu0 %v243, 15
    %v456 = vpop.permute.xlu0 %455
    %457 = vrot.lane.b32.xlu0 %v247, 15
    %v458 = vpop.permute.xlu0 %457
    %459 = vrot.lane.b32.xlu0 %v251, 15
    %v460 = vpop.permute.xlu0 %459
    %vm461 = vcmp.lt.s32.totalorder %v285, 15
    %v462 = vsel %vm461, %v446, %v454
    %v463 = vsel %vm461, %v448, %v456
    %v464 = vsel %vm461, %v450, %v458
    %v465 = vsel %vm461, %v452, %v460
    %v466 = vsel %vm461, %v438, %v446
    %v467 = vsel %vm461, %v440, %v448
    %v468 = vsel %vm461, %v442, %v450
    %v469 = vsel %vm461, %v444, %v452
    %v470 = vsel %vm461, %v430, %v438
    %v471 = vsel %vm461, %v432, %v440
    %v472 = vsel %vm461, %v434, %v442
    %v473 = vsel %vm461, %v436, %v444
    %v474 = vsel %vm461, %v454, %v430
    %v475 = vsel %vm461, %v456, %v432
    %v476 = vsel %vm461, %v458, %v434
    %v477 = vsel %vm461, %v460, %v436
    %s478 = scalar_lea.vmem [#allocation5], 8
    %v479 = vld [vmem:[%s478] sm:$0xf]
    %v481 = vlaneseq
    %v482 = vshrl.u32 %v481, 7
    %v483 = vsub.s32 0, %v482
    %v484 = vrot.slane %v479, %v483
    %v485 = vlaneseq
    %v486 = vshrl.u32 %v485, 7
    %v487 = vsub.s32 1, %v486
    %v488 = vrot.slane %v479, %v487
    %v489 = vlaneseq
    %v490 = vshrl.u32 %v489, 7
    %v491 = vsub.s32 2, %v490
    %v492 = vrot.slane %v479, %v491
    %v493 = vlaneseq
    %v494 = vshrl.u32 %v493, 7
    %v495 = vsub.s32 3, %v494
    %v496 = vrot.slane %v479, %v495
    %v501 = vmul.f32 %v474, %v484
    %v502 = vmul.f32 %v470, %v488
    %v503 = vmul.f32 %v466, %v492
    %v504 = vmul.f32 %v462, %v496
    %v505 = vmul.f32 %v475, %v484
    %v506 = vmul.f32 %v471, %v488
    %v507 = vmul.f32 %v467, %v492
    %v508 = vmul.f32 %v463, %v496
    %v509 = vmul.f32 %v476, %v484
    %v510 = vmul.f32 %v472, %v488
    %v511 = vmul.f32 %v468, %v492
    %v512 = vmul.f32 %v464, %v496
    %v513 = vmul.f32 %v477, %v484
    %v514 = vmul.f32 %v473, %v488
    %v515 = vmul.f32 %v469, %v492
    %v516 = vmul.f32 %v465, %v496
    %517 = vrot.lane.b32.xlu0 %v236, 1
    %v518 = vpop.permute.xlu0 %517
    %519 = vrot.lane.b32.xlu0 %v240, 1
    %v520 = vpop.permute.xlu0 %519
    %521 = vrot.lane.b32.xlu0 %v244, 1
    %v522 = vpop.permute.xlu0 %521
    %523 = vrot.lane.b32.xlu0 %v248, 1
    %v524 = vpop.permute.xlu0 %523
    %525 = vrot.lane.b32.xlu0 %v237, 1
    %v526 = vpop.permute.xlu0 %525
    %527 = vrot.lane.b32.xlu0 %v241, 1
    %v528 = vpop.permute.xlu0 %527
    %529 = vrot.lane.b32.xlu0 %v245, 1
    %v530 = vpop.permute.xlu0 %529
    %531 = vrot.lane.b32.xlu0 %v249, 1
    %v532 = vpop.permute.xlu0 %531
    %533 = vrot.lane.b32.xlu0 %v238, 1
    %v534 = vpop.permute.xlu0 %533
    %535 = vrot.lane.b32.xlu0 %v242, 1
    %v536 = vpop.permute.xlu0 %535
    %537 = vrot.lane.b32.xlu0 %v246, 1
    %v538 = vpop.permute.xlu0 %537
    %539 = vrot.lane.b32.xlu0 %v250, 1
    %v540 = vpop.permute.xlu0 %539
    %541 = vrot.lane.b32.xlu0 %v239, 1
    %v542 = vpop.permute.xlu0 %541
    %543 = vrot.lane.b32.xlu0 %v243, 1
    %v544 = vpop.permute.xlu0 %543
    %545 = vrot.lane.b32.xlu0 %v247, 1
    %v546 = vpop.permute.xlu0 %545
    %547 = vrot.lane.b32.xlu0 %v251, 1
    %v548 = vpop.permute.xlu0 %547
    %vm549 = vcmp.lt.s32.totalorder %v285, 1
    %v550 = vsel %vm549, %v534, %v542
    %v551 = vsel %vm549, %v536, %v544
    %v552 = vsel %vm549, %v538, %v546
    %v553 = vsel %vm549, %v540, %v548
    %v554 = vsel %vm549, %v526, %v534
    %v555 = vsel %vm549, %v528, %v536
    %v556 = vsel %vm549, %v530, %v538
    %v557 = vsel %vm549, %v532, %v540
    %v558 = vsel %vm549, %v518, %v526
    %v559 = vsel %vm549, %v520, %v528
    %v560 = vsel %vm549, %v522, %v530
    %v561 = vsel %vm549, %v524, %v532
    %v562 = vsel %vm549, %v542, %v518
    %v563 = vsel %vm549, %v544, %v520
    %v564 = vsel %vm549, %v546, %v522
    %v565 = vsel %vm549, %v548, %v524
    %s566 = scalar_lea.vmem [#allocation5], 12
    %v567 = vld [vmem:[%s566] sm:$0xf]
    %v569 = vlaneseq
    %v570 = vshrl.u32 %v569, 7
    %v571 = vsub.s32 0, %v570
    %v572 = vrot.slane %v567, %v571
    %v573 = vlaneseq
    %v574 = vshrl.u32 %v573, 7
    %v575 = vsub.s32 1, %v574
    %v576 = vrot.slane %v567, %v575
    %v577 = vlaneseq
    %v578 = vshrl.u32 %v577, 7
    %v579 = vsub.s32 2, %v578
    %v580 = vrot.slane %v567, %v579
    %v581 = vlaneseq
    %v582 = vshrl.u32 %v581, 7
    %v583 = vsub.s32 3, %v582
    %v584 = vrot.slane %v567, %v583
    %v589 = vmul.f32 %v562, %v572
    %v590 = vmul.f32 %v558, %v576
    %v591 = vmul.f32 %v554, %v580
    %v592 = vmul.f32 %v550, %v584
    %v593 = vmul.f32 %v563, %v572
    %v594 = vmul.f32 %v559, %v576
    %v595 = vmul.f32 %v555, %v580
    %v596 = vmul.f32 %v551, %v584
    %v597 = vmul.f32 %v564, %v572
    %v598 = vmul.f32 %v560, %v576
    %v599 = vmul.f32 %v556, %v580
    %v600 = vmul.f32 %v552, %v584
    %v601 = vmul.f32 %v565, %v572
    %v602 = vmul.f32 %v561, %v576
    %v603 = vmul.f32 %v557, %v580
    %v604 = vmul.f32 %v553, %v584
    %605 = vrot.lane.b32.xlu0 %v236, 127
    %v606 = vpop.permute.xlu0 %605
    %607 = vrot.lane.b32.xlu0 %v240, 127
    %v608 = vpop.permute.xlu0 %607
    %609 = vrot.lane.b32.xlu0 %v244, 127
    %v610 = vpop.permute.xlu0 %609
    %611 = vrot.lane.b32.xlu0 %v248, 127
    %v612 = vpop.permute.xlu0 %611
    %613 = vrot.lane.b32.xlu0 %v237, 127
    %v614 = vpop.permute.xlu0 %613
    %615 = vrot.lane.b32.xlu0 %v241, 127
    %v616 = vpop.permute.xlu0 %615
    %617 = vrot.lane.b32.xlu0 %v245, 127
    %v618 = vpop.permute.xlu0 %617
    %619 = vrot.lane.b32.xlu0 %v249, 127
    %v620 = vpop.permute.xlu0 %619
    %621 = vrot.lane.b32.xlu0 %v238, 127
    %v622 = vpop.permute.xlu0 %621
    %623 = vrot.lane.b32.xlu0 %v242, 127
    %v624 = vpop.permute.xlu0 %623
    %625 = vrot.lane.b32.xlu0 %v246, 127
    %v626 = vpop.permute.xlu0 %625
    %627 = vrot.lane.b32.xlu0 %v250, 127
    %v628 = vpop.permute.xlu0 %627
    %629 = vrot.lane.b32.xlu0 %v239, 127
    %v630 = vpop.permute.xlu0 %629
    %631 = vrot.lane.b32.xlu0 %v243, 127
    %v632 = vpop.permute.xlu0 %631
    %633 = vrot.lane.b32.xlu0 %v247, 127
    %v634 = vpop.permute.xlu0 %633
    %635 = vrot.lane.b32.xlu0 %v251, 127
    %v636 = vpop.permute.xlu0 %635
    %vm637 = vcmp.lt.s32.totalorder %v285, 127
    %v638 = vsel %vm637, %v622, %v630
    %v639 = vsel %vm637, %v624, %v632
    %v640 = vsel %vm637, %v626, %v634
    %v641 = vsel %vm637, %v628, %v636
    %v642 = vsel %vm637, %v614, %v622
    %v643 = vsel %vm637, %v616, %v624
    %v644 = vsel %vm637, %v618, %v626
    %v645 = vsel %vm637, %v620, %v628
    %v646 = vsel %vm637, %v606, %v614
    %v647 = vsel %vm637, %v608, %v616
    %v648 = vsel %vm637, %v610, %v618
    %v649 = vsel %vm637, %v612, %v620
    %v650 = vsel %vm637, %v630, %v606
    %v651 = vsel %vm637, %v632, %v608
    %v652 = vsel %vm637, %v634, %v610
    %v653 = vsel %vm637, %v636, %v612
    %s654 = scalar_lea.vmem [#allocation5], 20
    %v655 = vld [vmem:[%s654] sm:$0xf]
    %v657 = vlaneseq
    %v658 = vshrl.u32 %v657, 7
    %v659 = vsub.s32 0, %v658
    %v660 = vrot.slane %v655, %v659
    %v661 = vlaneseq
    %v662 = vshrl.u32 %v661, 7
    %v663 = vsub.s32 1, %v662
    %v664 = vrot.slane %v655, %v663
    %v665 = vlaneseq
    %v666 = vshrl.u32 %v665, 7
    %v667 = vsub.s32 2, %v666
    %v668 = vrot.slane %v655, %v667
    %v669 = vlaneseq
    %v670 = vshrl.u32 %v669, 7
    %v671 = vsub.s32 3, %v670
    %v672 = vrot.slane %v655, %v671
    %v677 = vmul.f32 %v646, %v660
    %v678 = vmul.f32 %v642, %v664
    %v679 = vmul.f32 %v638, %v668
    %v680 = vmul.f32 %v650, %v672
    %v681 = vmul.f32 %v647, %v660
    %v682 = vmul.f32 %v643, %v664
    %v683 = vmul.f32 %v639, %v668
    %v684 = vmul.f32 %v651, %v672
    %v685 = vmul.f32 %v648, %v660
    %v686 = vmul.f32 %v644, %v664
    %v687 = vmul.f32 %v640, %v668
    %v688 = vmul.f32 %v652, %v672
    %v689 = vmul.f32 %v649, %v660
    %v690 = vmul.f32 %v645, %v664
    %v691 = vmul.f32 %v641, %v668
    %v692 = vmul.f32 %v653, %v672
    %693 = vrot.lane.b32.xlu0 %v236, 113
    %v694 = vpop.permute.xlu0 %693
    %695 = vrot.lane.b32.xlu0 %v240, 113
    %v696 = vpop.permute.xlu0 %695
    %697 = vrot.lane.b32.xlu0 %v244, 113
    %v698 = vpop.permute.xlu0 %697
    %699 = vrot.lane.b32.xlu0 %v248, 113
    %v700 = vpop.permute.xlu0 %699
    %701 = vrot.lane.b32.xlu0 %v237, 113
    %v702 = vpop.permute.xlu0 %701
    %703 = vrot.lane.b32.xlu0 %v241, 113
    %v704 = vpop.permute.xlu0 %703
    %705 = vrot.lane.b32.xlu0 %v245, 113
    %v706 = vpop.permute.xlu0 %705
    %707 = vrot.lane.b32.xlu0 %v249, 113
    %v708 = vpop.permute.xlu0 %707
    %709 = vrot.lane.b32.xlu0 %v238, 113
    %v710 = vpop.permute.xlu0 %709
    %711 = vrot.lane.b32.xlu0 %v242, 113
    %v712 = vpop.permute.xlu0 %711
    %713 = vrot.lane.b32.xlu0 %v246, 113
    %v714 = vpop.permute.xlu0 %713
    %715 = vrot.lane.b32.xlu0 %v250, 113
    %v716 = vpop.permute.xlu0 %715
    %717 = vrot.lane.b32.xlu0 %v239, 113
    %v718 = vpop.permute.xlu0 %717
    %719 = vrot.lane.b32.xlu0 %v243, 113
    %v720 = vpop.permute.xlu0 %719
    %721 = vrot.lane.b32.xlu0 %v247, 113
    %v722 = vpop.permute.xlu0 %721
    %723 = vrot.lane.b32.xlu0 %v251, 113
    %v724 = vpop.permute.xlu0 %723
    %vm725 = vcmp.lt.s32.totalorder %v285, 113
    %v726 = vsel %vm725, %v710, %v718
    %v727 = vsel %vm725, %v712, %v720
    %v728 = vsel %vm725, %v714, %v722
    %v729 = vsel %vm725, %v716, %v724
    %v730 = vsel %vm725, %v702, %v710
    %v731 = vsel %vm725, %v704, %v712
    %v732 = vsel %vm725, %v706, %v714
    %v733 = vsel %vm725, %v708, %v716
    %v734 = vsel %vm725, %v694, %v702
    %v735 = vsel %vm725, %v696, %v704
    %v736 = vsel %vm725, %v698, %v706
    %v737 = vsel %vm725, %v700, %v708
    %v738 = vsel %vm725, %v718, %v694
    %v739 = vsel %vm725, %v720, %v696
    %v740 = vsel %vm725, %v722, %v698
    %v741 = vsel %vm725, %v724, %v700
    %s742 = scalar_lea.vmem [#allocation5], 24
    %v743 = vld [vmem:[%s742] sm:$0xf]
    %v745 = vlaneseq
    %v746 = vshrl.u32 %v745, 7
    %v747 = vsub.s32 0, %v746
    %v748 = vrot.slane %v743, %v747
    %v749 = vlaneseq
    %v750 = vshrl.u32 %v749, 7
    %v751 = vsub.s32 1, %v750
    %v752 = vrot.slane %v743, %v751
    %v753 = vlaneseq
    %v754 = vshrl.u32 %v753, 7
    %v755 = vsub.s32 2, %v754
    %v756 = vrot.slane %v743, %v755
    %v757 = vlaneseq
    %v758 = vshrl.u32 %v757, 7
    %v759 = vsub.s32 3, %v758
    %v760 = vrot.slane %v743, %v759
    %v765 = vmul.f32 %v734, %v748
    %v766 = vmul.f32 %v730, %v752
    %v767 = vmul.f32 %v726, %v756
    %v768 = vmul.f32 %v738, %v760
    %v769 = vmul.f32 %v735, %v748
    %v770 = vmul.f32 %v731, %v752
    %v771 = vmul.f32 %v727, %v756
    %v772 = vmul.f32 %v739, %v760
    %v773 = vmul.f32 %v736, %v748
    %v774 = vmul.f32 %v732, %v752
    %v775 = vmul.f32 %v728, %v756
    %v776 = vmul.f32 %v740, %v760
    %v777 = vmul.f32 %v737, %v748
    %v778 = vmul.f32 %v733, %v752
    %v779 = vmul.f32 %v729, %v756
    %v780 = vmul.f32 %v741, %v760
    %781 = vrot.lane.b32.xlu0 %v236, 112
    %v782 = vpop.permute.xlu0 %781
    %783 = vrot.lane.b32.xlu0 %v240, 112
    %v784 = vpop.permute.xlu0 %783
    %785 = vrot.lane.b32.xlu0 %v244, 112
    %v786 = vpop.permute.xlu0 %785
    %787 = vrot.lane.b32.xlu0 %v248, 112
    %v788 = vpop.permute.xlu0 %787
    %789 = vrot.lane.b32.xlu0 %v237, 112
    %v790 = vpop.permute.xlu0 %789
    %791 = vrot.lane.b32.xlu0 %v241, 112
    %v792 = vpop.permute.xlu0 %791
    %793 = vrot.lane.b32.xlu0 %v245, 112
    %v794 = vpop.permute.xlu0 %793
    %795 = vrot.lane.b32.xlu0 %v249, 112
    %v796 = vpop.permute.xlu0 %795
    %797 = vrot.lane.b32.xlu0 %v238, 112
    %v798 = vpop.permute.xlu0 %797
    %799 = vrot.lane.b32.xlu0 %v242, 112
    %v800 = vpop.permute.xlu0 %799
    %801 = vrot.lane.b32.xlu0 %v246, 112
    %v802 = vpop.permute.xlu0 %801
    %803 = vrot.lane.b32.xlu0 %v250, 112
    %v804 = vpop.permute.xlu0 %803
    %805 = vrot.lane.b32.xlu0 %v239, 112
    %v806 = vpop.permute.xlu0 %805
    %807 = vrot.lane.b32.xlu0 %v243, 112
    %v808 = vpop.permute.xlu0 %807
    %809 = vrot.lane.b32.xlu0 %v247, 112
    %v810 = vpop.permute.xlu0 %809
    %811 = vrot.lane.b32.xlu0 %v251, 112
    %v812 = vpop.permute.xlu0 %811
    %vm813 = vcmp.lt.s32.totalorder %v285, 112
    %v814 = vsel %vm813, %v798, %v806
    %v815 = vsel %vm813, %v800, %v808
    %v816 = vsel %vm813, %v802, %v810
    %v817 = vsel %vm813, %v804, %v812
    %v818 = vsel %vm813, %v790, %v798
    %v819 = vsel %vm813, %v792, %v800
    %v820 = vsel %vm813, %v794, %v802
    %v821 = vsel %vm813, %v796, %v804
    %v822 = vsel %vm813, %v782, %v790
    %v823 = vsel %vm813, %v784, %v792
    %v824 = vsel %vm813, %v786, %v794
    %v825 = vsel %vm813, %v788, %v796
    %v826 = vsel %vm813, %v806, %v782
    %v827 = vsel %vm813, %v808, %v784
    %v828 = vsel %vm813, %v810, %v786
    %v829 = vsel %vm813, %v812, %v788
    %s830 = scalar_lea.vmem [#allocation5], 28
    %v831 = vld [vmem:[%s830] sm:$0xf]
    %v833 = vlaneseq
    %v834 = vshrl.u32 %v833, 7
    %v835 = vsub.s32 0, %v834
    %v836 = vrot.slane %v831, %v835
    %v837 = vlaneseq
    %v838 = vshrl.u32 %v837, 7
    %v839 = vsub.s32 1, %v838
    %v840 = vrot.slane %v831, %v839
    %v841 = vlaneseq
    %v842 = vshrl.u32 %v841, 7
    %v843 = vsub.s32 2, %v842
    %v844 = vrot.slane %v831, %v843
    %v845 = vlaneseq
    %v846 = vshrl.u32 %v845, 7
    %v847 = vsub.s32 3, %v846
    %v848 = vrot.slane %v831, %v847
    %v853 = vmul.f32 %v822, %v836
    %v854 = vmul.f32 %v818, %v840
    %v855 = vmul.f32 %v814, %v844
    %v856 = vmul.f32 %v826, %v848
    %v857 = vmul.f32 %v823, %v836
    %v858 = vmul.f32 %v819, %v840
    %v859 = vmul.f32 %v815, %v844
    %v860 = vmul.f32 %v827, %v848
    %v861 = vmul.f32 %v824, %v836
    %v862 = vmul.f32 %v820, %v840
    %v863 = vmul.f32 %v816, %v844
    %v864 = vmul.f32 %v828, %v848
    %v865 = vmul.f32 %v825, %v836
    %v866 = vmul.f32 %v821, %v840
    %v867 = vmul.f32 %v817, %v844
    %v868 = vmul.f32 %v829, %v848
    %869 = vrot.lane.b32.xlu0 %v236, 111
    %v870 = vpop.permute.xlu0 %869
    %871 = vrot.lane.b32.xlu0 %v240, 111
    %v872 = vpop.permute.xlu0 %871
    %873 = vrot.lane.b32.xlu0 %v244, 111
    %v874 = vpop.permute.xlu0 %873
    %875 = vrot.lane.b32.xlu0 %v248, 111
    %v876 = vpop.permute.xlu0 %875
    %877 = vrot.lane.b32.xlu0 %v237, 111
    %v878 = vpop.permute.xlu0 %877
    %879 = vrot.lane.b32.xlu0 %v241, 111
    %v880 = vpop.permute.xlu0 %879
    %881 = vrot.lane.b32.xlu0 %v245, 111
    %v882 = vpop.permute.xlu0 %881
    %883 = vrot.lane.b32.xlu0 %v249, 111
    %v884 = vpop.permute.xlu0 %883
    %885 = vrot.lane.b32.xlu0 %v238, 111
    %v886 = vpop.permute.xlu0 %885
    %887 = vrot.lane.b32.xlu0 %v242, 111
    %v888 = vpop.permute.xlu0 %887
    %889 = vrot.lane.b32.xlu0 %v246, 111
    %v890 = vpop.permute.xlu0 %889
    %891 = vrot.lane.b32.xlu0 %v250, 111
    %v892 = vpop.permute.xlu0 %891
    %893 = vrot.lane.b32.xlu0 %v239, 111
    %v894 = vpop.permute.xlu0 %893
    %895 = vrot.lane.b32.xlu0 %v243, 111
    %v896 = vpop.permute.xlu0 %895
    %897 = vrot.lane.b32.xlu0 %v247, 111
    %v898 = vpop.permute.xlu0 %897
    %899 = vrot.lane.b32.xlu0 %v251, 111
    %v900 = vpop.permute.xlu0 %899
    %vm901 = vcmp.lt.s32.totalorder %v285, 111
    %v902 = vsel %vm901, %v886, %v894
    %v903 = vsel %vm901, %v888, %v896
    %v904 = vsel %vm901, %v890, %v898
    %v905 = vsel %vm901, %v892, %v900
    %v906 = vsel %vm901, %v878, %v886
    %v907 = vsel %vm901, %v880, %v888
    %v908 = vsel %vm901, %v882, %v890
    %v909 = vsel %vm901, %v884, %v892
    %v910 = vsel %vm901, %v870, %v878
    %v911 = vsel %vm901, %v872, %v880
    %v912 = vsel %vm901, %v874, %v882
    %v913 = vsel %vm901, %v876, %v884
    %v914 = vsel %vm901, %v894, %v870
    %v915 = vsel %vm901, %v896, %v872
    %v916 = vsel %vm901, %v898, %v874
    %v917 = vsel %vm901, %v900, %v876
    %s918 = scalar_lea.vmem [#allocation5], 32
    %v919 = vld [vmem:[%s918] sm:$0xf]
    %v921 = vlaneseq
    %v922 = vshrl.u32 %v921, 7
    %v923 = vsub.s32 0, %v922
    %v924 = vrot.slane %v919, %v923
    %v925 = vlaneseq
    %v926 = vshrl.u32 %v925, 7
    %v927 = vsub.s32 1, %v926
    %v928 = vrot.slane %v919, %v927
    %v929 = vlaneseq
    %v930 = vshrl.u32 %v929, 7
    %v931 = vsub.s32 2, %v930
    %v932 = vrot.slane %v919, %v931
    %v933 = vlaneseq
    %v934 = vshrl.u32 %v933, 7
    %v935 = vsub.s32 3, %v934
    %v936 = vrot.slane %v919, %v935
    %v941 = vmul.f32 %v910, %v924
    %v942 = vmul.f32 %v906, %v928
    %v943 = vmul.f32 %v902, %v932
    %v944 = vmul.f32 %v914, %v936
    %v945 = vmul.f32 %v911, %v924
    %v946 = vmul.f32 %v907, %v928
    %v947 = vmul.f32 %v903, %v932
    %v948 = vmul.f32 %v915, %v936
    %v949 = vmul.f32 %v912, %v924
    %v950 = vmul.f32 %v908, %v928
    %v951 = vmul.f32 %v904, %v932
    %v952 = vmul.f32 %v916, %v936
    %v953 = vmul.f32 %v913, %v924
    %v954 = vmul.f32 %v909, %v928
    %v955 = vmul.f32 %v905, %v932
    %v956 = vmul.f32 %v917, %v936
    %v957 = vld [vmem:[#allocation7] sm:$0xff]
    %v958 = vld [vmem:[#allocation7 + $0x8] sm:$0xff]
    %v959 = vld [vmem:[#allocation7 + $0x10] sm:$0xff]
    %v960 = vld [vmem:[#allocation7 + $0x18] sm:$0xff]
    %v961 = vld [vmem:[#allocation7 + $0x20] sm:$0xff]
    %v962 = vld [vmem:[#allocation7 + $0x28] sm:$0xff]
    %v963 = vld [vmem:[#allocation7 + $0x30] sm:$0xff]
    %v964 = vld [vmem:[#allocation7 + $0x38] sm:$0xff]
    %v965 = vld [vmem:[#allocation7 + $0x40] sm:$0xff]
    %v966 = vld [vmem:[#allocation7 + $0x48] sm:$0xff]
    %v967 = vld [vmem:[#allocation7 + $0x50] sm:$0xff]
    %v968 = vld [vmem:[#allocation7 + $0x58] sm:$0xff]
    %v969 = vld [vmem:[#allocation8] sm:$0xff]
    %v970 = vld [vmem:[#allocation8 + $0x8] sm:$0xff]
    %v971 = vld [vmem:[#allocation8 + $0x10] sm:$0xff]
    %v972 = vld [vmem:[#allocation8 + $0x18] sm:$0xff]
    %974 = vset.pattern.permute.xlu0 0
    %975 = vperm.xlu0 %974, %v969
    %v976 = vpop.permute.xlu0 %975
    %979 = vset.pattern.permute.xlu0 0
    %980 = vperm.xlu0 %979, %v970
    %v981 = vpop.permute.xlu0 %980
    %984 = vset.pattern.permute.xlu0 0
    %985 = vperm.xlu0 %984, %v971
    %v986 = vpop.permute.xlu0 %985
    %989 = vset.pattern.permute.xlu0 0
    %990 = vperm.xlu0 %989, %v972
    %v991 = vpop.permute.xlu0 %990
    %vm993 = vcmask 261120
    %v995 = vsel %vm993, %v959, 0
    %v998 = vsel %vm993, %v962, 0
    %v1001 = vsel %vm993, %v965, 0
    %v1004 = vsel %vm993, %v968, 0
    %1006 = vmatprep.subr.mxu0 %v326
    %1007 = vmatpush1.msra.mxu0 %v325
    %1008 = vmatprep.subr.mxu0 %v330
    %1009 = vmatpush1.msra.mxu0 %v329
    %1010 = vmatprep.subr.mxu0 %v334
    %1011 = vmatpush1.msra.mxu0 %v333
    %1012 = vmatprep.subr.mxu0 %v338
    %1013 = vmatpush1.msra.mxu0 %v337
    %1014 = vmatprep.subr.mxu0 %v414
    %1015 = vmatpush1.msra.mxu0 %v413
    %1016 = vmatprep.subr.mxu0 %v418
    %1017 = vmatpush1.msra.mxu0 %v417
    %1018 = vmatprep.subr.mxu0 %v422
    %1019 = vmatpush1.msra.mxu0 %v421
    %1020 = vmatprep.subr.mxu0 %v426
    %1021 = vmatpush1.msra.mxu0 %v425
    %1022 = vmatprep.subr.mxu0 %v502
    %1023 = vmatpush1.msra.mxu0 %v501
    %1024 = vmatprep.subr.mxu0 %v506
    %1025 = vmatpush1.msra.mxu0 %v505
    %1026 = vmatprep.subr.mxu0 %v510
    %1027 = vmatpush1.msra.mxu0 %v509
    %1028 = vmatprep.subr.mxu0 %v514
    %1029 = vmatpush1.msra.mxu0 %v513
    %1030 = vmatprep.subr.mxu0 %v590
    %1031 = vmatpush1.msra.mxu0 %v589
    %1032 = vmatprep.subr.mxu0 %v594
    %1033 = vmatpush1.msra.mxu0 %v593
    %1034 = vmatprep.subr.mxu0 %v598
    %1035 = vmatpush1.msra.mxu0 %v597
    %1036 = vmatprep.subr.mxu0 %v602
    %1037 = vmatpush1.msra.mxu0 %v601
    %1038 = vmatprep.subr.mxu0 %v237
    %1039 = vmatpush1.msra.mxu0 %v236
    %1040 = vmatprep.subr.mxu0 %v241
    %1041 = vmatpush1.msra.mxu0 %v240
    %1042 = vmatprep.subr.mxu0 %v245
    %1043 = vmatpush1.msra.mxu0 %v244
    %1044 = vmatprep.subr.mxu0 %v249
    %1045 = vmatpush1.msra.mxu0 %v248
    %1046 = vmatprep.subr.mxu0 %v678
    %1047 = vmatpush1.msra.mxu0 %v677
    %1048 = vmatprep.subr.mxu0 %v682
    %1049 = vmatpush1.msra.mxu0 %v681
    %1050 = vmatprep.subr.mxu0 %v686
    %1051 = vmatpush1.msra.mxu0 %v685
    %1052 = vmatprep.subr.mxu0 %v690
    %1053 = vmatpush1.msra.mxu0 %v689
    %1054 = vmatprep.subr.mxu0 %v766
    %1055 = vmatpush1.msra.mxu0 %v765
    %1056 = vmatprep.subr.mxu0 %v770
    %1057 = vmatpush1.msra.mxu0 %v769
    %1058 = vmatprep.subr.mxu0 %v774
    %1059 = vmatpush1.msra.mxu0 %v773
    %1060 = vmatprep.subr.mxu0 %v778
    %1061 = vmatpush1.msra.mxu0 %v777
    %1062 = vmatprep.subr.mxu0 %v854
    %1063 = vmatpush1.msra.mxu0 %v853
    %1064 = vmatprep.subr.mxu0 %v858
    %1065 = vmatpush1.msra.mxu0 %v857
    %1066 = vmatprep.subr.mxu0 %v862
    %1067 = vmatpush1.msra.mxu0 %v861
    %1068 = vmatprep.subr.mxu0 %v866
    %1069 = vmatpush1.msra.mxu0 %v865
    %1070 = vmatprep.mubr.f32.mxu0 %v958
    %1071 = vmatmul.mubr.f32.gmra.mrb[0].mxu0 %v957
    %v1072 = vpop.f32.mrb[0].mxu0
    %v1073 = vadd.f32 %v976, %v1072
    %v1074 = vpop.f32.mrb[0].mxu0
    %v1075 = vadd.f32 %v976, %v1074
    %1076 = vmatprep.mubr.f32.mxu0 %v961
    %1077 = vmatmul.mubr.f32.gmra.mrb[0].mxu0 %v960
    %v1078 = vpop.f32.mrb[0].mxu0
    %v1079 = vadd.f32 %v981, %v1078
    %v1080 = vpop.f32.mrb[0].mxu0
    %v1081 = vadd.f32 %v981, %v1080
    %1082 = vmatprep.mubr.f32.mxu0 %v964
    %1083 = vmatmul.mubr.f32.gmra.mrb[0].mxu0 %v963
    %v1084 = vpop.f32.mrb[0].mxu0
    %v1085 = vadd.f32 %v986, %v1084
    %v1086 = vpop.f32.mrb[0].mxu0
    %v1087 = vadd.f32 %v986, %v1086
    %1088 = vmatprep.mubr.f32.mxu0 %v967
    %1089 = vmatmul.mubr.f32.gmra.mrb[0].mxu0 %v966
    %v1090 = vpop.f32.mrb[0].mxu0
    %v1091 = vadd.f32 %v991, %v1090
    %v1092 = vpop.f32.mrb[0].mxu0
    %v1093 = vadd.f32 %v991, %v1092
    %1094 = vdwg.mxu0
    %1095 = vmatprep.subr.mxu0 %v942
    %1096 = vmatpush1.msra.mxu0 %v941
    %1097 = vmatprep.subr.mxu0 %v946
    %1098 = vmatpush1.msra.mxu0 %v945
    %1099 = vmatprep.subr.mxu0 %v950
    %1100 = vmatpush1.msra.mxu0 %v949
    %1101 = vmatprep.subr.mxu0 %v954
    %1102 = vmatpush1.msra.mxu0 %v953
    %1103 = vmatprep.subr.mxu0 0.0
    %1104 = vmatpush1.msra.mxu0 0.0
    %1105 = vmatprep.subr.mxu0 0.0
    %1106 = vmatpush1.msra.mxu0 0.0
    %1107 = vmatprep.subr.mxu0 0.0
    %1108 = vmatpush1.msra.mxu0 0.0
    %1109 = vmatprep.subr.mxu0 0.0
    %1110 = vmatpush1.msra.mxu0 0.0
    %1111 = vmatprep.subr.mxu0 0.0
    %1112 = vmatpush1.msra.mxu0 0.0
    %1113 = vmatprep.subr.mxu0 0.0
    %1114 = vmatpush1.msra.mxu0 0.0
    %1115 = vmatprep.subr.mxu0 0.0
    %1116 = vmatpush1.msra.mxu0 0.0
    %1117 = vmatprep.subr.mxu0 0.0
    %1118 = vmatpush1.msra.mxu0 0.0
    %1119 = vmatprep.subr.mxu0 0.0
    %1120 = vmatpush1.msra.mxu0 0.0
    %1121 = vmatprep.subr.mxu0 0.0
    %1122 = vmatpush1.msra.mxu0 0.0
    %1123 = vmatprep.subr.mxu0 0.0
    %1124 = vmatpush1.msra.mxu0 0.0
    %1125 = vmatprep.subr.mxu0 0.0
    %1126 = vmatpush1.msra.mxu0 0.0
    %1127 = vmatprep.subr.mxu0 0.0
    %1128 = vmatpush1.msra.mxu0 0.0
    %1129 = vmatprep.subr.mxu0 0.0
    %1130 = vmatpush1.msra.mxu0 0.0
    %1131 = vmatprep.subr.mxu0 0.0
    %1132 = vmatpush1.msra.mxu0 0.0
    %1133 = vmatprep.subr.mxu0 0.0
    %1134 = vmatpush1.msra.mxu0 0.0
    %1135 = vmatprep.subr.mxu0 0.0
    %1136 = vmatpush1.msra.mxu0 0.0
    %1137 = vmatprep.subr.mxu0 0.0
    %1138 = vmatpush1.msra.mxu0 0.0
    %1139 = vmatprep.subr.mxu0 0.0
    %1140 = vmatpush1.msra.mxu0 0.0
    %1141 = vmatprep.subr.mxu0 0.0
    %1142 = vmatpush1.msra.mxu0 0.0
    %1143 = vmatprep.subr.mxu0 0.0
    %1144 = vmatpush1.msra.mxu0 0.0
    %1145 = vmatprep.subr.mxu0 0.0
    %1146 = vmatpush1.msra.mxu0 0.0
    %1147 = vmatprep.subr.mxu0 0.0
    %1148 = vmatpush1.msra.mxu0 0.0
    %1149 = vmatprep.subr.mxu0 0.0
    %1150 = vmatpush1.msra.mxu0 0.0
    %1151 = vmatprep.subr.mxu0 0.0
    %1152 = vmatpush1.msra.mxu0 0.0
    %1153 = vmatprep.subr.mxu0 0.0
    %1154 = vmatpush1.msra.mxu0 0.0
    %1155 = vmatprep.subr.mxu0 0.0
    %1156 = vmatpush1.msra.mxu0 0.0
    %1157 = vmatprep.subr.mxu0 0.0
    %1158 = vmatpush1.msra.mxu0 0.0
    %1159 = vmatprep.mubr.f32.mxu0 0.0
    %1160 = vmatmul.mubr.f32.gmra.mrb[0].mxu0 %v995
    %v1161 = vpop.f32.mrb[0].mxu0
    %v1162 = vadd.f32 %v1073, %v1161
    %v1163 = vpop.f32.mrb[0].mxu0
    %v1164 = vadd.f32 %v1075, %v1163
    %1165 = vmatprep.mubr.f32.mxu0 0.0
    %1166 = vmatmul.mubr.f32.gmra.mrb[0].mxu0 %v998
    %v1167 = vpop.f32.mrb[0].mxu0
    %v1168 = vadd.f32 %v1079, %v1167
    %v1169 = vpop.f32.mrb[0].mxu0
    %v1170 = vadd.f32 %v1081, %v1169
    %1171 = vmatprep.mubr.f32.mxu0 0.0
    %1172 = vmatmul.mubr.f32.gmra.mrb[0].mxu0 %v1001
    %v1173 = vpop.f32.mrb[0].mxu0
    %v1174 = vadd.f32 %v1085, %v1173
    %v1175 = vpop.f32.mrb[0].mxu0
    %v1176 = vadd.f32 %v1087, %v1175
    %1177 = vmatprep.mubr.f32.mxu0 0.0
    %1178 = vmatmul.mubr.f32.gmra.mrb[0].mxu0 %v1004
    %v1179 = vpop.f32.mrb[0].mxu0
    %v1180 = vadd.f32 %v1091, %v1179
    %v1181 = vpop.f32.mrb[0].mxu0
    %v1182 = vadd.f32 %v1093, %v1181
    %1183 = vdwg.mxu0
    %1184 = vmatprep.subr.mxu0 %v328
    %1185 = vmatpush1.msra.mxu0 %v327
    %1186 = vmatprep.subr.mxu0 %v332
    %1187 = vmatpush1.msra.mxu0 %v331
    %1188 = vmatprep.subr.mxu0 %v336
    %1189 = vmatpush1.msra.mxu0 %v335
    %1190 = vmatprep.subr.mxu0 %v340
    %1191 = vmatpush1.msra.mxu0 %v339
    %1192 = vmatprep.subr.mxu0 %v416
    %1193 = vmatpush1.msra.mxu0 %v415
    %1194 = vmatprep.subr.mxu0 %v420
    %1195 = vmatpush1.msra.mxu0 %v419
    %1196 = vmatprep.subr.mxu0 %v424
    %1197 = vmatpush1.msra.mxu0 %v423
    %1198 = vmatprep.subr.mxu0 %v428
    %1199 = vmatpush1.msra.mxu0 %v427
    %1200 = vmatprep.subr.mxu0 %v504
    %1201 = vmatpush1.msra.mxu0 %v503
    %1202 = vmatprep.subr.mxu0 %v508
    %1203 = vmatpush1.msra.mxu0 %v507
    %1204 = vmatprep.subr.mxu0 %v512
    %1205 = vmatpush1.msra.mxu0 %v511
    %1206 = vmatprep.subr.mxu0 %v516
    %1207 = vmatpush1.msra.mxu0 %v515
    %1208 = vmatprep.subr.mxu0 %v592
    %1209 = vmatpush1.msra.mxu0 %v591
    %1210 = vmatprep.subr.mxu0 %v596
    %1211 = vmatpush1.msra.mxu0 %v595
    %1212 = vmatprep.subr.mxu0 %v600
    %1213 = vmatpush1.msra.mxu0 %v599
    %1214 = vmatprep.subr.mxu0 %v604
    %1215 = vmatpush1.msra.mxu0 %v603
    %1216 = vmatprep.subr.mxu0 %v239
    %1217 = vmatpush1.msra.mxu0 %v238
    %1218 = vmatprep.subr.mxu0 %v243
    %1219 = vmatpush1.msra.mxu0 %v242
    %1220 = vmatprep.subr.mxu0 %v247
    %1221 = vmatpush1.msra.mxu0 %v246
    %1222 = vmatprep.subr.mxu0 %v251
    %1223 = vmatpush1.msra.mxu0 %v250
    %1224 = vmatprep.subr.mxu0 %v680
    %1225 = vmatpush1.msra.mxu0 %v679
    %1226 = vmatprep.subr.mxu0 %v684
    %1227 = vmatpush1.msra.mxu0 %v683
    %1228 = vmatprep.subr.mxu0 %v688
    %1229 = vmatpush1.msra.mxu0 %v687
    %1230 = vmatprep.subr.mxu0 %v692
    %1231 = vmatpush1.msra.mxu0 %v691
    %1232 = vmatprep.subr.mxu0 %v768
    %1233 = vmatpush1.msra.mxu0 %v767
    %1234 = vmatprep.subr.mxu0 %v772
    %1235 = vmatpush1.msra.mxu0 %v771
    %1236 = vmatprep.subr.mxu0 %v776
    %1237 = vmatpush1.msra.mxu0 %v775
    %1238 = vmatprep.subr.mxu0 %v780
    %1239 = vmatpush1.msra.mxu0 %v779
    %1240 = vmatprep.subr.mxu0 %v856
    %1241 = vmatpush1.msra.mxu0 %v855
    %1242 = vmatprep.subr.mxu0 %v860
    %1243 = vmatpush1.msra.mxu0 %v859
    %1244 = vmatprep.subr.mxu0 %v864
    %1245 = vmatpush1.msra.mxu0 %v863
    %1246 = vmatprep.subr.mxu0 %v868
    %1247 = vmatpush1.msra.mxu0 %v867
    %1248 = vmatprep.mubr.f32.mxu0 %v958
    %1249 = vmatmul.mubr.f32.gmra.mrb[0].mxu0 %v957
    %v1250 = vpop.f32.mrb[0].mxu0
    %v1251 = vadd.f32 %v976, %v1250
    %v1252 = vpop.f32.mrb[0].mxu0
    %v1253 = vadd.f32 %v976, %v1252
    %1254 = vmatprep.mubr.f32.mxu0 %v961
    %1255 = vmatmul.mubr.f32.gmra.mrb[0].mxu0 %v960
    %v1256 = vpop.f32.mrb[0].mxu0
    %v1257 = vadd.f32 %v981, %v1256
    %v1258 = vpop.f32.mrb[0].mxu0
    %v1259 = vadd.f32 %v981, %v1258
    %1260 = vmatprep.mubr.f32.mxu0 %v964
    %1261 = vmatmul.mubr.f32.gmra.mrb[0].mxu0 %v963
    %v1262 = vpop.f32.mrb[0].mxu0
    %v1263 = vadd.f32 %v986, %v1262
    %v1264 = vpop.f32.mrb[0].mxu0
    %v1265 = vadd.f32 %v986, %v1264
    %1266 = vmatprep.mubr.f32.mxu0 %v967
    %1267 = vmatmul.mubr.f32.gmra.mrb[0].mxu0 %v966
    %v1268 = vpop.f32.mrb[0].mxu0
    %v1269 = vadd.f32 %v991, %v1268
    %v1270 = vpop.f32.mrb[0].mxu0
    %v1271 = vadd.f32 %v991, %v1270
    %1272 = vdwg.mxu0
    %1273 = vmatprep.subr.mxu0 %v944
    %1274 = vmatpush1.msra.mxu0 %v943
    %1275 = vmatprep.subr.mxu0 %v948
    %1276 = vmatpush1.msra.mxu0 %v947
    %1277 = vmatprep.subr.mxu0 %v952
    %1278 = vmatpush1.msra.mxu0 %v951
    %1279 = vmatprep.subr.mxu0 %v956
    %1280 = vmatpush1.msra.mxu0 %v955
    %1281 = vmatprep.subr.mxu0 0.0
    %1282 = vmatpush1.msra.mxu0 0.0
    %1283 = vmatprep.subr.mxu0 0.0
    %1284 = vmatpush1.msra.mxu0 0.0
    %1285 = vmatprep.subr.mxu0 0.0
    %1286 = vmatpush1.msra.mxu0 0.0
    %1287 = vmatprep.subr.mxu0 0.0
    %1288 = vmatpush1.msra.mxu0 0.0
    %1289 = vmatprep.subr.mxu0 0.0
    %1290 = vmatpush1.msra.mxu0 0.0
    %1291 = vmatprep.subr.mxu0 0.0
    %1292 = vmatpush1.msra.mxu0 0.0
    %1293 = vmatprep.subr.mxu0 0.0
    %1294 = vmatpush1.msra.mxu0 0.0
    %1295 = vmatprep.subr.mxu0 0.0
    %1296 = vmatpush1.msra.mxu0 0.0
    %1297 = vmatprep.subr.mxu0 0.0
    %1298 = vmatpush1.msra.mxu0 0.0
    %1299 = vmatprep.subr.mxu0 0.0
    %1300 = vmatpush1.msra.mxu0 0.0
    %1301 = vmatprep.subr.mxu0 0.0
    %1302 = vmatpush1.msra.mxu0 0.0
    %1303 = vmatprep.subr.mxu0 0.0
    %1304 = vmatpush1.msra.mxu0 0.0
    %1305 = vmatprep.subr.mxu0 0.0
    %1306 = vmatpush1.msra.mxu0 0.0
    %1307 = vmatprep.subr.mxu0 0.0
    %1308 = vmatpush1.msra.mxu0 0.0
    %1309 = vmatprep.subr.mxu0 0.0
    %1310 = vmatpush1.msra.mxu0 0.0
    %1311 = vmatprep.subr.mxu0 0.0
    %1312 = vmatpush1.msra.mxu0 0.0
    %1313 = vmatprep.subr.mxu0 0.0
    %1314 = vmatpush1.msra.mxu0 0.0
    %1315 = vmatprep.subr.mxu0 0.0
    %1316 = vmatpush1.msra.mxu0 0.0
    %1317 = vmatprep.subr.mxu0 0.0
    %1318 = vmatpush1.msra.mxu0 0.0
    %1319 = vmatprep.subr.mxu0 0.0
    %1320 = vmatpush1.msra.mxu0 0.0
    %1321 = vmatprep.subr.mxu0 0.0
    %1322 = vmatpush1.msra.mxu0 0.0
    %1323 = vmatprep.subr.mxu0 0.0
    %1324 = vmatpush1.msra.mxu0 0.0
    %1325 = vmatprep.subr.mxu0 0.0
    %1326 = vmatpush1.msra.mxu0 0.0
    %1327 = vmatprep.subr.mxu0 0.0
    %1328 = vmatpush1.msra.mxu0 0.0
    %1329 = vmatprep.subr.mxu0 0.0
    %1330 = vmatpush1.msra.mxu0 0.0
    %1331 = vmatprep.subr.mxu0 0.0
    %1332 = vmatpush1.msra.mxu0 0.0
    %1333 = vmatprep.subr.mxu0 0.0
    %1334 = vmatpush1.msra.mxu0 0.0
    %1335 = vmatprep.subr.mxu0 0.0
    %1336 = vmatpush1.msra.mxu0 0.0
    %1337 = vmatprep.mubr.f32.mxu0 0.0
    %1338 = vmatmul.mubr.f32.gmra.mrb[0].mxu0 %v995
    %v1339 = vpop.f32.mrb[0].mxu0
    %v1340 = vadd.f32 %v1251, %v1339
    %v1341 = vpop.f32.mrb[0].mxu0
    %v1342 = vadd.f32 %v1253, %v1341
    %1343 = vmatprep.mubr.f32.mxu0 0.0
    %1344 = vmatmul.mubr.f32.gmra.mrb[0].mxu0 %v998
    %v1345 = vpop.f32.mrb[0].mxu0
    %v1346 = vadd.f32 %v1257, %v1345
    %v1347 = vpop.f32.mrb[0].mxu0
    %v1348 = vadd.f32 %v1259, %v1347
    %1349 = vmatprep.mubr.f32.mxu0 0.0
    %1350 = vmatmul.mubr.f32.gmra.mrb[0].mxu0 %v1001
    %v1351 = vpop.f32.mrb[0].mxu0
    %v1352 = vadd.f32 %v1263, %v1351
    %v1353 = vpop.f32.mrb[0].mxu0
    %v1354 = vadd.f32 %v1265, %v1353
    %1355 = vmatprep.mubr.f32.mxu0 0.0
    %1356 = vmatmul.mubr.f32.gmra.mrb[0].mxu0 %v1004
    %v1357 = vpop.f32.mrb[0].mxu0
    %v1358 = vadd.f32 %v1269, %v1357
    %v1359 = vpop.f32.mrb[0].mxu0
    %v1360 = vadd.f32 %v1271, %v1359
    %1361 = vdwg.mxu0
    %v1362 = vmax.f32 %v1162, 0.0
    %v1363 = vmax.f32 %v1164, 0.0
    %v1364 = vmax.f32 %v1340, 0.0
    %v1365 = vmax.f32 %v1342, 0.0
    %v1366 = vmax.f32 %v1168, 0.0
    %v1367 = vmax.f32 %v1170, 0.0
    %v1368 = vmax.f32 %v1346, 0.0
    %v1369 = vmax.f32 %v1348, 0.0
    %v1370 = vmax.f32 %v1174, 0.0
    %v1371 = vmax.f32 %v1176, 0.0
    %v1372 = vmax.f32 %v1352, 0.0
    %v1373 = vmax.f32 %v1354, 0.0
    %v1374 = vmax.f32 %v1180, 0.0
    %v1375 = vmax.f32 %v1182, 0.0
    %v1376 = vmax.f32 %v1358, 0.0
    %v1377 = vmax.f32 %v1360, 0.0
    %1378 = vrot.lane.b32.xlu0 %v1362, 17
    %v1379 = vpop.permute.xlu0 %1378
    %1380 = vrot.lane.b32.xlu0 %v1366, 17
    %v1381 = vpop.permute.xlu0 %1380
    %1382 = vrot.lane.b32.xlu0 %v1370, 17
    %v1383 = vpop.permute.xlu0 %1382
    %1384 = vrot.lane.b32.xlu0 %v1374, 17
    %v1385 = vpop.permute.xlu0 %1384
    %1386 = vrot.lane.b32.xlu0 %v1363, 17
    %v1387 = vpop.permute.xlu0 %1386
    %1388 = vrot.lane.b32.xlu0 %v1367, 17
    %v1389 = vpop.permute.xlu0 %1388
    %1390 = vrot.lane.b32.xlu0 %v1371, 17
    %v1391 = vpop.permute.xlu0 %1390
    %1392 = vrot.lane.b32.xlu0 %v1375, 17
    %v1393 = vpop.permute.xlu0 %1392
    %1394 = vrot.lane.b32.xlu0 %v1364, 17
    %v1395 = vpop.permute.xlu0 %1394
    %1396 = vrot.lane.b32.xlu0 %v1368, 17
    %v1397 = vpop.permute.xlu0 %1396
    %1398 = vrot.lane.b32.xlu0 %v1372, 17
    %v1399 = vpop.permute.xlu0 %1398
    %1400 = vrot.lane.b32.xlu0 %v1376, 17
    %v1401 = vpop.permute.xlu0 %1400
    %1402 = vrot.lane.b32.xlu0 %v1365, 17
    %v1403 = vpop.permute.xlu0 %1402
    %1404 = vrot.lane.b32.xlu0 %v1369, 17
    %v1405 = vpop.permute.xlu0 %1404
    %1406 = vrot.lane.b32.xlu0 %v1373, 17
    %v1407 = vpop.permute.xlu0 %1406
    %1408 = vrot.lane.b32.xlu0 %v1377, 17
    %v1409 = vpop.permute.xlu0 %1408
    %v1410 = vsel %vm286, %v1395, %v1403
    %v1411 = vsel %vm286, %v1397, %v1405
    %v1412 = vsel %vm286, %v1399, %v1407
    %v1413 = vsel %vm286, %v1401, %v1409
    %v1414 = vsel %vm286, %v1387, %v1395
    %v1415 = vsel %vm286, %v1389, %v1397
    %v1416 = vsel %vm286, %v1391, %v1399
    %v1417 = vsel %vm286, %v1393, %v1401
    %v1418 = vsel %vm286, %v1379, %v1387
    %v1419 = vsel %vm286, %v1381, %v1389
    %v1420 = vsel %vm286, %v1383, %v1391
    %v1421 = vsel %vm286, %v1385, %v1393
    %v1422 = vsel %vm286, %v1403, %v1379
    %v1423 = vsel %vm286, %v1405, %v1381
    %v1424 = vsel %vm286, %v1407, %v1383
    %v1425 = vsel %vm286, %v1409, %v1385
    %v1426 = vmul.f32 %v1422, %v308
    %v1427 = vmul.f32 %v1418, %v312
    %v1428 = vmul.f32 %v1414, %v316
    %v1429 = vmul.f32 %v1410, %v320
    %v1430 = vmul.f32 %v1423, %v308
    %v1431 = vmul.f32 %v1419, %v312
    %v1432 = vmul.f32 %v1415, %v316
    %v1433 = vmul.f32 %v1411, %v320
    %v1434 = vmul.f32 %v1424, %v308
    %v1435 = vmul.f32 %v1420, %v312
    %v1436 = vmul.f32 %v1416, %v316
    %v1437 = vmul.f32 %v1412, %v320
    %v1438 = vmul.f32 %v1425, %v308
    %v1439 = vmul.f32 %v1421, %v312
    %v1440 = vmul.f32 %v1417, %v316
    %v1441 = vmul.f32 %v1413, %v320
    %1442 = vrot.lane.b32.xlu0 %v1362, 16
    %v1443 = vpop.permute.xlu0 %1442
    %1444 = vrot.lane.b32.xlu0 %v1366, 16
    %v1445 = vpop.permute.xlu0 %1444
    %1446 = vrot.lane.b32.xlu0 %v1370, 16
    %v1447 = vpop.permute.xlu0 %1446
    %1448 = vrot.lane.b32.xlu0 %v1374, 16
    %v1449 = vpop.permute.xlu0 %1448
    %1450 = vrot.lane.b32.xlu0 %v1363, 16
    %v1451 = vpop.permute.xlu0 %1450
    %1452 = vrot.lane.b32.xlu0 %v1367, 16
    %v1453 = vpop.permute.xlu0 %1452
    %1454 = vrot.lane.b32.xlu0 %v1371, 16
    %v1455 = vpop.permute.xlu0 %1454
    %1456 = vrot.lane.b32.xlu0 %v1375, 16
    %v1457 = vpop.permute.xlu0 %1456
    %1458 = vrot.lane.b32.xlu0 %v1364, 16
    %v1459 = vpop.permute.xlu0 %1458
    %1460 = vrot.lane.b32.xlu0 %v1368, 16
    %v1461 = vpop.permute.xlu0 %1460
    %1462 = vrot.lane.b32.xlu0 %v1372, 16
    %v1463 = vpop.permute.xlu0 %1462
    %1464 = vrot.lane.b32.xlu0 %v1376, 16
    %v1465 = vpop.permute.xlu0 %1464
    %1466 = vrot.lane.b32.xlu0 %v1365, 16
    %v1467 = vpop.permute.xlu0 %1466
    %1468 = vrot.lane.b32.xlu0 %v1369, 16
    %v1469 = vpop.permute.xlu0 %1468
    %1470 = vrot.lane.b32.xlu0 %v1373, 16
    %v1471 = vpop.permute.xlu0 %1470
    %1472 = vrot.lane.b32.xlu0 %v1377, 16
    %v1473 = vpop.permute.xlu0 %1472
    %v1474 = vsel %vm373, %v1459, %v1467
    %v1475 = vsel %vm373, %v1461, %v1469
    %v1476 = vsel %vm373, %v1463, %v1471
    %v1477 = vsel %vm373, %v1465, %v1473
    %v1478 = vsel %vm373, %v1451, %v1459
    %v1479 = vsel %vm373, %v1453, %v1461
    %v1480 = vsel %vm373, %v1455, %v1463
    %v1481 = vsel %vm373, %v1457, %v1465
    %v1482 = vsel %vm373, %v1443, %v1451
    %v1483 = vsel %vm373, %v1445, %v1453
    %v1484 = vsel %vm373, %v1447, %v1455
    %v1485 = vsel %vm373, %v1449, %v1457
    %v1486 = vsel %vm373, %v1467, %v1443
    %v1487 = vsel %vm373, %v1469, %v1445
    %v1488 = vsel %vm373, %v1471, %v1447
    %v1489 = vsel %vm373, %v1473, %v1449
    %v1490 = vmul.f32 %v1486, %v396
    %v1491 = vmul.f32 %v1482, %v400
    %v1492 = vmul.f32 %v1478, %v404
    %v1493 = vmul.f32 %v1474, %v408
    %v1494 = vmul.f32 %v1487, %v396
    %v1495 = vmul.f32 %v1483, %v400
    %v1496 = vmul.f32 %v1479, %v404
    %v1497 = vmul.f32 %v1475, %v408
    %v1498 = vmul.f32 %v1488, %v396
    %v1499 = vmul.f32 %v1484, %v400
    %v1500 = vmul.f32 %v1480, %v404
    %v1501 = vmul.f32 %v1476, %v408
    %v1502 = vmul.f32 %v1489, %v396
    %v1503 = vmul.f32 %v1485, %v400
    %v1504 = vmul.f32 %v1481, %v404
    %v1505 = vmul.f32 %v1477, %v408
    %1506 = vrot.lane.b32.xlu0 %v1362, 15
    %v1507 = vpop.permute.xlu0 %1506
    %1508 = vrot.lane.b32.xlu0 %v1366, 15
    %v1509 = vpop.permute.xlu0 %1508
    %1510 = vrot.lane.b32.xlu0 %v1370, 15
    %v1511 = vpop.permute.xlu0 %1510
    %1512 = vrot.lane.b32.xlu0 %v1374, 15
    %v1513 = vpop.permute.xlu0 %1512
    %1514 = vrot.lane.b32.xlu0 %v1363, 15
    %v1515 = vpop.permute.xlu0 %1514
    %1516 = vrot.lane.b32.xlu0 %v1367, 15
    %v1517 = vpop.permute.xlu0 %1516
    %1518 = vrot.lane.b32.xlu0 %v1371, 15
    %v1519 = vpop.permute.xlu0 %1518
    %1520 = vrot.lane.b32.xlu0 %v1375, 15
    %v1521 = vpop.permute.xlu0 %1520
    %1522 = vrot.lane.b32.xlu0 %v1364, 15
    %v1523 = vpop.permute.xlu0 %1522
    %1524 = vrot.lane.b32.xlu0 %v1368, 15
    %v1525 = vpop.permute.xlu0 %1524
    %1526 = vrot.lane.b32.xlu0 %v1372, 15
    %v1527 = vpop.permute.xlu0 %1526
    %1528 = vrot.lane.b32.xlu0 %v1376, 15
    %v1529 = vpop.permute.xlu0 %1528
    %1530 = vrot.lane.b32.xlu0 %v1365, 15
    %v1531 = vpop.permute.xlu0 %1530
    %1532 = vrot.lane.b32.xlu0 %v1369, 15
    %v1533 = vpop.permute.xlu0 %1532
    %1534 = vrot.lane.b32.xlu0 %v1373, 15
    %v1535 = vpop.permute.xlu0 %1534
    %1536 = vrot.lane.b32.xlu0 %v1377, 15
    %v1537 = vpop.permute.xlu0 %1536
    %v1538 = vsel %vm461, %v1523, %v1531
    %v1539 = vsel %vm461, %v1525, %v1533
    %v1540 = vsel %vm461, %v1527, %v1535
    %v1541 = vsel %vm461, %v1529, %v1537
    %v1542 = vsel %vm461, %v1515, %v1523
    %v1543 = vsel %vm461, %v1517, %v1525
    %v1544 = vsel %vm461, %v1519, %v1527
    %v1545 = vsel %vm461, %v1521, %v1529
    %v1546 = vsel %vm461, %v1507, %v1515
    %v1547 = vsel %vm461, %v1509, %v1517
    %v1548 = vsel %vm461, %v1511, %v1519
    %v1549 = vsel %vm461, %v1513, %v1521
    %v1550 = vsel %vm461, %v1531, %v1507
    %v1551 = vsel %vm461, %v1533, %v1509
    %v1552 = vsel %vm461, %v1535, %v1511
    %v1553 = vsel %vm461, %v1537, %v1513
    %v1554 = vmul.f32 %v1550, %v484
    %v1555 = vmul.f32 %v1546, %v488
    %v1556 = vmul.f32 %v1542, %v492
    %v1557 = vmul.f32 %v1538, %v496
    %v1558 = vmul.f32 %v1551, %v484
    %v1559 = vmul.f32 %v1547, %v488
    %v1560 = vmul.f32 %v1543, %v492
    %v1561 = vmul.f32 %v1539, %v496
    %v1562 = vmul.f32 %v1552, %v484
    %v1563 = vmul.f32 %v1548, %v488
    %v1564 = vmul.f32 %v1544, %v492
    %v1565 = vmul.f32 %v1540, %v496
    %v1566 = vmul.f32 %v1553, %v484
    %v1567 = vmul.f32 %v1549, %v488
    %v1568 = vmul.f32 %v1545, %v492
    %v1569 = vmul.f32 %v1541, %v496
    %1570 = vrot.lane.b32.xlu0 %v1362, 1
    %v1571 = vpop.permute.xlu0 %1570
    %1572 = vrot.lane.b32.xlu0 %v1366, 1
    %v1573 = vpop.permute.xlu0 %1572
    %1574 = vrot.lane.b32.xlu0 %v1370, 1
    %v1575 = vpop.permute.xlu0 %1574
    %1576 = vrot.lane.b32.xlu0 %v1374, 1
    %v1577 = vpop.permute.xlu0 %1576
    %1578 = vrot.lane.b32.xlu0 %v1363, 1
    %v1579 = vpop.permute.xlu0 %1578
    %1580 = vrot.lane.b32.xlu0 %v1367, 1
    %v1581 = vpop.permute.xlu0 %1580
    %1582 = vrot.lane.b32.xlu0 %v1371, 1
    %v1583 = vpop.permute.xlu0 %1582
    %1584 = vrot.lane.b32.xlu0 %v1375, 1
    %v1585 = vpop.permute.xlu0 %1584
    %1586 = vrot.lane.b32.xlu0 %v1364, 1
    %v1587 = vpop.permute.xlu0 %1586
    %1588 = vrot.lane.b32.xlu0 %v1368, 1
    %v1589 = vpop.permute.xlu0 %1588
    %1590 = vrot.lane.b32.xlu0 %v1372, 1
    %v1591 = vpop.permute.xlu0 %1590
    %1592 = vrot.lane.b32.xlu0 %v1376, 1
    %v1593 = vpop.permute.xlu0 %1592
    %1594 = vrot.lane.b32.xlu0 %v1365, 1
    %v1595 = vpop.permute.xlu0 %1594
    %1596 = vrot.lane.b32.xlu0 %v1369, 1
    %v1597 = vpop.permute.xlu0 %1596
    %1598 = vrot.lane.b32.xlu0 %v1373, 1
    %v1599 = vpop.permute.xlu0 %1598
    %1600 = vrot.lane.b32.xlu0 %v1377, 1
    %v1601 = vpop.permute.xlu0 %1600
    %v1602 = vsel %vm549, %v1587, %v1595
    %v1603 = vsel %vm549, %v1589, %v1597
    %v1604 = vsel %vm549, %v1591, %v1599
    %v1605 = vsel %vm549, %v1593, %v1601
    %v1606 = vsel %vm549, %v1579, %v1587
    %v1607 = vsel %vm549, %v1581, %v1589
    %v1608 = vsel %vm549, %v1583, %v1591
    %v1609 = vsel %vm549, %v1585, %v1593
    %v1610 = vsel %vm549, %v1571, %v1579
    %v1611 = vsel %vm549, %v1573, %v1581
    %v1612 = vsel %vm549, %v1575, %v1583
    %v1613 = vsel %vm549, %v1577, %v1585
    %v1614 = vsel %vm549, %v1595, %v1571
    %v1615 = vsel %vm549, %v1597, %v1573
    %v1616 = vsel %vm549, %v1599, %v1575
    %v1617 = vsel %vm549, %v1601, %v1577
    %v1618 = vmul.f32 %v1614, %v572
    %v1619 = vmul.f32 %v1610, %v576
    %v1620 = vmul.f32 %v1606, %v580
    %v1621 = vmul.f32 %v1602, %v584
    %v1622 = vmul.f32 %v1615, %v572
    %v1623 = vmul.f32 %v1611, %v576
    %v1624 = vmul.f32 %v1607, %v580
    %v1625 = vmul.f32 %v1603, %v584
    %v1626 = vmul.f32 %v1616, %v572
    %v1627 = vmul.f32 %v1612, %v576
    %v1628 = vmul.f32 %v1608, %v580
    %v1629 = vmul.f32 %v1604, %v584
    %v1630 = vmul.f32 %v1617, %v572
    %v1631 = vmul.f32 %v1613, %v576
    %v1632 = vmul.f32 %v1609, %v580
    %v1633 = vmul.f32 %v1605, %v584
    %1634 = vrot.lane.b32.xlu0 %v1362, 127
    %v1635 = vpop.permute.xlu0 %1634
    %1636 = vrot.lane.b32.xlu0 %v1366, 127
    %v1637 = vpop.permute.xlu0 %1636
    %1638 = vrot.lane.b32.xlu0 %v1370, 127
    %v1639 = vpop.permute.xlu0 %1638
    %1640 = vrot.lane.b32.xlu0 %v1374, 127
    %v1641 = vpop.permute.xlu0 %1640
    %1642 = vrot.lane.b32.xlu0 %v1363, 127
    %v1643 = vpop.permute.xlu0 %1642
    %1644 = vrot.lane.b32.xlu0 %v1367, 127
    %v1645 = vpop.permute.xlu0 %1644
    %1646 = vrot.lane.b32.xlu0 %v1371, 127
    %v1647 = vpop.permute.xlu0 %1646
    %1648 = vrot.lane.b32.xlu0 %v1375, 127
    %v1649 = vpop.permute.xlu0 %1648
    %1650 = vrot.lane.b32.xlu0 %v1364, 127
    %v1651 = vpop.permute.xlu0 %1650
    %1652 = vrot.lane.b32.xlu0 %v1368, 127
    %v1653 = vpop.permute.xlu0 %1652
    %1654 = vrot.lane.b32.xlu0 %v1372, 127
    %v1655 = vpop.permute.xlu0 %1654
    %1656 = vrot.lane.b32.xlu0 %v1376, 127
    %v1657 = vpop.permute.xlu0 %1656
    %1658 = vrot.lane.b32.xlu0 %v1365, 127
    %v1659 = vpop.permute.xlu0 %1658
    %1660 = vrot.lane.b32.xlu0 %v1369, 127
    %v1661 = vpop.permute.xlu0 %1660
    %1662 = vrot.lane.b32.xlu0 %v1373, 127
    %v1663 = vpop.permute.xlu0 %1662
    %1664 = vrot.lane.b32.xlu0 %v1377, 127
    %v1665 = vpop.permute.xlu0 %1664
    %v1666 = vsel %vm637, %v1651, %v1659
    %v1667 = vsel %vm637, %v1653, %v1661
    %v1668 = vsel %vm637, %v1655, %v1663
    %v1669 = vsel %vm637, %v1657, %v1665
    %v1670 = vsel %vm637, %v1643, %v1651
    %v1671 = vsel %vm637, %v1645, %v1653
    %v1672 = vsel %vm637, %v1647, %v1655
    %v1673 = vsel %vm637, %v1649, %v1657
    %v1674 = vsel %vm637, %v1635, %v1643
    %v1675 = vsel %vm637, %v1637, %v1645
    %v1676 = vsel %vm637, %v1639, %v1647
    %v1677 = vsel %vm637, %v1641, %v1649
    %v1678 = vsel %vm637, %v1659, %v1635
    %v1679 = vsel %vm637, %v1661, %v1637
    %v1680 = vsel %vm637, %v1663, %v1639
    %v1681 = vsel %vm637, %v1665, %v1641
    %v1682 = vmul.f32 %v1674, %v660
    %v1683 = vmul.f32 %v1670, %v664
    %v1684 = vmul.f32 %v1666, %v668
    %v1685 = vmul.f32 %v1678, %v672
    %v1686 = vmul.f32 %v1675, %v660
    %v1687 = vmul.f32 %v1671, %v664
    %v1688 = vmul.f32 %v1667, %v668
    %v1689 = vmul.f32 %v1679, %v672
    %v1690 = vmul.f32 %v1676, %v660
    %v1691 = vmul.f32 %v1672, %v664
    %v1692 = vmul.f32 %v1668, %v668
    %v1693 = vmul.f32 %v1680, %v672
    %v1694 = vmul.f32 %v1677, %v660
    %v1695 = vmul.f32 %v1673, %v664
    %v1696 = vmul.f32 %v1669, %v668
    %v1697 = vmul.f32 %v1681, %v672
    %1698 = vrot.lane.b32.xlu0 %v1362, 113
    %v1699 = vpop.permute.xlu0 %1698
    %1700 = vrot.lane.b32.xlu0 %v1366, 113
    %v1701 = vpop.permute.xlu0 %1700
    %1702 = vrot.lane.b32.xlu0 %v1370, 113
    %v1703 = vpop.permute.xlu0 %1702
    %1704 = vrot.lane.b32.xlu0 %v1374, 113
    %v1705 = vpop.permute.xlu0 %1704
    %1706 = vrot.lane.b32.xlu0 %v1363, 113
    %v1707 = vpop.permute.xlu0 %1706
    %1708 = vrot.lane.b32.xlu0 %v1367, 113
    %v1709 = vpop.permute.xlu0 %1708
    %1710 = vrot.lane.b32.xlu0 %v1371, 113
    %v1711 = vpop.permute.xlu0 %1710
    %1712 = vrot.lane.b32.xlu0 %v1375, 113
    %v1713 = vpop.permute.xlu0 %1712
    %1714 = vrot.lane.b32.xlu0 %v1364, 113
    %v1715 = vpop.permute.xlu0 %1714
    %1716 = vrot.lane.b32.xlu0 %v1368, 113
    %v1717 = vpop.permute.xlu0 %1716
    %1718 = vrot.lane.b32.xlu0 %v1372, 113
    %v1719 = vpop.permute.xlu0 %1718
    %1720 = vrot.lane.b32.xlu0 %v1376, 113
    %v1721 = vpop.permute.xlu0 %1720
    %1722 = vrot.lane.b32.xlu0 %v1365, 113
    %v1723 = vpop.permute.xlu0 %1722
    %1724 = vrot.lane.b32.xlu0 %v1369, 113
    %v1725 = vpop.permute.xlu0 %1724
    %1726 = vrot.lane.b32.xlu0 %v1373, 113
    %v1727 = vpop.permute.xlu0 %1726
    %1728 = vrot.lane.b32.xlu0 %v1377, 113
    %v1729 = vpop.permute.xlu0 %1728
    %v1730 = vsel %vm725, %v1715, %v1723
    %v1731 = vsel %vm725, %v1717, %v1725
    %v1732 = vsel %vm725, %v1719, %v1727
    %v1733 = vsel %vm725, %v1721, %v1729
    %v1734 = vsel %vm725, %v1707, %v1715
    %v1735 = vsel %vm725, %v1709, %v1717
    %v1736 = vsel %vm725, %v1711, %v1719
    %v1737 = vsel %vm725, %v1713, %v1721
    %v1738 = vsel %vm725, %v1699, %v1707
    %v1739 = vsel %vm725, %v1701, %v1709
    %v1740 = vsel %vm725, %v1703, %v1711
    %v1741 = vsel %vm725, %v1705, %v1713
    %v1742 = vsel %vm725, %v1723, %v1699
    %v1743 = vsel %vm725, %v1725, %v1701
    %v1744 = vsel %vm725, %v1727, %v1703
    %v1745 = vsel %vm725, %v1729, %v1705
    %v1746 = vmul.f32 %v1738, %v748
    %v1747 = vmul.f32 %v1734, %v752
    %v1748 = vmul.f32 %v1730, %v756
    %v1749 = vmul.f32 %v1742, %v760
    %v1750 = vmul.f32 %v1739, %v748
    %v1751 = vmul.f32 %v1735, %v752
    %v1752 = vmul.f32 %v1731, %v756
    %v1753 = vmul.f32 %v1743, %v760
    %v1754 = vmul.f32 %v1740, %v748
    %v1755 = vmul.f32 %v1736, %v752
    %v1756 = vmul.f32 %v1732, %v756
    %v1757 = vmul.f32 %v1744, %v760
    %v1758 = vmul.f32 %v1741, %v748
    %v1759 = vmul.f32 %v1737, %v752
    %v1760 = vmul.f32 %v1733, %v756
    %v1761 = vmul.f32 %v1745, %v760
    %1762 = vrot.lane.b32.xlu0 %v1362, 112
    %v1763 = vpop.permute.xlu0 %1762
    %1764 = vrot.lane.b32.xlu0 %v1366, 112
    %v1765 = vpop.permute.xlu0 %1764
    %1766 = vrot.lane.b32.xlu0 %v1370, 112
    %v1767 = vpop.permute.xlu0 %1766
    %1768 = vrot.lane.b32.xlu0 %v1374, 112
    %v1769 = vpop.permute.xlu0 %1768
    %1770 = vrot.lane.b32.xlu0 %v1363, 112
    %v1771 = vpop.permute.xlu0 %1770
    %1772 = vrot.lane.b32.xlu0 %v1367, 112
    %v1773 = vpop.permute.xlu0 %1772
    %1774 = vrot.lane.b32.xlu0 %v1371, 112
    %v1775 = vpop.permute.xlu0 %1774
    %1776 = vrot.lane.b32.xlu0 %v1375, 112
    %v1777 = vpop.permute.xlu0 %1776
    %1778 = vrot.lane.b32.xlu0 %v1364, 112
    %v1779 = vpop.permute.xlu0 %1778
    %1780 = vrot.lane.b32.xlu0 %v1368, 112
    %v1781 = vpop.permute.xlu0 %1780
    %1782 = vrot.lane.b32.xlu0 %v1372, 112
    %v1783 = vpop.permute.xlu0 %1782
    %1784 = vrot.lane.b32.xlu0 %v1376, 112
    %v1785 = vpop.permute.xlu0 %1784
    %1786 = vrot.lane.b32.xlu0 %v1365, 112
    %v1787 = vpop.permute.xlu0 %1786
    %1788 = vrot.lane.b32.xlu0 %v1369, 112
    %v1789 = vpop.permute.xlu0 %1788
    %1790 = vrot.lane.b32.xlu0 %v1373, 112
    %v1791 = vpop.permute.xlu0 %1790
    %1792 = vrot.lane.b32.xlu0 %v1377, 112
    %v1793 = vpop.permute.xlu0 %1792
    %v1794 = vsel %vm813, %v1779, %v1787
    %v1795 = vsel %vm813, %v1781, %v1789
    %v1796 = vsel %vm813, %v1783, %v1791
    %v1797 = vsel %vm813, %v1785, %v1793
    %v1798 = vsel %vm813, %v1771, %v1779
    %v1799 = vsel %vm813, %v1773, %v1781
    %v1800 = vsel %vm813, %v1775, %v1783
    %v1801 = vsel %vm813, %v1777, %v1785
    %v1802 = vsel %vm813, %v1763, %v1771
    %v1803 = vsel %vm813, %v1765, %v1773
    %v1804 = vsel %vm813, %v1767, %v1775
    %v1805 = vsel %vm813, %v1769, %v1777
    %v1806 = vsel %vm813, %v1787, %v1763
    %v1807 = vsel %vm813, %v1789, %v1765
    %v1808 = vsel %vm813, %v1791, %v1767
    %v1809 = vsel %vm813, %v1793, %v1769
    %v1810 = vmul.f32 %v1802, %v836
    %v1811 = vmul.f32 %v1798, %v840
    %v1812 = vmul.f32 %v1794, %v844
    %v1813 = vmul.f32 %v1806, %v848
    %v1814 = vmul.f32 %v1803, %v836
    %v1815 = vmul.f32 %v1799, %v840
    %v1816 = vmul.f32 %v1795, %v844
    %v1817 = vmul.f32 %v1807, %v848
    %v1818 = vmul.f32 %v1804, %v836
    %v1819 = vmul.f32 %v1800, %v840
    %v1820 = vmul.f32 %v1796, %v844
    %v1821 = vmul.f32 %v1808, %v848
    %v1822 = vmul.f32 %v1805, %v836
    %v1823 = vmul.f32 %v1801, %v840
    %v1824 = vmul.f32 %v1797, %v844
    %v1825 = vmul.f32 %v1809, %v848
    %1826 = vrot.lane.b32.xlu0 %v1362, 111
    %v1827 = vpop.permute.xlu0 %1826
    %1828 = vrot.lane.b32.xlu0 %v1366, 111
    %v1829 = vpop.permute.xlu0 %1828
    %1830 = vrot.lane.b32.xlu0 %v1370, 111
    %v1831 = vpop.permute.xlu0 %1830
    %1832 = vrot.lane.b32.xlu0 %v1374, 111
    %v1833 = vpop.permute.xlu0 %1832
    %1834 = vrot.lane.b32.xlu0 %v1363, 111
    %v1835 = vpop.permute.xlu0 %1834
    %1836 = vrot.lane.b32.xlu0 %v1367, 111
    %v1837 = vpop.permute.xlu0 %1836
    %1838 = vrot.lane.b32.xlu0 %v1371, 111
    %v1839 = vpop.permute.xlu0 %1838
    %1840 = vrot.lane.b32.xlu0 %v1375, 111
    %v1841 = vpop.permute.xlu0 %1840
    %1842 = vrot.lane.b32.xlu0 %v1364, 111
    %v1843 = vpop.permute.xlu0 %1842
    %1844 = vrot.lane.b32.xlu0 %v1368, 111
    %v1845 = vpop.permute.xlu0 %1844
    %1846 = vrot.lane.b32.xlu0 %v1372, 111
    %v1847 = vpop.permute.xlu0 %1846
    %1848 = vrot.lane.b32.xlu0 %v1376, 111
    %v1849 = vpop.permute.xlu0 %1848
    %1850 = vrot.lane.b32.xlu0 %v1365, 111
    %v1851 = vpop.permute.xlu0 %1850
    %1852 = vrot.lane.b32.xlu0 %v1369, 111
    %v1853 = vpop.permute.xlu0 %1852
    %1854 = vrot.lane.b32.xlu0 %v1373, 111
    %v1855 = vpop.permute.xlu0 %1854
    %1856 = vrot.lane.b32.xlu0 %v1377, 111
    %v1857 = vpop.permute.xlu0 %1856
    %v1858 = vsel %vm901, %v1843, %v1851
    %v1859 = vsel %vm901, %v1845, %v1853
    %v1860 = vsel %vm901, %v1847, %v1855
    %v1861 = vsel %vm901, %v1849, %v1857
    %v1862 = vsel %vm901, %v1835, %v1843
    %v1863 = vsel %vm901, %v1837, %v1845
    %v1864 = vsel %vm901, %v1839, %v1847
    %v1865 = vsel %vm901, %v1841, %v1849
    %v1866 = vsel %vm901, %v1827, %v1835
    %v1867 = vsel %vm901, %v1829, %v1837
    %v1868 = vsel %vm901, %v1831, %v1839
    %v1869 = vsel %vm901, %v1833, %v1841
    %v1870 = vsel %vm901, %v1851, %v1827
    %v1871 = vsel %vm901, %v1853, %v1829
    %v1872 = vsel %vm901, %v1855, %v1831
    %v1873 = vsel %vm901, %v1857, %v1833
    %v1874 = vmul.f32 %v1866, %v924
    %v1875 = vmul.f32 %v1862, %v928
    %v1876 = vmul.f32 %v1858, %v932
    %v1877 = vmul.f32 %v1870, %v936
    %v1878 = vmul.f32 %v1867, %v924
    %v1879 = vmul.f32 %v1863, %v928
    %v1880 = vmul.f32 %v1859, %v932
    %v1881 = vmul.f32 %v1871, %v936
    %v1882 = vmul.f32 %v1868, %v924
    %v1883 = vmul.f32 %v1864, %v928
    %v1884 = vmul.f32 %v1860, %v932
    %v1885 = vmul.f32 %v1872, %v936
    %v1886 = vmul.f32 %v1869, %v924
    %v1887 = vmul.f32 %v1865, %v928
    %v1888 = vmul.f32 %v1861, %v932
    %v1889 = vmul.f32 %v1873, %v936
    %v1890 = vld [vmem:[#allocation10] sm:$0xff]
    %v1891 = vld [vmem:[#allocation10 + $0x8] sm:$0xff]
    %v1892 = vld [vmem:[#allocation10 + $0x10] sm:$0xff]
    %v1893 = vld [vmem:[#allocation10 + $0x18] sm:$0xff]
    %v1894 = vld [vmem:[#allocation10 + $0x20] sm:$0xff]
    %v1895 = vld [vmem:[#allocation10 + $0x28] sm:$0xff]
    %v1896 = vld [vmem:[#allocation10 + $0x30] sm:$0xff]
    %v1897 = vld [vmem:[#allocation10 + $0x38] sm:$0xff]
    %v1898 = vld [vmem:[#allocation10 + $0x40] sm:$0xff]
    %v1899 = vld [vmem:[#allocation10 + $0x48] sm:$0xff]
    %v1900 = vld [vmem:[#allocation10 + $0x50] sm:$0xff]
    %v1901 = vld [vmem:[#allocation10 + $0x58] sm:$0xff]
    %v1902 = vld [vmem:[#allocation11] sm:$0xff]
    %v1903 = vld [vmem:[#allocation11 + $0x8] sm:$0xff]
    %v1904 = vld [vmem:[#allocation11 + $0x10] sm:$0xff]
    %v1905 = vld [vmem:[#allocation11 + $0x18] sm:$0xff]
    %1907 = vset.pattern.permute.xlu0 0
    %1908 = vperm.xlu0 %1907, %v1902
    %v1909 = vpop.permute.xlu0 %1908
    %1912 = vset.pattern.permute.xlu0 0
    %1913 = vperm.xlu0 %1912, %v1903
    %v1914 = vpop.permute.xlu0 %1913
    %1917 = vset.pattern.permute.xlu0 0
    %1918 = vperm.xlu0 %1917, %v1904
    %v1919 = vpop.permute.xlu0 %1918
    %1922 = vset.pattern.permute.xlu0 0
    %1923 = vperm.xlu0 %1922, %v1905
    %v1924 = vpop.permute.xlu0 %1923
    %v1927 = vsel %vm993, %v1892, 0
    %v1930 = vsel %vm993, %v1895, 0
    %v1933 = vsel %vm993, %v1898, 0
    %v1936 = vsel %vm993, %v1901, 0
    %1938 = vmatprep.subr.mxu0 %v1427
    %1939 = vmatpush1.msra.mxu0 %v1426
    %1940 = vmatprep.subr.mxu0 %v1431
    %1941 = vmatpush1.msra.mxu0 %v1430
    %1942 = vmatprep.subr.mxu0 %v1435
    %1943 = vmatpush1.msra.mxu0 %v1434
    %1944 = vmatprep.subr.mxu0 %v1439
    %1945 = vmatpush1.msra.mxu0 %v1438
    %1946 = vmatprep.subr.mxu0 %v1491
    %1947 = vmatpush1.msra.mxu0 %v1490
    %1948 = vmatprep.subr.mxu0 %v1495
    %1949 = vmatpush1.msra.mxu0 %v1494
    %1950 = vmatprep.subr.mxu0 %v1499
    %1951 = vmatpush1.msra.mxu0 %v1498
    %1952 = vmatprep.subr.mxu0 %v1503
    %1953 = vmatpush1.msra.mxu0 %v1502
    %1954 = vmatprep.subr.mxu0 %v1555
    %1955 = vmatpush1.msra.mxu0 %v1554
    %1956 = vmatprep.subr.mxu0 %v1559
    %1957 = vmatpush1.msra.mxu0 %v1558
    %1958 = vmatprep.subr.mxu0 %v1563
    %1959 = vmatpush1.msra.mxu0 %v1562
    %1960 = vmatprep.subr.mxu0 %v1567
    %1961 = vmatpush1.msra.mxu0 %v1566
    %1962 = vmatprep.subr.mxu0 %v1619
    %1963 = vmatpush1.msra.mxu0 %v1618
    %1964 = vmatprep.subr.mxu0 %v1623
    %1965 = vmatpush1.msra.mxu0 %v1622
    %1966 = vmatprep.subr.mxu0 %v1627
    %1967 = vmatpush1.msra.mxu0 %v1626
    %1968 = vmatprep.subr.mxu0 %v1631
    %1969 = vmatpush1.msra.mxu0 %v1630
    %1970 = vmatprep.subr.mxu0 %v1363
    %1971 = vmatpush1.msra.mxu0 %v1362
    %1972 = vmatprep.subr.mxu0 %v1367
    %1973 = vmatpush1.msra.mxu0 %v1366
    %1974 = vmatprep.subr.mxu0 %v1371
    %1975 = vmatpush1.msra.mxu0 %v1370
    %1976 = vmatprep.subr.mxu0 %v1375
    %1977 = vmatpush1.msra.mxu0 %v1374
    %1978 = vmatprep.subr.mxu0 %v1683
    %1979 = vmatpush1.msra.mxu0 %v1682
    %1980 = vmatprep.subr.mxu0 %v1687
    %1981 = vmatpush1.msra.mxu0 %v1686
    %1982 = vmatprep.subr.mxu0 %v1691
    %1983 = vmatpush1.msra.mxu0 %v1690
    %1984 = vmatprep.subr.mxu0 %v1695
    %1985 = vmatpush1.msra.mxu0 %v1694
    %1986 = vmatprep.subr.mxu0 %v1747
    %1987 = vmatpush1.msra.mxu0 %v1746
    %1988 = vmatprep.subr.mxu0 %v1751
    %1989 = vmatpush1.msra.mxu0 %v1750
    %1990 = vmatprep.subr.mxu0 %v1755
    %1991 = vmatpush1.msra.mxu0 %v1754
    %1992 = vmatprep.subr.mxu0 %v1759
    %1993 = vmatpush1.msra.mxu0 %v1758
    %1994 = vmatprep.subr.mxu0 %v1811
    %1995 = vmatpush1.msra.mxu0 %v1810
    %1996 = vmatprep.subr.mxu0 %v1815
    %1997 = vmatpush1.msra.mxu0 %v1814
    %1998 = vmatprep.subr.mxu0 %v1819
    %1999 = vmatpush1.msra.mxu0 %v1818
    %2000 = vmatprep.subr.mxu0 %v1823
    %2001 = vmatpush1.msra.mxu0 %v1822
    %2002 = vmatprep.mubr.f32.mxu0 %v1891
    %2003 = vmatmul.mubr.f32.gmra.mrb[0].mxu0 %v1890
    %v2004 = vpop.f32.mrb[0].mxu0
    %v2005 = vadd.f32 %v1909, %v2004
    %v2006 = vpop.f32.mrb[0].mxu0
    %v2007 = vadd.f32 %v1909, %v2006
    %2008 = vmatprep.mubr.f32.mxu0 %v1894
    %2009 = vmatmul.mubr.f32.gmra.mrb[0].mxu0 %v1893
    %v2010 = vpop.f32.mrb[0].mxu0
    %v2011 = vadd.f32 %v1914, %v2010
    %v2012 = vpop.f32.mrb[0].mxu0
    %v2013 = vadd.f32 %v1914, %v2012
    %2014 = vmatprep.mubr.f32.mxu0 %v1897
    %2015 = vmatmul.mubr.f32.gmra.mrb[0].mxu0 %v1896
    %v2016 = vpop.f32.mrb[0].mxu0
    %v2017 = vadd.f32 %v1919, %v2016
    %v2018 = vpop.f32.mrb[0].mxu0
    %v2019 = vadd.f32 %v1919, %v2018
    %2020 = vmatprep.mubr.f32.mxu0 %v1900
    %2021 = vmatmul.mubr.f32.gmra.mrb[0].mxu0 %v1899
    %v2022 = vpop.f32.mrb[0].mxu0
    %v2023 = vadd.f32 %v1924, %v2022
    %v2024 = vpop.f32.mrb[0].mxu0
    %v2025 = vadd.f32 %v1924, %v2024
    %2026 = vdwg.mxu0
    %2027 = vmatprep.subr.mxu0 %v1875
    %2028 = vmatpush1.msra.mxu0 %v1874
    %2029 = vmatprep.subr.mxu0 %v1879
    %2030 = vmatpush1.msra.mxu0 %v1878
    %2031 = vmatprep.subr.mxu0 %v1883
    %2032 = vmatpush1.msra.mxu0 %v1882
    %2033 = vmatprep.subr.mxu0 %v1887
    %2034 = vmatpush1.msra.mxu0 %v1886
    %2035 = vmatprep.subr.mxu0 0.0
    %2036 = vmatpush1.msra.mxu0 0.0
    %2037 = vmatprep.subr.mxu0 0.0
    %2038 = vmatpush1.msra.mxu0 0.0
    %2039 = vmatprep.subr.mxu0 0.0
    %2040 = vmatpush1.msra.mxu0 0.0
    %2041 = vmatprep.subr.mxu0 0.0
    %2042 = vmatpush1.msra.mxu0 0.0
    %2043 = vmatprep.subr.mxu0 0.0
    %2044 = vmatpush1.msra.mxu0 0.0
    %2045 = vmatprep.subr.mxu0 0.0
    %2046 = vmatpush1.msra.mxu0 0.0
    %2047 = vmatprep.subr.mxu0 0.0
    %2048 = vmatpush1.msra.mxu0 0.0
    %2049 = vmatprep.subr.mxu0 0.0
    %2050 = vmatpush1.msra.mxu0 0.0
    %2051 = vmatprep.subr.mxu0 0.0
    %2052 = vmatpush1.msra.mxu0 0.0
    %2053 = vmatprep.subr.mxu0 0.0
    %2054 = vmatpush1.msra.mxu0 0.0
    %2055 = vmatprep.subr.mxu0 0.0
    %2056 = vmatpush1.msra.mxu0 0.0
    %2057 = vmatprep.subr.mxu0 0.0
    %2058 = vmatpush1.msra.mxu0 0.0
    %2059 = vmatprep.subr.mxu0 0.0
    %2060 = vmatpush1.msra.mxu0 0.0
    %2061 = vmatprep.subr.mxu0 0.0
    %2062 = vmatpush1.msra.mxu0 0.0
    %2063 = vmatprep.subr.mxu0 0.0
    %2064 = vmatpush1.msra.mxu0 0.0
    %2065 = vmatprep.subr.mxu0 0.0
    %2066 = vmatpush1.msra.mxu0 0.0
    %2067 = vmatprep.subr.mxu0 0.0
    %2068 = vmatpush1.msra.mxu0 0.0
    %2069 = vmatprep.subr.mxu0 0.0
    %2070 = vmatpush1.msra.mxu0 0.0
    %2071 = vmatprep.subr.mxu0 0.0
    %2072 = vmatpush1.msra.mxu0 0.0
    %2073 = vmatprep.subr.mxu0 0.0
    %2074 = vmatpush1.msra.mxu0 0.0
    %2075 = vmatprep.subr.mxu0 0.0
    %2076 = vmatpush1.msra.mxu0 0.0
    %2077 = vmatprep.subr.mxu0 0.0
    %2078 = vmatpush1.msra.mxu0 0.0
    %2079 = vmatprep.subr.mxu0 0.0
    %2080 = vmatpush1.msra.mxu0 0.0
    %2081 = vmatprep.subr.mxu0 0.0
    %2082 = vmatpush1.msra.mxu0 0.0
    %2083 = vmatprep.subr.mxu0 0.0
    %2084 = vmatpush1.msra.mxu0 0.0
    %2085 = vmatprep.subr.mxu0 0.0
    %2086 = vmatpush1.msra.mxu0 0.0
    %2087 = vmatprep.subr.mxu0 0.0
    %2088 = vmatpush1.msra.mxu0 0.0
    %2089 = vmatprep.subr.mxu0 0.0
    %2090 = vmatpush1.msra.mxu0 0.0
    %2091 = vmatprep.mubr.f32.mxu0 0.0
    %2092 = vmatmul.mubr.f32.gmra.mrb[0].mxu0 %v1927
    %v2093 = vpop.f32.mrb[0].mxu0
    %v2094 = vadd.f32 %v2005, %v2093
    %v2095 = vpop.f32.mrb[0].mxu0
    %v2096 = vadd.f32 %v2007, %v2095
    %2097 = vmatprep.mubr.f32.mxu0 0.0
    %2098 = vmatmul.mubr.f32.gmra.mrb[0].mxu0 %v1930
    %v2099 = vpop.f32.mrb[0].mxu0
    %v2100 = vadd.f32 %v2011, %v2099
    %v2101 = vpop.f32.mrb[0].mxu0
    %v2102 = vadd.f32 %v2013, %v2101
    %2103 = vmatprep.mubr.f32.mxu0 0.0
    %2104 = vmatmul.mubr.f32.gmra.mrb[0].mxu0 %v1933
    %v2105 = vpop.f32.mrb[0].mxu0
    %v2106 = vadd.f32 %v2017, %v2105
    %v2107 = vpop.f32.mrb[0].mxu0
    %v2108 = vadd.f32 %v2019, %v2107
    %2109 = vmatprep.mubr.f32.mxu0 0.0
    %2110 = vmatmul.mubr.f32.gmra.mrb[0].mxu0 %v1936
    %v2111 = vpop.f32.mrb[0].mxu0
    %v2112 = vadd.f32 %v2023, %v2111
    %v2113 = vpop.f32.mrb[0].mxu0
    %v2114 = vadd.f32 %v2025, %v2113
    %2115 = vdwg.mxu0
    %2116 = vmatprep.subr.mxu0 %v1429
    %2117 = vmatpush1.msra.mxu0 %v1428
    %2118 = vmatprep.subr.mxu0 %v1433
    %2119 = vmatpush1.msra.mxu0 %v1432
    %2120 = vmatprep.subr.mxu0 %v1437
    %2121 = vmatpush1.msra.mxu0 %v1436
    %2122 = vmatprep.subr.mxu0 %v1441
    %2123 = vmatpush1.msra.mxu0 %v1440
    %2124 = vmatprep.subr.mxu0 %v1493
    %2125 = vmatpush1.msra.mxu0 %v1492
    %2126 = vmatprep.subr.mxu0 %v1497
    %2127 = vmatpush1.msra.mxu0 %v1496
    %2128 = vmatprep.subr.mxu0 %v1501
    %2129 = vmatpush1.msra.mxu0 %v1500
    %2130 = vmatprep.subr.mxu0 %v1505
    %2131 = vmatpush1.msra.mxu0 %v1504
    %2132 = vmatprep.subr.mxu0 %v1557
    %2133 = vmatpush1.msra.mxu0 %v1556
    %2134 = vmatprep.subr.mxu0 %v1561
    %2135 = vmatpush1.msra.mxu0 %v1560
    %2136 = vmatprep.subr.mxu0 %v1565
    %2137 = vmatpush1.msra.mxu0 %v1564
    %2138 = vmatprep.subr.mxu0 %v1569
    %2139 = vmatpush1.msra.mxu0 %v1568
    %2140 = vmatprep.subr.mxu0 %v1621
    %2141 = vmatpush1.msra.mxu0 %v1620
    %2142 = vmatprep.subr.mxu0 %v1625
    %2143 = vmatpush1.msra.mxu0 %v1624
    %2144 = vmatprep.subr.mxu0 %v1629
    %2145 = vmatpush1.msra.mxu0 %v1628
    %2146 = vmatprep.subr.mxu0 %v1633
    %2147 = vmatpush1.msra.mxu0 %v1632
    %2148 = vmatprep.subr.mxu0 %v1365
    %2149 = vmatpush1.msra.mxu0 %v1364
    %2150 = vmatprep.subr.mxu0 %v1369
    %2151 = vmatpush1.msra.mxu0 %v1368
    %2152 = vmatprep.subr.mxu0 %v1373
    %2153 = vmatpush1.msra.mxu0 %v1372
    %2154 = vmatprep.subr.mxu0 %v1377
    %2155 = vmatpush1.msra.mxu0 %v1376
    %2156 = vmatprep.subr.mxu0 %v1685
    %2157 = vmatpush1.msra.mxu0 %v1684
    %2158 = vmatprep.subr.mxu0 %v1689
    %2159 = vmatpush1.msra.mxu0 %v1688
    %2160 = vmatprep.subr.mxu0 %v1693
    %2161 = vmatpush1.msra.mxu0 %v1692
    %2162 = vmatprep.subr.mxu0 %v1697
    %2163 = vmatpush1.msra.mxu0 %v1696
    %2164 = vmatprep.subr.mxu0 %v1749
    %2165 = vmatpush1.msra.mxu0 %v1748
    %2166 = vmatprep.subr.mxu0 %v1753
    %2167 = vmatpush1.msra.mxu0 %v1752
    %2168 = vmatprep.subr.mxu0 %v1757
    %2169 = vmatpush1.msra.mxu0 %v1756
    %2170 = vmatprep.subr.mxu0 %v1761
    %2171 = vmatpush1.msra.mxu0 %v1760
    %2172 = vmatprep.subr.mxu0 %v1813
    %2173 = vmatpush1.msra.mxu0 %v1812
    %2174 = vmatprep.subr.mxu0 %v1817
    %2175 = vmatpush1.msra.mxu0 %v1816
    %2176 = vmatprep.subr.mxu0 %v1821
    %2177 = vmatpush1.msra.mxu0 %v1820
    %2178 = vmatprep.subr.mxu0 %v1825
    %2179 = vmatpush1.msra.mxu0 %v1824
    %2180 = vmatprep.mubr.f32.mxu0 %v1891
    %2181 = vmatmul.mubr.f32.gmra.mrb[0].mxu0 %v1890
    %v2182 = vpop.f32.mrb[0].mxu0
    %v2183 = vadd.f32 %v1909, %v2182
    %v2184 = vpop.f32.mrb[0].mxu0
    %v2185 = vadd.f32 %v1909, %v2184
    %2186 = vmatprep.mubr.f32.mxu0 %v1894
    %2187 = vmatmul.mubr.f32.gmra.mrb[0].mxu0 %v1893
    %v2188 = vpop.f32.mrb[0].mxu0
    %v2189 = vadd.f32 %v1914, %v2188
    %v2190 = vpop.f32.mrb[0].mxu0
    %v2191 = vadd.f32 %v1914, %v2190
    %2192 = vmatprep.mubr.f32.mxu0 %v1897
    %2193 = vmatmul.mubr.f32.gmra.mrb[0].mxu0 %v1896
    %v2194 = vpop.f32.mrb[0].mxu0
    %v2195 = vadd.f32 %v1919, %v2194
    %v2196 = vpop.f32.mrb[0].mxu0
    %v2197 = vadd.f32 %v1919, %v2196
    %2198 = vmatprep.mubr.f32.mxu0 %v1900
    %2199 = vmatmul.mubr.f32.gmra.mrb[0].mxu0 %v1899
    %v2200 = vpop.f32.mrb[0].mxu0
    %v2201 = vadd.f32 %v1924, %v2200
    %v2202 = vpop.f32.mrb[0].mxu0
    %v2203 = vadd.f32 %v1924, %v2202
    %2204 = vdwg.mxu0
    %2205 = vmatprep.subr.mxu0 %v1877
    %2206 = vmatpush1.msra.mxu0 %v1876
    %2207 = vmatprep.subr.mxu0 %v1881
    %2208 = vmatpush1.msra.mxu0 %v1880
    %2209 = vmatprep.subr.mxu0 %v1885
    %2210 = vmatpush1.msra.mxu0 %v1884
    %2211 = vmatprep.subr.mxu0 %v1889
    %2212 = vmatpush1.msra.mxu0 %v1888
    %2213 = vmatprep.subr.mxu0 0.0
    %2214 = vmatpush1.msra.mxu0 0.0
    %2215 = vmatprep.subr.mxu0 0.0
    %2216 = vmatpush1.msra.mxu0 0.0
    %2217 = vmatprep.subr.mxu0 0.0
    %2218 = vmatpush1.msra.mxu0 0.0
    %2219 = vmatprep.subr.mxu0 0.0
    %2220 = vmatpush1.msra.mxu0 0.0
    %2221 = vmatprep.subr.mxu0 0.0
    %2222 = vmatpush1.msra.mxu0 0.0
    %2223 = vmatprep.subr.mxu0 0.0
    %2224 = vmatpush1.msra.mxu0 0.0
    %2225 = vmatprep.subr.mxu0 0.0
    %2226 = vmatpush1.msra.mxu0 0.0
    %2227 = vmatprep.subr.mxu0 0.0
    %2228 = vmatpush1.msra.mxu0 0.0
    %2229 = vmatprep.subr.mxu0 0.0
    %2230 = vmatpush1.msra.mxu0 0.0
    %2231 = vmatprep.subr.mxu0 0.0
    %2232 = vmatpush1.msra.mxu0 0.0
    %2233 = vmatprep.subr.mxu0 0.0
    %2234 = vmatpush1.msra.mxu0 0.0
    %2235 = vmatprep.subr.mxu0 0.0
    %2236 = vmatpush1.msra.mxu0 0.0
    %2237 = vmatprep.subr.mxu0 0.0
    %2238 = vmatpush1.msra.mxu0 0.0
    %2239 = vmatprep.subr.mxu0 0.0
    %2240 = vmatpush1.msra.mxu0 0.0
    %2241 = vmatprep.subr.mxu0 0.0
    %2242 = vmatpush1.msra.mxu0 0.0
    %2243 = vmatprep.subr.mxu0 0.0
    %2244 = vmatpush1.msra.mxu0 0.0
    %2245 = vmatprep.subr.mxu0 0.0
    %2246 = vmatpush1.msra.mxu0 0.0
    %2247 = vmatprep.subr.mxu0 0.0
    %2248 = vmatpush1.msra.mxu0 0.0
    %2249 = vmatprep.subr.mxu0 0.0
    %2250 = vmatpush1.msra.mxu0 0.0
    %2251 = vmatprep.subr.mxu0 0.0
    %2252 = vmatpush1.msra.mxu0 0.0
    %2253 = vmatprep.subr.mxu0 0.0
    %2254 = vmatpush1.msra.mxu0 0.0
    %2255 = vmatprep.subr.mxu0 0.0
    %2256 = vmatpush1.msra.mxu0 0.0
    %2257 = vmatprep.subr.mxu0 0.0
    %2258 = vmatpush1.msra.mxu0 0.0
    %2259 = vmatprep.subr.mxu0 0.0
    %2260 = vmatpush1.msra.mxu0 0.0
    %2261 = vmatprep.subr.mxu0 0.0
    %2262 = vmatpush1.msra.mxu0 0.0
    %2263 = vmatprep.subr.mxu0 0.0
    %2264 = vmatpush1.msra.mxu0 0.0
    %2265 = vmatprep.subr.mxu0 0.0
    %2266 = vmatpush1.msra.mxu0 0.0
    %2267 = vmatprep.subr.mxu0 0.0
    %2268 = vmatpush1.msra.mxu0 0.0
    %2269 = vmatprep.mubr.f32.mxu0 0.0
    %2270 = vmatmul.mubr.f32.gmra.mrb[0].mxu0 %v1927
    %v2271 = vpop.f32.mrb[0].mxu0
    %v2272 = vadd.f32 %v2183, %v2271
    %v2273 = vpop.f32.mrb[0].mxu0
    %v2274 = vadd.f32 %v2185, %v2273
    %2275 = vmatprep.mubr.f32.mxu0 0.0
    %2276 = vmatmul.mubr.f32.gmra.mrb[0].mxu0 %v1930
    %v2277 = vpop.f32.mrb[0].mxu0
    %v2278 = vadd.f32 %v2189, %v2277
    %v2279 = vpop.f32.mrb[0].mxu0
    %v2280 = vadd.f32 %v2191, %v2279
    %2281 = vmatprep.mubr.f32.mxu0 0.0
    %2282 = vmatmul.mubr.f32.gmra.mrb[0].mxu0 %v1933
    %v2283 = vpop.f32.mrb[0].mxu0
    %v2284 = vadd.f32 %v2195, %v2283
    %v2285 = vpop.f32.mrb[0].mxu0
    %v2286 = vadd.f32 %v2197, %v2285
    %2287 = vmatprep.mubr.f32.mxu0 0.0
    %2288 = vmatmul.mubr.f32.gmra.mrb[0].mxu0 %v1936
    %v2289 = vpop.f32.mrb[0].mxu0
    %v2290 = vadd.f32 %v2201, %v2289
    %v2291 = vpop.f32.mrb[0].mxu0
    %v2292 = vadd.f32 %v2203, %v2291
    %2293 = vdwg.mxu0
    %v2294 = vmul.f32 %v2094, 0.1
    %v2295 = vmul.f32 %v2096, 0.1
    %v2296 = vmul.f32 %v2272, 0.1
    %v2297 = vmul.f32 %v2274, 0.1
    %v2298 = vmul.f32 %v2100, 0.1
    %v2299 = vmul.f32 %v2102, 0.1
    %v2300 = vmul.f32 %v2278, 0.1
    %v2301 = vmul.f32 %v2280, 0.1
    %v2302 = vmul.f32 %v2106, 0.1
    %v2303 = vmul.f32 %v2108, 0.1
    %v2304 = vmul.f32 %v2284, 0.1
    %v2305 = vmul.f32 %v2286, 0.1
    %v2306 = vmul.f32 %v2112, 0.1
    %v2307 = vmul.f32 %v2114, 0.1
    %v2308 = vmul.f32 %v2290, 0.1
    %v2309 = vmul.f32 %v2292, 0.1
    %v2310 = vadd.f32 %v2294, %v236
    %v2311 = vadd.f32 %v2295, %v237
    %v2312 = vadd.f32 %v2296, %v238
    %v2313 = vadd.f32 %v2297, %v239
    %v2314 = vadd.f32 %v2298, %v240
    %v2315 = vadd.f32 %v2299, %v241
    %v2316 = vadd.f32 %v2300, %v242
    %v2317 = vadd.f32 %v2301, %v243
    %v2318 = vadd.f32 %v2302, %v244
    %v2319 = vadd.f32 %v2303, %v245
    %v2320 = vadd.f32 %v2304, %v246
    %v2321 = vadd.f32 %v2305, %v247
    %v2322 = vadd.f32 %v2306, %v248
    %v2323 = vadd.f32 %v2307, %v249
    %v2324 = vadd.f32 %v2308, %v250
    %v2325 = vadd.f32 %v2309, %v251
    %v2326 = vld [vmem:[#allocation13] sm:$0xff]
    %v2327 = vld [vmem:[#allocation13 + $0x8] sm:$0xff]
    %v2328 = vld [vmem:[#allocation13 + $0x10] sm:$0xff]
    %v2329 = vld [vmem:[#allocation13 + $0x18] sm:$0xff]
    %v2330 = vld [vmem:[#allocation14] sm:$0xff]
    %v2331 = vld [vmem:[#allocation14 + $0x8] sm:$0xff]
    %v2332 = vld [vmem:[#allocation14 + $0x10] sm:$0xff]
    %v2333 = vld [vmem:[#allocation14 + $0x18] sm:$0xff]
    %2335 = vset.pattern.permute.xlu0 0
    %2336 = vperm.xlu0 %2335, %v2330
    %v2337 = vpop.permute.xlu0 %2336
    %2340 = vset.pattern.permute.xlu0 0
    %2341 = vperm.xlu0 %2340, %v2331
    %v2342 = vpop.permute.xlu0 %2341
    %2345 = vset.pattern.permute.xlu0 0
    %2346 = vperm.xlu0 %2345, %v2332
    %v2347 = vpop.permute.xlu0 %2346
    %2350 = vset.pattern.permute.xlu0 0
    %2351 = vperm.xlu0 %2350, %v2333
    %v2352 = vpop.permute.xlu0 %2351
    %v2355 = vsel %vm993, %v2326, 0
    %v2358 = vsel %vm993, %v2327, 0
    %v2361 = vsel %vm993, %v2328, 0
    %v2364 = vsel %vm993, %v2329, 0
    %2366 = vmatprep.subr.mxu0 %v2311
    %2367 = vmatpush1.msra.mxu0 %v2310
    %2368 = vmatprep.subr.mxu0 %v2315
    %2369 = vmatpush1.msra.mxu0 %v2314
    %2370 = vmatprep.subr.mxu0 %v2319
    %2371 = vmatpush1.msra.mxu0 %v2318
    %2372 = vmatprep.subr.mxu0 %v2323
    %2373 = vmatpush1.msra.mxu0 %v2322
    %2374 = vmatprep.subr.mxu0 0.0
    %2375 = vmatpush1.msra.mxu0 0.0
    %2376 = vmatprep.subr.mxu0 0.0
    %2377 = vmatpush1.msra.mxu0 0.0
    %2378 = vmatprep.subr.mxu0 0.0
    %2379 = vmatpush1.msra.mxu0 0.0
    %2380 = vmatprep.subr.mxu0 0.0
    %2381 = vmatpush1.msra.mxu0 0.0
    %2382 = vmatprep.subr.mxu0 0.0
    %2383 = vmatpush1.msra.mxu0 0.0
    %2384 = vmatprep.subr.mxu0 0.0
    %2385 = vmatpush1.msra.mxu0 0.0
    %2386 = vmatprep.subr.mxu0 0.0
    %2387 = vmatpush1.msra.mxu0 0.0
    %2388 = vmatprep.subr.mxu0 0.0
    %2389 = vmatpush1.msra.mxu0 0.0
    %2390 = vmatprep.subr.mxu0 0.0
    %2391 = vmatpush1.msra.mxu0 0.0
    %2392 = vmatprep.subr.mxu0 0.0
    %2393 = vmatpush1.msra.mxu0 0.0
    %2394 = vmatprep.subr.mxu0 0.0
    %2395 = vmatpush1.msra.mxu0 0.0
    %2396 = vmatprep.subr.mxu0 0.0
    %2397 = vmatpush1.msra.mxu0 0.0
    %2398 = vmatprep.subr.mxu0 0.0
    %2399 = vmatpush1.msra.mxu0 0.0
    %2400 = vmatprep.subr.mxu0 0.0
    %2401 = vmatpush1.msra.mxu0 0.0
    %2402 = vmatprep.subr.mxu0 0.0
    %2403 = vmatpush1.msra.mxu0 0.0
    %2404 = vmatprep.subr.mxu0 0.0
    %2405 = vmatpush1.msra.mxu0 0.0
    %2406 = vmatprep.subr.mxu0 0.0
    %2407 = vmatpush1.msra.mxu0 0.0
    %2408 = vmatprep.subr.mxu0 0.0
    %2409 = vmatpush1.msra.mxu0 0.0
    %2410 = vmatprep.subr.mxu0 0.0
    %2411 = vmatpush1.msra.mxu0 0.0
    %2412 = vmatprep.subr.mxu0 0.0
    %2413 = vmatpush1.msra.mxu0 0.0
    %2414 = vmatprep.subr.mxu0 0.0
    %2415 = vmatpush1.msra.mxu0 0.0
    %2416 = vmatprep.subr.mxu0 0.0
    %2417 = vmatpush1.msra.mxu0 0.0
    %2418 = vmatprep.subr.mxu0 0.0
    %2419 = vmatpush1.msra.mxu0 0.0
    %2420 = vmatprep.subr.mxu0 0.0
    %2421 = vmatpush1.msra.mxu0 0.0
    %2422 = vmatprep.subr.mxu0 0.0
    %2423 = vmatpush1.msra.mxu0 0.0
    %2424 = vmatprep.subr.mxu0 0.0
    %2425 = vmatpush1.msra.mxu0 0.0
    %2426 = vmatprep.subr.mxu0 0.0
    %2427 = vmatpush1.msra.mxu0 0.0
    %2428 = vmatprep.subr.mxu0 0.0
    %2429 = vmatpush1.msra.mxu0 0.0
    %2430 = vmatprep.mubr.f32.mxu0 0.0
    %2431 = vmatmul.mubr.f32.gmra.mrb[0].mxu0 %v2355
    %v2432 = vpop.f32.mrb[0].mxu0
    %v2433 = vadd.f32 %v2337, %v2432
    %v2434 = vpop.f32.mrb[0].mxu0
    %v2435 = vadd.f32 %v2337, %v2434
    %2436 = vmatprep.mubr.f32.mxu0 0.0
    %2437 = vmatmul.mubr.f32.gmra.mrb[0].mxu0 %v2358
    %v2438 = vpop.f32.mrb[0].mxu0
    %v2439 = vadd.f32 %v2342, %v2438
    %v2440 = vpop.f32.mrb[0].mxu0
    %v2441 = vadd.f32 %v2342, %v2440
    %2442 = vmatprep.mubr.f32.mxu0 0.0
    %2443 = vmatmul.mubr.f32.gmra.mrb[0].mxu0 %v2361
    %v2444 = vpop.f32.mrb[0].mxu0
    %v2445 = vadd.f32 %v2347, %v2444
    %v2446 = vpop.f32.mrb[0].mxu0
    %v2447 = vadd.f32 %v2347, %v2446
    %2448 = vmatprep.mubr.f32.mxu0 0.0
    %2449 = vmatmul.mubr.f32.gmra.mrb[0].mxu0 %v2364
    %v2450 = vpop.f32.mrb[0].mxu0
    %v2451 = vadd.f32 %v2352, %v2450
    %v2452 = vpop.f32.mrb[0].mxu0
    %v2453 = vadd.f32 %v2352, %v2452
    %2454 = vdwg.mxu0
    %2455 = vmatprep.subr.mxu0 %v2313
    %2456 = vmatpush1.msra.mxu0 %v2312
    %2457 = vmatprep.subr.mxu0 %v2317
    %2458 = vmatpush1.msra.mxu0 %v2316
    %2459 = vmatprep.subr.mxu0 %v2321
    %2460 = vmatpush1.msra.mxu0 %v2320
    %2461 = vmatprep.subr.mxu0 %v2325
    %2462 = vmatpush1.msra.mxu0 %v2324
    %2463 = vmatprep.subr.mxu0 0.0
    %2464 = vmatpush1.msra.mxu0 0.0
    %2465 = vmatprep.subr.mxu0 0.0
    %2466 = vmatpush1.msra.mxu0 0.0
    %2467 = vmatprep.subr.mxu0 0.0
    %2468 = vmatpush1.msra.mxu0 0.0
    %2469 = vmatprep.subr.mxu0 0.0
    %2470 = vmatpush1.msra.mxu0 0.0
    %2471 = vmatprep.subr.mxu0 0.0
    %2472 = vmatpush1.msra.mxu0 0.0
    %2473 = vmatprep.subr.mxu0 0.0
    %2474 = vmatpush1.msra.mxu0 0.0
    %2475 = vmatprep.subr.mxu0 0.0
    %2476 = vmatpush1.msra.mxu0 0.0
    %2477 = vmatprep.subr.mxu0 0.0
    %2478 = vmatpush1.msra.mxu0 0.0
    %2479 = vmatprep.subr.mxu0 0.0
    %2480 = vmatpush1.msra.mxu0 0.0
    %2481 = vmatprep.subr.mxu0 0.0
    %2482 = vmatpush1.msra.mxu0 0.0
    %2483 = vmatprep.subr.mxu0 0.0
    %2484 = vmatpush1.msra.mxu0 0.0
    %2485 = vmatprep.subr.mxu0 0.0
    %2486 = vmatpush1.msra.mxu0 0.0
    %2487 = vmatprep.subr.mxu0 0.0
    %2488 = vmatpush1.msra.mxu0 0.0
    %2489 = vmatprep.subr.mxu0 0.0
    %2490 = vmatpush1.msra.mxu0 0.0
    %2491 = vmatprep.subr.mxu0 0.0
    %2492 = vmatpush1.msra.mxu0 0.0
    %2493 = vmatprep.subr.mxu0 0.0
    %2494 = vmatpush1.msra.mxu0 0.0
    %2495 = vmatprep.subr.mxu0 0.0
    %2496 = vmatpush1.msra.mxu0 0.0
    %2497 = vmatprep.subr.mxu0 0.0
    %2498 = vmatpush1.msra.mxu0 0.0
    %2499 = vmatprep.subr.mxu0 0.0
    %2500 = vmatpush1.msra.mxu0 0.0
    %2501 = vmatprep.subr.mxu0 0.0
    %2502 = vmatpush1.msra.mxu0 0.0
    %2503 = vmatprep.subr.mxu0 0.0
    %2504 = vmatpush1.msra.mxu0 0.0
    %2505 = vmatprep.subr.mxu0 0.0
    %2506 = vmatpush1.msra.mxu0 0.0
    %2507 = vmatprep.subr.mxu0 0.0
    %2508 = vmatpush1.msra.mxu0 0.0
    %2509 = vmatprep.subr.mxu0 0.0
    %2510 = vmatpush1.msra.mxu0 0.0
    %2511 = vmatprep.subr.mxu0 0.0
    %2512 = vmatpush1.msra.mxu0 0.0
    %2513 = vmatprep.subr.mxu0 0.0
    %2514 = vmatpush1.msra.mxu0 0.0
    %2515 = vmatprep.subr.mxu0 0.0
    %2516 = vmatpush1.msra.mxu0 0.0
    %2517 = vmatprep.subr.mxu0 0.0
    %2518 = vmatpush1.msra.mxu0 0.0
    %2519 = vmatprep.mubr.f32.mxu0 0.0
    %2520 = vmatmul.mubr.f32.gmra.mrb[0].mxu0 %v2355
    %v2521 = vpop.f32.mrb[0].mxu0
    %v2522 = vadd.f32 %v2337, %v2521
    %v2523 = vpop.f32.mrb[0].mxu0
    %v2524 = vadd.f32 %v2337, %v2523
    %2525 = vmatprep.mubr.f32.mxu0 0.0
    %2526 = vmatmul.mubr.f32.gmra.mrb[0].mxu0 %v2358
    %v2527 = vpop.f32.mrb[0].mxu0
    %v2528 = vadd.f32 %v2342, %v2527
    %v2529 = vpop.f32.mrb[0].mxu0
    %v2530 = vadd.f32 %v2342, %v2529
    %2531 = vmatprep.mubr.f32.mxu0 0.0
    %2532 = vmatmul.mubr.f32.gmra.mrb[0].mxu0 %v2361
    %v2533 = vpop.f32.mrb[0].mxu0
    %v2534 = vadd.f32 %v2347, %v2533
    %v2535 = vpop.f32.mrb[0].mxu0
    %v2536 = vadd.f32 %v2347, %v2535
    %2537 = vmatprep.mubr.f32.mxu0 0.0
    %2538 = vmatmul.mubr.f32.gmra.mrb[0].mxu0 %v2364
    %v2539 = vpop.f32.mrb[0].mxu0
    %v2540 = vadd.f32 %v2352, %v2539
    %v2541 = vpop.f32.mrb[0].mxu0
    %v2542 = vadd.f32 %v2352, %v2541
    %2543 = vdwg.mxu0
    %v2544 = vmax.f32 %v2433, 0.0
    %v2545 = vmax.f32 %v2435, 0.0
    %v2546 = vmax.f32 %v2522, 0.0
    %v2547 = vmax.f32 %v2524, 0.0
    %v2548 = vmax.f32 %v2439, 0.0
    %v2549 = vmax.f32 %v2441, 0.0
    %v2550 = vmax.f32 %v2528, 0.0
    %v2551 = vmax.f32 %v2530, 0.0
    %v2552 = vmax.f32 %v2445, 0.0
    %v2553 = vmax.f32 %v2447, 0.0
    %v2554 = vmax.f32 %v2534, 0.0
    %v2555 = vmax.f32 %v2536, 0.0
    %v2556 = vmax.f32 %v2451, 0.0
    %v2557 = vmax.f32 %v2453, 0.0
    %v2558 = vmax.f32 %v2540, 0.0
    %v2559 = vmax.f32 %v2542, 0.0
    %v2560 = vld [vmem:[#allocation16] sm:$0xff]
    %v2561 = vld [vmem:[#allocation16 + $0x8] sm:$0xff]
    %v2562 = vld [vmem:[#allocation16 + $0x10] sm:$0xff]
    %v2563 = vld [vmem:[#allocation16 + $0x18] sm:$0xff]
    %v2564 = vld [vmem:[#allocation17] sm:$0xff]
    %v2565 = vld [vmem:[#allocation17 + $0x8] sm:$0xff]
    %v2566 = vld [vmem:[#allocation17 + $0x10] sm:$0xff]
    %v2567 = vld [vmem:[#allocation17 + $0x18] sm:$0xff]
    %2569 = vset.pattern.permute.xlu0 0
    %2570 = vperm.xlu0 %2569, %v2564
    %v2571 = vpop.permute.xlu0 %2570
    %2574 = vset.pattern.permute.xlu0 0
    %2575 = vperm.xlu0 %2574, %v2565
    %v2576 = vpop.permute.xlu0 %2575
    %2579 = vset.pattern.permute.xlu0 0
    %2580 = vperm.xlu0 %2579, %v2566
    %v2581 = vpop.permute.xlu0 %2580
    %2584 = vset.pattern.permute.xlu0 0
    %2585 = vperm.xlu0 %2584, %v2567
    %v2586 = vpop.permute.xlu0 %2585
    %v2589 = vsel %vm993, %v2560, 0
    %v2592 = vsel %vm993, %v2561, 0
    %v2595 = vsel %vm993, %v2562, 0
    %v2598 = vsel %vm993, %v2563, 0
    %2600 = vmatprep.subr.mxu0 %v2545
    %2601 = vmatpush1.msra.mxu0 %v2544
    %2602 = vmatprep.subr.mxu0 %v2549
    %2603 = vmatpush1.msra.mxu0 %v2548
    %2604 = vmatprep.subr.mxu0 %v2553
    %2605 = vmatpush1.msra.mxu0 %v2552
    %2606 = vmatprep.subr.mxu0 %v2557
    %2607 = vmatpush1.msra.mxu0 %v2556
    %2608 = vmatprep.subr.mxu0 0.0
    %2609 = vmatpush1.msra.mxu0 0.0
    %2610 = vmatprep.subr.mxu0 0.0
    %2611 = vmatpush1.msra.mxu0 0.0
    %2612 = vmatprep.subr.mxu0 0.0
    %2613 = vmatpush1.msra.mxu0 0.0
    %2614 = vmatprep.subr.mxu0 0.0
    %2615 = vmatpush1.msra.mxu0 0.0
    %2616 = vmatprep.subr.mxu0 0.0
    %2617 = vmatpush1.msra.mxu0 0.0
    %2618 = vmatprep.subr.mxu0 0.0
    %2619 = vmatpush1.msra.mxu0 0.0
    %2620 = vmatprep.subr.mxu0 0.0
    %2621 = vmatpush1.msra.mxu0 0.0
    %2622 = vmatprep.subr.mxu0 0.0
    %2623 = vmatpush1.msra.mxu0 0.0
    %2624 = vmatprep.subr.mxu0 0.0
    %2625 = vmatpush1.msra.mxu0 0.0
    %2626 = vmatprep.subr.mxu0 0.0
    %2627 = vmatpush1.msra.mxu0 0.0
    %2628 = vmatprep.subr.mxu0 0.0
    %2629 = vmatpush1.msra.mxu0 0.0
    %2630 = vmatprep.subr.mxu0 0.0
    %2631 = vmatpush1.msra.mxu0 0.0
    %2632 = vmatprep.subr.mxu0 0.0
    %2633 = vmatpush1.msra.mxu0 0.0
    %2634 = vmatprep.subr.mxu0 0.0
    %2635 = vmatpush1.msra.mxu0 0.0
    %2636 = vmatprep.subr.mxu0 0.0
    %2637 = vmatpush1.msra.mxu0 0.0
    %2638 = vmatprep.subr.mxu0 0.0
    %2639 = vmatpush1.msra.mxu0 0.0
    %2640 = vmatprep.subr.mxu0 0.0
    %2641 = vmatpush1.msra.mxu0 0.0
    %2642 = vmatprep.subr.mxu0 0.0
    %2643 = vmatpush1.msra.mxu0 0.0
    %2644 = vmatprep.subr.mxu0 0.0
    %2645 = vmatpush1.msra.mxu0 0.0
    %2646 = vmatprep.subr.mxu0 0.0
    %2647 = vmatpush1.msra.mxu0 0.0
    %2648 = vmatprep.subr.mxu0 0.0
    %2649 = vmatpush1.msra.mxu0 0.0
    %2650 = vmatprep.subr.mxu0 0.0
    %2651 = vmatpush1.msra.mxu0 0.0
    %2652 = vmatprep.subr.mxu0 0.0
    %2653 = vmatpush1.msra.mxu0 0.0
    %2654 = vmatprep.subr.mxu0 0.0
    %2655 = vmatpush1.msra.mxu0 0.0
    %2656 = vmatprep.subr.mxu0 0.0
    %2657 = vmatpush1.msra.mxu0 0.0
    %2658 = vmatprep.subr.mxu0 0.0
    %2659 = vmatpush1.msra.mxu0 0.0
    %2660 = vmatprep.subr.mxu0 0.0
    %2661 = vmatpush1.msra.mxu0 0.0
    %2662 = vmatprep.subr.mxu0 0.0
    %2663 = vmatpush1.msra.mxu0 0.0
    %2664 = vmatprep.mubr.f32.mxu0 0.0
    %2665 = vmatmul.mubr.f32.gmra.mrb[0].mxu0 %v2589
    %v2666 = vpop.f32.mrb[0].mxu0
    %v2667 = vadd.f32 %v2571, %v2666
    %v2668 = vpop.f32.mrb[0].mxu0
    %v2669 = vadd.f32 %v2571, %v2668
    %2670 = vmatprep.mubr.f32.mxu0 0.0
    %2671 = vmatmul.mubr.f32.gmra.mrb[0].mxu0 %v2592
    %v2672 = vpop.f32.mrb[0].mxu0
    %v2673 = vadd.f32 %v2576, %v2672
    %v2674 = vpop.f32.mrb[0].mxu0
    %v2675 = vadd.f32 %v2576, %v2674
    %2676 = vmatprep.mubr.f32.mxu0 0.0
    %2677 = vmatmul.mubr.f32.gmra.mrb[0].mxu0 %v2595
    %v2678 = vpop.f32.mrb[0].mxu0
    %v2679 = vadd.f32 %v2581, %v2678
    %v2680 = vpop.f32.mrb[0].mxu0
    %v2681 = vadd.f32 %v2581, %v2680
    %2682 = vmatprep.mubr.f32.mxu0 0.0
    %2683 = vmatmul.mubr.f32.gmra.mrb[0].mxu0 %v2598
    %v2684 = vpop.f32.mrb[0].mxu0
    %v2685 = vadd.f32 %v2586, %v2684
    %v2686 = vpop.f32.mrb[0].mxu0
    %v2687 = vadd.f32 %v2586, %v2686
    %2688 = vdwg.mxu0
    %2689 = vmatprep.subr.mxu0 %v2547
    %2690 = vmatpush1.msra.mxu0 %v2546
    %2691 = vmatprep.subr.mxu0 %v2551
    %2692 = vmatpush1.msra.mxu0 %v2550
    %2693 = vmatprep.subr.mxu0 %v2555
    %2694 = vmatpush1.msra.mxu0 %v2554
    %2695 = vmatprep.subr.mxu0 %v2559
    %2696 = vmatpush1.msra.mxu0 %v2558
    %2697 = vmatprep.subr.mxu0 0.0
    %2698 = vmatpush1.msra.mxu0 0.0
    %2699 = vmatprep.subr.mxu0 0.0
    %2700 = vmatpush1.msra.mxu0 0.0
    %2701 = vmatprep.subr.mxu0 0.0
    %2702 = vmatpush1.msra.mxu0 0.0
    %2703 = vmatprep.subr.mxu0 0.0
    %2704 = vmatpush1.msra.mxu0 0.0
    %2705 = vmatprep.subr.mxu0 0.0
    %2706 = vmatpush1.msra.mxu0 0.0
    %2707 = vmatprep.subr.mxu0 0.0
    %2708 = vmatpush1.msra.mxu0 0.0
    %2709 = vmatprep.subr.mxu0 0.0
    %2710 = vmatpush1.msra.mxu0 0.0
    %2711 = vmatprep.subr.mxu0 0.0
    %2712 = vmatpush1.msra.mxu0 0.0
    %2713 = vmatprep.subr.mxu0 0.0
    %2714 = vmatpush1.msra.mxu0 0.0
    %2715 = vmatprep.subr.mxu0 0.0
    %2716 = vmatpush1.msra.mxu0 0.0
    %2717 = vmatprep.subr.mxu0 0.0
    %2718 = vmatpush1.msra.mxu0 0.0
    %2719 = vmatprep.subr.mxu0 0.0
    %2720 = vmatpush1.msra.mxu0 0.0
    %2721 = vmatprep.subr.mxu0 0.0
    %2722 = vmatpush1.msra.mxu0 0.0
    %2723 = vmatprep.subr.mxu0 0.0
    %2724 = vmatpush1.msra.mxu0 0.0
    %2725 = vmatprep.subr.mxu0 0.0
    %2726 = vmatpush1.msra.mxu0 0.0
    %2727 = vmatprep.subr.mxu0 0.0
    %2728 = vmatpush1.msra.mxu0 0.0
    %2729 = vmatprep.subr.mxu0 0.0
    %2730 = vmatpush1.msra.mxu0 0.0
    %2731 = vmatprep.subr.mxu0 0.0
    %2732 = vmatpush1.msra.mxu0 0.0
    %2733 = vmatprep.subr.mxu0 0.0
    %2734 = vmatpush1.msra.mxu0 0.0
    %2735 = vmatprep.subr.mxu0 0.0
    %2736 = vmatpush1.msra.mxu0 0.0
    %2737 = vmatprep.subr.mxu0 0.0
    %2738 = vmatpush1.msra.mxu0 0.0
    %2739 = vmatprep.subr.mxu0 0.0
    %2740 = vmatpush1.msra.mxu0 0.0
    %2741 = vmatprep.subr.mxu0 0.0
    %2742 = vmatpush1.msra.mxu0 0.0
    %2743 = vmatprep.subr.mxu0 0.0
    %2744 = vmatpush1.msra.mxu0 0.0
    %2745 = vmatprep.subr.mxu0 0.0
    %2746 = vmatpush1.msra.mxu0 0.0
    %2747 = vmatprep.subr.mxu0 0.0
    %2748 = vmatpush1.msra.mxu0 0.0
    %2749 = vmatprep.subr.mxu0 0.0
    %2750 = vmatpush1.msra.mxu0 0.0
    %2751 = vmatprep.subr.mxu0 0.0
    %2752 = vmatpush1.msra.mxu0 0.0
    %2753 = vmatprep.mubr.f32.mxu0 0.0
    %2754 = vmatmul.mubr.f32.gmra.mrb[0].mxu0 %v2589
    %v2755 = vpop.f32.mrb[0].mxu0
    %v2756 = vadd.f32 %v2571, %v2755
    %v2757 = vpop.f32.mrb[0].mxu0
    %v2758 = vadd.f32 %v2571, %v2757
    %2759 = vmatprep.mubr.f32.mxu0 0.0
    %2760 = vmatmul.mubr.f32.gmra.mrb[0].mxu0 %v2592
    %v2761 = vpop.f32.mrb[0].mxu0
    %v2762 = vadd.f32 %v2576, %v2761
    %v2763 = vpop.f32.mrb[0].mxu0
    %v2764 = vadd.f32 %v2576, %v2763
    %2765 = vmatprep.mubr.f32.mxu0 0.0
    %2766 = vmatmul.mubr.f32.gmra.mrb[0].mxu0 %v2595
    %v2767 = vpop.f32.mrb[0].mxu0
    %v2768 = vadd.f32 %v2581, %v2767
    %v2769 = vpop.f32.mrb[0].mxu0
    %v2770 = vadd.f32 %v2581, %v2769
    %2771 = vmatprep.mubr.f32.mxu0 0.0
    %2772 = vmatmul.mubr.f32.gmra.mrb[0].mxu0 %v2598
    %v2773 = vpop.f32.mrb[0].mxu0
    %v2774 = vadd.f32 %v2586, %v2773
    %v2775 = vpop.f32.mrb[0].mxu0
    %v2776 = vadd.f32 %v2586, %v2775
    %2777 = vdwg.mxu0
    %v2778 = vadd.f32 %v2667, %v2669
    %2779 = vadd.xlane.f32.xlu0 %v2778
    %v2780 = vpop.xlane.xlu0 %2779
    %v2781 = vadd.f32 %v2673, %v2675
    %2782 = vadd.xlane.f32.xlu0 %v2781
    %v2783 = vpop.xlane.xlu0 %2782
    %v2784 = vadd.f32 %v2679, %v2681
    %2785 = vadd.xlane.f32.xlu0 %v2784
    %v2786 = vpop.xlane.xlu0 %2785
    %v2787 = vadd.f32 %v2685, %v2687
    %2788 = vadd.xlane.f32.xlu0 %v2787
    %v2789 = vpop.xlane.xlu0 %2788
    %v2790 = vrcp.pop 256.0
    %v2791 = vmul.f32 %v2780, %v2790
    %v2792 = vmul.f32 %v2783, %v2790
    %v2793 = vmul.f32 %v2786, %v2790
    %v2794 = vmul.f32 %v2789, %v2790
    %v2795 = vld [vmem:[#allocation19] sm:$0xff]
    %v2796 = vld [vmem:[#allocation19 + $0x8] sm:$0xff]
    %v2797 = vld [vmem:[#allocation19 + $0x10] sm:$0xff]
    %v2798 = vld [vmem:[#allocation19 + $0x18] sm:$0xff]
    %v2799 = vmul.f32 %v2795, %v2791
    %v2800 = vmul.f32 %v2796, %v2792
    %v2801 = vmul.f32 %v2797, %v2793
    %v2802 = vmul.f32 %v2798, %v2794
    %vm2803 = vcmask 15360
    %v2804 = vsel %vm2803, %v2799, 0.0
    %v2805 = vsel %vm2803, %v2800, 0.0
    %v2806 = vadd.f32 %v2804, %v2805
    %v2807 = vsel %vm2803, %v2801, 0.0
    %v2808 = vadd.f32 %v2806, %v2807
    %v2809 = vsel %vm2803, %v2802, 0.0
    %v2810 = vadd.f32 %v2808, %v2809
    %v2811 = vrot.slane %v2810, 4
    %v2812 = vadd.f32 %v2810, %v2811
    %v2813 = vrot.slane %v2812, 2
    %v2814 = vadd.f32 %v2812, %v2813
    %v2815 = vrot.slane %v2814, 1
    %v2816 = vadd.f32 %v2814, %v2815
    %v2817 = vld [vmem:[#allocation20] sm:$0x1]
    %v2818 = vadd.f32 %v2816, %v2817
    %v2819 = vmax.f32 %v2818, 0.0
    %v2820 = vld [vmem:[#allocation22] sm:$0xff]
    %v2821 = vld [vmem:[#allocation22 + $0x8] sm:$0xff]
    %v2822 = vld [vmem:[#allocation22 + $0x10] sm:$0xff]
    %v2823 = vld [vmem:[#allocation22 + $0x18] sm:$0xff]
    %v2824 = vlaneseq
    %v2825 = vshrl.u32 %v2824, 7
    %v2826 = vsub.s32 0, %v2825
    %v2827 = vrot.slane %v2819, %v2826
    %v2828 = vmul.f32 %v2820, %v2827
    %v2829 = vmul.f32 %v2821, %v2827
    %v2830 = vmul.f32 %v2822, %v2827
    %v2831 = vmul.f32 %v2823, %v2827
    %v2832 = vsel %vm2803, %v2828, 0.0
    %2833 = vadd.xlane.f32.xlu0 %v2832
    %v2834 = vpop.xlane.xlu0 %2833
    %v2835 = vsel %vm2803, %v2829, 0.0
    %2836 = vadd.xlane.f32.xlu0 %v2835
    %v2837 = vpop.xlane.xlu0 %2836
    %v2838 = vsel %vm2803, %v2830, 0.0
    %2839 = vadd.xlane.f32.xlu0 %v2838
    %v2840 = vpop.xlane.xlu0 %2839
    %v2841 = vsel %vm2803, %v2831, 0.0
    %2842 = vadd.xlane.f32.xlu0 %v2841
    %v2843 = vpop.xlane.xlu0 %2842
    %v2844 = vld [vmem:[#allocation23] sm:$0xff]
    %v2845 = vld [vmem:[#allocation23 + $0x8] sm:$0xff]
    %v2846 = vld [vmem:[#allocation23 + $0x10] sm:$0xff]
    %v2847 = vld [vmem:[#allocation23 + $0x18] sm:$0xff]
    %v2848 = vadd.f32 %v2834, %v2844
    %v2849 = vadd.f32 %v2837, %v2845
    %v2850 = vadd.f32 %v2840, %v2846
    %v2851 = vadd.f32 %v2843, %v2847
    %v2852 = vxor.u32 %v2848, 2147483648
    %v2853 = vxor.u32 %v2849, 2147483648
    %v2854 = vxor.u32 %v2850, 2147483648
    %v2855 = vxor.u32 %v2851, 2147483648
    %v2856 = vmul.f32 %v2852, 1.442695
    %v2857 = vpow.pop %v2856
    %v2858 = vmul.f32 %v2853, 1.442695
    %v2859 = vpow.pop %v2858
    %v2860 = vmul.f32 %v2854, 1.442695
    %v2861 = vpow.pop %v2860
    %v2862 = vmul.f32 %v2855, 1.442695
    %v2863 = vpow.pop %v2862
    %v2864 = vadd.f32 %v2857, 1.0
    %v2865 = vadd.f32 %v2859, 1.0
    %v2866 = vadd.f32 %v2861, 1.0
    %v2867 = vadd.f32 %v2863, 1.0
    %v2868 = vrcp.pop %v2864
    %v2869 = vmul.f32 1.0, %v2868
    %v2870 = vrcp.pop %v2865
    %v2871 = vmul.f32 1.0, %v2870
    %v2872 = vrcp.pop %v2866
    %v2873 = vmul.f32 1.0, %v2872
    %v2874 = vrcp.pop %v2867
    %v2875 = vmul.f32 1.0, %v2874
    %2877 = vset.pattern.permute.xlu0 0
    %2878 = vperm.xlu0 %2877, %v2869
    %v2879 = vpop.permute.xlu0 %2878
    %2882 = vset.pattern.permute.xlu0 0
    %2883 = vperm.xlu0 %2882, %v2871
    %v2884 = vpop.permute.xlu0 %2883
    %2887 = vset.pattern.permute.xlu0 0
    %2888 = vperm.xlu0 %2887, %v2873
    %v2889 = vpop.permute.xlu0 %2888
    %2892 = vset.pattern.permute.xlu0 0
    %2893 = vperm.xlu0 %2892, %v2875
    %v2894 = vpop.permute.xlu0 %2893
    %v2896 = vmul.f32 %v2667, %v2879
    %v2897 = vmul.f32 %v2669, %v2879
    %v2898 = vmul.f32 %v2673, %v2884
    %v2899 = vmul.f32 %v2675, %v2884
    %v2900 = vmul.f32 %v2679, %v2889
    %v2901 = vmul.f32 %v2681, %v2889
    %v2902 = vmul.f32 %v2685, %v2894
    %v2903 = vmul.f32 %v2687, %v2894
    %v2904 = vmul.f32 %v2896, 0.1
    %v2905 = vmul.f32 %v2897, 0.1
    %v2906 = vmul.f32 %v2898, 0.1
    %v2907 = vmul.f32 %v2899, 0.1
    %v2908 = vmul.f32 %v2900, 0.1
    %v2909 = vmul.f32 %v2901, 0.1
    %v2910 = vmul.f32 %v2902, 0.1
    %v2911 = vmul.f32 %v2903, 0.1
    %v2912 = vadd.f32 %v2904, %v2310
    %v2913 = vadd.f32 %v2905, %v2311
    %v2914 = vadd.f32 %v2906, %v2314
    %v2915 = vadd.f32 %v2907, %v2315
    %v2916 = vadd.f32 %v2908, %v2318
    %v2917 = vadd.f32 %v2909, %v2319
    %v2918 = vadd.f32 %v2910, %v2322
    %v2919 = vadd.f32 %v2911, %v2323
    %2920 = vst [vmem:[#allocation25] sm:$0xff] %v2912
    %2921 = vst [vmem:[#allocation25 + $0x8] sm:$0xff] %v2913
    %2922 = vst [vmem:[#allocation25 + $0x20] sm:$0xff] %v2914
    %2923 = vst [vmem:[#allocation25 + $0x28] sm:$0xff] %v2915
    %2924 = vst [vmem:[#allocation25 + $0x40] sm:$0xff] %v2916
    %2925 = vst [vmem:[#allocation25 + $0x48] sm:$0xff] %v2917
    %2926 = vst [vmem:[#allocation25 + $0x60] sm:$0xff] %v2918
    %2927 = vst [vmem:[#allocation25 + $0x68] sm:$0xff] %v2919
    %v2928 = vadd.f32 %v2756, %v2758
    %2929 = vadd.xlane.f32.xlu0 %v2928
    %v2930 = vpop.xlane.xlu0 %2929
    %v2931 = vadd.f32 %v2762, %v2764
    %2932 = vadd.xlane.f32.xlu0 %v2931
    %v2933 = vpop.xlane.xlu0 %2932
    %v2934 = vadd.f32 %v2768, %v2770
    %2935 = vadd.xlane.f32.xlu0 %v2934
    %v2936 = vpop.xlane.xlu0 %2935
    %v2937 = vadd.f32 %v2774, %v2776
    %2938 = vadd.xlane.f32.xlu0 %v2937
    %v2939 = vpop.xlane.xlu0 %2938
    %v2940 = vmul.f32 %v2930, %v2790
    %v2941 = vmul.f32 %v2933, %v2790
    %v2942 = vmul.f32 %v2936, %v2790
    %v2943 = vmul.f32 %v2939, %v2790
    %v2944 = vld [vmem:[#allocation19] sm:$0xff]
    %v2945 = vld [vmem:[#allocation19 + $0x8] sm:$0xff]
    %v2946 = vld [vmem:[#allocation19 + $0x10] sm:$0xff]
    %v2947 = vld [vmem:[#allocation19 + $0x18] sm:$0xff]
    %v2948 = vmul.f32 %v2944, %v2940
    %v2949 = vmul.f32 %v2945, %v2941
    %v2950 = vmul.f32 %v2946, %v2942
    %v2951 = vmul.f32 %v2947, %v2943
    %v2952 = vsel %vm2803, %v2948, 0.0
    %v2953 = vsel %vm2803, %v2949, 0.0
    %v2954 = vadd.f32 %v2952, %v2953
    %v2955 = vsel %vm2803, %v2950, 0.0
    %v2956 = vadd.f32 %v2954, %v2955
    %v2957 = vsel %vm2803, %v2951, 0.0
    %v2958 = vadd.f32 %v2956, %v2957
    %v2959 = vrot.slane %v2958, 4
    %v2960 = vadd.f32 %v2958, %v2959
    %v2961 = vrot.slane %v2960, 2
    %v2962 = vadd.f32 %v2960, %v2961
    %v2963 = vrot.slane %v2962, 1
    %v2964 = vadd.f32 %v2962, %v2963
    %v2965 = vld [vmem:[#allocation20] sm:$0x1]
    %v2966 = vadd.f32 %v2964, %v2965
    %v2967 = vmax.f32 %v2966, 0.0
    %v2968 = vld [vmem:[#allocation22] sm:$0xff]
    %v2969 = vld [vmem:[#allocation22 + $0x8] sm:$0xff]
    %v2970 = vld [vmem:[#allocation22 + $0x10] sm:$0xff]
    %v2971 = vld [vmem:[#allocation22 + $0x18] sm:$0xff]
    %v2972 = vlaneseq
    %v2973 = vshrl.u32 %v2972, 7
    %v2974 = vsub.s32 0, %v2973
    %v2975 = vrot.slane %v2967, %v2974
    %v2976 = vmul.f32 %v2968, %v2975
    %v2977 = vmul.f32 %v2969, %v2975
    %v2978 = vmul.f32 %v2970, %v2975
    %v2979 = vmul.f32 %v2971, %v2975
    %v2980 = vsel %vm2803, %v2976, 0.0
    %2981 = vadd.xlane.f32.xlu0 %v2980
    %v2982 = vpop.xlane.xlu0 %2981
    %v2983 = vsel %vm2803, %v2977, 0.0
    %2984 = vadd.xlane.f32.xlu0 %v2983
    %v2985 = vpop.xlane.xlu0 %2984
    %v2986 = vsel %vm2803, %v2978, 0.0
    %2987 = vadd.xlane.f32.xlu0 %v2986
    %v2988 = vpop.xlane.xlu0 %2987
    %v2989 = vsel %vm2803, %v2979, 0.0
    %2990 = vadd.xlane.f32.xlu0 %v2989
    %v2991 = vpop.xlane.xlu0 %2990
    %v2992 = vld [vmem:[#allocation23] sm:$0xff]
    %v2993 = vld [vmem:[#allocation23 + $0x8] sm:$0xff]
    %v2994 = vld [vmem:[#allocation23 + $0x10] sm:$0xff]
    %v2995 = vld [vmem:[#allocation23 + $0x18] sm:$0xff]
    %v2996 = vadd.f32 %v2982, %v2992
    %v2997 = vadd.f32 %v2985, %v2993
    %v2998 = vadd.f32 %v2988, %v2994
    %v2999 = vadd.f32 %v2991, %v2995
    %v3000 = vxor.u32 %v2996, 2147483648
    %v3001 = vxor.u32 %v2997, 2147483648
    %v3002 = vxor.u32 %v2998, 2147483648
    %v3003 = vxor.u32 %v2999, 2147483648
    %v3004 = vmul.f32 %v3000, 1.442695
    %v3005 = vpow.pop %v3004
    %v3006 = vmul.f32 %v3001, 1.442695
    %v3007 = vpow.pop %v3006
    %v3008 = vmul.f32 %v3002, 1.442695
    %v3009 = vpow.pop %v3008
    %v3010 = vmul.f32 %v3003, 1.442695
    %v3011 = vpow.pop %v3010
    %v3012 = vadd.f32 %v3005, 1.0
    %v3013 = vadd.f32 %v3007, 1.0
    %v3014 = vadd.f32 %v3009, 1.0
    %v3015 = vadd.f32 %v3011, 1.0
    %v3016 = vrcp.pop %v3012
    %v3017 = vmul.f32 1.0, %v3016
    %v3018 = vrcp.pop %v3013
    %v3019 = vmul.f32 1.0, %v3018
    %v3020 = vrcp.pop %v3014
    %v3021 = vmul.f32 1.0, %v3020
    %v3022 = vrcp.pop %v3015
    %v3023 = vmul.f32 1.0, %v3022
    %3025 = vset.pattern.permute.xlu0 0
    %3026 = vperm.xlu0 %3025, %v3017
    %v3027 = vpop.permute.xlu0 %3026
    %3030 = vset.pattern.permute.xlu0 0
    %3031 = vperm.xlu0 %3030, %v3019
    %v3032 = vpop.permute.xlu0 %3031
    %3035 = vset.pattern.permute.xlu0 0
    %3036 = vperm.xlu0 %3035, %v3021
    %v3037 = vpop.permute.xlu0 %3036
    %3040 = vset.pattern.permute.xlu0 0
    %3041 = vperm.xlu0 %3040, %v3023
    %v3042 = vpop.permute.xlu0 %3041
    %v3044 = vmul.f32 %v2756, %v3027
    %v3045 = vmul.f32 %v2758, %v3027
    %v3046 = vmul.f32 %v2762, %v3032
    %v3047 = vmul.f32 %v2764, %v3032
    %v3048 = vmul.f32 %v2768, %v3037
    %v3049 = vmul.f32 %v2770, %v3037
    %v3050 = vmul.f32 %v2774, %v3042
    %v3051 = vmul.f32 %v2776, %v3042
    %v3052 = vmul.f32 %v3044, 0.1
    %v3053 = vmul.f32 %v3045, 0.1
    %v3054 = vmul.f32 %v3046, 0.1
    %v3055 = vmul.f32 %v3047, 0.1
    %v3056 = vmul.f32 %v3048, 0.1
    %v3057 = vmul.f32 %v3049, 0.1
    %v3058 = vmul.f32 %v3050, 0.1
    %v3059 = vmul.f32 %v3051, 0.1
    %v3060 = vadd.f32 %v3052, %v2312
    %v3061 = vadd.f32 %v3053, %v2313
    %v3062 = vadd.f32 %v3054, %v2316
    %v3063 = vadd.f32 %v3055, %v2317
    %v3064 = vadd.f32 %v3056, %v2320
    %v3065 = vadd.f32 %v3057, %v2321
    %v3066 = vadd.f32 %v3058, %v2324
    %v3067 = vadd.f32 %v3059, %v2325
    %3068 = vst [vmem:[#allocation25 + $0x10] sm:$0xff] %v3060
    %3069 = vst [vmem:[#allocation25 + $0x18] sm:$0xff] %v3061
    %3070 = vst [vmem:[#allocation25 + $0x30] sm:$0xff] %v3062
    %3071 = vst [vmem:[#allocation25 + $0x38] sm:$0xff] %v3063
    %3072 = vst [vmem:[#allocation25 + $0x50] sm:$0xff] %v3064
    %3073 = vst [vmem:[#allocation25 + $0x58] sm:$0xff] %v3065
    %3074 = vst [vmem:[#allocation25 + $0x70] sm:$0xff] %v3066
    %3075 = vst [vmem:[#allocation25 + $0x78] sm:$0xff] %v3067
    // Predicated region
    $region114: #{tpu_custom_call.1} parent=1 // pred_check
      _
    $region115: #{tpu_custom_call.1} parent=1 // pred_check_branch
      %3077 = sbr.rel (0) target = $region117
    $region116: #{tpu_custom_call.1} parent=1 // pred_region
      %s3079 = ssub.s32 2048, 2048
      %3080 = vsyncadd [#allocation4], %s3079
      %s3081 = sshll.u32 [#allocation25], 4
      %s3082 = int_to_ptr.vmem [resolvable:$true] %s3081
      %3087 = dma.vmem_to_hbm [thread:$0]  %s3082, 2048, %s14, [#allocation4], 512, 512, 32
    $region117: #{tpu_custom_call.1} parent=1 // pred_fallthru
      _
    // Predicated region
    $region118: #{tpu_custom_call.1} parent=1 // pred_check
      _
    $region119: #{tpu_custom_call.1} parent=1 // pred_check_branch
      %3089 = sbr.rel (0) target = $region121
    $region120: #{tpu_custom_call.1} parent=1 // pred_region
      %3090 = dma.done [#allocation4], 2048
    $region121: #{tpu_custom_call.1} parent=1 // pred_fallthru
      _
    %3091 = vsyncpa [#allocation3], 1
    %3092 = vsyncpa [#allocation6], 1
    %3093 = vsyncpa [#allocation9], 1
    %3094 = vsyncpa [#allocation12], 1
    %3095 = vsyncpa [#allocation15], 1
    %3096 = vsyncpa [#allocation18], 1
    %3097 = vsyncpa [#allocation21], 1
    %3098 = vsyncpa [#allocation24], 1
    %3099 = vsyncpa [#allocation4], 1

// kernel: tpu_custom_call.1
$region0: #{tpu_custom_call.1}
  #allocation0 [shape = 'u32[]', space=smem, size = 0x4, offset = 0x4, fixed_abs, tag = 'smem constant byte address 0x4 - core index']
  #allocation1 [shape = 'u32[144,128]{1,0:T(1,128)}', space=vmem, size = 0x12000, scoped, tag = 'internal scratch']
  %s0 = inlined_call_operand.hbm [shape: f32[1,32,512], index: 0, kind: input, shape index: {}]
  %s1 = inlined_call_operand.hbm [shape: f32[9,1,512], index: 1, kind: input, shape index: {}]
  %s2 = inlined_call_operand.hbm [shape: f32[32,288], index: 2, kind: input, shape index: {}]
  %s3 = inlined_call_operand.hbm [shape: f32[32,1], index: 3, kind: input, shape index: {}]
  %s4 = inlined_call_operand.hbm [shape: f32[32,288], index: 4, kind: input, shape index: {}]
  %s5 = inlined_call_operand.hbm [shape: f32[32,1], index: 5, kind: input, shape index: {}]
  %s6 = inlined_call_operand.hbm [shape: f32[32,32], index: 6, kind: input, shape index: {}]
  %s7 = inlined_call_operand.hbm [shape: f32[32,1], index: 7, kind: input, shape index: {}]
  %s8 = inlined_call_operand.hbm [shape: f32[32,32], index: 8, kind: input, shape index: {}]
  %s9 = inlined_call_operand.hbm [shape: f32[32,1], index: 9, kind: input, shape index: {}]
  %s10 = inlined_call_operand.hbm [shape: f32[32,2], index: 10, kind: input, shape index: {}]
  %s11 = inlined_call_operand.hbm [shape: f32[1,2], index: 11, kind: input, shape index: {}]
  %s12 = inlined_call_operand.hbm [shape: f32[32,2], index: 12, kind: input, shape index: {}]
  %s13 = inlined_call_operand.hbm [shape: f32[32,1], index: 13, kind: input, shape index: {}]
  %s14 = inlined_call_operand.hbm [shape: f32[1,32,512], index: 14, kind: output, shape index: {}]
  %s15 = sld [smem:[#allocation0]]
  $region122: #{tpu_custom_call.1} parent=0
    _
  %s17 = ssub.s32 1, %s15
  %s18 = scalar_select 0, %s17, %s15
  $region1: #{tpu_custom_call.1} parent=0
    #allocation2 [shape = 'u8[65536]{0}', space=vmem, size = 0x10000, scoped, tag = 'input window, operand 0, single buffered']
    #allocation3 [shape = 's32[1]{0}', space=sflag, size = 0x4, scoped, tag = 'scoped memory for tpu_custom_call.1']
    #allocation4 [shape = 's32[1]{0}', space=sflag, size = 0x4, scoped, tag = 'scoped memory for tpu_custom_call.1']
    #allocation5 [shape = 'u8[18432]{0}', space=vmem, size = 0x4800, scoped, tag = 'input window, operand 1, single buffered']
    #allocation6 [shape = 's32[1]{0}', space=sflag, size = 0x4, scoped, tag = 'scoped memory for tpu_custom_call.1']
    #allocation7 [shape = 'u8[49152]{0}', space=vmem, size = 0xc000, scoped, tag = 'input window, operand 2, single buffered']
    #allocation8 [shape = 'u8[16384]{0}', space=vmem, size = 0x4000, scoped, tag = 'input window, operand 3, single buffered']
    #allocation9 [shape = 's32[1]{0}', space=sflag, size = 0x4, scoped, tag = 'scoped memory for tpu_custom_call.1']
    #allocation10 [shape = 'u8[49152]{0}', space=vmem, size = 0xc000, scoped, tag = 'input window, operand 4, single buffered']
    #allocation11 [shape = 'u8[16384]{0}', space=vmem, size = 0x4000, scoped, tag = 'input window, operand 5, single buffered']
    #allocation12 [shape = 's32[1]{0}', space=sflag, size = 0x4, scoped, tag = 'scoped memory for tpu_custom_call.1']
    #allocation13 [shape = 'u8[16384]{0}', space=vmem, size = 0x4000, scoped, tag = 'input window, operand 6, single buffered']
    #allocation14 [shape = 'u8[16384]{0}', space=vmem, size = 0x4000, scoped, tag = 'input window, operand 7, single buffered']
    #allocation15 [shape = 's32[1]{0}', space=sflag, size = 0x4, scoped, tag = 'scoped memory for tpu_custom_call.1']
    #allocation16 [shape = 'u8[16384]{0}', space=vmem, size = 0x4000, scoped, tag = 'input window, operand 8, single buffered']
    #allocation17 [shape = 'u8[16384]{0}', space=vmem, size = 0x4000, scoped, tag = 'input window, operand 9, single buffered']
    #allocation18 [shape = 's32[1]{0}', space=sflag, size = 0x4, scoped, tag = 'scoped memory for tpu_custom_call.1']
    #allocation19 [shape = 'u8[16384]{0}', space=vmem, size = 0x4000, scoped, tag = 'input window, operand 10, single buffered']
    #allocation20 [shape = 'u8[512]{0}', space=vmem, size = 0x400, scoped, tag = 'input window, operand 11, single buffered']
    #allocation21 [shape = 's32[1]{0}', space=sflag, size = 0x4, scoped, tag = 'scoped memory for tpu_custom_call.1']
    #allocation22 [shape = 'u8[16384]{0}', space=vmem, size = 0x4000, scoped, tag = 'input window, operand 12, single buffered']
    #allocation23 [shape = 'u8[16384]{0}', space=vmem, size = 0x4000, scoped, tag = 'input window, operand 13, single buffered']
    #allocation24 [shape = 's32[1]{0}', space=sflag, size = 0x4, scoped, tag = 'scoped memory for tpu_custom_call.1']
    #allocation25 [shape = 'u8[65536]{0}', space=vmem, size = 0x10000, scoped, tag = 'output window, operand 0, single buffered']
    %19 = vsyncpa [#allocation3], 0
    %20 = vsyncpa [#allocation6], 0
    %21 = vsyncpa [#allocation9], 0
    %22 = vsyncpa [#allocation12], 0
    %23 = vsyncpa [#allocation15], 0
    %24 = vsyncpa [#allocation18], 0
    %25 = vsyncpa [#allocation21], 0
    %26 = vsyncpa [#allocation24], 0
    %27 = vsyncpa [#allocation4], 0
    // Predicated region
    $region2: #{tpu_custom_call.1} parent=1 // pred_check
      _
    $region3: #{tpu_custom_call.1} parent=1 // pred_check_branch
      %29 = sbr.rel (0) target = $region5
    $region4: #{tpu_custom_call.1} parent=1 // pred_region
      %s31 = ssub.s32 2048, 2048
      %32 = vsyncadd [#allocation3], %s31
      %s33 = sshll.u32 [#allocation2], 4
      %s34 = int_to_ptr.vmem [resolvable:$true] %s33
      %39 = dma.hbm_to_vmem [thread:$0]  %s0, 2048, %s34, [#allocation3], 512, 512, 32
    $region5: #{tpu_custom_call.1} parent=1 // pred_fallthru
      _
    // Predicated region
    $region6: #{tpu_custom_call.1} parent=1 // pred_check
      _
    $region7: #{tpu_custom_call.1} parent=1 // pred_check_branch
      %41 = sbr.rel (0) target = $region9
    $region8: #{tpu_custom_call.1} parent=1 // pred_region
      %s43 = ssub.s32 576, 576
      %44 = vsyncadd [#allocation6], %s43
      %s45 = sshll.u32 [#allocation5], 4
      %s46 = int_to_ptr.vmem [resolvable:$true] %s45
      %51 = dma.hbm_to_vmem [thread:$0]  %s1, 576, %s46, [#allocation6], 64, 64, 4
    $region9: #{tpu_custom_call.1} parent=1 // pred_fallthru
      _
    // Predicated region
    $region10: #{tpu_custom_call.1} parent=1 // pred_check
      _
    $region11: #{tpu_custom_call.1} parent=1 // pred_check_branch
      %53 = sbr.rel (0) target = $region13
    $region12: #{tpu_custom_call.1} parent=1 // pred_region
      %s55 = ssub.s32 1536, 1536
      %56 = vsyncadd [#allocation6], %s55
      %s57 = sshll.u32 [#allocation7], 4
      %s58 = int_to_ptr.vmem [resolvable:$true] %s57
      %63 = dma.hbm_to_vmem [thread:$0]  %s2, 1536, %s58, [#allocation6], 384, 384, 24
    $region13: #{tpu_custom_call.1} parent=1 // pred_fallthru
      _
    // Predicated region
    $region14: #{tpu_custom_call.1} parent=1 // pred_check
      _
    $region15: #{tpu_custom_call.1} parent=1 // pred_check_branch
      %65 = sbr.rel (0) target = $region17
    $region16: #{tpu_custom_call.1} parent=1 // pred_region
      %s67 = ssub.s32 512, 512
      %68 = vsyncadd [#allocation9], %s67
      %s69 = sshll.u32 [#allocation8], 4
      %s70 = int_to_ptr.vmem [resolvable:$true] %s69
      %75 = dma.hbm_to_vmem [thread:$0]  %s3, 512, %s70, [#allocation9], 128, 128, 8
    $region17: #{tpu_custom_call.1} parent=1 // pred_fallthru
      _
    // Predicated region
    $region18: #{tpu_custom_call.1} parent=1 // pred_check
      _
    $region19: #{tpu_custom_call.1} parent=1 // pred_check_branch
      %77 = sbr.rel (0) target = $region21
    $region20: #{tpu_custom_call.1} parent=1 // pred_region
      %s79 = ssub.s32 1536, 1536
      %80 = vsyncadd [#allocation9], %s79
      %s81 = sshll.u32 [#allocation10], 4
      %s82 = int_to_ptr.vmem [resolvable:$true] %s81
      %87 = dma.hbm_to_vmem [thread:$0]  %s4, 1536, %s82, [#allocation9], 384, 384, 24
    $region21: #{tpu_custom_call.1} parent=1 // pred_fallthru
      _
    // Predicated region
    $region22: #{tpu_custom_call.1} parent=1 // pred_check
      _
    $region23: #{tpu_custom_call.1} parent=1 // pred_check_branch
      %89 = sbr.rel (0) target = $region25
    $region24: #{tpu_custom_call.1} parent=1 // pred_region
      %s91 = ssub.s32 512, 512
      %92 = vsyncadd [#allocation12], %s91
      %s93 = sshll.u32 [#allocation11], 4
      %s94 = int_to_ptr.vmem [resolvable:$true] %s93
      %99 = dma.hbm_to_vmem [thread:$0]  %s5, 512, %s94, [#allocation12], 128, 128, 8
    $region25: #{tpu_custom_call.1} parent=1 // pred_fallthru
      _
    // Predicated region
    $region26: #{tpu_custom_call.1} parent=1 // pred_check
      _
    $region27: #{tpu_custom_call.1} parent=1 // pred_check_branch
      %101 = sbr.rel (0) target = $region29
    $region28: #{tpu_custom_call.1} parent=1 // pred_region
      %s103 = ssub.s32 512, 512
      %104 = vsyncadd [#allocation12], %s103
      %s105 = sshll.u32 [#allocation13], 4
      %s106 = int_to_ptr.vmem [resolvable:$true] %s105
      %111 = dma.hbm_to_vmem [thread:$0]  %s6, 512, %s106, [#allocation12], 128, 128, 8
    $region29: #{tpu_custom_call.1} parent=1 // pred_fallthru
      _
    // Predicated region
    $region30: #{tpu_custom_call.1} parent=1 // pred_check
      _
    $region31: #{tpu_custom_call.1} parent=1 // pred_check_branch
      %113 = sbr.rel (0) target = $region33
    $region32: #{tpu_custom_call.1} parent=1 // pred_region
      %s115 = ssub.s32 512, 512
      %116 = vsyncadd [#allocation15], %s115
      %s117 = sshll.u32 [#allocation14], 4
      %s118 = int_to_ptr.vmem [resolvable:$true] %s117
      %123 = dma.hbm_to_vmem [thread:$0]  %s7, 512, %s118, [#allocation15], 128, 128, 8
    $region33: #{tpu_custom_call.1} parent=1 // pred_fallthru
      _
    // Predicated region
    $region34: #{tpu_custom_call.1} parent=1 // pred_check
      _
    $region35: #{tpu_custom_call.1} parent=1 // pred_check_branch
      %125 = sbr.rel (0) target = $region37
    $region36: #{tpu_custom_call.1} parent=1 // pred_region
      %s127 = ssub.s32 512, 512
      %128 = vsyncadd [#allocation15], %s127
      %s129 = sshll.u32 [#allocation16], 4
      %s130 = int_to_ptr.vmem [resolvable:$true] %s129
      %135 = dma.hbm_to_vmem [thread:$0]  %s8, 512, %s130, [#allocation15], 128, 128, 8
    $region37: #{tpu_custom_call.1} parent=1 // pred_fallthru
      _
    // Predicated region
    $region38: #{tpu_custom_call.1} parent=1 // pred_check
      _
    $region39: #{tpu_custom_call.1} parent=1 // pred_check_branch
      %137 = sbr.rel (0) target = $region41
    $region40: #{tpu_custom_call.1} parent=1 // pred_region
      %s139 = ssub.s32 512, 512
      %140 = vsyncadd [#allocation18], %s139
      %s141 = sshll.u32 [#allocation17], 4
      %s142 = int_to_ptr.vmem [resolvable:$true] %s141
      %147 = dma.hbm_to_vmem [thread:$0]  %s9, 512, %s142, [#allocation18], 128, 128, 8
    $region41: #{tpu_custom_call.1} parent=1 // pred_fallthru
      _
    // Predicated region
    $region42: #{tpu_custom_call.1} parent=1 // pred_check
      _
    $region43: #{tpu_custom_call.1} parent=1 // pred_check_branch
      %149 = sbr.rel (0) target = $region45
    $region44: #{tpu_custom_call.1} parent=1 // pred_region
      %s151 = ssub.s32 512, 512
      %152 = vsyncadd [#allocation18], %s151
      %s153 = sshll.u32 [#allocation19], 4
      %s154 = int_to_ptr.vmem [resolvable:$true] %s153
      %159 = dma.hbm_to_vmem [thread:$0]  %s10, 512, %s154, [#allocation18], 128, 128, 8
    $region45: #{tpu_custom_call.1} parent=1 // pred_fallthru
      _
    // Predicated region
    $region46: #{tpu_custom_call.1} parent=1 // pred_check
      _
    $region47: #{tpu_custom_call.1} parent=1 // pred_check_branch
      %161 = sbr.rel (0) target = $region49
    $region48: #{tpu_custom_call.1} parent=1 // pred_region
      %s163 = ssub.s32 16, 16
      %164 = vsyncadd [#allocation21], %s163
      %s166 = sshll.u32 [#allocation20], 4
      %s167 = int_to_ptr.vmem [resolvable:$true] %s166
      %169 = dma.hbm_to_vmem [thread:$0]  %s11, 16, %s167, [#allocation21]
    $region49: #{tpu_custom_call.1} parent=1 // pred_fallthru
      _
    // Predicated region
    $region50: #{tpu_custom_call.1} parent=1 // pred_check
      _
    $region51: #{tpu_custom_call.1} parent=1 // pred_check_branch
      %171 = sbr.rel (0) target = $region53
    $region52: #{tpu_custom_call.1} parent=1 // pred_region
      %s173 = ssub.s32 512, 512
      %174 = vsyncadd [#allocation21], %s173
      %s175 = sshll.u32 [#allocation22], 4
      %s176 = int_to_ptr.vmem [resolvable:$true] %s175
      %181 = dma.hbm_to_vmem [thread:$0]  %s12, 512, %s176, [#allocation21], 128, 128, 8
    $region53: #{tpu_custom_call.1} parent=1 // pred_fallthru
      _
    // Predicated region
    $region54: #{tpu_custom_call.1} parent=1 // pred_check
      _
    $region55: #{tpu_custom_call.1} parent=1 // pred_check_branch
      %183 = sbr.rel (0) target = $region57
    $region56: #{tpu_custom_call.1} parent=1 // pred_region
      %s185 = ssub.s32 512, 512
      %186 = vsyncadd [#allocation24], %s185
      %s187 = sshll.u32 [#allocation23], 4
      %s188 = int_to_ptr.vmem [resolvable:$true] %s187
      %193 = dma.hbm_to_vmem [thread:$0]  %s13, 512, %s188, [#allocation24], 128, 128, 8
    $region57: #{tpu_custom_call.1} parent=1 // pred_fallthru
      _
    // Predicated region
    $region58: #{tpu_custom_call.1} parent=1 // pred_check
      _
    $region59: #{tpu_custom_call.1} parent=1 // pred_check_branch
      %195 = sbr.rel (0) target = $region61
    $region60: #{tpu_custom_call.1} parent=1 // pred_region
      %196 = dma.done [#allocation3], 2048
    $region61: #{tpu_custom_call.1} parent=1 // pred_fallthru
      _
    // Predicated region
    $region62: #{tpu_custom_call.1} parent=1 // pred_check
      _
    $region63: #{tpu_custom_call.1} parent=1 // pred_check_branch
      %198 = sbr.rel (0) target = $region65
    $region64: #{tpu_custom_call.1} parent=1 // pred_region
      %199 = dma.done [#allocation6], 576
    $region65: #{tpu_custom_call.1} parent=1 // pred_fallthru
      _
    // Predicated region
    $region66: #{tpu_custom_call.1} parent=1 // pred_check
      _
    $region67: #{tpu_custom_call.1} parent=1 // pred_check_branch
      %201 = sbr.rel (0) target = $region69
    $region68: #{tpu_custom_call.1} parent=1 // pred_region
      %202 = dma.done [#allocation6], 1536
    $region69: #{tpu_custom_call.1} parent=1 // pred_fallthru
      _
    // Predicated region
    $region70: #{tpu_custom_call.1} parent=1 // pred_check
      _
    $region71: #{tpu_custom_call.1} parent=1 // pred_check_branch
      %204 = sbr.rel (0) target = $region73
    $region72: #{tpu_custom_call.1} parent=1 // pred_region
      %205 = dma.done [#allocation9], 512
    $region73: #{tpu_custom_call.1} parent=1 // pred_fallthru
      _
    // Predicated region
    $region74: #{tpu_custom_call.1} parent=1 // pred_check
      _
    $region75: #{tpu_custom_call.1} parent=1 // pred_check_branch
      %207 = sbr.rel (0) target = $region77
    $region76: #{tpu_custom_call.1} parent=1 // pred_region
      %208 = dma.done [#allocation9], 1536
    $region77: #{tpu_custom_call.1} parent=1 // pred_fallthru
      _
    // Predicated region
    $region78: #{tpu_custom_call.1} parent=1 // pred_check
      _
    $region79: #{tpu_custom_call.1} parent=1 // pred_check_branch
      %210 = sbr.rel (0) target = $region81
    $region80: #{tpu_custom_call.1} parent=1 // pred_region
      %211 = dma.done [#allocation12], 512
    $region81: #{tpu_custom_call.1} parent=1 // pred_fallthru
      _
    // Predicated region
    $region82: #{tpu_custom_call.1} parent=1 // pred_check
      _
    $region83: #{tpu_custom_call.1} parent=1 // pred_check_branch
      %213 = sbr.rel (0) target = $region85
    $region84: #{tpu_custom_call.1} parent=1 // pred_region
      %214 = dma.done [#allocation12], 512
    $region85: #{tpu_custom_call.1} parent=1 // pred_fallthru
      _
    // Predicated region
    $region86: #{tpu_custom_call.1} parent=1 // pred_check
      _
    $region87: #{tpu_custom_call.1} parent=1 // pred_check_branch
      %216 = sbr.rel (0) target = $region89
    $region88: #{tpu_custom_call.1} parent=1 // pred_region
      %217 = dma.done [#allocation15], 512
    $region89: #{tpu_custom_call.1} parent=1 // pred_fallthru
      _
    // Predicated region
    $region90: #{tpu_custom_call.1} parent=1 // pred_check
      _
    $region91: #{tpu_custom_call.1} parent=1 // pred_check_branch
      %219 = sbr.rel (0) target = $region93
    $region92: #{tpu_custom_call.1} parent=1 // pred_region
      %220 = dma.done [#allocation15], 512
    $region93: #{tpu_custom_call.1} parent=1 // pred_fallthru
      _
    // Predicated region
    $region94: #{tpu_custom_call.1} parent=1 // pred_check
      _
    $region95: #{tpu_custom_call.1} parent=1 // pred_check_branch
      %222 = sbr.rel (0) target = $region97
    $region96: #{tpu_custom_call.1} parent=1 // pred_region
      %223 = dma.done [#allocation18], 512
    $region97: #{tpu_custom_call.1} parent=1 // pred_fallthru
      _
    // Predicated region
    $region98: #{tpu_custom_call.1} parent=1 // pred_check
      _
    $region99: #{tpu_custom_call.1} parent=1 // pred_check_branch
      %225 = sbr.rel (0) target = $region101
    $region100: #{tpu_custom_call.1} parent=1 // pred_region
      %226 = dma.done [#allocation18], 512
    $region101: #{tpu_custom_call.1} parent=1 // pred_fallthru
      _
    // Predicated region
    $region102: #{tpu_custom_call.1} parent=1 // pred_check
      _
    $region103: #{tpu_custom_call.1} parent=1 // pred_check_branch
      %228 = sbr.rel (0) target = $region105
    $region104: #{tpu_custom_call.1} parent=1 // pred_region
      %229 = dma.done [#allocation21], 16
    $region105: #{tpu_custom_call.1} parent=1 // pred_fallthru
      _
    // Predicated region
    $region106: #{tpu_custom_call.1} parent=1 // pred_check
      _
    $region107: #{tpu_custom_call.1} parent=1 // pred_check_branch
      %231 = sbr.rel (0) target = $region109
    $region108: #{tpu_custom_call.1} parent=1 // pred_region
      %232 = dma.done [#allocation21], 512
    $region109: #{tpu_custom_call.1} parent=1 // pred_fallthru
      _
    // Predicated region
    $region110: #{tpu_custom_call.1} parent=1 // pred_check
      _
    $region111: #{tpu_custom_call.1} parent=1 // pred_check_branch
      %234 = sbr.rel (0) target = $region113
    $region112: #{tpu_custom_call.1} parent=1 // pred_region
      %235 = dma.done [#allocation24], 512
    $region113: #{tpu_custom_call.1} parent=1 // pred_fallthru
      _
    %v236 = vld [vmem:[#allocation2] sm:$0xff]
    %v237 = vld [vmem:[#allocation2 + $0x8] sm:$0xff]
    %v238 = vld [vmem:[#allocation2 + $0x10] sm:$0xff]
    %v239 = vld [vmem:[#allocation2 + $0x18] sm:$0xff]
    %v240 = vld [vmem:[#allocation2 + $0x20] sm:$0xff]
    %v241 = vld [vmem:[#allocation2 + $0x28] sm:$0xff]
    %v242 = vld [vmem:[#allocation2 + $0x30] sm:$0xff]
    %v243 = vld [vmem:[#allocation2 + $0x38] sm:$0xff]
    %v244 = vld [vmem:[#allocation2 + $0x40] sm:$0xff]
    %v245 = vld [vmem:[#allocation2 + $0x48] sm:$0xff]
    %v246 = vld [vmem:[#allocation2 + $0x50] sm:$0xff]
    %v247 = vld [vmem:[#allocation2 + $0x58] sm:$0xff]
    %v248 = vld [vmem:[#allocation2 + $0x60] sm:$0xff]
    %v249 = vld [vmem:[#allocation2 + $0x68] sm:$0xff]
    %v250 = vld [vmem:[#allocation2 + $0x70] sm:$0xff]
    %v251 = vld [vmem:[#allocation2 + $0x78] sm:$0xff]
    %252 = vrot.lane.b32.xlu0 %v236, 17
    %v253 = vpop.permute.xlu0 %252
    %254 = vrot.lane.b32.xlu0 %v240, 17
    %v255 = vpop.permute.xlu0 %254
    %256 = vrot.lane.b32.xlu0 %v244, 17
    %v257 = vpop.permute.xlu0 %256
    %258 = vrot.lane.b32.xlu0 %v248, 17
    %v259 = vpop.permute.xlu0 %258
    %260 = vrot.lane.b32.xlu0 %v237, 17
    %v261 = vpop.permute.xlu0 %260
    %262 = vrot.lane.b32.xlu0 %v241, 17
    %v263 = vpop.permute.xlu0 %262
    %264 = vrot.lane.b32.xlu0 %v245, 17
    %v265 = vpop.permute.xlu0 %264
    %266 = vrot.lane.b32.xlu0 %v249, 17
    %v267 = vpop.permute.xlu0 %266
    %268 = vrot.lane.b32.xlu0 %v238, 17
    %v269 = vpop.permute.xlu0 %268
    %270 = vrot.lane.b32.xlu0 %v242, 17
    %v271 = vpop.permute.xlu0 %270
    %272 = vrot.lane.b32.xlu0 %v246, 17
    %v273 = vpop.permute.xlu0 %272
    %274 = vrot.lane.b32.xlu0 %v250, 17
    %v275 = vpop.permute.xlu0 %274
    %276 = vrot.lane.b32.xlu0 %v239, 17
    %v277 = vpop.permute.xlu0 %276
    %278 = vrot.lane.b32.xlu0 %v243, 17
    %v279 = vpop.permute.xlu0 %278
    %280 = vrot.lane.b32.xlu0 %v247, 17
    %v281 = vpop.permute.xlu0 %280
    %282 = vrot.lane.b32.xlu0 %v251, 17
    %v283 = vpop.permute.xlu0 %282
    %v284 = vlaneseq
    %v285 = vand.u32 %v284, 127
    %vm286 = vcmp.lt.s32.totalorder %v285, 17
    %v287 = vsel %vm286, %v269, %v277
    %v288 = vsel %vm286, %v271, %v279
    %v289 = vsel %vm286, %v273, %v281
    %v290 = vsel %vm286, %v275, %v283
    %v291 = vsel %vm286, %v261, %v269
    %v292 = vsel %vm286, %v263, %v271
    %v293 = vsel %vm286, %v265, %v273
    %v294 = vsel %vm286, %v267, %v275
    %v295 = vsel %vm286, %v253, %v261
    %v296 = vsel %vm286, %v255, %v263
    %v297 = vsel %vm286, %v257, %v265
    %v298 = vsel %vm286, %v259, %v267
    %v299 = vsel %vm286, %v277, %v253
    %v300 = vsel %vm286, %v279, %v255
    %v301 = vsel %vm286, %v281, %v257
    %v302 = vsel %vm286, %v283, %v259
    %v303 = vld [vmem:[#allocation5] sm:$0xf]
    %v305 = vlaneseq
    %v306 = vshrl.u32 %v305, 7
    %v307 = vsub.s32 0, %v306
    %v308 = vrot.slane %v303, %v307
    %v309 = vlaneseq
    %v310 = vshrl.u32 %v309, 7
    %v311 = vsub.s32 1, %v310
    %v312 = vrot.slane %v303, %v311
    %v313 = vlaneseq
    %v314 = vshrl.u32 %v313, 7
    %v315 = vsub.s32 2, %v314
    %v316 = vrot.slane %v303, %v315
    %v317 = vlaneseq
    %v318 = vshrl.u32 %v317, 7
    %v319 = vsub.s32 3, %v318
    %v320 = vrot.slane %v303, %v319
    %v325 = vmul.f32 %v299, %v308
    %v326 = vmul.f32 %v295, %v312
    %v327 = vmul.f32 %v291, %v316
    %v328 = vmul.f32 %v287, %v320
    %v329 = vmul.f32 %v300, %v308
    %v330 = vmul.f32 %v296, %v312
    %v331 = vmul.f32 %v292, %v316
    %v332 = vmul.f32 %v288, %v320
    %v333 = vmul.f32 %v301, %v308
    %v334 = vmul.f32 %v297, %v312
    %v335 = vmul.f32 %v293, %v316
    %v336 = vmul.f32 %v289, %v320
    %v337 = vmul.f32 %v302, %v308
    %v338 = vmul.f32 %v298, %v312
    %v339 = vmul.f32 %v294, %v316
    %v340 = vmul.f32 %v290, %v320
    %341 = vrot.lane.b32.xlu0 %v236, 16
    %v342 = vpop.permute.xlu0 %341
    %343 = vrot.lane.b32.xlu0 %v240, 16
    %v344 = vpop.permute.xlu0 %343
    %345 = vrot.lane.b32.xlu0 %v244, 16
    %v346 = vpop.permute.xlu0 %345
    %347 = vrot.lane.b32.xlu0 %v248, 16
    %v348 = vpop.permute.xlu0 %347
    %349 = vrot.lane.b32.xlu0 %v237, 16
    %v350 = vpop.permute.xlu0 %349
    %351 = vrot.lane.b32.xlu0 %v241, 16
    %v352 = vpop.permute.xlu0 %351
    %353 = vrot.lane.b32.xlu0 %v245, 16
    %v354 = vpop.permute.xlu0 %353
    %355 = vrot.lane.b32.xlu0 %v249, 16
    %v356 = vpop.permute.xlu0 %355
    %357 = vrot.lane.b32.xlu0 %v238, 16
    %v358 = vpop.permute.xlu0 %357
    %359 = vrot.lane.b32.xlu0 %v242, 16
    %v360 = vpop.permute.xlu0 %359
    %361 = vrot.lane.b32.xlu0 %v246, 16
    %v362 = vpop.permute.xlu0 %361
    %363 = vrot.lane.b32.xlu0 %v250, 16
    %v364 = vpop.permute.xlu0 %363
    %365 = vrot.lane.b32.xlu0 %v239, 16
    %v366 = vpop.permute.xlu0 %365
    %367 = vrot.lane.b32.xlu0 %v243, 16
    %v368 = vpop.permute.xlu0 %367
    %369 = vrot.lane.b32.xlu0 %v247, 16
    %v370 = vpop.permute.xlu0 %369
    %371 = vrot.lane.b32.xlu0 %v251, 16
    %v372 = vpop.permute.xlu0 %371
    %vm373 = vcmp.lt.s32.totalorder %v285, 16
    %v374 = vsel %vm373, %v358, %v366
    %v375 = vsel %vm373, %v360, %v368
    %v376 = vsel %vm373, %v362, %v370
    %v377 = vsel %vm373, %v364, %v372
    %v378 = vsel %vm373, %v350, %v358
    %v379 = vsel %vm373, %v352, %v360
    %v380 = vsel %vm373, %v354, %v362
    %v381 = vsel %vm373, %v356, %v364
    %v382 = vsel %vm373, %v342, %v350
    %v383 = vsel %vm373, %v344, %v352
    %v384 = vsel %vm373, %v346, %v354
    %v385 = vsel %vm373, %v348, %v356
    %v386 = vsel %vm373, %v366, %v342
    %v387 = vsel %vm373, %v368, %v344
    %v388 = vsel %vm373, %v370, %v346
    %v389 = vsel %vm373, %v372, %v348
    %s390 = scalar_lea.vmem [#allocation5], 4
    %v391 = vld [vmem:[%s390] sm:$0xf]
    %v393 = vlaneseq
    %v394 = vshrl.u32 %v393, 7
    %v395 = vsub.s32 0, %v394
    %v396 = vrot.slane %v391, %v395
    %v397 = vlaneseq
    %v398 = vshrl.u32 %v397, 7
    %v399 = vsub.s32 1, %v398
    %v400 = vrot.slane %v391, %v399
    %v401 = vlaneseq
    %v402 = vshrl.u32 %v401, 7
    %v403 = vsub.s32 2, %v402
    %v404 = vrot.slane %v391, %v403
    %v405 = vlaneseq
    %v406 = vshrl.u32 %v405, 7
    %v407 = vsub.s32 3, %v406
    %v408 = vrot.slane %v391, %v407
    %v413 = vmul.f32 %v386, %v396
    %v414 = vmul.f32 %v382, %v400
    %v415 = vmul.f32 %v378, %v404
    %v416 = vmul.f32 %v374, %v408
    %v417 = vmul.f32 %v387, %v396
    %v418 = vmul.f32 %v383, %v400
    %v419 = vmul.f32 %v379, %v404
    %v420 = vmul.f32 %v375, %v408
    %v421 = vmul.f32 %v388, %v396
    %v422 = vmul.f32 %v384, %v400
    %v423 = vmul.f32 %v380, %v404
    %v424 = vmul.f32 %v376, %v408
    %v425 = vmul.f32 %v389, %v396
    %v426 = vmul.f32 %v385, %v400
    %v427 = vmul.f32 %v381, %v404
    %v428 = vmul.f32 %v377, %v408
    %429 = vrot.lane.b32.xlu0 %v236, 15
    %v430 = vpop.permute.xlu0 %429
    %431 = vrot.lane.b32.xlu0 %v240, 15
    %v432 = vpop.permute.xlu0 %431
    %433 = vrot.lane.b32.xlu0 %v244, 15
    %v434 = vpop.permute.xlu0 %433
    %435 = vrot.lane.b32.xlu0 %v248, 15
    %v436 = vpop.permute.xlu0 %435
    %437 = vrot.lane.b32.xlu0 %v237, 15
    %v438 = vpop.permute.xlu0 %437
    %439 = vrot.lane.b32.xlu0 %v241, 15
    %v440 = vpop.permute.xlu0 %439
    %441 = vrot.lane.b32.xlu0 %v245, 15
    %v442 = vpop.permute.xlu0 %441
    %443 = vrot.lane.b32.xlu0 %v249, 15
    %v444 = vpop.permute.xlu0 %443
    %445 = vrot.lane.b32.xlu0 %v238, 15
    %v446 = vpop.permute.xlu0 %445
    %447 = vrot.lane.b32.xlu0 %v242, 15
    %v448 = vpop.permute.xlu0 %447
    %449 = vrot.lane.b32.xlu0 %v246, 15
    %v450 = vpop.permute.xlu0 %449
    %451 = vrot.lane.b32.xlu0 %v250, 15
    %v452 = vpop.permute.xlu0 %451
    %453 = vrot.lane.b32.xlu0 %v239, 15
    %v454 = vpop.permute.xlu0 %453
    %455 = vrot.lane.b32.xlu0 %v243, 15
    %v456 = vpop.permute.xlu0 %455
    %457 = vrot.lane.b32.xlu0 %v247, 15
    %v458 = vpop.permute.xlu0 %457
    %459 = vrot.lane.b32.xlu0 %v251, 15
    %v460 = vpop.permute.xlu0 %459
    %vm461 = vcmp.lt.s32.totalorder %v285, 15
    %v462 = vsel %vm461, %v446, %v454
    %v463 = vsel %vm461, %v448, %v456
    %v464 = vsel %vm461, %v450, %v458
    %v465 = vsel %vm461, %v452, %v460
    %v466 = vsel %vm461, %v438, %v446
    %v467 = vsel %vm461, %v440, %v448
    %v468 = vsel %vm461, %v442, %v450
    %v469 = vsel %vm461, %v444, %v452
    %v470 = vsel %vm461, %v430, %v438
    %v471 = vsel %vm461, %v432, %v440
    %v472 = vsel %vm461, %v434, %v442
    %v473 = vsel %vm461, %v436, %v444
    %v474 = vsel %vm461, %v454, %v430
    %v475 = vsel %vm461, %v456, %v432
    %v476 = vsel %vm461, %v458, %v434
    %v477 = vsel %vm461, %v460, %v436
    %s478 = scalar_lea.vmem [#allocation5], 8
    %v479 = vld [vmem:[%s478] sm:$0xf]
    %v481 = vlaneseq
    %v482 = vshrl.u32 %v481, 7
    %v483 = vsub.s32 0, %v482
    %v484 = vrot.slane %v479, %v483
    %v485 = vlaneseq
    %v486 = vshrl.u32 %v485, 7
    %v487 = vsub.s32 1, %v486
    %v488 = vrot.slane %v479, %v487
    %v489 = vlaneseq
    %v490 = vshrl.u32 %v489, 7
    %v491 = vsub.s32 2, %v490
    %v492 = vrot.slane %v479, %v491
    %v493 = vlaneseq
    %v494 = vshrl.u32 %v493, 7
    %v495 = vsub.s32 3, %v494
    %v496 = vrot.slane %v479, %v495
    %v501 = vmul.f32 %v474, %v484
    %v502 = vmul.f32 %v470, %v488
    %v503 = vmul.f32 %v466, %v492
    %v504 = vmul.f32 %v462, %v496
    %v505 = vmul.f32 %v475, %v484
    %v506 = vmul.f32 %v471, %v488
    %v507 = vmul.f32 %v467, %v492
    %v508 = vmul.f32 %v463, %v496
    %v509 = vmul.f32 %v476, %v484
    %v510 = vmul.f32 %v472, %v488
    %v511 = vmul.f32 %v468, %v492
    %v512 = vmul.f32 %v464, %v496
    %v513 = vmul.f32 %v477, %v484
    %v514 = vmul.f32 %v473, %v488
    %v515 = vmul.f32 %v469, %v492
    %v516 = vmul.f32 %v465, %v496
    %517 = vrot.lane.b32.xlu0 %v236, 1
    %v518 = vpop.permute.xlu0 %517
    %519 = vrot.lane.b32.xlu0 %v240, 1
    %v520 = vpop.permute.xlu0 %519
    %521 = vrot.lane.b32.xlu0 %v244, 1
    %v522 = vpop.permute.xlu0 %521
    %523 = vrot.lane.b32.xlu0 %v248, 1
    %v524 = vpop.permute.xlu0 %523
    %525 = vrot.lane.b32.xlu0 %v237, 1
    %v526 = vpop.permute.xlu0 %525
    %527 = vrot.lane.b32.xlu0 %v241, 1
    %v528 = vpop.permute.xlu0 %527
    %529 = vrot.lane.b32.xlu0 %v245, 1
    %v530 = vpop.permute.xlu0 %529
    %531 = vrot.lane.b32.xlu0 %v249, 1
    %v532 = vpop.permute.xlu0 %531
    %533 = vrot.lane.b32.xlu0 %v238, 1
    %v534 = vpop.permute.xlu0 %533
    %535 = vrot.lane.b32.xlu0 %v242, 1
    %v536 = vpop.permute.xlu0 %535
    %537 = vrot.lane.b32.xlu0 %v246, 1
    %v538 = vpop.permute.xlu0 %537
    %539 = vrot.lane.b32.xlu0 %v250, 1
    %v540 = vpop.permute.xlu0 %539
    %541 = vrot.lane.b32.xlu0 %v239, 1
    %v542 = vpop.permute.xlu0 %541
    %543 = vrot.lane.b32.xlu0 %v243, 1
    %v544 = vpop.permute.xlu0 %543
    %545 = vrot.lane.b32.xlu0 %v247, 1
    %v546 = vpop.permute.xlu0 %545
    %547 = vrot.lane.b32.xlu0 %v251, 1
    %v548 = vpop.permute.xlu0 %547
    %vm549 = vcmp.lt.s32.totalorder %v285, 1
    %v550 = vsel %vm549, %v534, %v542
    %v551 = vsel %vm549, %v536, %v544
    %v552 = vsel %vm549, %v538, %v546
    %v553 = vsel %vm549, %v540, %v548
    %v554 = vsel %vm549, %v526, %v534
    %v555 = vsel %vm549, %v528, %v536
    %v556 = vsel %vm549, %v530, %v538
    %v557 = vsel %vm549, %v532, %v540
    %v558 = vsel %vm549, %v518, %v526
    %v559 = vsel %vm549, %v520, %v528
    %v560 = vsel %vm549, %v522, %v530
    %v561 = vsel %vm549, %v524, %v532
    %v562 = vsel %vm549, %v542, %v518
    %v563 = vsel %vm549, %v544, %v520
    %v564 = vsel %vm549, %v546, %v522
    %v565 = vsel %vm549, %v548, %v524
    %s566 = scalar_lea.vmem [#allocation5], 12
    %v567 = vld [vmem:[%s566] sm:$0xf]
    %v569 = vlaneseq
    %v570 = vshrl.u32 %v569, 7
    %v571 = vsub.s32 0, %v570
    %v572 = vrot.slane %v567, %v571
    %v573 = vlaneseq
    %v574 = vshrl.u32 %v573, 7
    %v575 = vsub.s32 1, %v574
    %v576 = vrot.slane %v567, %v575
    %v577 = vlaneseq
    %v578 = vshrl.u32 %v577, 7
    %v579 = vsub.s32 2, %v578
    %v580 = vrot.slane %v567, %v579
    %v581 = vlaneseq
    %v582 = vshrl.u32 %v581, 7
    %v583 = vsub.s32 3, %v582
    %v584 = vrot.slane %v567, %v583
    %v589 = vmul.f32 %v562, %v572
    %v590 = vmul.f32 %v558, %v576
    %v591 = vmul.f32 %v554, %v580
    %v592 = vmul.f32 %v550, %v584
    %v593 = vmul.f32 %v563, %v572
    %v594 = vmul.f32 %v559, %v576
    %v595 = vmul.f32 %v555, %v580
    %v596 = vmul.f32 %v551, %v584
    %v597 = vmul.f32 %v564, %v572
    %v598 = vmul.f32 %v560, %v576
    %v599 = vmul.f32 %v556, %v580
    %v600 = vmul.f32 %v552, %v584
    %v601 = vmul.f32 %v565, %v572
    %v602 = vmul.f32 %v561, %v576
    %v603 = vmul.f32 %v557, %v580
    %v604 = vmul.f32 %v553, %v584
    %605 = vrot.lane.b32.xlu0 %v236, 127
    %v606 = vpop.permute.xlu0 %605
    %607 = vrot.lane.b32.xlu0 %v240, 127
    %v608 = vpop.permute.xlu0 %607
    %609 = vrot.lane.b32.xlu0 %v244, 127
    %v610 = vpop.permute.xlu0 %609
    %611 = vrot.lane.b32.xlu0 %v248, 127
    %v612 = vpop.permute.xlu0 %611
    %613 = vrot.lane.b32.xlu0 %v237, 127
    %v614 = vpop.permute.xlu0 %613
    %615 = vrot.lane.b32.xlu0 %v241, 127
    %v616 = vpop.permute.xlu0 %615
    %617 = vrot.lane.b32.xlu0 %v245, 127
    %v618 = vpop.permute.xlu0 %617
    %619 = vrot.lane.b32.xlu0 %v249, 127
    %v620 = vpop.permute.xlu0 %619
    %621 = vrot.lane.b32.xlu0 %v238, 127
    %v622 = vpop.permute.xlu0 %621
    %623 = vrot.lane.b32.xlu0 %v242, 127
    %v624 = vpop.permute.xlu0 %623
    %625 = vrot.lane.b32.xlu0 %v246, 127
    %v626 = vpop.permute.xlu0 %625
    %627 = vrot.lane.b32.xlu0 %v250, 127
    %v628 = vpop.permute.xlu0 %627
    %629 = vrot.lane.b32.xlu0 %v239, 127
    %v630 = vpop.permute.xlu0 %629
    %631 = vrot.lane.b32.xlu0 %v243, 127
    %v632 = vpop.permute.xlu0 %631
    %633 = vrot.lane.b32.xlu0 %v247, 127
    %v634 = vpop.permute.xlu0 %633
    %635 = vrot.lane.b32.xlu0 %v251, 127
    %v636 = vpop.permute.xlu0 %635
    %vm637 = vcmp.lt.s32.totalorder %v285, 127
    %v638 = vsel %vm637, %v622, %v630
    %v639 = vsel %vm637, %v624, %v632
    %v640 = vsel %vm637, %v626, %v634
    %v641 = vsel %vm637, %v628, %v636
    %v642 = vsel %vm637, %v614, %v622
    %v643 = vsel %vm637, %v616, %v624
    %v644 = vsel %vm637, %v618, %v626
    %v645 = vsel %vm637, %v620, %v628
    %v646 = vsel %vm637, %v606, %v614
    %v647 = vsel %vm637, %v608, %v616
    %v648 = vsel %vm637, %v610, %v618
    %v649 = vsel %vm637, %v612, %v620
    %v650 = vsel %vm637, %v630, %v606
    %v651 = vsel %vm637, %v632, %v608
    %v652 = vsel %vm637, %v634, %v610
    %v653 = vsel %vm637, %v636, %v612
    %s654 = scalar_lea.vmem [#allocation5], 20
    %v655 = vld [vmem:[%s654] sm:$0xf]
    %v657 = vlaneseq
    %v658 = vshrl.u32 %v657, 7
    %v659 = vsub.s32 0, %v658
    %v660 = vrot.slane %v655, %v659
    %v661 = vlaneseq
    %v662 = vshrl.u32 %v661, 7
    %v663 = vsub.s32 1, %v662
    %v664 = vrot.slane %v655, %v663
    %v665 = vlaneseq
    %v666 = vshrl.u32 %v665, 7
    %v667 = vsub.s32 2, %v666
    %v668 = vrot.slane %v655, %v667
    %v669 = vlaneseq
    %v670 = vshrl.u32 %v669, 7
    %v671 = vsub.s32 3, %v670
    %v672 = vrot.slane %v655, %v671
    %v677 = vmul.f32 %v646, %v660
    %v678 = vmul.f32 %v642, %v664
    %v679 = vmul.f32 %v638, %v668
    %v680 = vmul.f32 %v650, %v672
    %v681 = vmul.f32 %v647, %v660
    %v682 = vmul.f32 %v643, %v664
    %v683 = vmul.f32 %v639, %v668
    %v684 = vmul.f32 %v651, %v672
    %v685 = vmul.f32 %v648, %v660
    %v686 = vmul.f32 %v644, %v664
    %v687 = vmul.f32 %v640, %v668
    %v688 = vmul.f32 %v652, %v672
    %v689 = vmul.f32 %v649, %v660
    %v690 = vmul.f32 %v645, %v664
    %v691 = vmul.f32 %v641, %v668
    %v692 = vmul.f32 %v653, %v672
    %693 = vrot.lane.b32.xlu0 %v236, 113
    %v694 = vpop.permute.xlu0 %693
    %695 = vrot.lane.b32.xlu0 %v240, 113
    %v696 = vpop.permute.xlu0 %695
    %697 = vrot.lane.b32.xlu0 %v244, 113
    %v698 = vpop.permute.xlu0 %697
    %699 = vrot.lane.b32.xlu0 %v248, 113
    %v700 = vpop.permute.xlu0 %699
    %701 = vrot.lane.b32.xlu0 %v237, 113
    %v702 = vpop.permute.xlu0 %701
    %703 = vrot.lane.b32.xlu0 %v241, 113
    %v704 = vpop.permute.xlu0 %703
    %705 = vrot.lane.b32.xlu0 %v245, 113
    %v706 = vpop.permute.xlu0 %705
    %707 = vrot.lane.b32.xlu0 %v249, 113
    %v708 = vpop.permute.xlu0 %707
    %709 = vrot.lane.b32.xlu0 %v238, 113
    %v710 = vpop.permute.xlu0 %709
    %711 = vrot.lane.b32.xlu0 %v242, 113
    %v712 = vpop.permute.xlu0 %711
    %713 = vrot.lane.b32.xlu0 %v246, 113
    %v714 = vpop.permute.xlu0 %713
    %715 = vrot.lane.b32.xlu0 %v250, 113
    %v716 = vpop.permute.xlu0 %715
    %717 = vrot.lane.b32.xlu0 %v239, 113
    %v718 = vpop.permute.xlu0 %717
    %719 = vrot.lane.b32.xlu0 %v243, 113
    %v720 = vpop.permute.xlu0 %719
    %721 = vrot.lane.b32.xlu0 %v247, 113
    %v722 = vpop.permute.xlu0 %721
    %723 = vrot.lane.b32.xlu0 %v251, 113
    %v724 = vpop.permute.xlu0 %723
    %vm725 = vcmp.lt.s32.totalorder %v285, 113
    %v726 = vsel %vm725, %v710, %v718
    %v727 = vsel %vm725, %v712, %v720
    %v728 = vsel %vm725, %v714, %v722
    %v729 = vsel %vm725, %v716, %v724
    %v730 = vsel %vm725, %v702, %v710
    %v731 = vsel %vm725, %v704, %v712
    %v732 = vsel %vm725, %v706, %v714
    %v733 = vsel %vm725, %v708, %v716
    %v734 = vsel %vm725, %v694, %v702
    %v735 = vsel %vm725, %v696, %v704
    %v736 = vsel %vm725, %v698, %v706
    %v737 = vsel %vm725, %v700, %v708
    %v738 = vsel %vm725, %v718, %v694
    %v739 = vsel %vm725, %v720, %v696
    %v740 = vsel %vm725, %v722, %v698
    %v741 = vsel %vm725, %v724, %v700
    %s742 = scalar_lea.vmem [#allocation5], 24
    %v743 = vld [vmem:[%s742] sm:$0xf]
    %v745 = vlaneseq
    %v746 = vshrl.u32 %v745, 7
    %v747 = vsub.s32 0, %v746
    %v748 = vrot.slane %v743, %v747
    %v749 = vlaneseq
    %v750 = vshrl.u32 %v749, 7
    %v751 = vsub.s32 1, %v750
    %v752 = vrot.slane %v743, %v751
    %v753 = vlaneseq
    %v754 = vshrl.u32 %v753, 7
    %v755 = vsub.s32 2, %v754
    %v756 = vrot.slane %v743, %v755
    %v757 = vlaneseq
    %v758 = vshrl.u32 %v757, 7
    %v759 = vsub.s32 3, %v758
    %v760 = vrot.slane %v743, %v759
    %v765 = vmul.f32 %v734, %v748
    %v766 = vmul.f32 %v730, %v752
    %v767 = vmul.f32 %v726, %v756
    %v768 = vmul.f32 %v738, %v760
    %v769 = vmul.f32 %v735, %v748
    %v770 = vmul.f32 %v731, %v752
    %v771 = vmul.f32 %v727, %v756
    %v772 = vmul.f32 %v739, %v760
    %v773 = vmul.f32 %v736, %v748
    %v774 = vmul.f32 %v732, %v752
    %v775 = vmul.f32 %v728, %v756
    %v776 = vmul.f32 %v740, %v760
    %v777 = vmul.f32 %v737, %v748
    %v778 = vmul.f32 %v733, %v752
    %v779 = vmul.f32 %v729, %v756
    %v780 = vmul.f32 %v741, %v760
    %781 = vrot.lane.b32.xlu0 %v236, 112
    %v782 = vpop.permute.xlu0 %781
    %783 = vrot.lane.b32.xlu0 %v240, 112
    %v784 = vpop.permute.xlu0 %783
    %785 = vrot.lane.b32.xlu0 %v244, 112
    %v786 = vpop.permute.xlu0 %785
    %787 = vrot.lane.b32.xlu0 %v248, 112
    %v788 = vpop.permute.xlu0 %787
    %789 = vrot.lane.b32.xlu0 %v237, 112
    %v790 = vpop.permute.xlu0 %789
    %791 = vrot.lane.b32.xlu0 %v241, 112
    %v792 = vpop.permute.xlu0 %791
    %793 = vrot.lane.b32.xlu0 %v245, 112
    %v794 = vpop.permute.xlu0 %793
    %795 = vrot.lane.b32.xlu0 %v249, 112
    %v796 = vpop.permute.xlu0 %795
    %797 = vrot.lane.b32.xlu0 %v238, 112
    %v798 = vpop.permute.xlu0 %797
    %799 = vrot.lane.b32.xlu0 %v242, 112
    %v800 = vpop.permute.xlu0 %799
    %801 = vrot.lane.b32.xlu0 %v246, 112
    %v802 = vpop.permute.xlu0 %801
    %803 = vrot.lane.b32.xlu0 %v250, 112
    %v804 = vpop.permute.xlu0 %803
    %805 = vrot.lane.b32.xlu0 %v239, 112
    %v806 = vpop.permute.xlu0 %805
    %807 = vrot.lane.b32.xlu0 %v243, 112
    %v808 = vpop.permute.xlu0 %807
    %809 = vrot.lane.b32.xlu0 %v247, 112
    %v810 = vpop.permute.xlu0 %809
    %811 = vrot.lane.b32.xlu0 %v251, 112
    %v812 = vpop.permute.xlu0 %811
    %vm813 = vcmp.lt.s32.totalorder %v285, 112
    %v814 = vsel %vm813, %v798, %v806
    %v815 = vsel %vm813, %v800, %v808
    %v816 = vsel %vm813, %v802, %v810
    %v817 = vsel %vm813, %v804, %v812
    %v818 = vsel %vm813, %v790, %v798
    %v819 = vsel %vm813, %v792, %v800
    %v820 = vsel %vm813, %v794, %v802
    %v821 = vsel %vm813, %v796, %v804
    %v822 = vsel %vm813, %v782, %v790
    %v823 = vsel %vm813, %v784, %v792
    %v824 = vsel %vm813, %v786, %v794
    %v825 = vsel %vm813, %v788, %v796
    %v826 = vsel %vm813, %v806, %v782
    %v827 = vsel %vm813, %v808, %v784
    %v828 = vsel %vm813, %v810, %v786
    %v829 = vsel %vm813, %v812, %v788
    %s830 = scalar_lea.vmem [#allocation5], 28
    %v831 = vld [vmem:[%s830] sm:$0xf]
    %v833 = vlaneseq
    %v834 = vshrl.u32 %v833, 7
    %v835 = vsub.s32 0, %v834
    %v836 = vrot.slane %v831, %v835
    %v837 = vlaneseq
    %v838 = vshrl.u32 %v837, 7
    %v839 = vsub.s32 1, %v838
    %v840 = vrot.slane %v831, %v839
    %v841 = vlaneseq
    %v842 = vshrl.u32 %v841, 7
    %v843 = vsub.s32 2, %v842
    %v844 = vrot.slane %v831, %v843
    %v845 = vlaneseq
    %v846 = vshrl.u32 %v845, 7
    %v847 = vsub.s32 3, %v846
    %v848 = vrot.slane %v831, %v847
    %v853 = vmul.f32 %v822, %v836
    %v854 = vmul.f32 %v818, %v840
    %v855 = vmul.f32 %v814, %v844
    %v856 = vmul.f32 %v826, %v848
    %v857 = vmul.f32 %v823, %v836
    %v858 = vmul.f32 %v819, %v840
    %v859 = vmul.f32 %v815, %v844
    %v860 = vmul.f32 %v827, %v848
    %v861 = vmul.f32 %v824, %v836
    %v862 = vmul.f32 %v820, %v840
    %v863 = vmul.f32 %v816, %v844
    %v864 = vmul.f32 %v828, %v848
    %v865 = vmul.f32 %v825, %v836
    %v866 = vmul.f32 %v821, %v840
    %v867 = vmul.f32 %v817, %v844
    %v868 = vmul.f32 %v829, %v848
    %869 = vrot.lane.b32.xlu0 %v236, 111
    %v870 = vpop.permute.xlu0 %869
    %871 = vrot.lane.b32.xlu0 %v240, 111
    %v872 = vpop.permute.xlu0 %871
    %873 = vrot.lane.b32.xlu0 %v244, 111
    %v874 = vpop.permute.xlu0 %873
    %875 = vrot.lane.b32.xlu0 %v248, 111
    %v876 = vpop.permute.xlu0 %875
    %877 = vrot.lane.b32.xlu0 %v237, 111
    %v878 = vpop.permute.xlu0 %877
    %879 = vrot.lane.b32.xlu0 %v241, 111
    %v880 = vpop.permute.xlu0 %879
    %881 = vrot.lane.b32.xlu0 %v245, 111
    %v882 = vpop.permute.xlu0 %881
    %883 = vrot.lane.b32.xlu0 %v249, 111
    %v884 = vpop.permute.xlu0 %883
    %885 = vrot.lane.b32.xlu0 %v238, 111
    %v886 = vpop.permute.xlu0 %885
    %887 = vrot.lane.b32.xlu0 %v242, 111
    %v888 = vpop.permute.xlu0 %887
    %889 = vrot.lane.b32.xlu0 %v246, 111
    %v890 = vpop.permute.xlu0 %889
    %891 = vrot.lane.b32.xlu0 %v250, 111
    %v892 = vpop.permute.xlu0 %891
    %893 = vrot.lane.b32.xlu0 %v239, 111
    %v894 = vpop.permute.xlu0 %893
    %895 = vrot.lane.b32.xlu0 %v243, 111
    %v896 = vpop.permute.xlu0 %895
    %897 = vrot.lane.b32.xlu0 %v247, 111
    %v898 = vpop.permute.xlu0 %897
    %899 = vrot.lane.b32.xlu0 %v251, 111
    %v900 = vpop.permute.xlu0 %899
    %vm901 = vcmp.lt.s32.totalorder %v285, 111
    %v902 = vsel %vm901, %v886, %v894
    %v903 = vsel %vm901, %v888, %v896
    %v904 = vsel %vm901, %v890, %v898
    %v905 = vsel %vm901, %v892, %v900
    %v906 = vsel %vm901, %v878, %v886
    %v907 = vsel %vm901, %v880, %v888
    %v908 = vsel %vm901, %v882, %v890
    %v909 = vsel %vm901, %v884, %v892
    %v910 = vsel %vm901, %v870, %v878
    %v911 = vsel %vm901, %v872, %v880
    %v912 = vsel %vm901, %v874, %v882
    %v913 = vsel %vm901, %v876, %v884
    %v914 = vsel %vm901, %v894, %v870
    %v915 = vsel %vm901, %v896, %v872
    %v916 = vsel %vm901, %v898, %v874
    %v917 = vsel %vm901, %v900, %v876
    %s918 = scalar_lea.vmem [#allocation5], 32
    %v919 = vld [vmem:[%s918] sm:$0xf]
    %v921 = vlaneseq
    %v922 = vshrl.u32 %v921, 7
    %v923 = vsub.s32 0, %v922
    %v924 = vrot.slane %v919, %v923
    %v925 = vlaneseq
    %v926 = vshrl.u32 %v925, 7
    %v927 = vsub.s32 1, %v926
    %v928 = vrot.slane %v919, %v927
    %v929 = vlaneseq
    %v930 = vshrl.u32 %v929, 7
    %v931 = vsub.s32 2, %v930
    %v932 = vrot.slane %v919, %v931
    %v933 = vlaneseq
    %v934 = vshrl.u32 %v933, 7
    %v935 = vsub.s32 3, %v934
    %v936 = vrot.slane %v919, %v935
    %v941 = vmul.f32 %v910, %v924
    %v942 = vmul.f32 %v906, %v928
    %v943 = vmul.f32 %v902, %v932
    %v944 = vmul.f32 %v914, %v936
    %v945 = vmul.f32 %v911, %v924
    %v946 = vmul.f32 %v907, %v928
    %v947 = vmul.f32 %v903, %v932
    %v948 = vmul.f32 %v915, %v936
    %v949 = vmul.f32 %v912, %v924
    %v950 = vmul.f32 %v908, %v928
    %v951 = vmul.f32 %v904, %v932
    %v952 = vmul.f32 %v916, %v936
    %v953 = vmul.f32 %v913, %v924
    %v954 = vmul.f32 %v909, %v928
    %v955 = vmul.f32 %v905, %v932
    %v956 = vmul.f32 %v917, %v936
    %v957 = vld [vmem:[#allocation7] sm:$0xff]
    %v958 = vld [vmem:[#allocation7 + $0x8] sm:$0xff]
    %v959 = vld [vmem:[#allocation7 + $0x10] sm:$0xff]
    %v960 = vld [vmem:[#allocation7 + $0x18] sm:$0xff]
    %v961 = vld [vmem:[#allocation7 + $0x20] sm:$0xff]
    %v962 = vld [vmem:[#allocation7 + $0x28] sm:$0xff]
    %v963 = vld [vmem:[#allocation7 + $0x30] sm:$0xff]
    %v964 = vld [vmem:[#allocation7 + $0x38] sm:$0xff]
    %v965 = vld [vmem:[#allocation7 + $0x40] sm:$0xff]
    %v966 = vld [vmem:[#allocation7 + $0x48] sm:$0xff]
    %v967 = vld [vmem:[#allocation7 + $0x50] sm:$0xff]
    %v968 = vld [vmem:[#allocation7 + $0x58] sm:$0xff]
    %v969 = vld [vmem:[#allocation8] sm:$0xff]
    %v970 = vld [vmem:[#allocation8 + $0x8] sm:$0xff]
    %v971 = vld [vmem:[#allocation8 + $0x10] sm:$0xff]
    %v972 = vld [vmem:[#allocation8 + $0x18] sm:$0xff]
    %974 = vset.pattern.permute.xlu0 0
    %975 = vperm.xlu0 %974, %v969
    %v976 = vpop.permute.xlu0 %975
    %979 = vset.pattern.permute.xlu0 0
    %980 = vperm.xlu0 %979, %v970
    %v981 = vpop.permute.xlu0 %980
    %984 = vset.pattern.permute.xlu0 0
    %985 = vperm.xlu0 %984, %v971
    %v986 = vpop.permute.xlu0 %985
    %989 = vset.pattern.permute.xlu0 0
    %990 = vperm.xlu0 %989, %v972
    %v991 = vpop.permute.xlu0 %990
    %vm993 = vcmask 261120
    %v995 = vsel %vm993, %v959, 0
    %v998 = vsel %vm993, %v962, 0
    %v1001 = vsel %vm993, %v965, 0
    %v1004 = vsel %vm993, %v968, 0
    %1006 = vmatprep.subr.mxu0 %v326
    %1007 = vmatpush1.msra.mxu0 %v325
    %1008 = vmatprep.subr.mxu0 %v330
    %1009 = vmatpush1.msra.mxu0 %v329
    %1010 = vmatprep.subr.mxu0 %v334
    %1011 = vmatpush1.msra.mxu0 %v333
    %1012 = vmatprep.subr.mxu0 %v338
    %1013 = vmatpush1.msra.mxu0 %v337
    %1014 = vmatprep.subr.mxu0 %v414
    %1015 = vmatpush1.msra.mxu0 %v413
    %1016 = vmatprep.subr.mxu0 %v418
    %1017 = vmatpush1.msra.mxu0 %v417
    %1018 = vmatprep.subr.mxu0 %v422
    %1019 = vmatpush1.msra.mxu0 %v421
    %1020 = vmatprep.subr.mxu0 %v426
    %1021 = vmatpush1.msra.mxu0 %v425
    %1022 = vmatprep.subr.mxu0 %v502
    %1023 = vmatpush1.msra.mxu0 %v501
    %1024 = vmatprep.subr.mxu0 %v506
    %1025 = vmatpush1.msra.mxu0 %v505
    %1026 = vmatprep.subr.mxu0 %v510
    %1027 = vmatpush1.msra.mxu0 %v509
    %1028 = vmatprep.subr.mxu0 %v514
    %1029 = vmatpush1.msra.mxu0 %v513
    %1030 = vmatprep.subr.mxu0 %v590
    %1031 = vmatpush1.msra.mxu0 %v589
    %1032 = vmatprep.subr.mxu0 %v594
    %1033 = vmatpush1.msra.mxu0 %v593
    %1034 = vmatprep.subr.mxu0 %v598
    %1035 = vmatpush1.msra.mxu0 %v597
    %1036 = vmatprep.subr.mxu0 %v602
    %1037 = vmatpush1.msra.mxu0 %v601
    %1038 = vmatprep.subr.mxu0 %v237
    %1039 = vmatpush1.msra.mxu0 %v236
    %1040 = vmatprep.subr.mxu0 %v241
    %1041 = vmatpush1.msra.mxu0 %v240
    %1042 = vmatprep.subr.mxu0 %v245
    %1043 = vmatpush1.msra.mxu0 %v244
    %1044 = vmatprep.subr.mxu0 %v249
    %1045 = vmatpush1.msra.mxu0 %v248
    %1046 = vmatprep.subr.mxu0 %v678
    %1047 = vmatpush1.msra.mxu0 %v677
    %1048 = vmatprep.subr.mxu0 %v682
    %1049 = vmatpush1.msra.mxu0 %v681
    %1050 = vmatprep.subr.mxu0 %v686
    %1051 = vmatpush1.msra.mxu0 %v685
    %1052 = vmatprep.subr.mxu0 %v690
    %1053 = vmatpush1.msra.mxu0 %v689
    %1054 = vmatprep.subr.mxu0 %v766
    %1055 = vmatpush1.msra.mxu0 %v765
    %1056 = vmatprep.subr.mxu0 %v770
    %1057 = vmatpush1.msra.mxu0 %v769
    %1058 = vmatprep.subr.mxu0 %v774
    %1059 = vmatpush1.msra.mxu0 %v773
    %1060 = vmatprep.subr.mxu0 %v778
    %1061 = vmatpush1.msra.mxu0 %v777
    %1062 = vmatprep.subr.mxu0 %v854
    %1063 = vmatpush1.msra.mxu0 %v853
    %1064 = vmatprep.subr.mxu0 %v858
    %1065 = vmatpush1.msra.mxu0 %v857
    %1066 = vmatprep.subr.mxu0 %v862
    %1067 = vmatpush1.msra.mxu0 %v861
    %1068 = vmatprep.subr.mxu0 %v866
    %1069 = vmatpush1.msra.mxu0 %v865
    %1070 = vmatprep.mubr.f32.mxu0 %v958
    %1071 = vmatmul.mubr.f32.gmra.mrb[0].mxu0 %v957
    %v1072 = vpop.f32.mrb[0].mxu0
    %v1073 = vadd.f32 %v976, %v1072
    %v1074 = vpop.f32.mrb[0].mxu0
    %v1075 = vadd.f32 %v976, %v1074
    %1076 = vmatprep.mubr.f32.mxu0 %v961
    %1077 = vmatmul.mubr.f32.gmra.mrb[0].mxu0 %v960
    %v1078 = vpop.f32.mrb[0].mxu0
    %v1079 = vadd.f32 %v981, %v1078
    %v1080 = vpop.f32.mrb[0].mxu0
    %v1081 = vadd.f32 %v981, %v1080
    %1082 = vmatprep.mubr.f32.mxu0 %v964
    %1083 = vmatmul.mubr.f32.gmra.mrb[0].mxu0 %v963
    %v1084 = vpop.f32.mrb[0].mxu0
    %v1085 = vadd.f32 %v986, %v1084
    %v1086 = vpop.f32.mrb[0].mxu0
    %v1087 = vadd.f32 %v986, %v1086
    %1088 = vmatprep.mubr.f32.mxu0 %v967
    %1089 = vmatmul.mubr.f32.gmra.mrb[0].mxu0 %v966
    %v1090 = vpop.f32.mrb[0].mxu0
    %v1091 = vadd.f32 %v991, %v1090
    %v1092 = vpop.f32.mrb[0].mxu0
    %v1093 = vadd.f32 %v991, %v1092
    %1094 = vdwg.mxu0
    %1095 = vmatprep.subr.mxu0 %v942
    %1096 = vmatpush1.msra.mxu0 %v941
    %1097 = vmatprep.subr.mxu0 %v946
    %1098 = vmatpush1.msra.mxu0 %v945
    %1099 = vmatprep.subr.mxu0 %v950
    %1100 = vmatpush1.msra.mxu0 %v949
    %1101 = vmatprep.subr.mxu0 %v954
    %1102 = vmatpush1.msra.mxu0 %v953
    %1103 = vmatprep.subr.mxu0 0.0
    %1104 = vmatpush1.msra.mxu0 0.0
    %1105 = vmatprep.subr.mxu0 0.0
    %1106 = vmatpush1.msra.mxu0 0.0
    %1107 = vmatprep.subr.mxu0 0.0
    %1108 = vmatpush1.msra.mxu0 0.0
    %1109 = vmatprep.subr.mxu0 0.0
    %1110 = vmatpush1.msra.mxu0 0.0
    %1111 = vmatprep.subr.mxu0 0.0
    %1112 = vmatpush1.msra.mxu0 0.0
    %1113 = vmatprep.subr.mxu0 0.0
    %1114 = vmatpush1.msra.mxu0 0.0
    %1115 = vmatprep.subr.mxu0 0.0
    %1116 = vmatpush1.msra.mxu0 0.0
    %1117 = vmatprep.subr.mxu0 0.0
    %1118 = vmatpush1.msra.mxu0 0.0
    %1119 = vmatprep.subr.mxu0 0.0
    %1120 = vmatpush1.msra.mxu0 0.0
    %1121 = vmatprep.subr.mxu0 0.0
    %1122 = vmatpush1.msra.mxu0 0.0
    %1123 = vmatprep.subr.mxu0 0.0
    %1124 = vmatpush1.msra.mxu0 0.0
    %1125 = vmatprep.subr.mxu0 0.0
    %1126 = vmatpush1.msra.mxu0 0.0
    %1127 = vmatprep.subr.mxu0 0.0
    %1128 = vmatpush1.msra.mxu0 0.0
    %1129 = vmatprep.subr.mxu0 0.0
    %1130 = vmatpush1.msra.mxu0 0.0
    %1131 = vmatprep.subr.mxu0 0.0
    %1132 = vmatpush1.msra.mxu0 0.0
    %1133 = vmatprep.subr.mxu0 0.0
    %1134 = vmatpush1.msra.mxu0 0.0
    %1135 = vmatprep.subr.mxu0 0.0
    %1136 = vmatpush1.msra.mxu0 0.0
    %1137 = vmatprep.subr.mxu0 0.0
    %1138 = vmatpush1.msra.mxu0 0.0
    %1139 = vmatprep.subr.mxu0 0.0
    %1140 = vmatpush1.msra.mxu0 0.0
    %1141 = vmatprep.subr.mxu0 0.0
    %1142 = vmatpush1.msra.mxu0 0.0
    %1143 = vmatprep.subr.mxu0 0.0
    %1144 = vmatpush1.msra.mxu0 0.0
    %1145 = vmatprep.subr.mxu0 0.0
    %1146 = vmatpush1.msra.mxu0 0.0
    %1147 = vmatprep.subr.mxu0 0.0
    %1148 = vmatpush1.msra.mxu0 0.0
    %1149 = vmatprep.subr.mxu0 0.0
    %1150 = vmatpush1.msra.mxu0 0.0
    %1151 = vmatprep.subr.mxu0 0.0
    %1152 = vmatpush1.msra.mxu0 0.0
    %1153 = vmatprep.subr.mxu0 0.0
    %1154 = vmatpush1.msra.mxu0 0.0
    %1155 = vmatprep.subr.mxu0 0.0
    %1156 = vmatpush1.msra.mxu0 0.0
    %1157 = vmatprep.subr.mxu0 0.0
    %1158 = vmatpush1.msra.mxu0 0.0
    %1159 = vmatprep.mubr.f32.mxu0 0.0
    %1160 = vmatmul.mubr.f32.gmra.mrb[0].mxu0 %v995
    %v1161 = vpop.f32.mrb[0].mxu0
    %v1162 = vadd.f32 %v1073, %v1161
    %v1163 = vpop.f32.mrb[0].mxu0
    %v1164 = vadd.f32 %v1075, %v1163
    %1165 = vmatprep.mubr.f32.mxu0 0.0
    %1166 = vmatmul.mubr.f32.gmra.mrb[0].mxu0 %v998
    %v1167 = vpop.f32.mrb[0].mxu0
    %v1168 = vadd.f32 %v1079, %v1167
    %v1169 = vpop.f32.mrb[0].mxu0
    %v1170 = vadd.f32 %v1081, %v1169
    %1171 = vmatprep.mubr.f32.mxu0 0.0
    %1172 = vmatmul.mubr.f32.gmra.mrb[0].mxu0 %v1001
    %v1173 = vpop.f32.mrb[0].mxu0
    %v1174 = vadd.f32 %v1085, %v1173
    %v1175 = vpop.f32.mrb[0].mxu0
    %v1176 = vadd.f32 %v1087, %v1175
    %1177 = vmatprep.mubr.f32.mxu0 0.0
    %1178 = vmatmul.mubr.f32.gmra.mrb[0].mxu0 %v1004
    %v1179 = vpop.f32.mrb[0].mxu0
    %v1180 = vadd.f32 %v1091, %v1179
    %v1181 = vpop.f32.mrb[0].mxu0
    %v1182 = vadd.f32 %v1093, %v1181
    %1183 = vdwg.mxu0
    %1184 = vmatprep.subr.mxu0 %v328
    %1185 = vmatpush1.msra.mxu0 %v327
    %1186 = vmatprep.subr.mxu0 %v332
    %1187 = vmatpush1.msra.mxu0 %v331
    %1188 = vmatprep.subr.mxu0 %v336
    %1189 = vmatpush1.msra.mxu0 %v335
    %1190 = vmatprep.subr.mxu0 %v340
    %1191 = vmatpush1.msra.mxu0 %v339
    %1192 = vmatprep.subr.mxu0 %v416
    %1193 = vmatpush1.msra.mxu0 %v415
    %1194 = vmatprep.subr.mxu0 %v420
    %1195 = vmatpush1.msra.mxu0 %v419
    %1196 = vmatprep.subr.mxu0 %v424
    %1197 = vmatpush1.msra.mxu0 %v423
    %1198 = vmatprep.subr.mxu0 %v428
    %1199 = vmatpush1.msra.mxu0 %v427
    %1200 = vmatprep.subr.mxu0 %v504
    %1201 = vmatpush1.msra.mxu0 %v503
    %1202 = vmatprep.subr.mxu0 %v508
    %1203 = vmatpush1.msra.mxu0 %v507
    %1204 = vmatprep.subr.mxu0 %v512
    %1205 = vmatpush1.msra.mxu0 %v511
    %1206 = vmatprep.subr.mxu0 %v516
    %1207 = vmatpush1.msra.mxu0 %v515
    %1208 = vmatprep.subr.mxu0 %v592
    %1209 = vmatpush1.msra.mxu0 %v591
    %1210 = vmatprep.subr.mxu0 %v596
    %1211 = vmatpush1.msra.mxu0 %v595
    %1212 = vmatprep.subr.mxu0 %v600
    %1213 = vmatpush1.msra.mxu0 %v599
    %1214 = vmatprep.subr.mxu0 %v604
    %1215 = vmatpush1.msra.mxu0 %v603
    %1216 = vmatprep.subr.mxu0 %v239
    %1217 = vmatpush1.msra.mxu0 %v238
    %1218 = vmatprep.subr.mxu0 %v243
    %1219 = vmatpush1.msra.mxu0 %v242
    %1220 = vmatprep.subr.mxu0 %v247
    %1221 = vmatpush1.msra.mxu0 %v246
    %1222 = vmatprep.subr.mxu0 %v251
    %1223 = vmatpush1.msra.mxu0 %v250
    %1224 = vmatprep.subr.mxu0 %v680
    %1225 = vmatpush1.msra.mxu0 %v679
    %1226 = vmatprep.subr.mxu0 %v684
    %1227 = vmatpush1.msra.mxu0 %v683
    %1228 = vmatprep.subr.mxu0 %v688
    %1229 = vmatpush1.msra.mxu0 %v687
    %1230 = vmatprep.subr.mxu0 %v692
    %1231 = vmatpush1.msra.mxu0 %v691
    %1232 = vmatprep.subr.mxu0 %v768
    %1233 = vmatpush1.msra.mxu0 %v767
    %1234 = vmatprep.subr.mxu0 %v772
    %1235 = vmatpush1.msra.mxu0 %v771
    %1236 = vmatprep.subr.mxu0 %v776
    %1237 = vmatpush1.msra.mxu0 %v775
    %1238 = vmatprep.subr.mxu0 %v780
    %1239 = vmatpush1.msra.mxu0 %v779
    %1240 = vmatprep.subr.mxu0 %v856
    %1241 = vmatpush1.msra.mxu0 %v855
    %1242 = vmatprep.subr.mxu0 %v860
    %1243 = vmatpush1.msra.mxu0 %v859
    %1244 = vmatprep.subr.mxu0 %v864
    %1245 = vmatpush1.msra.mxu0 %v863
    %1246 = vmatprep.subr.mxu0 %v868
    %1247 = vmatpush1.msra.mxu0 %v867
    %1248 = vmatprep.mubr.f32.mxu0 %v958
    %1249 = vmatmul.mubr.f32.gmra.mrb[0].mxu0 %v957
    %v1250 = vpop.f32.mrb[0].mxu0
    %v1251 = vadd.f32 %v976, %v1250
    %v1252 = vpop.f32.mrb[0].mxu0
    %v1253 = vadd.f32 %v976, %v1252
    %1254 = vmatprep.mubr.f32.mxu0 %v961
    %1255 = vmatmul.mubr.f32.gmra.mrb[0].mxu0 %v960
    %v1256 = vpop.f32.mrb[0].mxu0
    %v1257 = vadd.f32 %v981, %v1256
    %v1258 = vpop.f32.mrb[0].mxu0
    %v1259 = vadd.f32 %v981, %v1258
    %1260 = vmatprep.mubr.f32.mxu0 %v964
    %1261 = vmatmul.mubr.f32.gmra.mrb[0].mxu0 %v963
    %v1262 = vpop.f32.mrb[0].mxu0
    %v1263 = vadd.f32 %v986, %v1262
    %v1264 = vpop.f32.mrb[0].mxu0
    %v1265 = vadd.f32 %v986, %v1264
    %1266 = vmatprep.mubr.f32.mxu0 %v967
    %1267 = vmatmul.mubr.f32.gmra.mrb[0].mxu0 %v966
    %v1268 = vpop.f32.mrb[0].mxu0
    %v1269 = vadd.f32 %v991, %v1268
    %v1270 = vpop.f32.mrb[0].mxu0
    %v1271 = vadd.f32 %v991, %v1270
    %1272 = vdwg.mxu0
    %1273 = vmatprep.subr.mxu0 %v944
    %1274 = vmatpush1.msra.mxu0 %v943
    %1275 = vmatprep.subr.mxu0 %v948
    %1276 = vmatpush1.msra.mxu0 %v947
    %1277 = vmatprep.subr.mxu0 %v952
    %1278 = vmatpush1.msra.mxu0 %v951
    %1279 = vmatprep.subr.mxu0 %v956
    %1280 = vmatpush1.msra.mxu0 %v955
    %1281 = vmatprep.subr.mxu0 0.0
    %1282 = vmatpush1.msra.mxu0 0.0
    %1283 = vmatprep.subr.mxu0 0.0
    %1284 = vmatpush1.msra.mxu0 0.0
    %1285 = vmatprep.subr.mxu0 0.0
    %1286 = vmatpush1.msra.mxu0 0.0
    %1287 = vmatprep.subr.mxu0 0.0
    %1288 = vmatpush1.msra.mxu0 0.0
    %1289 = vmatprep.subr.mxu0 0.0
    %1290 = vmatpush1.msra.mxu0 0.0
    %1291 = vmatprep.subr.mxu0 0.0
    %1292 = vmatpush1.msra.mxu0 0.0
    %1293 = vmatprep.subr.mxu0 0.0
    %1294 = vmatpush1.msra.mxu0 0.0
    %1295 = vmatprep.subr.mxu0 0.0
    %1296 = vmatpush1.msra.mxu0 0.0
    %1297 = vmatprep.subr.mxu0 0.0
    %1298 = vmatpush1.msra.mxu0 0.0
    %1299 = vmatprep.subr.mxu0 0.0
    %1300 = vmatpush1.msra.mxu0 0.0
    %1301 = vmatprep.subr.mxu0 0.0
    %1302 = vmatpush1.msra.mxu0 0.0
    %1303 = vmatprep.subr.mxu0 0.0
    %1304 = vmatpush1.msra.mxu0 0.0
    %1305 = vmatprep.subr.mxu0 0.0
    %1306 = vmatpush1.msra.mxu0 0.0
    %1307 = vmatprep.subr.mxu0 0.0
    %1308 = vmatpush1.msra.mxu0 0.0
    %1309 = vmatprep.subr.mxu0 0.0
    %1310 = vmatpush1.msra.mxu0 0.0
    %1311 = vmatprep.subr.mxu0 0.0
    %1312 = vmatpush1.msra.mxu0 0.0
    %1313 = vmatprep.subr.mxu0 0.0
    %1314 = vmatpush1.msra.mxu0 0.0
    %1315 = vmatprep.subr.mxu0 0.0
    %1316 = vmatpush1.msra.mxu0 0.0
    %1317 = vmatprep.subr.mxu0 0.0
    %1318 = vmatpush1.msra.mxu0 0.0
    %1319 = vmatprep.subr.mxu0 0.0
    %1320 = vmatpush1.msra.mxu0 0.0
    %1321 = vmatprep.subr.mxu0 0.0
    %1322 = vmatpush1.msra.mxu0 0.0
    %1323 = vmatprep.subr.mxu0 0.0
    %1324 = vmatpush1.msra.mxu0 0.0
    %1325 = vmatprep.subr.mxu0 0.0
    %1326 = vmatpush1.msra.mxu0 0.0
    %1327 = vmatprep.subr.mxu0 0.0
    %1328 = vmatpush1.msra.mxu0 0.0
    %1329 = vmatprep.subr.mxu0 0.0
    %1330 = vmatpush1.msra.mxu0 0.0
    %1331 = vmatprep.subr.mxu0 0.0
    %1332 = vmatpush1.msra.mxu0 0.0
    %1333 = vmatprep.subr.mxu0 0.0
    %1334 = vmatpush1.msra.mxu0 0.0
    %1335 = vmatprep.subr.mxu0 0.0
    %1336 = vmatpush1.msra.mxu0 0.0
    %1337 = vmatprep.mubr.f32.mxu0 0.0
    %1338 = vmatmul.mubr.f32.gmra.mrb[0].mxu0 %v995
    %v1339 = vpop.f32.mrb[0].mxu0
    %v1340 = vadd.f32 %v1251, %v1339
    %v1341 = vpop.f32.mrb[0].mxu0
    %v1342 = vadd.f32 %v1253, %v1341
    %1343 = vmatprep.mubr.f32.mxu0 0.0
    %1344 = vmatmul.mubr.f32.gmra.mrb[0].mxu0 %v998
    %v1345 = vpop.f32.mrb[0].mxu0
    %v1346 = vadd.f32 %v1257, %v1345
    %v1347 = vpop.f32.mrb[0].mxu0
    %v1348 = vadd.f32 %v1259, %v1347
    %1349 = vmatprep.mubr.f32.mxu0 0.0
    %1350 = vmatmul.mubr.f32.gmra.mrb[0].mxu0 %v1001
    %v1351 = vpop.f32.mrb[0].mxu0
    %v1352 = vadd.f32 %v1263, %v1351
    %v1353 = vpop.f32.mrb[0].mxu0
    %v1354 = vadd.f32 %v1265, %v1353
    %1355 = vmatprep.mubr.f32.mxu0 0.0
    %1356 = vmatmul.mubr.f32.gmra.mrb[0].mxu0 %v1004
    %v1357 = vpop.f32.mrb[0].mxu0
    %v1358 = vadd.f32 %v1269, %v1357
    %v1359 = vpop.f32.mrb[0].mxu0
    %v1360 = vadd.f32 %v1271, %v1359
    %1361 = vdwg.mxu0
    %v1362 = vmax.f32 %v1162, 0.0
    %v1363 = vmax.f32 %v1164, 0.0
    %v1364 = vmax.f32 %v1340, 0.0
    %v1365 = vmax.f32 %v1342, 0.0
    %v1366 = vmax.f32 %v1168, 0.0
    %v1367 = vmax.f32 %v1170, 0.0
    %v1368 = vmax.f32 %v1346, 0.0
    %v1369 = vmax.f32 %v1348, 0.0
    %v1370 = vmax.f32 %v1174, 0.0
    %v1371 = vmax.f32 %v1176, 0.0
    %v1372 = vmax.f32 %v1352, 0.0
    %v1373 = vmax.f32 %v1354, 0.0
    %v1374 = vmax.f32 %v1180, 0.0
    %v1375 = vmax.f32 %v1182, 0.0
    %v1376 = vmax.f32 %v1358, 0.0
    %v1377 = vmax.f32 %v1360, 0.0
    %1378 = vrot.lane.b32.xlu0 %v1362, 17
    %v1379 = vpop.permute.xlu0 %1378
    %1380 = vrot.lane.b32.xlu0 %v1366, 17
    %v1381 = vpop.permute.xlu0 %1380
    %1382 = vrot.lane.b32.xlu0 %v1370, 17
    %v1383 = vpop.permute.xlu0 %1382
    %1384 = vrot.lane.b32.xlu0 %v1374, 17
    %v1385 = vpop.permute.xlu0 %1384
    %1386 = vrot.lane.b32.xlu0 %v1363, 17
    %v1387 = vpop.permute.xlu0 %1386
    %1388 = vrot.lane.b32.xlu0 %v1367, 17
    %v1389 = vpop.permute.xlu0 %1388
    %1390 = vrot.lane.b32.xlu0 %v1371, 17
    %v1391 = vpop.permute.xlu0 %1390
    %1392 = vrot.lane.b32.xlu0 %v1375, 17
    %v1393 = vpop.permute.xlu0 %1392
    %1394 = vrot.lane.b32.xlu0 %v1364, 17
    %v1395 = vpop.permute.xlu0 %1394
    %1396 = vrot.lane.b32.xlu0 %v1368, 17
    %v1397 = vpop.permute.xlu0 %1396
    %1398 = vrot.lane.b32.xlu0 %v1372, 17
    %v1399 = vpop.permute.xlu0 %1398
    %1400 = vrot.lane.b32.xlu0 %v1376, 17
    %v1401 = vpop.permute.xlu0 %1400
    %1402 = vrot.lane.b32.xlu0 %v1365, 17
    %v1403 = vpop.permute.xlu0 %1402
    %1404 = vrot.lane.b32.xlu0 %v1369, 17
    %v1405 = vpop.permute.xlu0 %1404
    %1406 = vrot.lane.b32.xlu0 %v1373, 17
    %v1407 = vpop.permute.xlu0 %1406
    %1408 = vrot.lane.b32.xlu0 %v1377, 17
    %v1409 = vpop.permute.xlu0 %1408
    %v1410 = vsel %vm286, %v1395, %v1403
    %v1411 = vsel %vm286, %v1397, %v1405
    %v1412 = vsel %vm286, %v1399, %v1407
    %v1413 = vsel %vm286, %v1401, %v1409
    %v1414 = vsel %vm286, %v1387, %v1395
    %v1415 = vsel %vm286, %v1389, %v1397
    %v1416 = vsel %vm286, %v1391, %v1399
    %v1417 = vsel %vm286, %v1393, %v1401
    %v1418 = vsel %vm286, %v1379, %v1387
    %v1419 = vsel %vm286, %v1381, %v1389
    %v1420 = vsel %vm286, %v1383, %v1391
    %v1421 = vsel %vm286, %v1385, %v1393
    %v1422 = vsel %vm286, %v1403, %v1379
    %v1423 = vsel %vm286, %v1405, %v1381
    %v1424 = vsel %vm286, %v1407, %v1383
    %v1425 = vsel %vm286, %v1409, %v1385
    %v1426 = vmul.f32 %v1422, %v308
    %v1427 = vmul.f32 %v1418, %v312
    %v1428 = vmul.f32 %v1414, %v316
    %v1429 = vmul.f32 %v1410, %v320
    %v1430 = vmul.f32 %v1423, %v308
    %v1431 = vmul.f32 %v1419, %v312
    %v1432 = vmul.f32 %v1415, %v316
    %v1433 = vmul.f32 %v1411, %v320
    %v1434 = vmul.f32 %v1424, %v308
    %v1435 = vmul.f32 %v1420, %v312
    %v1436 = vmul.f32 %v1416, %v316
    %v1437 = vmul.f32 %v1412, %v320
    %v1438 = vmul.f32 %v1425, %v308
    %v1439 = vmul.f32 %v1421, %v312
    %v1440 = vmul.f32 %v1417, %v316
    %v1441 = vmul.f32 %v1413, %v320
    %1442 = vrot.lane.b32.xlu0 %v1362, 16
    %v1443 = vpop.permute.xlu0 %1442
    %1444 = vrot.lane.b32.xlu0 %v1366, 16
    %v1445 = vpop.permute.xlu0 %1444
    %1446 = vrot.lane.b32.xlu0 %v1370, 16
    %v1447 = vpop.permute.xlu0 %1446
    %1448 = vrot.lane.b32.xlu0 %v1374, 16
    %v1449 = vpop.permute.xlu0 %1448
    %1450 = vrot.lane.b32.xlu0 %v1363, 16
    %v1451 = vpop.permute.xlu0 %1450
    %1452 = vrot.lane.b32.xlu0 %v1367, 16
    %v1453 = vpop.permute.xlu0 %1452
    %1454 = vrot.lane.b32.xlu0 %v1371, 16
    %v1455 = vpop.permute.xlu0 %1454
    %1456 = vrot.lane.b32.xlu0 %v1375, 16
    %v1457 = vpop.permute.xlu0 %1456
    %1458 = vrot.lane.b32.xlu0 %v1364, 16
    %v1459 = vpop.permute.xlu0 %1458
    %1460 = vrot.lane.b32.xlu0 %v1368, 16
    %v1461 = vpop.permute.xlu0 %1460
    %1462 = vrot.lane.b32.xlu0 %v1372, 16
    %v1463 = vpop.permute.xlu0 %1462
    %1464 = vrot.lane.b32.xlu0 %v1376, 16
    %v1465 = vpop.permute.xlu0 %1464
    %1466 = vrot.lane.b32.xlu0 %v1365, 16
    %v1467 = vpop.permute.xlu0 %1466
    %1468 = vrot.lane.b32.xlu0 %v1369, 16
    %v1469 = vpop.permute.xlu0 %1468
    %1470 = vrot.lane.b32.xlu0 %v1373, 16
    %v1471 = vpop.permute.xlu0 %1470
    %1472 = vrot.lane.b32.xlu0 %v1377, 16
    %v1473 = vpop.permute.xlu0 %1472
    %v1474 = vsel %vm373, %v1459, %v1467
    %v1475 = vsel %vm373, %v1461, %v1469
    %v1476 = vsel %vm373, %v1463, %v1471
    %v1477 = vsel %vm373, %v1465, %v1473
    %v1478 = vsel %vm373, %v1451, %v1459
    %v1479 = vsel %vm373, %v1453, %v1461
    %v1480 = vsel %vm373, %v1455, %v1463
    %v1481 = vsel %vm373, %v1457, %v1465
    %v1482 = vsel %vm373, %v1443, %v1451
    %v1483 = vsel %vm373, %v1445, %v1453
    %v1484 = vsel %vm373, %v1447, %v1455
    %v1485 = vsel %vm373, %v1449, %v1457
    %v1486 = vsel %vm373, %v1467, %v1443
    %v1487 = vsel %vm373, %v1469, %v1445
    %v1488 = vsel %vm373, %v1471, %v1447
    %v1489 = vsel %vm373, %v1473, %v1449
    %v1490 = vmul.f32 %v1486, %v396
    %v1491 = vmul.f32 %v1482, %v400
    %v1492 = vmul.f32 %v1478, %v404
    %v1493 = vmul.f32 %v1474, %v408
    %v1494 = vmul.f32 %v1487, %v396
    %v1495 = vmul.f32 %v1483, %v400
    %v1496 = vmul.f32 %v1479, %v404
    %v1497 = vmul.f32 %v1475, %v408
    %v1498 = vmul.f32 %v1488, %v396
    %v1499 = vmul.f32 %v1484, %v400
    %v1500 = vmul.f32 %v1480, %v404
    %v1501 = vmul.f32 %v1476, %v408
    %v1502 = vmul.f32 %v1489, %v396
    %v1503 = vmul.f32 %v1485, %v400
    %v1504 = vmul.f32 %v1481, %v404
    %v1505 = vmul.f32 %v1477, %v408
    %1506 = vrot.lane.b32.xlu0 %v1362, 15
    %v1507 = vpop.permute.xlu0 %1506
    %1508 = vrot.lane.b32.xlu0 %v1366, 15
    %v1509 = vpop.permute.xlu0 %1508
    %1510 = vrot.lane.b32.xlu0 %v1370, 15
    %v1511 = vpop.permute.xlu0 %1510
    %1512 = vrot.lane.b32.xlu0 %v1374, 15
    %v1513 = vpop.permute.xlu0 %1512
    %1514 = vrot.lane.b32.xlu0 %v1363, 15
    %v1515 = vpop.permute.xlu0 %1514
    %1516 = vrot.lane.b32.xlu0 %v1367, 15
    %v1517 = vpop.permute.xlu0 %1516
    %1518 = vrot.lane.b32.xlu0 %v1371, 15
    %v1519 = vpop.permute.xlu0 %1518
    %1520 = vrot.lane.b32.xlu0 %v1375, 15
    %v1521 = vpop.permute.xlu0 %1520
    %1522 = vrot.lane.b32.xlu0 %v1364, 15
    %v1523 = vpop.permute.xlu0 %1522
    %1524 = vrot.lane.b32.xlu0 %v1368, 15
    %v1525 = vpop.permute.xlu0 %1524
    %1526 = vrot.lane.b32.xlu0 %v1372, 15
    %v1527 = vpop.permute.xlu0 %1526
    %1528 = vrot.lane.b32.xlu0 %v1376, 15
    %v1529 = vpop.permute.xlu0 %1528
    %1530 = vrot.lane.b32.xlu0 %v1365, 15
    %v1531 = vpop.permute.xlu0 %1530
    %1532 = vrot.lane.b32.xlu0 %v1369, 15
    %v1533 = vpop.permute.xlu0 %1532
    %1534 = vrot.lane.b32.xlu0 %v1373, 15
    %v1535 = vpop.permute.xlu0 %1534
    %1536 = vrot.lane.b32.xlu0 %v1377, 15
    %v1537 = vpop.permute.xlu0 %1536
    %v1538 = vsel %vm461, %v1523, %v1531
    %v1539 = vsel %vm461, %v1525, %v1533
    %v1540 = vsel %vm461, %v1527, %v1535
    %v1541 = vsel %vm461, %v1529, %v1537
    %v1542 = vsel %vm461, %v1515, %v1523
    %v1543 = vsel %vm461, %v1517, %v1525
    %v1544 = vsel %vm461, %v1519, %v1527
    %v1545 = vsel %vm461, %v1521, %v1529
    %v1546 = vsel %vm461, %v1507, %v1515
    %v1547 = vsel %vm461, %v1509, %v1517
    %v1548 = vsel %vm461, %v1511, %v1519
    %v1549 = vsel %vm461, %v1513, %v1521
    %v1550 = vsel %vm461, %v1531, %v1507
    %v1551 = vsel %vm461, %v1533, %v1509
    %v1552 = vsel %vm461, %v1535, %v1511
    %v1553 = vsel %vm461, %v1537, %v1513
    %v1554 = vmul.f32 %v1550, %v484
    %v1555 = vmul.f32 %v1546, %v488
    %v1556 = vmul.f32 %v1542, %v492
    %v1557 = vmul.f32 %v1538, %v496
    %v1558 = vmul.f32 %v1551, %v484
    %v1559 = vmul.f32 %v1547, %v488
    %v1560 = vmul.f32 %v1543, %v492
    %v1561 = vmul.f32 %v1539, %v496
    %v1562 = vmul.f32 %v1552, %v484
    %v1563 = vmul.f32 %v1548, %v488
    %v1564 = vmul.f32 %v1544, %v492
    %v1565 = vmul.f32 %v1540, %v496
    %v1566 = vmul.f32 %v1553, %v484
    %v1567 = vmul.f32 %v1549, %v488
    %v1568 = vmul.f32 %v1545, %v492
    %v1569 = vmul.f32 %v1541, %v496
    %1570 = vrot.lane.b32.xlu0 %v1362, 1
    %v1571 = vpop.permute.xlu0 %1570
    %1572 = vrot.lane.b32.xlu0 %v1366, 1
    %v1573 = vpop.permute.xlu0 %1572
    %1574 = vrot.lane.b32.xlu0 %v1370, 1
    %v1575 = vpop.permute.xlu0 %1574
    %1576 = vrot.lane.b32.xlu0 %v1374, 1
    %v1577 = vpop.permute.xlu0 %1576
    %1578 = vrot.lane.b32.xlu0 %v1363, 1
    %v1579 = vpop.permute.xlu0 %1578
    %1580 = vrot.lane.b32.xlu0 %v1367, 1
    %v1581 = vpop.permute.xlu0 %1580
    %1582 = vrot.lane.b32.xlu0 %v1371, 1
    %v1583 = vpop.permute.xlu0 %1582
    %1584 = vrot.lane.b32.xlu0 %v1375, 1
    %v1585 = vpop.permute.xlu0 %1584
    %1586 = vrot.lane.b32.xlu0 %v1364, 1
    %v1587 = vpop.permute.xlu0 %1586
    %1588 = vrot.lane.b32.xlu0 %v1368, 1
    %v1589 = vpop.permute.xlu0 %1588
    %1590 = vrot.lane.b32.xlu0 %v1372, 1
    %v1591 = vpop.permute.xlu0 %1590
    %1592 = vrot.lane.b32.xlu0 %v1376, 1
    %v1593 = vpop.permute.xlu0 %1592
    %1594 = vrot.lane.b32.xlu0 %v1365, 1
    %v1595 = vpop.permute.xlu0 %1594
    %1596 = vrot.lane.b32.xlu0 %v1369, 1
    %v1597 = vpop.permute.xlu0 %1596
    %1598 = vrot.lane.b32.xlu0 %v1373, 1
    %v1599 = vpop.permute.xlu0 %1598
    %1600 = vrot.lane.b32.xlu0 %v1377, 1
    %v1601 = vpop.permute.xlu0 %1600
    %v1602 = vsel %vm549, %v1587, %v1595
    %v1603 = vsel %vm549, %v1589, %v1597
    %v1604 = vsel %vm549, %v1591, %v1599
    %v1605 = vsel %vm549, %v1593, %v1601
    %v1606 = vsel %vm549, %v1579, %v1587
    %v1607 = vsel %vm549, %v1581, %v1589
    %v1608 = vsel %vm549, %v1583, %v1591
    %v1609 = vsel %vm549, %v1585, %v1593
    %v1610 = vsel %vm549, %v1571, %v1579
    %v1611 = vsel %vm549, %v1573, %v1581
    %v1612 = vsel %vm549, %v1575, %v1583
    %v1613 = vsel %vm549, %v1577, %v1585
    %v1614 = vsel %vm549, %v1595, %v1571
    %v1615 = vsel %vm549, %v1597, %v1573
    %v1616 = vsel %vm549, %v1599, %v1575
    %v1617 = vsel %vm549, %v1601, %v1577
    %v1618 = vmul.f32 %v1614, %v572
    %v1619 = vmul.f32 %v1610, %v576
    %v1620 = vmul.f32 %v1606, %v580
    %v1621 = vmul.f32 %v1602, %v584
    %v1622 = vmul.f32 %v1615, %v572
    %v1623 = vmul.f32 %v1611, %v576
    %v1624 = vmul.f32 %v1607, %v580
    %v1625 = vmul.f32 %v1603, %v584
    %v1626 = vmul.f32 %v1616, %v572
    %v1627 = vmul.f32 %v1612, %v576
    %v1628 = vmul.f32 %v1608, %v580
    %v1629 = vmul.f32 %v1604, %v584
    %v1630 = vmul.f32 %v1617, %v572
    %v1631 = vmul.f32 %v1613, %v576
    %v1632 = vmul.f32 %v1609, %v580
    %v1633 = vmul.f32 %v1605, %v584
    %1634 = vrot.lane.b32.xlu0 %v1362, 127
    %v1635 = vpop.permute.xlu0 %1634
    %1636 = vrot.lane.b32.xlu0 %v1366, 127
    %v1637 = vpop.permute.xlu0 %1636
    %1638 = vrot.lane.b32.xlu0 %v1370, 127
    %v1639 = vpop.permute.xlu0 %1638
    %1640 = vrot.lane.b32.xlu0 %v1374, 127
    %v1641 = vpop.permute.xlu0 %1640
    %1642 = vrot.lane.b32.xlu0 %v1363, 127
    %v1643 = vpop.permute.xlu0 %1642
    %1644 = vrot.lane.b32.xlu0 %v1367, 127
    %v1645 = vpop.permute.xlu0 %1644
    %1646 = vrot.lane.b32.xlu0 %v1371, 127
    %v1647 = vpop.permute.xlu0 %1646
    %1648 = vrot.lane.b32.xlu0 %v1375, 127
    %v1649 = vpop.permute.xlu0 %1648
    %1650 = vrot.lane.b32.xlu0 %v1364, 127
    %v1651 = vpop.permute.xlu0 %1650
    %1652 = vrot.lane.b32.xlu0 %v1368, 127
    %v1653 = vpop.permute.xlu0 %1652
    %1654 = vrot.lane.b32.xlu0 %v1372, 127
    %v1655 = vpop.permute.xlu0 %1654
    %1656 = vrot.lane.b32.xlu0 %v1376, 127
    %v1657 = vpop.permute.xlu0 %1656
    %1658 = vrot.lane.b32.xlu0 %v1365, 127
    %v1659 = vpop.permute.xlu0 %1658
    %1660 = vrot.lane.b32.xlu0 %v1369, 127
    %v1661 = vpop.permute.xlu0 %1660
    %1662 = vrot.lane.b32.xlu0 %v1373, 127
    %v1663 = vpop.permute.xlu0 %1662
    %1664 = vrot.lane.b32.xlu0 %v1377, 127
    %v1665 = vpop.permute.xlu0 %1664
    %v1666 = vsel %vm637, %v1651, %v1659
    %v1667 = vsel %vm637, %v1653, %v1661
    %v1668 = vsel %vm637, %v1655, %v1663
    %v1669 = vsel %vm637, %v1657, %v1665
    %v1670 = vsel %vm637, %v1643, %v1651
    %v1671 = vsel %vm637, %v1645, %v1653
    %v1672 = vsel %vm637, %v1647, %v1655
    %v1673 = vsel %vm637, %v1649, %v1657
    %v1674 = vsel %vm637, %v1635, %v1643
    %v1675 = vsel %vm637, %v1637, %v1645
    %v1676 = vsel %vm637, %v1639, %v1647
    %v1677 = vsel %vm637, %v1641, %v1649
    %v1678 = vsel %vm637, %v1659, %v1635
    %v1679 = vsel %vm637, %v1661, %v1637
    %v1680 = vsel %vm637, %v1663, %v1639
    %v1681 = vsel %vm637, %v1665, %v1641
    %v1682 = vmul.f32 %v1674, %v660
    %v1683 = vmul.f32 %v1670, %v664
    %v1684 = vmul.f32 %v1666, %v668
    %v1685 = vmul.f32 %v1678, %v672
    %v1686 = vmul.f32 %v1675, %v660
    %v1687 = vmul.f32 %v1671, %v664
    %v1688 = vmul.f32 %v1667, %v668
    %v1689 = vmul.f32 %v1679, %v672
    %v1690 = vmul.f32 %v1676, %v660
    %v1691 = vmul.f32 %v1672, %v664
    %v1692 = vmul.f32 %v1668, %v668
    %v1693 = vmul.f32 %v1680, %v672
    %v1694 = vmul.f32 %v1677, %v660
    %v1695 = vmul.f32 %v1673, %v664
    %v1696 = vmul.f32 %v1669, %v668
    %v1697 = vmul.f32 %v1681, %v672
    %1698 = vrot.lane.b32.xlu0 %v1362, 113
    %v1699 = vpop.permute.xlu0 %1698
    %1700 = vrot.lane.b32.xlu0 %v1366, 113
    %v1701 = vpop.permute.xlu0 %1700
    %1702 = vrot.lane.b32.xlu0 %v1370, 113
    %v1703 = vpop.permute.xlu0 %1702
    %1704 = vrot.lane.b32.xlu0 %v1374, 113
    %v1705 = vpop.permute.xlu0 %1704
    %1706 = vrot.lane.b32.xlu0 %v1363, 113
    %v1707 = vpop.permute.xlu0 %1706
    %1708 = vrot.lane.b32.xlu0 %v1367, 113
    %v1709 = vpop.permute.xlu0 %1708
    %1710 = vrot.lane.b32.xlu0 %v1371, 113
    %v1711 = vpop.permute.xlu0 %1710
    %1712 = vrot.lane.b32.xlu0 %v1375, 113
    %v1713 = vpop.permute.xlu0 %1712
    %1714 = vrot.lane.b32.xlu0 %v1364, 113
    %v1715 = vpop.permute.xlu0 %1714
    %1716 = vrot.lane.b32.xlu0 %v1368, 113
    %v1717 = vpop.permute.xlu0 %1716
    %1718 = vrot.lane.b32.xlu0 %v1372, 113
    %v1719 = vpop.permute.xlu0 %1718
    %1720 = vrot.lane.b32.xlu0 %v1376, 113
    %v1721 = vpop.permute.xlu0 %1720
    %1722 = vrot.lane.b32.xlu0 %v1365, 113
    %v1723 = vpop.permute.xlu0 %1722
    %1724 = vrot.lane.b32.xlu0 %v1369, 113
    %v1725 = vpop.permute.xlu0 %1724
    %1726 = vrot.lane.b32.xlu0 %v1373, 113
    %v1727 = vpop.permute.xlu0 %1726
    %1728 = vrot.lane.b32.xlu0 %v1377, 113
    %v1729 = vpop.permute.xlu0 %1728
    %v1730 = vsel %vm725, %v1715, %v1723
    %v1731 = vsel %vm725, %v1717, %v1725
    %v1732 = vsel %vm725, %v1719, %v1727
    %v1733 = vsel %vm725, %v1721, %v1729
    %v1734 = vsel %vm725, %v1707, %v1715
    %v1735 = vsel %vm725, %v1709, %v1717
    %v1736 = vsel %vm725, %v1711, %v1719
    %v1737 = vsel %vm725, %v1713, %v1721
    %v1738 = vsel %vm725, %v1699, %v1707
    %v1739 = vsel %vm725, %v1701, %v1709
    %v1740 = vsel %vm725, %v1703, %v1711
    %v1741 = vsel %vm725, %v1705, %v1713
    %v1742 = vsel %vm725, %v1723, %v1699
    %v1743 = vsel %vm725, %v1725, %v1701
    %v1744 = vsel %vm725, %v1727, %v1703
    %v1745 = vsel %vm725, %v1729, %v1705
    %v1746 = vmul.f32 %v1738, %v748
    %v1747 = vmul.f32 %v1734, %v752
    %v1748 = vmul.f32 %v1730, %v756
    %v1749 = vmul.f32 %v1742, %v760
    %v1750 = vmul.f32 %v1739, %v748
    %v1751 = vmul.f32 %v1735, %v752
    %v1752 = vmul.f32 %v1731, %v756
    %v1753 = vmul.f32 %v1743, %v760
    %v1754 = vmul.f32 %v1740, %v748
    %v1755 = vmul.f32 %v1736, %v752
    %v1756 = vmul.f32 %v1732, %v756
    %v1757 = vmul.f32 %v1744, %v760
    %v1758 = vmul.f32 %v1741, %v748
    %v1759 = vmul.f32 %v1737, %v752
    %v1760 = vmul.f32 %v1733, %v756
    %v1761 = vmul.f32 %v1745, %v760
    %1762 = vrot.lane.b32.xlu0 %v1362, 112
    %v1763 = vpop.permute.xlu0 %1762
    %1764 = vrot.lane.b32.xlu0 %v1366, 112
    %v1765 = vpop.permute.xlu0 %1764
    %1766 = vrot.lane.b32.xlu0 %v1370, 112
    %v1767 = vpop.permute.xlu0 %1766
    %1768 = vrot.lane.b32.xlu0 %v1374, 112
    %v1769 = vpop.permute.xlu0 %1768
    %1770 = vrot.lane.b32.xlu0 %v1363, 112
    %v1771 = vpop.permute.xlu0 %1770
    %1772 = vrot.lane.b32.xlu0 %v1367, 112
    %v1773 = vpop.permute.xlu0 %1772
    %1774 = vrot.lane.b32.xlu0 %v1371, 112
    %v1775 = vpop.permute.xlu0 %1774
    %1776 = vrot.lane.b32.xlu0 %v1375, 112
    %v1777 = vpop.permute.xlu0 %1776
    %1778 = vrot.lane.b32.xlu0 %v1364, 112
    %v1779 = vpop.permute.xlu0 %1778
    %1780 = vrot.lane.b32.xlu0 %v1368, 112
    %v1781 = vpop.permute.xlu0 %1780
    %1782 = vrot.lane.b32.xlu0 %v1372, 112
    %v1783 = vpop.permute.xlu0 %1782
    %1784 = vrot.lane.b32.xlu0 %v1376, 112
    %v1785 = vpop.permute.xlu0 %1784
    %1786 = vrot.lane.b32.xlu0 %v1365, 112
    %v1787 = vpop.permute.xlu0 %1786
    %1788 = vrot.lane.b32.xlu0 %v1369, 112
    %v1789 = vpop.permute.xlu0 %1788
    %1790 = vrot.lane.b32.xlu0 %v1373, 112
    %v1791 = vpop.permute.xlu0 %1790
    %1792 = vrot.lane.b32.xlu0 %v1377, 112
    %v1793 = vpop.permute.xlu0 %1792
    %v1794 = vsel %vm813, %v1779, %v1787
    %v1795 = vsel %vm813, %v1781, %v1789
    %v1796 = vsel %vm813, %v1783, %v1791
    %v1797 = vsel %vm813, %v1785, %v1793
    %v1798 = vsel %vm813, %v1771, %v1779
    %v1799 = vsel %vm813, %v1773, %v1781
    %v1800 = vsel %vm813, %v1775, %v1783
    %v1801 = vsel %vm813, %v1777, %v1785
    %v1802 = vsel %vm813, %v1763, %v1771
    %v1803 = vsel %vm813, %v1765, %v1773
    %v1804 = vsel %vm813, %v1767, %v1775
    %v1805 = vsel %vm813, %v1769, %v1777
    %v1806 = vsel %vm813, %v1787, %v1763
    %v1807 = vsel %vm813, %v1789, %v1765
    %v1808 = vsel %vm813, %v1791, %v1767
    %v1809 = vsel %vm813, %v1793, %v1769
    %v1810 = vmul.f32 %v1802, %v836
    %v1811 = vmul.f32 %v1798, %v840
    %v1812 = vmul.f32 %v1794, %v844
    %v1813 = vmul.f32 %v1806, %v848
    %v1814 = vmul.f32 %v1803, %v836
    %v1815 = vmul.f32 %v1799, %v840
    %v1816 = vmul.f32 %v1795, %v844
    %v1817 = vmul.f32 %v1807, %v848
    %v1818 = vmul.f32 %v1804, %v836
    %v1819 = vmul.f32 %v1800, %v840
    %v1820 = vmul.f32 %v1796, %v844
    %v1821 = vmul.f32 %v1808, %v848
    %v1822 = vmul.f32 %v1805, %v836
    %v1823 = vmul.f32 %v1801, %v840
    %v1824 = vmul.f32 %v1797, %v844
    %v1825 = vmul.f32 %v1809, %v848
    %1826 = vrot.lane.b32.xlu0 %v1362, 111
    %v1827 = vpop.permute.xlu0 %1826
    %1828 = vrot.lane.b32.xlu0 %v1366, 111
    %v1829 = vpop.permute.xlu0 %1828
    %1830 = vrot.lane.b32.xlu0 %v1370, 111
    %v1831 = vpop.permute.xlu0 %1830
    %1832 = vrot.lane.b32.xlu0 %v1374, 111
    %v1833 = vpop.permute.xlu0 %1832
    %1834 = vrot.lane.b32.xlu0 %v1363, 111
    %v1835 = vpop.permute.xlu0 %1834
    %1836 = vrot.lane.b32.xlu0 %v1367, 111
    %v1837 = vpop.permute.xlu0 %1836
    %1838 = vrot.lane.b32.xlu0 %v1371, 111
    %v1839 = vpop.permute.xlu0 %1838
    %1840 = vrot.lane.b32.xlu0 %v1375, 111
    %v1841 = vpop.permute.xlu0 %1840
    %1842 = vrot.lane.b32.xlu0 %v1364, 111
    %v1843 = vpop.permute.xlu0 %1842
    %1844 = vrot.lane.b32.xlu0 %v1368, 111
    %v1845 = vpop.permute.xlu0 %1844
    %1846 = vrot.lane.b32.xlu0 %v1372, 111
    %v1847 = vpop.permute.xlu0 %1846
    %1848 = vrot.lane.b32.xlu0 %v1376, 111
    %v1849 = vpop.permute.xlu0 %1848
    %1850 = vrot.lane.b32.xlu0 %v1365, 111
    %v1851 = vpop.permute.xlu0 %1850
    %1852 = vrot.lane.b32.xlu0 %v1369, 111
    %v1853 = vpop.permute.xlu0 %1852
    %1854 = vrot.lane.b32.xlu0 %v1373, 111
    %v1855 = vpop.permute.xlu0 %1854
    %1856 = vrot.lane.b32.xlu0 %v1377, 111
    %v1857 = vpop.permute.xlu0 %1856
    %v1858 = vsel %vm901, %v1843, %v1851
    %v1859 = vsel %vm901, %v1845, %v1853
    %v1860 = vsel %vm901, %v1847, %v1855
    %v1861 = vsel %vm901, %v1849, %v1857
    %v1862 = vsel %vm901, %v1835, %v1843
    %v1863 = vsel %vm901, %v1837, %v1845
    %v1864 = vsel %vm901, %v1839, %v1847
    %v1865 = vsel %vm901, %v1841, %v1849
    %v1866 = vsel %vm901, %v1827, %v1835
    %v1867 = vsel %vm901, %v1829, %v1837
    %v1868 = vsel %vm901, %v1831, %v1839
    %v1869 = vsel %vm901, %v1833, %v1841
    %v1870 = vsel %vm901, %v1851, %v1827
    %v1871 = vsel %vm901, %v1853, %v1829
    %v1872 = vsel %vm901, %v1855, %v1831
    %v1873 = vsel %vm901, %v1857, %v1833
    %v1874 = vmul.f32 %v1866, %v924
    %v1875 = vmul.f32 %v1862, %v928
    %v1876 = vmul.f32 %v1858, %v932
    %v1877 = vmul.f32 %v1870, %v936
    %v1878 = vmul.f32 %v1867, %v924
    %v1879 = vmul.f32 %v1863, %v928
    %v1880 = vmul.f32 %v1859, %v932
    %v1881 = vmul.f32 %v1871, %v936
    %v1882 = vmul.f32 %v1868, %v924
    %v1883 = vmul.f32 %v1864, %v928
    %v1884 = vmul.f32 %v1860, %v932
    %v1885 = vmul.f32 %v1872, %v936
    %v1886 = vmul.f32 %v1869, %v924
    %v1887 = vmul.f32 %v1865, %v928
    %v1888 = vmul.f32 %v1861, %v932
    %v1889 = vmul.f32 %v1873, %v936
    %v1890 = vld [vmem:[#allocation10] sm:$0xff]
    %v1891 = vld [vmem:[#allocation10 + $0x8] sm:$0xff]
    %v1892 = vld [vmem:[#allocation10 + $0x10] sm:$0xff]
    %v1893 = vld [vmem:[#allocation10 + $0x18] sm:$0xff]
    %v1894 = vld [vmem:[#allocation10 + $0x20] sm:$0xff]
    %v1895 = vld [vmem:[#allocation10 + $0x28] sm:$0xff]
    %v1896 = vld [vmem:[#allocation10 + $0x30] sm:$0xff]
    %v1897 = vld [vmem:[#allocation10 + $0x38] sm:$0xff]
    %v1898 = vld [vmem:[#allocation10 + $0x40] sm:$0xff]
    %v1899 = vld [vmem:[#allocation10 + $0x48] sm:$0xff]
    %v1900 = vld [vmem:[#allocation10 + $0x50] sm:$0xff]
    %v1901 = vld [vmem:[#allocation10 + $0x58] sm:$0xff]
    %v1902 = vld [vmem:[#allocation11] sm:$0xff]
    %v1903 = vld [vmem:[#allocation11 + $0x8] sm:$0xff]
    %v1904 = vld [vmem:[#allocation11 + $0x10] sm:$0xff]
    %v1905 = vld [vmem:[#allocation11 + $0x18] sm:$0xff]
    %1907 = vset.pattern.permute.xlu0 0
    %1908 = vperm.xlu0 %1907, %v1902
    %v1909 = vpop.permute.xlu0 %1908
    %1912 = vset.pattern.permute.xlu0 0
    %1913 = vperm.xlu0 %1912, %v1903
    %v1914 = vpop.permute.xlu0 %1913
    %1917 = vset.pattern.permute.xlu0 0
    %1918 = vperm.xlu0 %1917, %v1904
    %v1919 = vpop.permute.xlu0 %1918
    %1922 = vset.pattern.permute.xlu0 0
    %1923 = vperm.xlu0 %1922, %v1905
    %v1924 = vpop.permute.xlu0 %1923
    %v1927 = vsel %vm993, %v1892, 0
    %v1930 = vsel %vm993, %v1895, 0
    %v1933 = vsel %vm993, %v1898, 0
    %v1936 = vsel %vm993, %v1901, 0
    %1938 = vmatprep.subr.mxu0 %v1427
    %1939 = vmatpush1.msra.mxu0 %v1426
    %1940 = vmatprep.subr.mxu0 %v1431
    %1941 = vmatpush1.msra.mxu0 %v1430
    %1942 = vmatprep.subr.mxu0 %v1435
    %1943 = vmatpush1.msra.mxu0 %v1434
    %1944 = vmatprep.subr.mxu0 %v1439
    %1945 = vmatpush1.msra.mxu0 %v1438
    %1946 = vmatprep.subr.mxu0 %v1491
    %1947 = vmatpush1.msra.mxu0 %v1490
    %1948 = vmatprep.subr.mxu0 %v1495
    %1949 = vmatpush1.msra.mxu0 %v1494
    %1950 = vmatprep.subr.mxu0 %v1499
    %1951 = vmatpush1.msra.mxu0 %v1498
    %1952 = vmatprep.subr.mxu0 %v1503
    %1953 = vmatpush1.msra.mxu0 %v1502
    %1954 = vmatprep.subr.mxu0 %v1555
    %1955 = vmatpush1.msra.mxu0 %v1554
    %1956 = vmatprep.subr.mxu0 %v1559
    %1957 = vmatpush1.msra.mxu0 %v1558
    %1958 = vmatprep.subr.mxu0 %v1563
    %1959 = vmatpush1.msra.mxu0 %v1562
    %1960 = vmatprep.subr.mxu0 %v1567
    %1961 = vmatpush1.msra.mxu0 %v1566
    %1962 = vmatprep.subr.mxu0 %v1619
    %1963 = vmatpush1.msra.mxu0 %v1618
    %1964 = vmatprep.subr.mxu0 %v1623
    %1965 = vmatpush1.msra.mxu0 %v1622
    %1966 = vmatprep.subr.mxu0 %v1627
    %1967 = vmatpush1.msra.mxu0 %v1626
    %1968 = vmatprep.subr.mxu0 %v1631
    %1969 = vmatpush1.msra.mxu0 %v1630
    %1970 = vmatprep.subr.mxu0 %v1363
    %1971 = vmatpush1.msra.mxu0 %v1362
    %1972 = vmatprep.subr.mxu0 %v1367
    %1973 = vmatpush1.msra.mxu0 %v1366
    %1974 = vmatprep.subr.mxu0 %v1371
    %1975 = vmatpush1.msra.mxu0 %v1370
    %1976 = vmatprep.subr.mxu0 %v1375
    %1977 = vmatpush1.msra.mxu0 %v1374
    %1978 = vmatprep.subr.mxu0 %v1683
    %1979 = vmatpush1.msra.mxu0 %v1682
    %1980 = vmatprep.subr.mxu0 %v1687
    %1981 = vmatpush1.msra.mxu0 %v1686
    %1982 = vmatprep.subr.mxu0 %v1691
    %1983 = vmatpush1.msra.mxu0 %v1690
    %1984 = vmatprep.subr.mxu0 %v1695
    %1985 = vmatpush1.msra.mxu0 %v1694
    %1986 = vmatprep.subr.mxu0 %v1747
    %1987 = vmatpush1.msra.mxu0 %v1746
    %1988 = vmatprep.subr.mxu0 %v1751
    %1989 = vmatpush1.msra.mxu0 %v1750
    %1990 = vmatprep.subr.mxu0 %v1755
    %1991 = vmatpush1.msra.mxu0 %v1754
    %1992 = vmatprep.subr.mxu0 %v1759
    %1993 = vmatpush1.msra.mxu0 %v1758
    %1994 = vmatprep.subr.mxu0 %v1811
    %1995 = vmatpush1.msra.mxu0 %v1810
    %1996 = vmatprep.subr.mxu0 %v1815
    %1997 = vmatpush1.msra.mxu0 %v1814
    %1998 = vmatprep.subr.mxu0 %v1819
    %1999 = vmatpush1.msra.mxu0 %v1818
    %2000 = vmatprep.subr.mxu0 %v1823
    %2001 = vmatpush1.msra.mxu0 %v1822
    %2002 = vmatprep.mubr.f32.mxu0 %v1891
    %2003 = vmatmul.mubr.f32.gmra.mrb[0].mxu0 %v1890
    %v2004 = vpop.f32.mrb[0].mxu0
    %v2005 = vadd.f32 %v1909, %v2004
    %v2006 = vpop.f32.mrb[0].mxu0
    %v2007 = vadd.f32 %v1909, %v2006
    %2008 = vmatprep.mubr.f32.mxu0 %v1894
    %2009 = vmatmul.mubr.f32.gmra.mrb[0].mxu0 %v1893
    %v2010 = vpop.f32.mrb[0].mxu0
    %v2011 = vadd.f32 %v1914, %v2010
    %v2012 = vpop.f32.mrb[0].mxu0
    %v2013 = vadd.f32 %v1914, %v2012
    %2014 = vmatprep.mubr.f32.mxu0 %v1897
    %2015 = vmatmul.mubr.f32.gmra.mrb[0].mxu0 %v1896
    %v2016 = vpop.f32.mrb[0].mxu0
    %v2017 = vadd.f32 %v1919, %v2016
    %v2018 = vpop.f32.mrb[0].mxu0
    %v2019 = vadd.f32 %v1919, %v2018
    %2020 = vmatprep.mubr.f32.mxu0 %v1900
    %2021 = vmatmul.mubr.f32.gmra.mrb[0].mxu0 %v1899
    %v2022 = vpop.f32.mrb[0].mxu0
    %v2023 = vadd.f32 %v1924, %v2022
    %v2024 = vpop.f32.mrb[0].mxu0
    %v2025 = vadd.f32 %v1924, %v2024
    %2026 = vdwg.mxu0
    %2027 = vmatprep.subr.mxu0 %v1875
    %2028 = vmatpush1.msra.mxu0 %v1874
    %2029 = vmatprep.subr.mxu0 %v1879
    %2030 = vmatpush1.msra.mxu0 %v1878
    %2031 = vmatprep.subr.mxu0 %v1883
    %2032 = vmatpush1.msra.mxu0 %v1882
    %2033 = vmatprep.subr.mxu0 %v1887
    %2034 = vmatpush1.msra.mxu0 %v1886
    %2035 = vmatprep.subr.mxu0 0.0
    %2036 = vmatpush1.msra.mxu0 0.0
    %2037 = vmatprep.subr.mxu0 0.0
    %2038 = vmatpush1.msra.mxu0 0.0
    %2039 = vmatprep.subr.mxu0 0.0
    %2040 = vmatpush1.msra.mxu0 0.0
    %2041 = vmatprep.subr.mxu0 0.0
    %2042 = vmatpush1.msra.mxu0 0.0
    %2043 = vmatprep.subr.mxu0 0.0
    %2044 = vmatpush1.msra.mxu0 0.0
    %2045 = vmatprep.subr.mxu0 0.0
    %2046 = vmatpush1.msra.mxu0 0.0
    %2047 = vmatprep.subr.mxu0 0.0
    %2048 = vmatpush1.msra.mxu0 0.0
    %2049 = vmatprep.subr.mxu0 0.0
    %2050 = vmatpush1.msra.mxu0 0.0
    %2051 = vmatprep.subr.mxu0 0.0
    %2052 = vmatpush1.msra.mxu0 0.0
    %2053 = vmatprep.subr.mxu0 0.0
    %2054 = vmatpush1.msra.mxu0 0.0
    %2055 = vmatprep.subr.mxu0 0.0
    %2056 = vmatpush1.msra.mxu0 0.0
    %2057 = vmatprep.subr.mxu0 0.0
    %2058 = vmatpush1.msra.mxu0 0.0
    %2059 = vmatprep.subr.mxu0 0.0
    %2060 = vmatpush1.msra.mxu0 0.0
    %2061 = vmatprep.subr.mxu0 0.0
    %2062 = vmatpush1.msra.mxu0 0.0
    %2063 = vmatprep.subr.mxu0 0.0
    %2064 = vmatpush1.msra.mxu0 0.0
    %2065 = vmatprep.subr.mxu0 0.0
    %2066 = vmatpush1.msra.mxu0 0.0
    %2067 = vmatprep.subr.mxu0 0.0
    %2068 = vmatpush1.msra.mxu0 0.0
    %2069 = vmatprep.subr.mxu0 0.0
    %2070 = vmatpush1.msra.mxu0 0.0
    %2071 = vmatprep.subr.mxu0 0.0
    %2072 = vmatpush1.msra.mxu0 0.0
    %2073 = vmatprep.subr.mxu0 0.0
    %2074 = vmatpush1.msra.mxu0 0.0
    %2075 = vmatprep.subr.mxu0 0.0
    %2076 = vmatpush1.msra.mxu0 0.0
    %2077 = vmatprep.subr.mxu0 0.0
    %2078 = vmatpush1.msra.mxu0 0.0
    %2079 = vmatprep.subr.mxu0 0.0
    %2080 = vmatpush1.msra.mxu0 0.0
    %2081 = vmatprep.subr.mxu0 0.0
    %2082 = vmatpush1.msra.mxu0 0.0
    %2083 = vmatprep.subr.mxu0 0.0
    %2084 = vmatpush1.msra.mxu0 0.0
    %2085 = vmatprep.subr.mxu0 0.0
    %2086 = vmatpush1.msra.mxu0 0.0
    %2087 = vmatprep.subr.mxu0 0.0
    %2088 = vmatpush1.msra.mxu0 0.0
    %2089 = vmatprep.subr.mxu0 0.0
    %2090 = vmatpush1.msra.mxu0 0.0
    %2091 = vmatprep.mubr.f32.mxu0 0.0
    %2092 = vmatmul.mubr.f32.gmra.mrb[0].mxu0 %v1927
    %v2093 = vpop.f32.mrb[0].mxu0
    %v2094 = vadd.f32 %v2005, %v2093
    %v2095 = vpop.f32.mrb[0].mxu0
    %v2096 = vadd.f32 %v2007, %v2095
    %2097 = vmatprep.mubr.f32.mxu0 0.0
    %2098 = vmatmul.mubr.f32.gmra.mrb[0].mxu0 %v1930
    %v2099 = vpop.f32.mrb[0].mxu0
    %v2100 = vadd.f32 %v2011, %v2099
    %v2101 = vpop.f32.mrb[0].mxu0
    %v2102 = vadd.f32 %v2013, %v2101
    %2103 = vmatprep.mubr.f32.mxu0 0.0
    %2104 = vmatmul.mubr.f32.gmra.mrb[0].mxu0 %v1933
    %v2105 = vpop.f32.mrb[0].mxu0
    %v2106 = vadd.f32 %v2017, %v2105
    %v2107 = vpop.f32.mrb[0].mxu0
    %v2108 = vadd.f32 %v2019, %v2107
    %2109 = vmatprep.mubr.f32.mxu0 0.0
    %2110 = vmatmul.mubr.f32.gmra.mrb[0].mxu0 %v1936
    %v2111 = vpop.f32.mrb[0].mxu0
    %v2112 = vadd.f32 %v2023, %v2111
    %v2113 = vpop.f32.mrb[0].mxu0
    %v2114 = vadd.f32 %v2025, %v2113
    %2115 = vdwg.mxu0
    %2116 = vmatprep.subr.mxu0 %v1429
    %2117 = vmatpush1.msra.mxu0 %v1428
    %2118 = vmatprep.subr.mxu0 %v1433
    %2119 = vmatpush1.msra.mxu0 %v1432
    %2120 = vmatprep.subr.mxu0 %v1437
    %2121 = vmatpush1.msra.mxu0 %v1436
    %2122 = vmatprep.subr.mxu0 %v1441
    %2123 = vmatpush1.msra.mxu0 %v1440
    %2124 = vmatprep.subr.mxu0 %v1493
    %2125 = vmatpush1.msra.mxu0 %v1492
    %2126 = vmatprep.subr.mxu0 %v1497
    %2127 = vmatpush1.msra.mxu0 %v1496
    %2128 = vmatprep.subr.mxu0 %v1501
    %2129 = vmatpush1.msra.mxu0 %v1500
    %2130 = vmatprep.subr.mxu0 %v1505
    %2131 = vmatpush1.msra.mxu0 %v1504
    %2132 = vmatprep.subr.mxu0 %v1557
    %2133 = vmatpush1.msra.mxu0 %v1556
    %2134 = vmatprep.subr.mxu0 %v1561
    %2135 = vmatpush1.msra.mxu0 %v1560
    %2136 = vmatprep.subr.mxu0 %v1565
    %2137 = vmatpush1.msra.mxu0 %v1564
    %2138 = vmatprep.subr.mxu0 %v1569
    %2139 = vmatpush1.msra.mxu0 %v1568
    %2140 = vmatprep.subr.mxu0 %v1621
    %2141 = vmatpush1.msra.mxu0 %v1620
    %2142 = vmatprep.subr.mxu0 %v1625
    %2143 = vmatpush1.msra.mxu0 %v1624
    %2144 = vmatprep.subr.mxu0 %v1629
    %2145 = vmatpush1.msra.mxu0 %v1628
    %2146 = vmatprep.subr.mxu0 %v1633
    %2147 = vmatpush1.msra.mxu0 %v1632
    %2148 = vmatprep.subr.mxu0 %v1365
    %2149 = vmatpush1.msra.mxu0 %v1364
    %2150 = vmatprep.subr.mxu0 %v1369
    %2151 = vmatpush1.msra.mxu0 %v1368
    %2152 = vmatprep.subr.mxu0 %v1373
    %2153 = vmatpush1.msra.mxu0 %v1372
    %2154 = vmatprep.subr.mxu0 %v1377
    %2155 = vmatpush1.msra.mxu0 %v1376
    %2156 = vmatprep.subr.mxu0 %v1685
    %2157 = vmatpush1.msra.mxu0 %v1684
    %2158 = vmatprep.subr.mxu0 %v1689
    %2159 = vmatpush1.msra.mxu0 %v1688
    %2160 = vmatprep.subr.mxu0 %v1693
    %2161 = vmatpush1.msra.mxu0 %v1692
    %2162 = vmatprep.subr.mxu0 %v1697
    %2163 = vmatpush1.msra.mxu0 %v1696
    %2164 = vmatprep.subr.mxu0 %v1749
    %2165 = vmatpush1.msra.mxu0 %v1748
    %2166 = vmatprep.subr.mxu0 %v1753
    %2167 = vmatpush1.msra.mxu0 %v1752
    %2168 = vmatprep.subr.mxu0 %v1757
    %2169 = vmatpush1.msra.mxu0 %v1756
    %2170 = vmatprep.subr.mxu0 %v1761
    %2171 = vmatpush1.msra.mxu0 %v1760
    %2172 = vmatprep.subr.mxu0 %v1813
    %2173 = vmatpush1.msra.mxu0 %v1812
    %2174 = vmatprep.subr.mxu0 %v1817
    %2175 = vmatpush1.msra.mxu0 %v1816
    %2176 = vmatprep.subr.mxu0 %v1821
    %2177 = vmatpush1.msra.mxu0 %v1820
    %2178 = vmatprep.subr.mxu0 %v1825
    %2179 = vmatpush1.msra.mxu0 %v1824
    %2180 = vmatprep.mubr.f32.mxu0 %v1891
    %2181 = vmatmul.mubr.f32.gmra.mrb[0].mxu0 %v1890
    %v2182 = vpop.f32.mrb[0].mxu0
    %v2183 = vadd.f32 %v1909, %v2182
    %v2184 = vpop.f32.mrb[0].mxu0
    %v2185 = vadd.f32 %v1909, %v2184
    %2186 = vmatprep.mubr.f32.mxu0 %v1894
    %2187 = vmatmul.mubr.f32.gmra.mrb[0].mxu0 %v1893
    %v2188 = vpop.f32.mrb[0].mxu0
    %v2189 = vadd.f32 %v1914, %v2188
    %v2190 = vpop.f32.mrb[0].mxu0
    %v2191 = vadd.f32 %v1914, %v2190
    %2192 = vmatprep.mubr.f32.mxu0 %v1897
    %2193 = vmatmul.mubr.f32.gmra.mrb[0].mxu0 %v1896
    %v2194 = vpop.f32.mrb[0].mxu0
    %v2195 = vadd.f32 %v1919, %v2194
    %v2196 = vpop.f32.mrb[0].mxu0
    %v2197 = vadd.f32 %v1919, %v2196
    %2198 = vmatprep.mubr.f32.mxu0 %v1900
    %2199 = vmatmul.mubr.f32.gmra.mrb[0].mxu0 %v1899
    %v2200 = vpop.f32.mrb[0].mxu0
    %v2201 = vadd.f32 %v1924, %v2200
    %v2202 = vpop.f32.mrb[0].mxu0
    %v2203 = vadd.f32 %v1924, %v2202
    %2204 = vdwg.mxu0
    %2205 = vmatprep.subr.mxu0 %v1877
    %2206 = vmatpush1.msra.mxu0 %v1876
    %2207 = vmatprep.subr.mxu0 %v1881
    %2208 = vmatpush1.msra.mxu0 %v1880
    %2209 = vmatprep.subr.mxu0 %v1885
    %2210 = vmatpush1.msra.mxu0 %v1884
    %2211 = vmatprep.subr.mxu0 %v1889
    %2212 = vmatpush1.msra.mxu0 %v1888
    %2213 = vmatprep.subr.mxu0 0.0
    %2214 = vmatpush1.msra.mxu0 0.0
    %2215 = vmatprep.subr.mxu0 0.0
    %2216 = vmatpush1.msra.mxu0 0.0
    %2217 = vmatprep.subr.mxu0 0.0
    %2218 = vmatpush1.msra.mxu0 0.0
    %2219 = vmatprep.subr.mxu0 0.0
    %2220 = vmatpush1.msra.mxu0 0.0
    %2221 = vmatprep.subr.mxu0 0.0
    %2222 = vmatpush1.msra.mxu0 0.0
    %2223 = vmatprep.subr.mxu0 0.0
    %2224 = vmatpush1.msra.mxu0 0.0
    %2225 = vmatprep.subr.mxu0 0.0
    %2226 = vmatpush1.msra.mxu0 0.0
    %2227 = vmatprep.subr.mxu0 0.0
    %2228 = vmatpush1.msra.mxu0 0.0
    %2229 = vmatprep.subr.mxu0 0.0
    %2230 = vmatpush1.msra.mxu0 0.0
    %2231 = vmatprep.subr.mxu0 0.0
    %2232 = vmatpush1.msra.mxu0 0.0
    %2233 = vmatprep.subr.mxu0 0.0
    %2234 = vmatpush1.msra.mxu0 0.0
    %2235 = vmatprep.subr.mxu0 0.0
    %2236 = vmatpush1.msra.mxu0 0.0
    %2237 = vmatprep.subr.mxu0 0.0
    %2238 = vmatpush1.msra.mxu0 0.0
    %2239 = vmatprep.subr.mxu0 0.0
    %2240 = vmatpush1.msra.mxu0 0.0
    %2241 = vmatprep.subr.mxu0 0.0
    %2242 = vmatpush1.msra.mxu0 0.0
    %2243 = vmatprep.subr.mxu0 0.0
    %2244 = vmatpush1.msra.mxu0 0.0
    %2245 = vmatprep.subr.mxu0 0.0
    %2246 = vmatpush1.msra.mxu0 0.0
    %2247 = vmatprep.subr.mxu0 0.0
    %2248 = vmatpush1.msra.mxu0 0.0
    %2249 = vmatprep.subr.mxu0 0.0
    %2250 = vmatpush1.msra.mxu0 0.0
    %2251 = vmatprep.subr.mxu0 0.0
    %2252 = vmatpush1.msra.mxu0 0.0
    %2253 = vmatprep.subr.mxu0 0.0
    %2254 = vmatpush1.msra.mxu0 0.0
    %2255 = vmatprep.subr.mxu0 0.0
    %2256 = vmatpush1.msra.mxu0 0.0
    %2257 = vmatprep.subr.mxu0 0.0
    %2258 = vmatpush1.msra.mxu0 0.0
    %2259 = vmatprep.subr.mxu0 0.0
    %2260 = vmatpush1.msra.mxu0 0.0
    %2261 = vmatprep.subr.mxu0 0.0
    %2262 = vmatpush1.msra.mxu0 0.0
    %2263 = vmatprep.subr.mxu0 0.0
    %2264 = vmatpush1.msra.mxu0 0.0
    %2265 = vmatprep.subr.mxu0 0.0
    %2266 = vmatpush1.msra.mxu0 0.0
    %2267 = vmatprep.subr.mxu0 0.0
    %2268 = vmatpush1.msra.mxu0 0.0
    %2269 = vmatprep.mubr.f32.mxu0 0.0
    %2270 = vmatmul.mubr.f32.gmra.mrb[0].mxu0 %v1927
    %v2271 = vpop.f32.mrb[0].mxu0
    %v2272 = vadd.f32 %v2183, %v2271
    %v2273 = vpop.f32.mrb[0].mxu0
    %v2274 = vadd.f32 %v2185, %v2273
    %2275 = vmatprep.mubr.f32.mxu0 0.0
    %2276 = vmatmul.mubr.f32.gmra.mrb[0].mxu0 %v1930
    %v2277 = vpop.f32.mrb[0].mxu0
    %v2278 = vadd.f32 %v2189, %v2277
    %v2279 = vpop.f32.mrb[0].mxu0
    %v2280 = vadd.f32 %v2191, %v2279
    %2281 = vmatprep.mubr.f32.mxu0 0.0
    %2282 = vmatmul.mubr.f32.gmra.mrb[0].mxu0 %v1933
    %v2283 = vpop.f32.mrb[0].mxu0
    %v2284 = vadd.f32 %v2195, %v2283
    %v2285 = vpop.f32.mrb[0].mxu0
    %v2286 = vadd.f32 %v2197, %v2285
    %2287 = vmatprep.mubr.f32.mxu0 0.0
    %2288 = vmatmul.mubr.f32.gmra.mrb[0].mxu0 %v1936
    %v2289 = vpop.f32.mrb[0].mxu0
    %v2290 = vadd.f32 %v2201, %v2289
    %v2291 = vpop.f32.mrb[0].mxu0
    %v2292 = vadd.f32 %v2203, %v2291
    %2293 = vdwg.mxu0
    %v2294 = vmul.f32 %v2094, 0.1
    %v2295 = vmul.f32 %v2096, 0.1
    %v2296 = vmul.f32 %v2272, 0.1
    %v2297 = vmul.f32 %v2274, 0.1
    %v2298 = vmul.f32 %v2100, 0.1
    %v2299 = vmul.f32 %v2102, 0.1
    %v2300 = vmul.f32 %v2278, 0.1
    %v2301 = vmul.f32 %v2280, 0.1
    %v2302 = vmul.f32 %v2106, 0.1
    %v2303 = vmul.f32 %v2108, 0.1
    %v2304 = vmul.f32 %v2284, 0.1
    %v2305 = vmul.f32 %v2286, 0.1
    %v2306 = vmul.f32 %v2112, 0.1
    %v2307 = vmul.f32 %v2114, 0.1
    %v2308 = vmul.f32 %v2290, 0.1
    %v2309 = vmul.f32 %v2292, 0.1
    %v2310 = vadd.f32 %v2294, %v236
    %v2311 = vadd.f32 %v2295, %v237
    %v2312 = vadd.f32 %v2296, %v238
    %v2313 = vadd.f32 %v2297, %v239
    %v2314 = vadd.f32 %v2298, %v240
    %v2315 = vadd.f32 %v2299, %v241
    %v2316 = vadd.f32 %v2300, %v242
    %v2317 = vadd.f32 %v2301, %v243
    %v2318 = vadd.f32 %v2302, %v244
    %v2319 = vadd.f32 %v2303, %v245
    %v2320 = vadd.f32 %v2304, %v246
    %v2321 = vadd.f32 %v2305, %v247
    %v2322 = vadd.f32 %v2306, %v248
    %v2323 = vadd.f32 %v2307, %v249
    %v2324 = vadd.f32 %v2308, %v250
    %v2325 = vadd.f32 %v2309, %v251
    %v2326 = vld [vmem:[#allocation13] sm:$0xff]
    %v2327 = vld [vmem:[#allocation13 + $0x8] sm:$0xff]
    %v2328 = vld [vmem:[#allocation13 + $0x10] sm:$0xff]
    %v2329 = vld [vmem:[#allocation13 + $0x18] sm:$0xff]
    %v2330 = vld [vmem:[#allocation14] sm:$0xff]
    %v2331 = vld [vmem:[#allocation14 + $0x8] sm:$0xff]
    %v2332 = vld [vmem:[#allocation14 + $0x10] sm:$0xff]
    %v2333 = vld [vmem:[#allocation14 + $0x18] sm:$0xff]
    %2335 = vset.pattern.permute.xlu0 0
    %2336 = vperm.xlu0 %2335, %v2330
    %v2337 = vpop.permute.xlu0 %2336
    %2340 = vset.pattern.permute.xlu0 0
    %2341 = vperm.xlu0 %2340, %v2331
    %v2342 = vpop.permute.xlu0 %2341
    %2345 = vset.pattern.permute.xlu0 0
    %2346 = vperm.xlu0 %2345, %v2332
    %v2347 = vpop.permute.xlu0 %2346
    %2350 = vset.pattern.permute.xlu0 0
    %2351 = vperm.xlu0 %2350, %v2333
    %v2352 = vpop.permute.xlu0 %2351
    %v2355 = vsel %vm993, %v2326, 0
    %v2358 = vsel %vm993, %v2327, 0
    %v2361 = vsel %vm993, %v2328, 0
    %v2364 = vsel %vm993, %v2329, 0
    %2366 = vmatprep.subr.mxu0 %v2311
    %2367 = vmatpush1.msra.mxu0 %v2310
    %2368 = vmatprep.subr.mxu0 %v2315
    %2369 = vmatpush1.msra.mxu0 %v2314
    %2370 = vmatprep.subr.mxu0 %v2319
    %2371 = vmatpush1.msra.mxu0 %v2318
    %2372 = vmatprep.subr.mxu0 %v2323
    %2373 = vmatpush1.msra.mxu0 %v2322
    %2374 = vmatprep.subr.mxu0 0.0
    %2375 = vmatpush1.msra.mxu0 0.0
    %2376 = vmatprep.subr.mxu0 0.0
    %2377 = vmatpush1.msra.mxu0 0.0
    %2378 = vmatprep.subr.mxu0 0.0
    %2379 = vmatpush1.msra.mxu0 0.0
    %2380 = vmatprep.subr.mxu0 0.0
    %2381 = vmatpush1.msra.mxu0 0.0
    %2382 = vmatprep.subr.mxu0 0.0
    %2383 = vmatpush1.msra.mxu0 0.0
    %2384 = vmatprep.subr.mxu0 0.0
    %2385 = vmatpush1.msra.mxu0 0.0
    %2386 = vmatprep.subr.mxu0 0.0
    %2387 = vmatpush1.msra.mxu0 0.0
    %2388 = vmatprep.subr.mxu0 0.0
    %2389 = vmatpush1.msra.mxu0 0.0
    %2390 = vmatprep.subr.mxu0 0.0
    %2391 = vmatpush1.msra.mxu0 0.0
    %2392 = vmatprep.subr.mxu0 0.0
    %2393 = vmatpush1.msra.mxu0 0.0
    %2394 = vmatprep.subr.mxu0 0.0
    %2395 = vmatpush1.msra.mxu0 0.0
    %2396 = vmatprep.subr.mxu0 0.0
    %2397 = vmatpush1.msra.mxu0 0.0
    %2398 = vmatprep.subr.mxu0 0.0
    %2399 = vmatpush1.msra.mxu0 0.0
    %2400 = vmatprep.subr.mxu0 0.0
    %2401 = vmatpush1.msra.mxu0 0.0
    %2402 = vmatprep.subr.mxu0 0.0
    %2403 = vmatpush1.msra.mxu0 0.0
    %2404 = vmatprep.subr.mxu0 0.0
    %2405 = vmatpush1.msra.mxu0 0.0
    %2406 = vmatprep.subr.mxu0 0.0
    %2407 = vmatpush1.msra.mxu0 0.0
    %2408 = vmatprep.subr.mxu0 0.0
    %2409 = vmatpush1.msra.mxu0 0.0
    %2410 = vmatprep.subr.mxu0 0.0
    %2411 = vmatpush1.msra.mxu0 0.0
    %2412 = vmatprep.subr.mxu0 0.0
    %2413 = vmatpush1.msra.mxu0 0.0
    %2414 = vmatprep.subr.mxu0 0.0
    %2415 = vmatpush1.msra.mxu0 0.0
    %2416 = vmatprep.subr.mxu0 0.0
    %2417 = vmatpush1.msra.mxu0 0.0
    %2418 = vmatprep.subr.mxu0 0.0
    %2419 = vmatpush1.msra.mxu0 0.0
    %2420 = vmatprep.subr.mxu0 0.0
    %2421 = vmatpush1.msra.mxu0 0.0
    %2422 = vmatprep.subr.mxu0 0.0
    %2423 = vmatpush1.msra.mxu0 0.0
    %2424 = vmatprep.subr.mxu0 0.0
    %2425 = vmatpush1.msra.mxu0 0.0
    %2426 = vmatprep.subr.mxu0 0.0
    %2427 = vmatpush1.msra.mxu0 0.0
    %2428 = vmatprep.subr.mxu0 0.0
    %2429 = vmatpush1.msra.mxu0 0.0
    %2430 = vmatprep.mubr.f32.mxu0 0.0
    %2431 = vmatmul.mubr.f32.gmra.mrb[0].mxu0 %v2355
    %v2432 = vpop.f32.mrb[0].mxu0
    %v2433 = vadd.f32 %v2337, %v2432
    %v2434 = vpop.f32.mrb[0].mxu0
    %v2435 = vadd.f32 %v2337, %v2434
    %2436 = vmatprep.mubr.f32.mxu0 0.0
    %2437 = vmatmul.mubr.f32.gmra.mrb[0].mxu0 %v2358
    %v2438 = vpop.f32.mrb[0].mxu0
    %v2439 = vadd.f32 %v2342, %v2438
    %v2440 = vpop.f32.mrb[0].mxu0
    %v2441 = vadd.f32 %v2342, %v2440
    %2442 = vmatprep.mubr.f32.mxu0 0.0
    %2443 = vmatmul.mubr.f32.gmra.mrb[0].mxu0 %v2361
    %v2444 = vpop.f32.mrb[0].mxu0
    %v2445 = vadd.f32 %v2347, %v2444
    %v2446 = vpop.f32.mrb[0].mxu0
    %v2447 = vadd.f32 %v2347, %v2446
    %2448 = vmatprep.mubr.f32.mxu0 0.0
    %2449 = vmatmul.mubr.f32.gmra.mrb[0].mxu0 %v2364
    %v2450 = vpop.f32.mrb[0].mxu0
    %v2451 = vadd.f32 %v2352, %v2450
    %v2452 = vpop.f32.mrb[0].mxu0
    %v2453 = vadd.f32 %v2352, %v2452
    %2454 = vdwg.mxu0
    %2455 = vmatprep.subr.mxu0 %v2313
    %2456 = vmatpush1.msra.mxu0 %v2312
    %2457 = vmatprep.subr.mxu0 %v2317
    %2458 = vmatpush1.msra.mxu0 %v2316
    %2459 = vmatprep.subr.mxu0 %v2321
    %2460 = vmatpush1.msra.mxu0 %v2320
    %2461 = vmatprep.subr.mxu0 %v2325
    %2462 = vmatpush1.msra.mxu0 %v2324
    %2463 = vmatprep.subr.mxu0 0.0
    %2464 = vmatpush1.msra.mxu0 0.0
    %2465 = vmatprep.subr.mxu0 0.0
    %2466 = vmatpush1.msra.mxu0 0.0
    %2467 = vmatprep.subr.mxu0 0.0
    %2468 = vmatpush1.msra.mxu0 0.0
    %2469 = vmatprep.subr.mxu0 0.0
    %2470 = vmatpush1.msra.mxu0 0.0
    %2471 = vmatprep.subr.mxu0 0.0
    %2472 = vmatpush1.msra.mxu0 0.0
    %2473 = vmatprep.subr.mxu0 0.0
    %2474 = vmatpush1.msra.mxu0 0.0
    %2475 = vmatprep.subr.mxu0 0.0
    %2476 = vmatpush1.msra.mxu0 0.0
    %2477 = vmatprep.subr.mxu0 0.0
    %2478 = vmatpush1.msra.mxu0 0.0
    %2479 = vmatprep.subr.mxu0 0.0
    %2480 = vmatpush1.msra.mxu0 0.0
    %2481 = vmatprep.subr.mxu0 0.0
    %2482 = vmatpush1.msra.mxu0 0.0
    %2483 = vmatprep.subr.mxu0 0.0
    %2484 = vmatpush1.msra.mxu0 0.0
    %2485 = vmatprep.subr.mxu0 0.0
    %2486 = vmatpush1.msra.mxu0 0.0
    %2487 = vmatprep.subr.mxu0 0.0
    %2488 = vmatpush1.msra.mxu0 0.0
    %2489 = vmatprep.subr.mxu0 0.0
    %2490 = vmatpush1.msra.mxu0 0.0
    %2491 = vmatprep.subr.mxu0 0.0
    %2492 = vmatpush1.msra.mxu0 0.0
    %2493 = vmatprep.subr.mxu0 0.0
    %2494 = vmatpush1.msra.mxu0 0.0
    %2495 = vmatprep.subr.mxu0 0.0
    %2496 = vmatpush1.msra.mxu0 0.0
    %2497 = vmatprep.subr.mxu0 0.0
    %2498 = vmatpush1.msra.mxu0 0.0
    %2499 = vmatprep.subr.mxu0 0.0
    %2500 = vmatpush1.msra.mxu0 0.0
    %2501 = vmatprep.subr.mxu0 0.0
    %2502 = vmatpush1.msra.mxu0 0.0
    %2503 = vmatprep.subr.mxu0 0.0
    %2504 = vmatpush1.msra.mxu0 0.0
    %2505 = vmatprep.subr.mxu0 0.0
    %2506 = vmatpush1.msra.mxu0 0.0
    %2507 = vmatprep.subr.mxu0 0.0
    %2508 = vmatpush1.msra.mxu0 0.0
    %2509 = vmatprep.subr.mxu0 0.0
    %2510 = vmatpush1.msra.mxu0 0.0
    %2511 = vmatprep.subr.mxu0 0.0
    %2512 = vmatpush1.msra.mxu0 0.0
    %2513 = vmatprep.subr.mxu0 0.0
    %2514 = vmatpush1.msra.mxu0 0.0
    %2515 = vmatprep.subr.mxu0 0.0
    %2516 = vmatpush1.msra.mxu0 0.0
    %2517 = vmatprep.subr.mxu0 0.0
    %2518 = vmatpush1.msra.mxu0 0.0
    %2519 = vmatprep.mubr.f32.mxu0 0.0
    %2520 = vmatmul.mubr.f32.gmra.mrb[0].mxu0 %v2355
    %v2521 = vpop.f32.mrb[0].mxu0
    %v2522 = vadd.f32 %v2337, %v2521
    %v2523 = vpop.f32.mrb[0].mxu0
    %v2524 = vadd.f32 %v2337, %v2523
    %2525 = vmatprep.mubr.f32.mxu0 0.0
    %2526 = vmatmul.mubr.f32.gmra.mrb[0].mxu0 %v2358
    %v2527 = vpop.f32.mrb[0].mxu0
    %v2528 = vadd.f32 %v2342, %v2527
    %v2529 = vpop.f32.mrb[0].mxu0
    %v2530 = vadd.f32 %v2342, %v2529
    %2531 = vmatprep.mubr.f32.mxu0 0.0
    %2532 = vmatmul.mubr.f32.gmra.mrb[0].mxu0 %v2361
    %v2533 = vpop.f32.mrb[0].mxu0
    %v2534 = vadd.f32 %v2347, %v2533
    %v2535 = vpop.f32.mrb[0].mxu0
    %v2536 = vadd.f32 %v2347, %v2535
    %2537 = vmatprep.mubr.f32.mxu0 0.0
    %2538 = vmatmul.mubr.f32.gmra.mrb[0].mxu0 %v2364
    %v2539 = vpop.f32.mrb[0].mxu0
    %v2540 = vadd.f32 %v2352, %v2539
    %v2541 = vpop.f32.mrb[0].mxu0
    %v2542 = vadd.f32 %v2352, %v2541
    %2543 = vdwg.mxu0
    %v2544 = vmax.f32 %v2433, 0.0
    %v2545 = vmax.f32 %v2435, 0.0
    %v2546 = vmax.f32 %v2522, 0.0
    %v2547 = vmax.f32 %v2524, 0.0
    %v2548 = vmax.f32 %v2439, 0.0
    %v2549 = vmax.f32 %v2441, 0.0
    %v2550 = vmax.f32 %v2528, 0.0
    %v2551 = vmax.f32 %v2530, 0.0
    %v2552 = vmax.f32 %v2445, 0.0
    %v2553 = vmax.f32 %v2447, 0.0
    %v2554 = vmax.f32 %v2534, 0.0
    %v2555 = vmax.f32 %v2536, 0.0
    %v2556 = vmax.f32 %v2451, 0.0
    %v2557 = vmax.f32 %v2453, 0.0
    %v2558 = vmax.f32 %v2540, 0.0
    %v2559 = vmax.f32 %v2542, 0.0
    %v2560 = vld [vmem:[#allocation16] sm:$0xff]
    %v2561 = vld [vmem:[#allocation16 + $0x8] sm:$0xff]
    %v2562 = vld [vmem:[#allocation16 + $0x10] sm:$0xff]
    %v2563 = vld [vmem:[#allocation16 + $0x18] sm:$0xff]
    %v2564 = vld [vmem:[#allocation17] sm:$0xff]
    %v2565 = vld [vmem:[#allocation17 + $0x8] sm:$0xff]
    %v2566 = vld [vmem:[#allocation17 + $0x10] sm:$0xff]
    %v2567 = vld [vmem:[#allocation17 + $0x18] sm:$0xff]
    %2569 = vset.pattern.permute.xlu0 0
    %2570 = vperm.xlu0 %2569, %v2564
    %v2571 = vpop.permute.xlu0 %2570
    %2574 = vset.pattern.permute.xlu0 0
    %2575 = vperm.xlu0 %2574, %v2565
    %v2576 = vpop.permute.xlu0 %2575
    %2579 = vset.pattern.permute.xlu0 0
    %2580 = vperm.xlu0 %2579, %v2566
    %v2581 = vpop.permute.xlu0 %2580
    %2584 = vset.pattern.permute.xlu0 0
    %2585 = vperm.xlu0 %2584, %v2567
    %v2586 = vpop.permute.xlu0 %2585
    %v2589 = vsel %vm993, %v2560, 0
    %v2592 = vsel %vm993, %v2561, 0
    %v2595 = vsel %vm993, %v2562, 0
    %v2598 = vsel %vm993, %v2563, 0
    %2600 = vmatprep.subr.mxu0 %v2545
    %2601 = vmatpush1.msra.mxu0 %v2544
    %2602 = vmatprep.subr.mxu0 %v2549
    %2603 = vmatpush1.msra.mxu0 %v2548
    %2604 = vmatprep.subr.mxu0 %v2553
    %2605 = vmatpush1.msra.mxu0 %v2552
    %2606 = vmatprep.subr.mxu0 %v2557
    %2607 = vmatpush1.msra.mxu0 %v2556
    %2608 = vmatprep.subr.mxu0 0.0
    %2609 = vmatpush1.msra.mxu0 0.0
    %2610 = vmatprep.subr.mxu0 0.0
    %2611 = vmatpush1.msra.mxu0 0.0
    %2612 = vmatprep.subr.mxu0 0.0
    %2613 = vmatpush1.msra.mxu0 0.0
    %2614 = vmatprep.subr.mxu0 0.0
    %2615 = vmatpush1.msra.mxu0 0.0
    %2616 = vmatprep.subr.mxu0 0.0
    %2617 = vmatpush1.msra.mxu0 0.0
    %2618 = vmatprep.subr.mxu0 0.0
    %2619 = vmatpush1.msra.mxu0 0.0
    %2620 = vmatprep.subr.mxu0 0.0
    %2621 = vmatpush1.msra.mxu0 0.0
    %2622 = vmatprep.subr.mxu0 0.0
    %2623 = vmatpush1.msra.mxu0 0.0
    %2624 = vmatprep.subr.mxu0 0.0
    %2625 = vmatpush1.msra.mxu0 0.0
    %2626 = vmatprep.subr.mxu0 0.0
    %2627 = vmatpush1.msra.mxu0 0.0
    %2628 = vmatprep.subr.mxu0 0.0
    %2629 = vmatpush1.msra.mxu0 0.0
    %2630 = vmatprep.subr.mxu0 0.0
    %2631 = vmatpush1.msra.mxu0 0.0
    %2632 = vmatprep.subr.mxu0 0.0
    %2633 = vmatpush1.msra.mxu0 0.0
    %2634 = vmatprep.subr.mxu0 0.0
    %2635 = vmatpush1.msra.mxu0 0.0
    %2636 = vmatprep.subr.mxu0 0.0
    %2637 = vmatpush1.msra.mxu0 0.0
    %2638 = vmatprep.subr.mxu0 0.0
    %2639 = vmatpush1.msra.mxu0 0.0
    %2640 = vmatprep.subr.mxu0 0.0
    %2641 = vmatpush1.msra.mxu0 0.0
    %2642 = vmatprep.subr.mxu0 0.0
    %2643 = vmatpush1.msra.mxu0 0.0
    %2644 = vmatprep.subr.mxu0 0.0
    %2645 = vmatpush1.msra.mxu0 0.0
    %2646 = vmatprep.subr.mxu0 0.0
    %2647 = vmatpush1.msra.mxu0 0.0
    %2648 = vmatprep.subr.mxu0 0.0
    %2649 = vmatpush1.msra.mxu0 0.0
    %2650 = vmatprep.subr.mxu0 0.0
    %2651 = vmatpush1.msra.mxu0 0.0
    %2652 = vmatprep.subr.mxu0 0.0
    %2653 = vmatpush1.msra.mxu0 0.0
    %2654 = vmatprep.subr.mxu0 0.0
    %2655 = vmatpush1.msra.mxu0 0.0
    %2656 = vmatprep.subr.mxu0 0.0
    %2657 = vmatpush1.msra.mxu0 0.0
    %2658 = vmatprep.subr.mxu0 0.0
    %2659 = vmatpush1.msra.mxu0 0.0
    %2660 = vmatprep.subr.mxu0 0.0
    %2661 = vmatpush1.msra.mxu0 0.0
    %2662 = vmatprep.subr.mxu0 0.0
    %2663 = vmatpush1.msra.mxu0 0.0
    %2664 = vmatprep.mubr.f32.mxu0 0.0
    %2665 = vmatmul.mubr.f32.gmra.mrb[0].mxu0 %v2589
    %v2666 = vpop.f32.mrb[0].mxu0
    %v2667 = vadd.f32 %v2571, %v2666
    %v2668 = vpop.f32.mrb[0].mxu0
    %v2669 = vadd.f32 %v2571, %v2668
    %2670 = vmatprep.mubr.f32.mxu0 0.0
    %2671 = vmatmul.mubr.f32.gmra.mrb[0].mxu0 %v2592
    %v2672 = vpop.f32.mrb[0].mxu0
    %v2673 = vadd.f32 %v2576, %v2672
    %v2674 = vpop.f32.mrb[0].mxu0
    %v2675 = vadd.f32 %v2576, %v2674
    %2676 = vmatprep.mubr.f32.mxu0 0.0
    %2677 = vmatmul.mubr.f32.gmra.mrb[0].mxu0 %v2595
    %v2678 = vpop.f32.mrb[0].mxu0
    %v2679 = vadd.f32 %v2581, %v2678
    %v2680 = vpop.f32.mrb[0].mxu0
    %v2681 = vadd.f32 %v2581, %v2680
    %2682 = vmatprep.mubr.f32.mxu0 0.0
    %2683 = vmatmul.mubr.f32.gmra.mrb[0].mxu0 %v2598
    %v2684 = vpop.f32.mrb[0].mxu0
    %v2685 = vadd.f32 %v2586, %v2684
    %v2686 = vpop.f32.mrb[0].mxu0
    %v2687 = vadd.f32 %v2586, %v2686
    %2688 = vdwg.mxu0
    %2689 = vmatprep.subr.mxu0 %v2547
    %2690 = vmatpush1.msra.mxu0 %v2546
    %2691 = vmatprep.subr.mxu0 %v2551
    %2692 = vmatpush1.msra.mxu0 %v2550
    %2693 = vmatprep.subr.mxu0 %v2555
    %2694 = vmatpush1.msra.mxu0 %v2554
    %2695 = vmatprep.subr.mxu0 %v2559
    %2696 = vmatpush1.msra.mxu0 %v2558
    %2697 = vmatprep.subr.mxu0 0.0
    %2698 = vmatpush1.msra.mxu0 0.0
    %2699 = vmatprep.subr.mxu0 0.0
    %2700 = vmatpush1.msra.mxu0 0.0
    %2701 = vmatprep.subr.mxu0 0.0
    %2702 = vmatpush1.msra.mxu0 0.0
    %2703 = vmatprep.subr.mxu0 0.0
    %2704 = vmatpush1.msra.mxu0 0.0
    %2705 = vmatprep.subr.mxu0 0.0
    %2706 = vmatpush1.msra.mxu0 0.0
    %2707 = vmatprep.subr.mxu0 0.0
    %2708 = vmatpush1.msra.mxu0 0.0
    %2709 = vmatprep.subr.mxu0 0.0
    %2710 = vmatpush1.msra.mxu0 0.0
    %2711 = vmatprep.subr.mxu0 0.0
    %2712 = vmatpush1.msra.mxu0 0.0
    %2713 = vmatprep.subr.mxu0 0.0
    %2714 = vmatpush1.msra.mxu0 0.0
    %2715 = vmatprep.subr.mxu0 0.0
    %2716 = vmatpush1.msra.mxu0 0.0
    %2717 = vmatprep.subr.mxu0 0.0
    %2718 = vmatpush1.msra.mxu0 0.0
    %2719 = vmatprep.subr.mxu0 0.0
    %2720 = vmatpush1.msra.mxu0 0.0
    %2721 = vmatprep.subr.mxu0 0.0
    %2722 = vmatpush1.msra.mxu0 0.0
    %2723 = vmatprep.subr.mxu0 0.0
    %2724 = vmatpush1.msra.mxu0 0.0
    %2725 = vmatprep.subr.mxu0 0.0
    %2726 = vmatpush1.msra.mxu0 0.0
    %2727 = vmatprep.subr.mxu0 0.0
    %2728 = vmatpush1.msra.mxu0 0.0
    %2729 = vmatprep.subr.mxu0 0.0
    %2730 = vmatpush1.msra.mxu0 0.0
    %2731 = vmatprep.subr.mxu0 0.0
    %2732 = vmatpush1.msra.mxu0 0.0
    %2733 = vmatprep.subr.mxu0 0.0
    %2734 = vmatpush1.msra.mxu0 0.0
    %2735 = vmatprep.subr.mxu0 0.0
    %2736 = vmatpush1.msra.mxu0 0.0
    %2737 = vmatprep.subr.mxu0 0.0
    %2738 = vmatpush1.msra.mxu0 0.0
    %2739 = vmatprep.subr.mxu0 0.0
    %2740 = vmatpush1.msra.mxu0 0.0
    %2741 = vmatprep.subr.mxu0 0.0
    %2742 = vmatpush1.msra.mxu0 0.0
    %2743 = vmatprep.subr.mxu0 0.0
    %2744 = vmatpush1.msra.mxu0 0.0
    %2745 = vmatprep.subr.mxu0 0.0
    %2746 = vmatpush1.msra.mxu0 0.0
    %2747 = vmatprep.subr.mxu0 0.0
    %2748 = vmatpush1.msra.mxu0 0.0
    %2749 = vmatprep.subr.mxu0 0.0
    %2750 = vmatpush1.msra.mxu0 0.0
    %2751 = vmatprep.subr.mxu0 0.0
    %2752 = vmatpush1.msra.mxu0 0.0
    %2753 = vmatprep.mubr.f32.mxu0 0.0
    %2754 = vmatmul.mubr.f32.gmra.mrb[0].mxu0 %v2589
    %v2755 = vpop.f32.mrb[0].mxu0
    %v2756 = vadd.f32 %v2571, %v2755
    %v2757 = vpop.f32.mrb[0].mxu0
    %v2758 = vadd.f32 %v2571, %v2757
    %2759 = vmatprep.mubr.f32.mxu0 0.0
    %2760 = vmatmul.mubr.f32.gmra.mrb[0].mxu0 %v2592
    %v2761 = vpop.f32.mrb[0].mxu0
    %v2762 = vadd.f32 %v2576, %v2761
    %v2763 = vpop.f32.mrb[0].mxu0
    %v2764 = vadd.f32 %v2576, %v2763
    %2765 = vmatprep.mubr.f32.mxu0 0.0
    %2766 = vmatmul.mubr.f32.gmra.mrb[0].mxu0 %v2595
    %v2767 = vpop.f32.mrb[0].mxu0
    %v2768 = vadd.f32 %v2581, %v2767
    %v2769 = vpop.f32.mrb[0].mxu0
    %v2770 = vadd.f32 %v2581, %v2769
    %2771 = vmatprep.mubr.f32.mxu0 0.0
    %2772 = vmatmul.mubr.f32.gmra.mrb[0].mxu0 %v2598
    %v2773 = vpop.f32.mrb[0].mxu0
    %v2774 = vadd.f32 %v2586, %v2773
    %v2775 = vpop.f32.mrb[0].mxu0
    %v2776 = vadd.f32 %v2586, %v2775
    %2777 = vdwg.mxu0
    %v2778 = vadd.f32 %v2667, %v2669
    %2779 = vadd.xlane.f32.xlu0 %v2778
    %v2780 = vpop.xlane.xlu0 %2779
    %v2781 = vadd.f32 %v2673, %v2675
    %2782 = vadd.xlane.f32.xlu0 %v2781
    %v2783 = vpop.xlane.xlu0 %2782
    %v2784 = vadd.f32 %v2679, %v2681
    %2785 = vadd.xlane.f32.xlu0 %v2784
    %v2786 = vpop.xlane.xlu0 %2785
    %v2787 = vadd.f32 %v2685, %v2687
    %2788 = vadd.xlane.f32.xlu0 %v2787
    %v2789 = vpop.xlane.xlu0 %2788
    %v2790 = vrcp.pop 256.0
    %v2791 = vmul.f32 %v2780, %v2790
    %v2792 = vmul.f32 %v2783, %v2790
    %v2793 = vmul.f32 %v2786, %v2790
    %v2794 = vmul.f32 %v2789, %v2790
    %v2795 = vld [vmem:[#allocation19] sm:$0xff]
    %v2796 = vld [vmem:[#allocation19 + $0x8] sm:$0xff]
    %v2797 = vld [vmem:[#allocation19 + $0x10] sm:$0xff]
    %v2798 = vld [vmem:[#allocation19 + $0x18] sm:$0xff]
    %v2799 = vmul.f32 %v2795, %v2791
    %v2800 = vmul.f32 %v2796, %v2792
    %v2801 = vmul.f32 %v2797, %v2793
    %v2802 = vmul.f32 %v2798, %v2794
    %vm2803 = vcmask 15360
    %v2804 = vsel %vm2803, %v2799, 0.0
    %v2805 = vsel %vm2803, %v2800, 0.0
    %v2806 = vadd.f32 %v2804, %v2805
    %v2807 = vsel %vm2803, %v2801, 0.0
    %v2808 = vadd.f32 %v2806, %v2807
    %v2809 = vsel %vm2803, %v2802, 0.0
    %v2810 = vadd.f32 %v2808, %v2809
    %v2811 = vrot.slane %v2810, 4
    %v2812 = vadd.f32 %v2810, %v2811
    %v2813 = vrot.slane %v2812, 2
    %v2814 = vadd.f32 %v2812, %v2813
    %v2815 = vrot.slane %v2814, 1
    %v2816 = vadd.f32 %v2814, %v2815
    %v2817 = vld [vmem:[#allocation20] sm:$0x1]
    %v2818 = vadd.f32 %v2816, %v2817
    %v2819 = vmax.f32 %v2818, 0.0
    %v2820 = vld [vmem:[#allocation22] sm:$0xff]
    %v2821 = vld [vmem:[#allocation22 + $0x8] sm:$0xff]
    %v2822 = vld [vmem:[#allocation22 + $0x10] sm:$0xff]
    %v2823 = vld [vmem:[#allocation22 + $0x18] sm:$0xff]
    %v2824 = vlaneseq
    %v2825 = vshrl.u32 %v2824, 7
    %v2826 = vsub.s32 0, %v2825
    %v2827 = vrot.slane %v2819, %v2826
    %v2828 = vmul.f32 %v2820, %v2827
    %v2829 = vmul.f32 %v2821, %v2827
    %v2830 = vmul.f32 %v2822, %v2827
    %v2831 = vmul.f32 %v2823, %v2827
    %v2832 = vsel %vm2803, %v2828, 0.0
    %2833 = vadd.xlane.f32.xlu0 %v2832
    %v2834 = vpop.xlane.xlu0 %2833
    %v2835 = vsel %vm2803, %v2829, 0.0
    %2836 = vadd.xlane.f32.xlu0 %v2835
    %v2837 = vpop.xlane.xlu0 %2836
    %v2838 = vsel %vm2803, %v2830, 0.0
    %2839 = vadd.xlane.f32.xlu0 %v2838
    %v2840 = vpop.xlane.xlu0 %2839
    %v2841 = vsel %vm2803, %v2831, 0.0
    %2842 = vadd.xlane.f32.xlu0 %v2841
    %v2843 = vpop.xlane.xlu0 %2842
    %v2844 = vld [vmem:[#allocation23] sm:$0xff]
    %v2845 = vld [vmem:[#allocation23 + $0x8] sm:$0xff]
    %v2846 = vld [vmem:[#allocation23 + $0x10] sm:$0xff]
    %v2847 = vld [vmem:[#allocation23 + $0x18] sm:$0xff]
    %v2848 = vadd.f32 %v2834, %v2844
    %v2849 = vadd.f32 %v2837, %v2845
    %v2850 = vadd.f32 %v2840, %v2846
    %v2851 = vadd.f32 %v2843, %v2847
    %v2852 = vxor.u32 %v2848, 2147483648
    %v2853 = vxor.u32 %v2849, 2147483648
    %v2854 = vxor.u32 %v2850, 2147483648
    %v2855 = vxor.u32 %v2851, 2147483648
    %v2856 = vmul.f32 %v2852, 1.442695
    %v2857 = vpow.pop %v2856
    %v2858 = vmul.f32 %v2853, 1.442695
    %v2859 = vpow.pop %v2858
    %v2860 = vmul.f32 %v2854, 1.442695
    %v2861 = vpow.pop %v2860
    %v2862 = vmul.f32 %v2855, 1.442695
    %v2863 = vpow.pop %v2862
    %v2864 = vadd.f32 %v2857, 1.0
    %v2865 = vadd.f32 %v2859, 1.0
    %v2866 = vadd.f32 %v2861, 1.0
    %v2867 = vadd.f32 %v2863, 1.0
    %v2868 = vrcp.pop %v2864
    %v2869 = vmul.f32 1.0, %v2868
    %v2870 = vrcp.pop %v2865
    %v2871 = vmul.f32 1.0, %v2870
    %v2872 = vrcp.pop %v2866
    %v2873 = vmul.f32 1.0, %v2872
    %v2874 = vrcp.pop %v2867
    %v2875 = vmul.f32 1.0, %v2874
    %2877 = vset.pattern.permute.xlu0 0
    %2878 = vperm.xlu0 %2877, %v2869
    %v2879 = vpop.permute.xlu0 %2878
    %2882 = vset.pattern.permute.xlu0 0
    %2883 = vperm.xlu0 %2882, %v2871
    %v2884 = vpop.permute.xlu0 %2883
    %2887 = vset.pattern.permute.xlu0 0
    %2888 = vperm.xlu0 %2887, %v2873
    %v2889 = vpop.permute.xlu0 %2888
    %2892 = vset.pattern.permute.xlu0 0
    %2893 = vperm.xlu0 %2892, %v2875
    %v2894 = vpop.permute.xlu0 %2893
    %v2896 = vmul.f32 %v2667, %v2879
    %v2897 = vmul.f32 %v2669, %v2879
    %v2898 = vmul.f32 %v2673, %v2884
    %v2899 = vmul.f32 %v2675, %v2884
    %v2900 = vmul.f32 %v2679, %v2889
    %v2901 = vmul.f32 %v2681, %v2889
    %v2902 = vmul.f32 %v2685, %v2894
    %v2903 = vmul.f32 %v2687, %v2894
    %v2904 = vmul.f32 %v2896, 0.1
    %v2905 = vmul.f32 %v2897, 0.1
    %v2906 = vmul.f32 %v2898, 0.1
    %v2907 = vmul.f32 %v2899, 0.1
    %v2908 = vmul.f32 %v2900, 0.1
    %v2909 = vmul.f32 %v2901, 0.1
    %v2910 = vmul.f32 %v2902, 0.1
    %v2911 = vmul.f32 %v2903, 0.1
    %v2912 = vadd.f32 %v2904, %v2310
    %v2913 = vadd.f32 %v2905, %v2311
    %v2914 = vadd.f32 %v2906, %v2314
    %v2915 = vadd.f32 %v2907, %v2315
    %v2916 = vadd.f32 %v2908, %v2318
    %v2917 = vadd.f32 %v2909, %v2319
    %v2918 = vadd.f32 %v2910, %v2322
    %v2919 = vadd.f32 %v2911, %v2323
    %2920 = vst [vmem:[#allocation25] sm:$0xff] %v2912
    %2921 = vst [vmem:[#allocation25 + $0x8] sm:$0xff] %v2913
    %2922 = vst [vmem:[#allocation25 + $0x20] sm:$0xff] %v2914
    %2923 = vst [vmem:[#allocation25 + $0x28] sm:$0xff] %v2915
    %2924 = vst [vmem:[#allocation25 + $0x40] sm:$0xff] %v2916
    %2925 = vst [vmem:[#allocation25 + $0x48] sm:$0xff] %v2917
    %2926 = vst [vmem:[#allocation25 + $0x60] sm:$0xff] %v2918
    %2927 = vst [vmem:[#allocation25 + $0x68] sm:$0xff] %v2919
    %v2928 = vadd.f32 %v2756, %v2758
    %2929 = vadd.xlane.f32.xlu0 %v2928
    %v2930 = vpop.xlane.xlu0 %2929
    %v2931 = vadd.f32 %v2762, %v2764
    %2932 = vadd.xlane.f32.xlu0 %v2931
    %v2933 = vpop.xlane.xlu0 %2932
    %v2934 = vadd.f32 %v2768, %v2770
    %2935 = vadd.xlane.f32.xlu0 %v2934
    %v2936 = vpop.xlane.xlu0 %2935
    %v2937 = vadd.f32 %v2774, %v2776
    %2938 = vadd.xlane.f32.xlu0 %v2937
    %v2939 = vpop.xlane.xlu0 %2938
    %v2940 = vmul.f32 %v2930, %v2790
    %v2941 = vmul.f32 %v2933, %v2790
    %v2942 = vmul.f32 %v2936, %v2790
    %v2943 = vmul.f32 %v2939, %v2790
    %v2944 = vld [vmem:[#allocation19] sm:$0xff]
    %v2945 = vld [vmem:[#allocation19 + $0x8] sm:$0xff]
    %v2946 = vld [vmem:[#allocation19 + $0x10] sm:$0xff]
    %v2947 = vld [vmem:[#allocation19 + $0x18] sm:$0xff]
    %v2948 = vmul.f32 %v2944, %v2940
    %v2949 = vmul.f32 %v2945, %v2941
    %v2950 = vmul.f32 %v2946, %v2942
    %v2951 = vmul.f32 %v2947, %v2943
    %v2952 = vsel %vm2803, %v2948, 0.0
    %v2953 = vsel %vm2803, %v2949, 0.0
    %v2954 = vadd.f32 %v2952, %v2953
    %v2955 = vsel %vm2803, %v2950, 0.0
    %v2956 = vadd.f32 %v2954, %v2955
    %v2957 = vsel %vm2803, %v2951, 0.0
    %v2958 = vadd.f32 %v2956, %v2957
    %v2959 = vrot.slane %v2958, 4
    %v2960 = vadd.f32 %v2958, %v2959
    %v2961 = vrot.slane %v2960, 2
    %v2962 = vadd.f32 %v2960, %v2961
    %v2963 = vrot.slane %v2962, 1
    %v2964 = vadd.f32 %v2962, %v2963
    %v2965 = vld [vmem:[#allocation20] sm:$0x1]
    %v2966 = vadd.f32 %v2964, %v2965
    %v2967 = vmax.f32 %v2966, 0.0
    %v2968 = vld [vmem:[#allocation22] sm:$0xff]
    %v2969 = vld [vmem:[#allocation22 + $0x8] sm:$0xff]
    %v2970 = vld [vmem:[#allocation22 + $0x10] sm:$0xff]
    %v2971 = vld [vmem:[#allocation22 + $0x18] sm:$0xff]
    %v2972 = vlaneseq
    %v2973 = vshrl.u32 %v2972, 7
    %v2974 = vsub.s32 0, %v2973
    %v2975 = vrot.slane %v2967, %v2974
    %v2976 = vmul.f32 %v2968, %v2975
    %v2977 = vmul.f32 %v2969, %v2975
    %v2978 = vmul.f32 %v2970, %v2975
    %v2979 = vmul.f32 %v2971, %v2975
    %v2980 = vsel %vm2803, %v2976, 0.0
    %2981 = vadd.xlane.f32.xlu0 %v2980
    %v2982 = vpop.xlane.xlu0 %2981
    %v2983 = vsel %vm2803, %v2977, 0.0
    %2984 = vadd.xlane.f32.xlu0 %v2983
    %v2985 = vpop.xlane.xlu0 %2984
    %v2986 = vsel %vm2803, %v2978, 0.0
    %2987 = vadd.xlane.f32.xlu0 %v2986
    %v2988 = vpop.xlane.xlu0 %2987
    %v2989 = vsel %vm2803, %v2979, 0.0
    %2990 = vadd.xlane.f32.xlu0 %v2989
    %v2991 = vpop.xlane.xlu0 %2990
    %v2992 = vld [vmem:[#allocation23] sm:$0xff]
    %v2993 = vld [vmem:[#allocation23 + $0x8] sm:$0xff]
    %v2994 = vld [vmem:[#allocation23 + $0x10] sm:$0xff]
    %v2995 = vld [vmem:[#allocation23 + $0x18] sm:$0xff]
    %v2996 = vadd.f32 %v2982, %v2992
    %v2997 = vadd.f32 %v2985, %v2993
    %v2998 = vadd.f32 %v2988, %v2994
    %v2999 = vadd.f32 %v2991, %v2995
    %v3000 = vxor.u32 %v2996, 2147483648
    %v3001 = vxor.u32 %v2997, 2147483648
    %v3002 = vxor.u32 %v2998, 2147483648
    %v3003 = vxor.u32 %v2999, 2147483648
    %v3004 = vmul.f32 %v3000, 1.442695
    %v3005 = vpow.pop %v3004
    %v3006 = vmul.f32 %v3001, 1.442695
    %v3007 = vpow.pop %v3006
    %v3008 = vmul.f32 %v3002, 1.442695
    %v3009 = vpow.pop %v3008
    %v3010 = vmul.f32 %v3003, 1.442695
    %v3011 = vpow.pop %v3010
    %v3012 = vadd.f32 %v3005, 1.0
    %v3013 = vadd.f32 %v3007, 1.0
    %v3014 = vadd.f32 %v3009, 1.0
    %v3015 = vadd.f32 %v3011, 1.0
    %v3016 = vrcp.pop %v3012
    %v3017 = vmul.f32 1.0, %v3016
    %v3018 = vrcp.pop %v3013
    %v3019 = vmul.f32 1.0, %v3018
    %v3020 = vrcp.pop %v3014
    %v3021 = vmul.f32 1.0, %v3020
    %v3022 = vrcp.pop %v3015
    %v3023 = vmul.f32 1.0, %v3022
    %3025 = vset.pattern.permute.xlu0 0
    %3026 = vperm.xlu0 %3025, %v3017
    %v3027 = vpop.permute.xlu0 %3026
    %3030 = vset.pattern.permute.xlu0 0
    %3031 = vperm.xlu0 %3030, %v3019
    %v3032 = vpop.permute.xlu0 %3031
    %3035 = vset.pattern.permute.xlu0 0
    %3036 = vperm.xlu0 %3035, %v3021
    %v3037 = vpop.permute.xlu0 %3036
    %3040 = vset.pattern.permute.xlu0 0
    %3041 = vperm.xlu0 %3040, %v3023
    %v3042 = vpop.permute.xlu0 %3041
    %v3044 = vmul.f32 %v2756, %v3027
    %v3045 = vmul.f32 %v2758, %v3027
    %v3046 = vmul.f32 %v2762, %v3032
    %v3047 = vmul.f32 %v2764, %v3032
    %v3048 = vmul.f32 %v2768, %v3037
    %v3049 = vmul.f32 %v2770, %v3037
    %v3050 = vmul.f32 %v2774, %v3042
    %v3051 = vmul.f32 %v2776, %v3042
    %v3052 = vmul.f32 %v3044, 0.1
    %v3053 = vmul.f32 %v3045, 0.1
    %v3054 = vmul.f32 %v3046, 0.1
    %v3055 = vmul.f32 %v3047, 0.1
    %v3056 = vmul.f32 %v3048, 0.1
    %v3057 = vmul.f32 %v3049, 0.1
    %v3058 = vmul.f32 %v3050, 0.1
    %v3059 = vmul.f32 %v3051, 0.1
    %v3060 = vadd.f32 %v3052, %v2312
    %v3061 = vadd.f32 %v3053, %v2313
    %v3062 = vadd.f32 %v3054, %v2316
    %v3063 = vadd.f32 %v3055, %v2317
    %v3064 = vadd.f32 %v3056, %v2320
    %v3065 = vadd.f32 %v3057, %v2321
    %v3066 = vadd.f32 %v3058, %v2324
    %v3067 = vadd.f32 %v3059, %v2325
    %3068 = vst [vmem:[#allocation25 + $0x10] sm:$0xff] %v3060
    %3069 = vst [vmem:[#allocation25 + $0x18] sm:$0xff] %v3061
    %3070 = vst [vmem:[#allocation25 + $0x30] sm:$0xff] %v3062
    %3071 = vst [vmem:[#allocation25 + $0x38] sm:$0xff] %v3063
    %3072 = vst [vmem:[#allocation25 + $0x50] sm:$0xff] %v3064
    %3073 = vst [vmem:[#allocation25 + $0x58] sm:$0xff] %v3065
    %3074 = vst [vmem:[#allocation25 + $0x70] sm:$0xff] %v3066
    %3075 = vst [vmem:[#allocation25 + $0x78] sm:$0xff] %v3067
    // Predicated region
    $region114: #{tpu_custom_call.1} parent=1 // pred_check
      _
    $region115: #{tpu_custom_call.1} parent=1 // pred_check_branch
      %3077 = sbr.rel (0) target = $region117
    $region116: #{tpu_custom_call.1} parent=1 // pred_region
      %s3079 = ssub.s32 2048, 2048
      %3080 = vsyncadd [#allocation4], %s3079
      %s3081 = sshll.u32 [#allocation25], 4
      %s3082 = int_to_ptr.vmem [resolvable:$true] %s3081
      %3087 = dma.vmem_to_hbm [thread:$0]  %s3082, 2048, %s14, [#allocation4], 512, 512, 32
    $region117: #{tpu_custom_call.1} parent=1 // pred_fallthru
      _
    // Predicated region
    $region118: #{tpu_custom_call.1} parent=1 // pred_check
      _
    $region119: #{tpu_custom_call.1} parent=1 // pred_check_branch
      %3089 = sbr.rel (0) target = $region121
    $region120: #{tpu_custom_call.1} parent=1 // pred_region
      %3090 = dma.done [#allocation4], 2048
    $region121: #{tpu_custom_call.1} parent=1 // pred_fallthru
      _
    %3091 = vsyncpa [#allocation3], 1
    %3092 = vsyncpa [#allocation6], 1
    %3093 = vsyncpa [#allocation9], 1
    %3094 = vsyncpa [#allocation12], 1
    %3095 = vsyncpa [#allocation15], 1
    %3096 = vsyncpa [#allocation18], 1
    %3097 = vsyncpa [#allocation21], 1
    %3098 = vsyncpa [#allocation24], 1
    %3099 = vsyncpa [#allocation4], 1

</llo_original>
